<compile_context>
chip_gen: v5e
topology: v5e:2x2
jax: 0.10.0
libtpu: 0.0.40
codegen_flags: <defaults>
</compile_context>

<pallas_src>
import functools

import jax
import jax.numpy as jnp
from jax import lax
from jax.experimental import pallas as pl
from jax.experimental.pallas import tpu as pltpu

L_B = 90          # fixed lookback window of the reference implementation
ROW_TILE = 128    # rows (points) per sub-block; also the half window width
SUB_BLOCKS = 4    # 128-row sub-blocks per grid step (amortizes per-step overhead)


def _knn_kernel(xprev_ref, xsup_ref, nn_ref, *, kk, l_b, tm, r_sub):
    """xprev_ref: (1, tm, C)        last tm rows before this super-block (clamped at 0).
    xsup_ref : (1, r_sub*tm, C)  this super-block of L2-normalized points.
    nn_ref   : (1, r_sub*tm, kk) int32 relative window columns of the kk nearest
               causal neighbours; column c of global row g maps to absolute index
               (g // tm - 1) * tm + c (offset added in the wrapper)."""
    w = 2 * tm
    sent = jnp.int32(0x7FFFFFFF)          # > any valid packed key

    def process(xp, xc, row0, first_tile_guard):
        # Window Gram matrix on the MXU (contraction over channels). For small C
        # the (w, C) operand concat is a tiny VMEM copy; keep a single dot.
        x_win = jnp.concatenate([xp, xc], axis=0)                    # (w, C)
        gram = lax.dot_general(xc, x_win,
                               dimension_numbers=(((1,), (1,)), ((), ())),
                               preferred_element_type=jnp.float32)   # (tm, w)

        # Squared distance between unit vectors: 2 - 2*dot. Clamp tiny negative
        # round-off so the positive-f32 bit pattern stays order preserving.
        score = jnp.maximum(2.0 - 2.0 * gram, 0.0)

        # Pack (distance, window column) into one sortable int32 key: clear the
        # low 8 mantissa bits, OR in the column (< 256 by the static asserts in
        # the wrapper). One cross-lane min then yields value and argmin together.
        col = lax.broadcasted_iota(jnp.int32, (tm, w), 1)
        row = lax.broadcasted_iota(jnp.int32, (tm, w), 0)
        d = col - row                     # independent of the tile's base index
        # causal: j <= i  <=>  d <= tm ; lookback: i - j < l_b  <=>  d > tm - l_b
        valid = (d <= tm) & (d > (tm - l_b))
        if first_tile_guard:
            # j >= 0 can only fail for the very first global tile (left window half)
            valid = valid & ((col >= tm) | (pl.program_id(1) > 0))

        keys = (pltpu.bitcast(score, jnp.int32) & jnp.int32(-256)) | col
        keys = jnp.where(valid, keys, sent)

        # Iterative top-k (k smallest): winner columns go straight to the output
        # ref (narrow stores overlap the next step's VPU/XLU work); no wide
        # accumulator, no per-step (tm, 128) scatter/select.
        for s in range(kk):
            mk = jnp.min(keys, axis=-1, keepdims=True)               # (tm, 1)
            nn_ref[0, pl.ds(row0, tm), pl.ds(s, 1)] = mk & jnp.int32(0xFF)
            if s + 1 < kk:
                keys = jnp.where(keys == mk, sent, keys)             # knock out winner

    # Sub-block 0: previous rows come from the dedicated prev-tail fetch.
    process(xprev_ref[0], xsup_ref[0, :tm, :], 0, True)

    # Sub-blocks 1..r_sub-1: previous rows are the preceding sub-block.
    if r_sub > 1:
        @pl.loop(1, r_sub)
        def _(s):
            r0 = pl.multiple_of(s * tm, tm)
            rp = pl.multiple_of((s - 1) * tm, tm)
            process(xsup_ref[0, pl.ds(rp, tm), :],
                    xsup_ref[0, pl.ds(r0, tm), :], r0, False)


def dense_dilated_knn_graph(x, k=9, dilation=1):
    """x: (B, C, N, 1) float. Returns (2, B, N, k) int32 edge indices."""
    B, C, N, _ = x.shape
    kk = k * dilation
    l_b = L_B
    tm = ROW_TILE

    # Static invariants the packed key / causal-window math rely on.
    assert l_b >= kk, "lookback window must cover k*dilation neighbours"
    assert l_b <= tm, "lookback window must fit inside one 128-row tile"
    assert 2 * tm <= 256, "window column must fit the packed key's low 8 bits"

    # glue: (B, C, N, 1) -> (B, N, C); F.normalize(p=2, dim=channel) done once here.
    x_bnc = jnp.transpose(x[..., 0], (0, 2, 1)).astype(jnp.float32)
    norm = jnp.sqrt(jnp.sum(x_bnc * x_bnc, axis=-1, keepdims=True))
    x_bnc = x_bnc / jnp.maximum(norm, 1e-12)
    if C >= 64:
        # bf16 MXU operands when the channel dim is large; precision impact is
        # comparable to the existing 8-bit packed-key truncation.
        x_bnc = x_bnc.astype(jnp.bfloat16)

    # r_sub 128-row sub-blocks per grid step; pad N to a super-block multiple.
    r_sub = min(SUB_BLOCKS, pl.cdiv(N, tm))
    sup = r_sub * tm
    n_pad = pl.cdiv(N, sup) * sup
    if n_pad != N:
        x_bnc = jnp.pad(x_bnc, ((0, 0), (0, n_pad - N), (0, 0)))

    nn_rel = pl.pallas_call(
        functools.partial(_knn_kernel, kk=kk, l_b=l_b, tm=tm, r_sub=r_sub),
        out_shape=jax.ShapeDtypeStruct((B, n_pad, kk), jnp.int32),
        grid_spec=pltpu.PrefetchScalarGridSpec(
            num_scalar_prefetch=0,
            grid=(B, n_pad // sup),
            in_specs=[
                # last 128 rows before this super-block (left half of sub-block 0's
                # window); clamped to tile 0 for i == 0 (masked inside the kernel)
                pl.BlockSpec((1, tm, C),
                             lambda b, i: (b, jnp.maximum(i * r_sub - 1, 0), 0)),
                # the super-block of rows itself
                pl.BlockSpec((1, sup, C), lambda b, i: (b, i, 0)),
            ],
            out_specs=pl.BlockSpec((1, sup, kk), lambda b, i: (b, i, 0)),
        ),
        compiler_params=pltpu.CompilerParams(
            dimension_semantics=("parallel", "parallel")),
    )(x_bnc, x_bnc)

    # relative window column -> absolute point index.
    offs = ((jnp.arange(N, dtype=jnp.int32) // tm) - 1) * tm
    nn_idx = nn_rel[:, :N, :] + offs[None, :, None]

    # reference: nn_idx[:, j, j+1:] = nn_idx[:, j, 0] for j < l_b (only rows with
    # fewer than kk causal candidates, i.e. j < kk - 1, actually change).
    m = min(l_b, N)
    rows_m = jnp.arange(m, dtype=jnp.int32)[None, :, None]
    slots = jnp.arange(kk, dtype=jnp.int32)[None, None, :]
    head = jnp.where(slots > rows_m, nn_idx[:, :m, :1], nn_idx[:, :m, :])
    nn_idx = jnp.concatenate([head, nn_idx[:, m:, :]], axis=1)

    center_idx = jnp.broadcast_to(
        jnp.arange(N, dtype=jnp.int32)[None, :, None], (B, N, kk))
    edge_index = jnp.stack([nn_idx, center_idx], axis=0)             # (2, B, N, kk)

    if dilation == 1:
        # ::1 and the first-l_b-rows overwrite are identities; skip the extra copies.
        return edge_index
    out = edge_index[:, :, :, ::dilation]                            # (2, B, N, k)
    out = out.at[:, :, :m].set(edge_index[:, :, :m, :k])
    return out


def _reference_edge_index(x, k, dilation):
    """Pure-JAX mirror of the PyTorch DenseDilatedKnnGraph forward (dense O(N^2))."""
    B, C, N, _ = x.shape
    kk = k * dilation
    xn = x / jnp.maximum(jnp.sqrt(jnp.sum(x * x, axis=1, keepdims=True)), 1e-12)
    pts = jnp.transpose(xn[..., 0], (0, 2, 1))                       # (B, N, C)
    sq = jnp.sum(pts * pts, axis=-1, keepdims=True)
    dist = sq - 2.0 * jnp.einsum("bnc,bmc->bnm", pts, pts) + jnp.transpose(sq, (0, 2, 1))
    i = jnp.arange(N)[:, None]
    j = jnp.arange(N)[None, :]
    invalid = (j > i) | ((i - j) >= L_B)
    dist = jnp.where(invalid[None], jnp.finfo(dist.dtype).max, dist)
    _, nn_idx = lax.top_k(-dist, kk)                                 # (B, N, kk)
    rows = jnp.arange(N)[None, :, None]
    slots = jnp.arange(kk)[None, None, :]
    nn_idx = jnp.where((rows < L_B) & (slots > rows), nn_idx[:, :, :1], nn_idx)
    center = jnp.broadcast_to(jnp.arange(N)[None, :, None], nn_idx.shape)
    ei = jnp.stack([nn_idx.astype(jnp.int32), center.astype(jnp.int32)], axis=0)
    if dilation == 1:
        return ei
    m = min(L_B, N)
    out = ei[:, :, :, ::dilation]
    out = out.at[:, :, :m].set(ei[:, :, :m, :k])
    return out


if __name__ == "__main__":
    key = jax.random.PRNGKey(0)
    # N > 512 exercises the in-kernel sub-block loop, multi-step grid and padding;
    # N > l_b(=90) exercises both causal masks.
    B, C, N = 2, 4, 640
    x = jax.random.normal(key, (B, C, N, 1), dtype=jnp.float32)

    for k, dilation in ((9, 1), (9, 2)):
        edge_index = dense_dilated_knn_graph(x, k=k, dilation=dilation)
        edge_index = jax.block_until_ready(edge_index)
        assert edge_index.shape == (2, B, N, k), edge_index.shape

        rows = jnp.arange(N, dtype=jnp.int32)[None, :, None]
        nn = edge_index[0]
        # structural sanity: neighbours are causal and inside the lookback window,
        # slot 0 is the point itself, the center list points back to each row.
        assert bool(jnp.all((nn >= 0) & (nn <= rows) & (rows - nn < L_B)))
        assert bool(jnp.all(nn[:, :, 0] == rows[..., 0]))
        assert bool(jnp.all(edge_index[1] == jnp.broadcast_to(rows, (B, N, k))))

        # dense pure-JAX reference; tolerate a tiny fraction of near-tie reorderings
        # (documented 8-bit packed-key truncation vs full-precision topk).
        ref = _reference_edge_index(x, k, dilation)
        match = float(jnp.mean((edge_index == ref).astype(jnp.float32)))
        assert match > 0.99, f"reference match rate too low: {match}"

    print("KERNEL_OK")
</pallas_src>

<mosaic_0001>
module attributes {stable_mosaic.version = 11 : i64} {
  func.func @_knn_kernel(%arg0: i32, %arg1: i32, %arg2: memref<1x128x4xf32, #tpu.memory_space<vmem>>, %arg3: memref<1x512x4xf32, #tpu.memory_space<vmem>>, %arg4: memref<1x512x9xi32, #tpu.memory_space<vmem>>) attributes {dimension_semantics = [#tpu.dimension_semantics<parallel>, #tpu.dimension_semantics<parallel>], iteration_bounds = array<i64: 2, 2>, scalar_prefetch = 0 : i64, scratch_operands = 0 : i64, tpu.core_type = #tpu.core_type<tc>, window_params = [{transform_indices = @transform_0, window_bounds = array<i64: 1, 128, 4>}, {transform_indices = @transform_1, window_bounds = array<i64: 1, 512, 4>}, {transform_indices = @transform_2, window_bounds = array<i64: 1, 512, 9>}]} {
    %c0 = arith.constant 0 : index
    %c0_0 = arith.constant 0 : index
    %c0_1 = arith.constant 0 : index
    %0 = vector.load %arg2[%c0, %c0_0, %c0_1] : memref<1x128x4xf32, #tpu.memory_space<vmem>>, vector<1x128x4xf32>
    %1 = vector.shape_cast %0 : vector<1x128x4xf32> to vector<128x4xf32>
    %c0_2 = arith.constant 0 : index
    %c0_3 = arith.constant 0 : index
    %c0_4 = arith.constant 0 : index
    %2 = vector.load %arg3[%c0_2, %c0_3, %c0_4] : memref<1x512x4xf32, #tpu.memory_space<vmem>>, vector<1x128x4xf32>
    %3 = vector.shape_cast %2 : vector<1x128x4xf32> to vector<128x4xf32>
    %4 = tpu.concatenate %1, %3 in 0 : vector<128x4xf32>, vector<128x4xf32> -> vector<256x4xf32>
    %cst = arith.constant dense<0.000000e+00> : vector<128x256xf32>
    %5 = tpu.matmul %3, %4, %cst {dimension_numbers = #tpu.dot_dimension_numbers<[1], [1], [0], [0], [0, 0, 1, 0], [], []>} : vector<128x4xf32>, vector<256x4xf32>, vector<128x256xf32> -> vector<128x256xf32>
    %cst_5 = arith.constant 2.000000e+00 : f32
    %6 = vector.broadcast %cst_5 : f32 to vector<128x256xf32>
    %7 = arith.mulf %6, %5 : vector<128x256xf32>
    %cst_6 = arith.constant 2.000000e+00 : f32
    %8 = vector.broadcast %cst_6 : f32 to vector<128x256xf32>
    %9 = arith.subf %8, %7 : vector<128x256xf32>
    %cst_7 = arith.constant 0.000000e+00 : f32
    %10 = vector.broadcast %cst_7 : f32 to vector<128x256xf32>
    %11 = arith.maximumf %9, %10 : vector<128x256xf32>
    %12 = tpu.iota {dimensions = array<i32: 1>} : vector<128x256xi32>
    %13 = tpu.iota {dimensions = array<i32: 0>} : vector<128x256xi32>
    %14 = arith.subi %12, %13 : vector<128x256xi32>
    %c128_i32 = arith.constant 128 : i32
    %15 = vector.broadcast %c128_i32 : i32 to vector<128x256xi32>
    %16 = arith.cmpi sle, %14, %15 : vector<128x256xi32>
    %c38_i32 = arith.constant 38 : i32
    %17 = vector.broadcast %c38_i32 : i32 to vector<128x256xi32>
    %18 = arith.cmpi sgt, %14, %17 : vector<128x256xi32>
    %19 = arith.andi %16, %18 : vector<128x256xi1>
    %c128_i32_8 = arith.constant 128 : i32
    %20 = vector.broadcast %c128_i32_8 : i32 to vector<128x256xi32>
    %21 = arith.cmpi sge, %12, %20 : vector<128x256xi32>
    %c0_i32 = arith.constant 0 : i32
    %22 = arith.cmpi sgt, %arg1, %c0_i32 : i32
    %23 = vector.broadcast %22 : i1 to vector<128x256xi1>
    %24 = arith.ori %21, %23 : vector<128x256xi1>
    %25 = arith.andi %19, %24 : vector<128x256xi1>
    %26 = tpu.bitcast %11 : vector<128x256xf32> -> vector<128x256xi32>
    %c-256_i32 = arith.constant -256 : i32
    %27 = vector.broadcast %c-256_i32 : i32 to vector<128x256xi32>
    %28 = arith.andi %26, %27 : vector<128x256xi32>
    %29 = arith.ori %28, %12 : vector<128x256xi32>
    %c2147483647_i32 = arith.constant 2147483647 : i32
    %30 = vector.broadcast %c2147483647_i32 : i32 to vector<128x256xi32>
    %31 = arith.select %25, %29, %30 : vector<128x256xi1>, vector<128x256xi32>
    %cst_9 = arith.constant dense<2147483647> : vector<128xi32>
    %32 = vector.multi_reduction <minsi>, %31, %cst_9 [1] : vector<128x256xi32> to vector<128xi32>
    %33 = vector.shape_cast %32 : vector<128xi32> to vector<128x1xi32>
    %c255_i32 = arith.constant 255 : i32
    %34 = vector.broadcast %c255_i32 : i32 to vector<128x1xi32>
    %35 = arith.andi %33, %34 : vector<128x1xi32>
    %c0_10 = arith.constant 0 : index
    %c0_11 = arith.constant 0 : index
    %c0_12 = arith.constant 0 : index
    %36 = vector.load %arg4[%c0_10, %c0_11, %c0_12] : memref<1x512x9xi32, #tpu.memory_space<vmem>>, vector<1x128x1xi32>
    %37 = vector.shape_cast %36 : vector<1x128x1xi32> to vector<128x1xi32>
    %38 = vector.shape_cast %35 : vector<128x1xi32> to vector<1x128x1xi32>
    tpu.vector_store %arg4[%c0_10, %c0_11, %c0_12], %38 {strides = array<i32>} : memref<1x512x9xi32, #tpu.memory_space<vmem>>, vector<1x128x1xi32>,
    %39 = vector.broadcast %33 : vector<128x1xi32> to vector<128x256xi32>
    %40 = arith.cmpi eq, %31, %39 : vector<128x256xi32>
    %c2147483647_i32_13 = arith.constant 2147483647 : i32
    %41 = vector.broadcast %c2147483647_i32_13 : i32 to vector<128x256xi32>
    %42 = arith.select %40, %41, %31 : vector<128x256xi1>, vector<128x256xi32>
    %cst_14 = arith.constant dense<2147483647> : vector<128xi32>
    %43 = vector.multi_reduction <minsi>, %42, %cst_14 [1] : vector<128x256xi32> to vector<128xi32>
    %44 = vector.shape_cast %43 : vector<128xi32> to vector<128x1xi32>
    %c255_i32_15 = arith.constant 255 : i32
    %45 = vector.broadcast %c255_i32_15 : i32 to vector<128x1xi32>
    %46 = arith.andi %44, %45 : vector<128x1xi32>
    %c0_16 = arith.constant 0 : index
    %c0_17 = arith.constant 0 : index
    %c1 = arith.constant 1 : index
    %47 = vector.load %arg4[%c0_16, %c0_17, %c1] : memref<1x512x9xi32, #tpu.memory_space<vmem>>, vector<1x128x1xi32>
    %48 = vector.shape_cast %47 : vector<1x128x1xi32> to vector<128x1xi32>
    %49 = vector.shape_cast %46 : vector<128x1xi32> to vector<1x128x1xi32>
    tpu.vector_store %arg4[%c0_16, %c0_17, %c1], %49 {strides = array<i32>} : memref<1x512x9xi32, #tpu.memory_space<vmem>>, vector<1x128x1xi32>,
    %50 = vector.broadcast %44 : vector<128x1xi32> to vector<128x256xi32>
    %51 = arith.cmpi eq, %42, %50 : vector<128x256xi32>
    %c2147483647_i32_18 = arith.constant 2147483647 : i32
    %52 = vector.broadcast %c2147483647_i32_18 : i32 to vector<128x256xi32>
    %53 = arith.select %51, %52, %42 : vector<128x256xi1>, vector<128x256xi32>
    %cst_19 = arith.constant dense<2147483647> : vector<128xi32>
    %54 = vector.multi_reduction <minsi>, %53, %cst_19 [1] : vector<128x256xi32> to vector<128xi32>
    %55 = vector.shape_cast %54 : vector<128xi32> to vector<128x1xi32>
    %c255_i32_20 = arith.constant 255 : i32
    %56 = vector.broadcast %c255_i32_20 : i32 to vector<128x1xi32>
    %57 = arith.andi %55, %56 : vector<128x1xi32>
    %c0_21 = arith.constant 0 : index
    %c0_22 = arith.constant 0 : index
    %c2 = arith.constant 2 : index
    %58 = vector.load %arg4[%c0_21, %c0_22, %c2] : memref<1x512x9xi32, #tpu.memory_space<vmem>>, vector<1x128x1xi32>
    %59 = vector.shape_cast %58 : vector<1x128x1xi32> to vector<128x1xi32>
    %60 = vector.shape_cast %57 : vector<128x1xi32> to vector<1x128x1xi32>
    tpu.vector_store %arg4[%c0_21, %c0_22, %c2], %60 {strides = array<i32>} : memref<1x512x9xi32, #tpu.memory_space<vmem>>, vector<1x128x1xi32>,
    %61 = vector.broadcast %55 : vector<128x1xi32> to vector<128x256xi32>
    %62 = arith.cmpi eq, %53, %61 : vector<128x256xi32>
    %c2147483647_i32_23 = arith.constant 2147483647 : i32
    %63 = vector.broadcast %c2147483647_i32_23 : i32 to vector<128x256xi32>
    %64 = arith.select %62, %63, %53 : vector<128x256xi1>, vector<128x256xi32>
    %cst_24 = arith.constant dense<2147483647> : vector<128xi32>
    %65 = vector.multi_reduction <minsi>, %64, %cst_24 [1] : vector<128x256xi32> to vector<128xi32>
    %66 = vector.shape_cast %65 : vector<128xi32> to vector<128x1xi32>
    %c255_i32_25 = arith.constant 255 : i32
    %67 = vector.broadcast %c255_i32_25 : i32 to vector<128x1xi32>
    %68 = arith.andi %66, %67 : vector<128x1xi32>
    %c0_26 = arith.constant 0 : index
    %c0_27 = arith.constant 0 : index
    %c3 = arith.constant 3 : index
    %69 = vector.load %arg4[%c0_26, %c0_27, %c3] : memref<1x512x9xi32, #tpu.memory_space<vmem>>, vector<1x128x1xi32>
    %70 = vector.shape_cast %69 : vector<1x128x1xi32> to vector<128x1xi32>
    %71 = vector.shape_cast %68 : vector<128x1xi32> to vector<1x128x1xi32>
    tpu.vector_store %arg4[%c0_26, %c0_27, %c3], %71 {strides = array<i32>} : memref<1x512x9xi32, #tpu.memory_space<vmem>>, vector<1x128x1xi32>,
    %72 = vector.broadcast %66 : vector<128x1xi32> to vector<128x256xi32>
    %73 = arith.cmpi eq, %64, %72 : vector<128x256xi32>
    %c2147483647_i32_28 = arith.constant 2147483647 : i32
    %74 = vector.broadcast %c2147483647_i32_28 : i32 to vector<128x256xi32>
    %75 = arith.select %73, %74, %64 : vector<128x256xi1>, vector<128x256xi32>
    %cst_29 = arith.constant dense<2147483647> : vector<128xi32>
    %76 = vector.multi_reduction <minsi>, %75, %cst_29 [1] : vector<128x256xi32> to vector<128xi32>
    %77 = vector.shape_cast %76 : vector<128xi32> to vector<128x1xi32>
    %c255_i32_30 = arith.constant 255 : i32
    %78 = vector.broadcast %c255_i32_30 : i32 to vector<128x1xi32>
    %79 = arith.andi %77, %78 : vector<128x1xi32>
    %c0_31 = arith.constant 0 : index
    %c0_32 = arith.constant 0 : index
    %c4 = arith.constant 4 : index
    %80 = vector.load %arg4[%c0_31, %c0_32, %c4] : memref<1x512x9xi32, #tpu.memory_space<vmem>>, vector<1x128x1xi32>
    %81 = vector.shape_cast %80 : vector<1x128x1xi32> to vector<128x1xi32>
    %82 = vector.shape_cast %79 : vector<128x1xi32> to vector<1x128x1xi32>
    tpu.vector_store %arg4[%c0_31, %c0_32, %c4], %82 {strides = array<i32>} : memref<1x512x9xi32, #tpu.memory_space<vmem>>, vector<1x128x1xi32>,
    %83 = vector.broadcast %77 : vector<128x1xi32> to vector<128x256xi32>
    %84 = arith.cmpi eq, %75, %83 : vector<128x256xi32>
    %c2147483647_i32_33 = arith.constant 2147483647 : i32
    %85 = vector.broadcast %c2147483647_i32_33 : i32 to vector<128x256xi32>
    %86 = arith.select %84, %85, %75 : vector<128x256xi1>, vector<128x256xi32>
    %cst_34 = arith.constant dense<2147483647> : vector<128xi32>
    %87 = vector.multi_reduction <minsi>, %86, %cst_34 [1] : vector<128x256xi32> to vector<128xi32>
    %88 = vector.shape_cast %87 : vector<128xi32> to vector<128x1xi32>
    %c255_i32_35 = arith.constant 255 : i32
    %89 = vector.broadcast %c255_i32_35 : i32 to vector<128x1xi32>
    %90 = arith.andi %88, %89 : vector<128x1xi32>
    %c0_36 = arith.constant 0 : index
    %c0_37 = arith.constant 0 : index
    %c5 = arith.constant 5 : index
    %91 = vector.load %arg4[%c0_36, %c0_37, %c5] : memref<1x512x9xi32, #tpu.memory_space<vmem>>, vector<1x128x1xi32>
    %92 = vector.shape_cast %91 : vector<1x128x1xi32> to vector<128x1xi32>
    %93 = vector.shape_cast %90 : vector<128x1xi32> to vector<1x128x1xi32>
    tpu.vector_store %arg4[%c0_36, %c0_37, %c5], %93 {strides = array<i32>} : memref<1x512x9xi32, #tpu.memory_space<vmem>>, vector<1x128x1xi32>,
    %94 = vector.broadcast %88 : vector<128x1xi32> to vector<128x256xi32>
    %95 = arith.cmpi eq, %86, %94 : vector<128x256xi32>
    %c2147483647_i32_38 = arith.constant 2147483647 : i32
    %96 = vector.broadcast %c2147483647_i32_38 : i32 to vector<128x256xi32>
    %97 = arith.select %95, %96, %86 : vector<128x256xi1>, vector<128x256xi32>
    %cst_39 = arith.constant dense<2147483647> : vector<128xi32>
    %98 = vector.multi_reduction <minsi>, %97, %cst_39 [1] : vector<128x256xi32> to vector<128xi32>
    %99 = vector.shape_cast %98 : vector<128xi32> to vector<128x1xi32>
    %c255_i32_40 = arith.constant 255 : i32
    %100 = vector.broadcast %c255_i32_40 : i32 to vector<128x1xi32>
    %101 = arith.andi %99, %100 : vector<128x1xi32>
    %c0_41 = arith.constant 0 : index
    %c0_42 = arith.constant 0 : index
    %c6 = arith.constant 6 : index
    %102 = vector.load %arg4[%c0_41, %c0_42, %c6] : memref<1x512x9xi32, #tpu.memory_space<vmem>>, vector<1x128x1xi32>
    %103 = vector.shape_cast %102 : vector<1x128x1xi32> to vector<128x1xi32>
    %104 = vector.shape_cast %101 : vector<128x1xi32> to vector<1x128x1xi32>
    tpu.vector_store %arg4[%c0_41, %c0_42, %c6], %104 {strides = array<i32>} : memref<1x512x9xi32, #tpu.memory_space<vmem>>, vector<1x128x1xi32>,
    %105 = vector.broadcast %99 : vector<128x1xi32> to vector<128x256xi32>
    %106 = arith.cmpi eq, %97, %105 : vector<128x256xi32>
    %c2147483647_i32_43 = arith.constant 2147483647 : i32
    %107 = vector.broadcast %c2147483647_i32_43 : i32 to vector<128x256xi32>
    %108 = arith.select %106, %107, %97 : vector<128x256xi1>, vector<128x256xi32>
    %cst_44 = arith.constant dense<2147483647> : vector<128xi32>
    %109 = vector.multi_reduction <minsi>, %108, %cst_44 [1] : vector<128x256xi32> to vector<128xi32>
    %110 = vector.shape_cast %109 : vector<128xi32> to vector<128x1xi32>
    %c255_i32_45 = arith.constant 255 : i32
    %111 = vector.broadcast %c255_i32_45 : i32 to vector<128x1xi32>
    %112 = arith.andi %110, %111 : vector<128x1xi32>
    %c0_46 = arith.constant 0 : index
    %c0_47 = arith.constant 0 : index
    %c7 = arith.constant 7 : index
    %113 = vector.load %arg4[%c0_46, %c0_47, %c7] : memref<1x512x9xi32, #tpu.memory_space<vmem>>, vector<1x128x1xi32>
    %114 = vector.shape_cast %113 : vector<1x128x1xi32> to vector<128x1xi32>
    %115 = vector.shape_cast %112 : vector<128x1xi32> to vector<1x128x1xi32>
    tpu.vector_store %arg4[%c0_46, %c0_47, %c7], %115 {strides = array<i32>} : memref<1x512x9xi32, #tpu.memory_space<vmem>>, vector<1x128x1xi32>,
    %116 = vector.broadcast %110 : vector<128x1xi32> to vector<128x256xi32>
    %117 = arith.cmpi eq, %108, %116 : vector<128x256xi32>
    %c2147483647_i32_48 = arith.constant 2147483647 : i32
    %118 = vector.broadcast %c2147483647_i32_48 : i32 to vector<128x256xi32>
    %119 = arith.select %117, %118, %108 : vector<128x256xi1>, vector<128x256xi32>
    %cst_49 = arith.constant dense<2147483647> : vector<128xi32>
    %120 = vector.multi_reduction <minsi>, %119, %cst_49 [1] : vector<128x256xi32> to vector<128xi32>
    %121 = vector.shape_cast %120 : vector<128xi32> to vector<128x1xi32>
    %c255_i32_50 = arith.constant 255 : i32
    %122 = vector.broadcast %c255_i32_50 : i32 to vector<128x1xi32>
    %123 = arith.andi %121, %122 : vector<128x1xi32>
    %c0_51 = arith.constant 0 : index
    %c0_52 = arith.constant 0 : index
    %c8 = arith.constant 8 : index
    %124 = vector.load %arg4[%c0_51, %c0_52, %c8] : memref<1x512x9xi32, #tpu.memory_space<vmem>>, vector<1x128x1xi32>
    %125 = vector.shape_cast %124 : vector<1x128x1xi32> to vector<128x1xi32>
    %126 = vector.shape_cast %123 : vector<128x1xi32> to vector<1x128x1xi32>
    tpu.vector_store %arg4[%c0_51, %c0_52, %c8], %126 {strides = array<i32>} : memref<1x512x9xi32, #tpu.memory_space<vmem>>, vector<1x128x1xi32>,
    %c2147483647_i32_53 = arith.constant 2147483647 : i32
    %c0_i32_54 = arith.constant 0 : i32
    %c3_i32 = arith.constant 3 : i32
    %127 = arith.addi %c0_i32_54, %c3_i32 : i32
    %c1_i32 = arith.constant 1 : i32
    scf.for %arg5 = %c0_i32_54 to %127 step %c1_i32  : i32 {
      %c1_i32_56 = arith.constant 1 : i32
      %128 = arith.muli %arg5, %c1_i32_56 : i32
      %c1_i32_57 = arith.constant 1 : i32
      %129 = arith.addi %c1_i32_57, %128 : i32
      %c128_i32_58 = arith.constant 128 : i32
      %130 = arith.muli %129, %c128_i32_58 : i32
      %131 = tpu.assume_multiple %130, 128 : i32
      %c1_i32_59 = arith.constant 1 : i32
      %132 = arith.subi %129, %c1_i32_59 : i32
      %c128_i32_60 = arith.constant 128 : i32
      %133 = arith.muli %132, %c128_i32_60 : i32
      %134 = tpu.assume_multiple %133, 128 : i32
      %c0_61 = arith.constant 0 : index
      %135 = arith.index_cast %134 : i32 to index
      %c0_62 = arith.constant 0 : index
      %136 = vector.load %arg3[%c0_61, %135, %c0_62] : memref<1x512x4xf32, #tpu.memory_space<vmem>>, vector<1x128x4xf32>
      %137 = vector.shape_cast %136 : vector<1x128x4xf32> to vector<128x4xf32>
      %c0_63 = arith.constant 0 : index
      %138 = arith.index_cast %131 : i32 to index
      %c0_64 = arith.constant 0 : index
      %139 = vector.load %arg3[%c0_63, %138, %c0_64] : memref<1x512x4xf32, #tpu.memory_space<vmem>>, vector<1x128x4xf32>
      %140 = vector.shape_cast %139 : vector<1x128x4xf32> to vector<128x4xf32>
      %141 = tpu.concatenate %137, %140 in 0 : vector<128x4xf32>, vector<128x4xf32> -> vector<256x4xf32>
      %cst_65 = arith.constant dense<0.000000e+00> : vector<128x256xf32>
      %142 = tpu.matmul %140, %141, %cst_65 {dimension_numbers = #tpu.dot_dimension_numbers<[1], [1], [0], [0], [0, 0, 1, 0], [], []>} : vector<128x4xf32>, vector<256x4xf32>, vector<128x256xf32> -> vector<128x256xf32>
      %cst_66 = arith.constant 2.000000e+00 : f32
      %143 = vector.broadcast %cst_66 : f32 to vector<128x256xf32>
      %144 = arith.mulf %143, %142 : vector<128x256xf32>
      %cst_67 = arith.constant 2.000000e+00 : f32
      %145 = vector.broadcast %cst_67 : f32 to vector<128x256xf32>
      %146 = arith.subf %145, %144 : vector<128x256xf32>
      %cst_68 = arith.constant 0.000000e+00 : f32
      %147 = vector.broadcast %cst_68 : f32 to vector<128x256xf32>
      %148 = arith.maximumf %146, %147 : vector<128x256xf32>
      %149 = tpu.iota {dimensions = array<i32: 1>} : vector<128x256xi32>
      %150 = tpu.iota {dimensions = array<i32: 0>} : vector<128x256xi32>
      %151 = arith.subi %149, %150 : vector<128x256xi32>
      %c128_i32_69 = arith.constant 128 : i32
      %152 = vector.broadcast %c128_i32_69 : i32 to vector<128x256xi32>
      %153 = arith.cmpi sle, %151, %152 : vector<128x256xi32>
      %c38_i32_70 = arith.constant 38 : i32
      %154 = vector.broadcast %c38_i32_70 : i32 to vector<128x256xi32>
      %155 = arith.cmpi sgt, %151, %154 : vector<128x256xi32>
      %156 = arith.andi %153, %155 : vector<128x256xi1>
      %157 = tpu.bitcast %148 : vector<128x256xf32> -> vector<128x256xi32>
      %c-256_i32_71 = arith.constant -256 : i32
      %158 = vector.broadcast %c-256_i32_71 : i32 to vector<128x256xi32>
      %159 = arith.andi %157, %158 : vector<128x256xi32>
      %160 = arith.ori %159, %149 : vector<128x256xi32>
      %161 = vector.broadcast %c2147483647_i32_53 : i32 to vector<128x256xi32>
      %162 = arith.select %156, %160, %161 : vector<128x256xi1>, vector<128x256xi32>
      %cst_72 = arith.constant dense<2147483647> : vector<128xi32>
      %163 = vector.multi_reduction <minsi>, %162, %cst_72 [1] : vector<128x256xi32> to vector<128xi32>
      %164 = vector.shape_cast %163 : vector<128xi32> to vector<128x1xi32>
      %c255_i32_73 = arith.constant 255 : i32
      %165 = vector.broadcast %c255_i32_73 : i32 to vector<128x1xi32>
      %166 = arith.andi %164, %165 : vector<128x1xi32>
      %c0_74 = arith.constant 0 : index
      %167 = arith.index_cast %131 : i32 to index
      %c0_75 = arith.constant 0 : index
      %168 = vector.load %arg4[%c0_74, %167, %c0_75] : memref<1x512x9xi32, #tpu.memory_space<vmem>>, vector<1x128x1xi32>
      %169 = vector.shape_cast %168 : vector<1x128x1xi32> to vector<128x1xi32>
      %170 = vector.shape_cast %166 : vector<128x1xi32> to vector<1x128x1xi32>
      tpu.vector_store %arg4[%c0_74, %167, %c0_75], %170 {strides = array<i32>} : memref<1x512x9xi32, #tpu.memory_space<vmem>>, vector<1x128x1xi32>,
      %171 = vector.broadcast %164 : vector<128x1xi32> to vector<128x256xi32>
      %172 = arith.cmpi eq, %162, %171 : vector<128x256xi32>
      %173 = vector.broadcast %c2147483647_i32_53 : i32 to vector<128x256xi32>
      %174 = arith.select %172, %173, %162 : vector<128x256xi1>, vector<128x256xi32>
      %cst_76 = arith.constant dense<2147483647> : vector<128xi32>
      %175 = vector.multi_reduction <minsi>, %174, %cst_76 [1] : vector<128x256xi32> to vector<128xi32>
      %176 = vector.shape_cast %175 : vector<128xi32> to vector<128x1xi32>
      %c255_i32_77 = arith.constant 255 : i32
      %177 = vector.broadcast %c255_i32_77 : i32 to vector<128x1xi32>
      %178 = arith.andi %176, %177 : vector<128x1xi32>
      %c0_78 = arith.constant 0 : index
      %179 = arith.index_cast %131 : i32 to index
      %c1_79 = arith.constant 1 : index
      %180 = vector.load %arg4[%c0_78, %179, %c1_79] : memref<1x512x9xi32, #tpu.memory_space<vmem>>, vector<1x128x1xi32>
      %181 = vector.shape_cast %180 : vector<1x128x1xi32> to vector<128x1xi32>
      %182 = vector.shape_cast %178 : vector<128x1xi32> to vector<1x128x1xi32>
      tpu.vector_store %arg4[%c0_78, %179, %c1_79], %182 {strides = array<i32>} : memref<1x512x9xi32, #tpu.memory_space<vmem>>, vector<1x128x1xi32>,
      %183 = vector.broadcast %176 : vector<128x1xi32> to vector<128x256xi32>
      %184 = arith.cmpi eq, %174, %183 : vector<128x256xi32>
      %185 = vector.broadcast %c2147483647_i32_53 : i32 to vector<128x256xi32>
      %186 = arith.select %184, %185, %174 : vector<128x256xi1>, vector<128x256xi32>
      %cst_80 = arith.constant dense<2147483647> : vector<128xi32>
      %187 = vector.multi_reduction <minsi>, %186, %cst_80 [1] : vector<128x256xi32> to vector<128xi32>
      %188 = vector.shape_cast %187 : vector<128xi32> to vector<128x1xi32>
      %c255_i32_81 = arith.constant 255 : i32
      %189 = vector.broadcast %c255_i32_81 : i32 to vector<128x1xi32>
      %190 = arith.andi %188, %189 : vector<128x1xi32>
      %c0_82 = arith.constant 0 : index
      %191 = arith.index_cast %131 : i32 to index
      %c2_83 = arith.constant 2 : index
      %192 = vector.load %arg4[%c0_82, %191, %c2_83] : memref<1x512x9xi32, #tpu.memory_space<vmem>>, vector<1x128x1xi32>
      %193 = vector.shape_cast %192 : vector<1x128x1xi32> to vector<128x1xi32>
      %194 = vector.shape_cast %190 : vector<128x1xi32> to vector<1x128x1xi32>
      tpu.vector_store %arg4[%c0_82, %191, %c2_83], %194 {strides = array<i32>} : memref<1x512x9xi32, #tpu.memory_space<vmem>>, vector<1x128x1xi32>,
      %195 = vector.broadcast %188 : vector<128x1xi32> to vector<128x256xi32>
      %196 = arith.cmpi eq, %186, %195 : vector<128x256xi32>
      %197 = vector.broadcast %c2147483647_i32_53 : i32 to vector<128x256xi32>
      %198 = arith.select %196, %197, %186 : vector<128x256xi1>, vector<128x256xi32>
      %cst_84 = arith.constant dense<2147483647> : vector<128xi32>
      %199 = vector.multi_reduction <minsi>, %198, %cst_84 [1] : vector<128x256xi32> to vector<128xi32>
      %200 = vector.shape_cast %199 : vector<128xi32> to vector<128x1xi32>
      %c255_i32_85 = arith.constant 255 : i32
      %201 = vector.broadcast %c255_i32_85 : i32 to vector<128x1xi32>
      %202 = arith.andi %200, %201 : vector<128x1xi32>
      %c0_86 = arith.constant 0 : index
      %203 = arith.index_cast %131 : i32 to index
      %c3_87 = arith.constant 3 : index
      %204 = vector.load %arg4[%c0_86, %203, %c3_87] : memref<1x512x9xi32, #tpu.memory_space<vmem>>, vector<1x128x1xi32>
      %205 = vector.shape_cast %204 : vector<1x128x1xi32> to vector<128x1xi32>
      %206 = vector.shape_cast %202 : vector<128x1xi32> to vector<1x128x1xi32>
      tpu.vector_store %arg4[%c0_86, %203, %c3_87], %206 {strides = array<i32>} : memref<1x512x9xi32, #tpu.memory_space<vmem>>, vector<1x128x1xi32>,
      %207 = vector.broadcast %200 : vector<128x1xi32> to vector<128x256xi32>
      %208 = arith.cmpi eq, %198, %207 : vector<128x256xi32>
      %209 = vector.broadcast %c2147483647_i32_53 : i32 to vector<128x256xi32>
      %210 = arith.select %208, %209, %198 : vector<128x256xi1>, vector<128x256xi32>
      %cst_88 = arith.constant dense<2147483647> : vector<128xi32>
      %211 = vector.multi_reduction <minsi>, %210, %cst_88 [1] : vector<128x256xi32> to vector<128xi32>
      %212 = vector.shape_cast %211 : vector<128xi32> to vector<128x1xi32>
      %c255_i32_89 = arith.constant 255 : i32
      %213 = vector.broadcast %c255_i32_89 : i32 to vector<128x1xi32>
      %214 = arith.andi %212, %213 : vector<128x1xi32>
      %c0_90 = arith.constant 0 : index
      %215 = arith.index_cast %131 : i32 to index
      %c4_91 = arith.constant 4 : index
      %216 = vector.load %arg4[%c0_90, %215, %c4_91] : memref<1x512x9xi32, #tpu.memory_space<vmem>>, vector<1x128x1xi32>
      %217 = vector.shape_cast %216 : vector<1x128x1xi32> to vector<128x1xi32>
      %218 = vector.shape_cast %214 : vector<128x1xi32> to vector<1x128x1xi32>
      tpu.vector_store %arg4[%c0_90, %215, %c4_91], %218 {strides = array<i32>} : memref<1x512x9xi32, #tpu.memory_space<vmem>>, vector<1x128x1xi32>,
      %219 = vector.broadcast %212 : vector<128x1xi32> to vector<128x256xi32>
      %220 = arith.cmpi eq, %210, %219 : vector<128x256xi32>
      %221 = vector.broadcast %c2147483647_i32_53 : i32 to vector<128x256xi32>
      %222 = arith.select %220, %221, %210 : vector<128x256xi1>, vector<128x256xi32>
      %cst_92 = arith.constant dense<2147483647> : vector<128xi32>
      %223 = vector.multi_reduction <minsi>, %222, %cst_92 [1] : vector<128x256xi32> to vector<128xi32>
      %224 = vector.shape_cast %223 : vector<128xi32> to vector<128x1xi32>
      %c255_i32_93 = arith.constant 255 : i32
      %225 = vector.broadcast %c255_i32_93 : i32 to vector<128x1xi32>
      %226 = arith.andi %224, %225 : vector<128x1xi32>
      %c0_94 = arith.constant 0 : index
      %227 = arith.index_cast %131 : i32 to index
      %c5_95 = arith.constant 5 : index
      %228 = vector.load %arg4[%c0_94, %227, %c5_95] : memref<1x512x9xi32, #tpu.memory_space<vmem>>, vector<1x128x1xi32>
      %229 = vector.shape_cast %228 : vector<1x128x1xi32> to vector<128x1xi32>
      %230 = vector.shape_cast %226 : vector<128x1xi32> to vector<1x128x1xi32>
      tpu.vector_store %arg4[%c0_94, %227, %c5_95], %230 {strides = array<i32>} : memref<1x512x9xi32, #tpu.memory_space<vmem>>, vector<1x128x1xi32>,
      %231 = vector.broadcast %224 : vector<128x1xi32> to vector<128x256xi32>
      %232 = arith.cmpi eq, %222, %231 : vector<128x256xi32>
      %233 = vector.broadcast %c2147483647_i32_53 : i32 to vector<128x256xi32>
      %234 = arith.select %232, %233, %222 : vector<128x256xi1>, vector<128x256xi32>
      %cst_96 = arith.constant dense<2147483647> : vector<128xi32>
      %235 = vector.multi_reduction <minsi>, %234, %cst_96 [1] : vector<128x256xi32> to vector<128xi32>
      %236 = vector.shape_cast %235 : vector<128xi32> to vector<128x1xi32>
      %c255_i32_97 = arith.constant 255 : i32
      %237 = vector.broadcast %c255_i32_97 : i32 to vector<128x1xi32>
      %238 = arith.andi %236, %237 : vector<128x1xi32>
      %c0_98 = arith.constant 0 : index
      %239 = arith.index_cast %131 : i32 to index
      %c6_99 = arith.constant 6 : index
      %240 = vector.load %arg4[%c0_98, %239, %c6_99] : memref<1x512x9xi32, #tpu.memory_space<vmem>>, vector<1x128x1xi32>
      %241 = vector.shape_cast %240 : vector<1x128x1xi32> to vector<128x1xi32>
      %242 = vector.shape_cast %238 : vector<128x1xi32> to vector<1x128x1xi32>
      tpu.vector_store %arg4[%c0_98, %239, %c6_99], %242 {strides = array<i32>} : memref<1x512x9xi32, #tpu.memory_space<vmem>>, vector<1x128x1xi32>,
      %243 = vector.broadcast %236 : vector<128x1xi32> to vector<128x256xi32>
      %244 = arith.cmpi eq, %234, %243 : vector<128x256xi32>
      %245 = vector.broadcast %c2147483647_i32_53 : i32 to vector<128x256xi32>
      %246 = arith.select %244, %245, %234 : vector<128x256xi1>, vector<128x256xi32>
      %cst_100 = arith.constant dense<2147483647> : vector<128xi32>
      %247 = vector.multi_reduction <minsi>, %246, %cst_100 [1] : vector<128x256xi32> to vector<128xi32>
      %248 = vector.shape_cast %247 : vector<128xi32> to vector<128x1xi32>
      %c255_i32_101 = arith.constant 255 : i32
      %249 = vector.broadcast %c255_i32_101 : i32 to vector<128x1xi32>
      %250 = arith.andi %248, %249 : vector<128x1xi32>
      %c0_102 = arith.constant 0 : index
      %251 = arith.index_cast %131 : i32 to index
      %c7_103 = arith.constant 7 : index
      %252 = vector.load %arg4[%c0_102, %251, %c7_103] : memref<1x512x9xi32, #tpu.memory_space<vmem>>, vector<1x128x1xi32>
      %253 = vector.shape_cast %252 : vector<1x128x1xi32> to vector<128x1xi32>
      %254 = vector.shape_cast %250 : vector<128x1xi32> to vector<1x128x1xi32>
      tpu.vector_store %arg4[%c0_102, %251, %c7_103], %254 {strides = array<i32>} : memref<1x512x9xi32, #tpu.memory_space<vmem>>, vector<1x128x1xi32>,
      %255 = vector.broadcast %248 : vector<128x1xi32> to vector<128x256xi32>
      %256 = arith.cmpi eq, %246, %255 : vector<128x256xi32>
      %257 = vector.broadcast %c2147483647_i32_53 : i32 to vector<128x256xi32>
      %258 = arith.select %256, %257, %246 : vector<128x256xi1>, vector<128x256xi32>
      %cst_104 = arith.constant dense<2147483647> : vector<128xi32>
      %259 = vector.multi_reduction <minsi>, %258, %cst_104 [1] : vector<128x256xi32> to vector<128xi32>
      %260 = vector.shape_cast %259 : vector<128xi32> to vector<128x1xi32>
      %c255_i32_105 = arith.constant 255 : i32
      %261 = vector.broadcast %c255_i32_105 : i32 to vector<128x1xi32>
      %262 = arith.andi %260, %261 : vector<128x1xi32>
      %c0_106 = arith.constant 0 : index
      %263 = arith.index_cast %131 : i32 to index
      %c8_107 = arith.constant 8 : index
      %264 = vector.load %arg4[%c0_106, %263, %c8_107] : memref<1x512x9xi32, #tpu.memory_space<vmem>>, vector<1x128x1xi32>
      %265 = vector.shape_cast %264 : vector<1x128x1xi32> to vector<128x1xi32>
      %266 = vector.shape_cast %262 : vector<128x1xi32> to vector<1x128x1xi32>
      tpu.vector_store %arg4[%c0_106, %263, %c8_107], %266 {strides = array<i32>} : memref<1x512x9xi32, #tpu.memory_space<vmem>>, vector<1x128x1xi32>,
    }
    %c3_i32_55 = arith.constant 3 : i32
    return
  }
  func.func @transform_0(%arg0: i32, %arg1: i32) -> (i32, i32, i32) {
    %c4_i32 = arith.constant 4 : i32
    %0 = arith.muli %arg1, %c4_i32 : i32
    %c1_i32 = arith.constant 1 : i32
    %1 = arith.subi %0, %c1_i32 : i32
    %c0_i32 = arith.constant 0 : i32
    %2 = arith.maxsi %1, %c0_i32 : i32
    %c0_i32_0 = arith.constant 0 : i32
    %c0_i32_1 = arith.constant 0 : i32
    return %arg0, %2, %c0_i32_0 : i32, i32, i32
  }
  func.func @transform_1(%arg0: i32, %arg1: i32) -> (i32, i32, i32) {
    %c0_i32 = arith.constant 0 : i32
    %c0_i32_0 = arith.constant 0 : i32
    return %arg0, %arg1, %c0_i32 : i32, i32, i32
  }
  func.func @transform_2(%arg0: i32, %arg1: i32) -> (i32, i32, i32) {
    %c0_i32 = arith.constant 0 : i32
    %c0_i32_0 = arith.constant 0 : i32
    return %arg0, %arg1, %c0_i32 : i32, i32, i32
  }
}

</mosaic_0001>

<llo_original>
// kernel: tpu_custom_call.1
$region0: #{tpu_custom_call.1}
  #allocation0 [shape = 'u32[]', space=smem, size = 0x4, offset = 0x4, fixed_abs, tag = 'smem constant byte address 0x4 - core index']
  #allocation1 [shape = 'u32[72,128]{1,0:T(1,128)}', space=vmem, size = 0x9000, scoped, tag = 'internal scratch']
  %s0 = inlined_call_operand.vmem [shape: f32[2,1024,4], index: 0, kind: input, shape index: {}]
  %s1 = inlined_call_operand.vmem [shape: f32[2,1024,4], index: 1, kind: input, shape index: {}]
  %s2 = inlined_call_operand.vmem [shape: s32[2,1024,9], index: 2, kind: output, shape index: {}]
  %s3 = sld [smem:[#allocation0]]
  $region48: #{tpu_custom_call.1} parent=0
    _
  %s5 = ssub.s32 1, %s3
  %s6 = scalar_select 0, %s5, %s3
  loop: start=0, step=1, limit=6
  $region2: #{tpu_custom_call.1} parent=0 // loop_pre_header
    _
  $region3: #{tpu_custom_call.1} parent=0 // loop_header
    %s8 = sphi 0, %s12
    %p9 = scmp.ge.s32.totalorder %s8, 6
    %s15 = sphi 0, %s27
    %s16 = sphi 0, %s23
    %s17 = sphi 0, %s15
    %s18 = sphi 0, %s16
    %s19 = sphi 0, %s17
    %s20 = sphi 0, %s18
    %s40 = sphi 0, %s42
    %s43 = sphi 0, %s40
    %s44 = sphi 0, %s43
    %s60 = sphi 0, %s44
    %s68 = sphi 0, %s70
    %s71 = sphi 0, %s68
    %s72 = sphi 0, %s71
    %s88 = sphi 0, %s72
    %s96 = sphi 0, %s98
    %s99 = sphi 0, %s96
    %s100 = sphi 0, %s99
    %s116 = sphi 0, %s100
  $region4: #{tpu_custom_call.1} parent=0 // loop_header_branch
    %11 = sbr.rel (%p9) target = $region8
  $region5: #{tpu_custom_call.1} parent=0 // loop_body
    %s13 = ssub.s32 %s8, 1
    %s14 = ssub.s32 %s8, 2
    %s21 = sadd.s32 1, %s16
    %p22 = scmp.ge.s32.totalorder %s21, 2
    %s23 = scalar_select %p22, 0, %s21
    %s24 = sadd.s32 1, %s15
    %s25 = scalar_select %p22, %s24, %s15
    %p26 = scmp.ge.s32.totalorder %s25, 2
    %s27 = scalar_select %p26, 0, %s25
    %s28 = smul.u32 %s16, 4
    %s29 = ssub.s32 %s28, 1
    %p30 = scmp.gt.s32.totalorder %s29, 0
    %s31 = scalar_select %p30, %s29, 0
    %s32 = smul.u32 %s23, 4
    %s33 = ssub.s32 %s32, 1
    %p34 = scmp.gt.s32.totalorder %s33, 0
    %s35 = scalar_select %p34, %s33, 0
    %s36 = ssub.s32 %s15, %s27
    %s37 = ssub.s32 %s31, %s35
    %s38 = sor.u32 %s36, %s37
    %p39 = scmp.eq.s32.totalorder %s38, 0
    %s41 = sadd.s32 %s40, 1
    %s42 = scalar_select %p39, %s40, %s41
    %p45 = pneg %p39
    %p46 = scmp.eq.s32.totalorder %s8, 3
    %p47 = por %p45, %p46
    %p48 = scmp.ne.s32.totalorder %s40, %s43
    %p49 = scmp.eq.s32.totalorder %s8, 0
    %p50 = por %p48, %p49
    %p51 = scmp.ne.s32.totalorder %s40, %s43
    %p52 = scmp.eq.s32.totalorder %s13, 3
    %p53 = por %p51, %p52
    %p54 = scmp.ne.s32.totalorder %s43, %s44
    %p55 = scmp.eq.s32.totalorder %s13, 0
    %p56 = por %p54, %p55
    %p57 = scmp.ne.s32.totalorder %s43, %s44
    %p58 = scmp.eq.s32.totalorder %s14, 3
    %p59 = por %p57, %p58
    %p61 = scmp.ne.s32.totalorder %s44, %s60
    %p62 = scmp.eq.s32.totalorder %s14, 0
    %p63 = por %p61, %p62
    %s64 = ssub.s32 %s15, %s27
    %s65 = ssub.s32 %s16, %s23
    %s66 = sor.u32 %s64, %s65
    %p67 = scmp.eq.s32.totalorder %s66, 0
    %s69 = sadd.s32 %s68, 1
    %s70 = scalar_select %p67, %s68, %s69
    %p73 = pneg %p67
    %p74 = scmp.eq.s32.totalorder %s8, 3
    %p75 = por %p73, %p74
    %p76 = scmp.ne.s32.totalorder %s68, %s71
    %p77 = scmp.eq.s32.totalorder %s8, 0
    %p78 = por %p76, %p77
    %p79 = scmp.ne.s32.totalorder %s68, %s71
    %p80 = scmp.eq.s32.totalorder %s13, 3
    %p81 = por %p79, %p80
    %p82 = scmp.ne.s32.totalorder %s71, %s72
    %p83 = scmp.eq.s32.totalorder %s13, 0
    %p84 = por %p82, %p83
    %p85 = scmp.ne.s32.totalorder %s71, %s72
    %p86 = scmp.eq.s32.totalorder %s14, 3
    %p87 = por %p85, %p86
    %p89 = scmp.ne.s32.totalorder %s72, %s88
    %p90 = scmp.eq.s32.totalorder %s14, 0
    %p91 = por %p89, %p90
    %s92 = ssub.s32 %s15, %s27
    %s93 = ssub.s32 %s16, %s23
    %s94 = sor.u32 %s92, %s93
    %p95 = scmp.eq.s32.totalorder %s94, 0
    %s97 = sadd.s32 %s96, 1
    %s98 = scalar_select %p95, %s96, %s97
    %p101 = pneg %p95
    %p102 = scmp.eq.s32.totalorder %s8, 3
    %p103 = por %p101, %p102
    %p104 = scmp.ne.s32.totalorder %s96, %s99
    %p105 = scmp.eq.s32.totalorder %s8, 0
    %p106 = por %p104, %p105
    %p107 = scmp.ne.s32.totalorder %s96, %s99
    %p108 = scmp.eq.s32.totalorder %s13, 3
    %p109 = por %p107, %p108
    %p110 = scmp.ne.s32.totalorder %s99, %s100
    %p111 = scmp.eq.s32.totalorder %s13, 0
    %p112 = por %p110, %p111
    %p113 = scmp.ne.s32.totalorder %s99, %s100
    %p114 = scmp.eq.s32.totalorder %s14, 3
    %p115 = por %p113, %p114
    %p117 = scmp.ne.s32.totalorder %s100, %s116
    %p118 = scmp.eq.s32.totalorder %s14, 0
    %p119 = por %p117, %p118
    %p120 = scmp.le.s32.totalorder 1, %s8
    %p121 = scmp.lt.s32.totalorder %s8, 5
    %p122 = pnand %p120, %p121
    %p123 = pneg %p122
    // Predicated region
    $region9: #{tpu_custom_call.1} parent=5 // pred_check
      _
    $region10: #{tpu_custom_call.1} parent=5 // pred_check_branch
      %125 = sbr.rel (%p122) target = $region12
    $region11: #{tpu_custom_call.1} parent=5 // pred_region
      %s126 = ssub.s32 %s8, 1
    $region12: #{tpu_custom_call.1} parent=5 // pred_fallthru
      _
    %p127 = scmp.lt.s32.totalorder %s8, 4
    // Predicated region
    $region13: #{tpu_custom_call.1} parent=5 // pred_check
      %p128 = pneg %p127
    $region14: #{tpu_custom_call.1} parent=5 // pred_check_branch
      %130 = sbr.rel (%p128) target = $region16
    $region15: #{tpu_custom_call.1} parent=5 // pred_region
      // Predicated region
      $region17: #{tpu_custom_call.1} parent=15 // pred_check
        %p131 = pneg %p50
      $region18: #{tpu_custom_call.1} parent=15 // pred_check_branch
        %133 = sbr.rel (%p131) target = $region20
      $region19: #{tpu_custom_call.1} parent=15 // pred_region
        %s134 = smul.u32 %s16, 4
        %s135 = ssub.s32 %s134, 1
        %p136 = scmp.gt.s32.totalorder %s135, 0
        %s137 = scalar_select %p136, %s135, 0
        %s138 = smul.u32 16, %s137
        %p139 = scmp.lt.s32.totalorder %s15, 1
        %s140 = scalar_select %p139, %s15, 1
        %p141 = scmp.lt.s32.totalorder %s138, 127
        %s142 = scalar_select %p141, %s138, 127
        %s143 = smul.addr %s140, 128
        %s144 = sadd.s32 %s142, %s143
        %s145 = smul.addr %s144, 8
        %s146 = scalar_lea.vmem %s0, %s145
        %s147 = smul.u32 %s16, 4
        %s148 = ssub.s32 %s147, 1
        %p149 = scmp.gt.s32.totalorder %s148, 0
        %s150 = scalar_select %p149, %s148, 0
        %s151 = smul.u32 16, %s150
      $region20: #{tpu_custom_call.1} parent=15 // pred_fallthru
        _
      // Predicated region
      $region21: #{tpu_custom_call.1} parent=15 // pred_check
        %p152 = pneg %p78
      $region22: #{tpu_custom_call.1} parent=15 // pred_check_branch
        %154 = sbr.rel (%p152) target = $region24
      $region23: #{tpu_custom_call.1} parent=15 // pred_region
        %s155 = smul.u32 64, %s16
        %p156 = scmp.lt.s32.totalorder %s15, 1
        %s157 = scalar_select %p156, %s15, 1
        %p158 = scmp.lt.s32.totalorder %s155, 127
        %s159 = scalar_select %p158, %s155, 127
        %s160 = smul.addr %s157, 128
        %s161 = sadd.s32 %s159, %s160
        %s162 = smul.addr %s161, 8
        %s163 = scalar_lea.vmem %s1, %s162
        %s164 = smul.u32 64, %s16
      $region24: #{tpu_custom_call.1} parent=15 // pred_fallthru
        _
    $region16: #{tpu_custom_call.1} parent=5 // pred_fallthru
      _
    %p165 = scmp.le.s32.totalorder 1, %s8
    %p166 = scmp.lt.s32.totalorder %s8, 5
    %p167 = pnand %p165, %p166
    %p168 = pneg %p167
    // Predicated region
    $region25: #{tpu_custom_call.1} parent=5 // pred_check
      _
    $region26: #{tpu_custom_call.1} parent=5 // pred_check_branch
      %170 = sbr.rel (%p167) target = $region28
    $region27: #{tpu_custom_call.1} parent=5 // pred_region
      %s171 = ssub.s32 %s8, 1
      %s172 = smul.u32 %s18, 4
      %s173 = ssub.s32 %s172, 1
      %p174 = scmp.gt.s32.totalorder %s173, 0
      %s175 = scalar_select %p174, %s173, 0
      %s176 = smul.u32 16, %s175
      %p177 = scmp.lt.s32.totalorder %s17, 1
      %s178 = scalar_select %p177, %s17, 1
      %p179 = scmp.lt.s32.totalorder %s176, 127
      %s180 = scalar_select %p179, %s176, 127
      %s181 = smul.addr %s178, 128
      %s182 = sadd.s32 %s180, %s181
      %s183 = smul.addr %s182, 8
      %s184 = scalar_lea.vmem %s0, %s183
      %p185 = pneg %p56
      %p186 = pneg %p53
      %s187 = smul.u32 64, %s18
      %p188 = scmp.lt.s32.totalorder %s17, 1
      %s189 = scalar_select %p188, %s17, 1
      %p190 = scmp.lt.s32.totalorder %s187, 127
      %s191 = scalar_select %p190, %s187, 127
      %s192 = smul.addr %s189, 128
      %s193 = sadd.s32 %s191, %s192
      %s194 = smul.addr %s193, 8
      %s195 = scalar_lea.vmem %s1, %s194
      %p196 = pneg %p84
      %p197 = pneg %p81
      %p198 = pneg %p112
      %p199 = pneg %p109
      %s200 = smul.u32 64, %s18
      %p201 = scmp.lt.s32.totalorder %s17, 1
      %s202 = scalar_select %p201, %s17, 1
      %p203 = scmp.lt.s32.totalorder %s200, 127
      %s204 = scalar_select %p203, %s200, 127
      %s205 = smul.addr %s202, 128
      %s206 = sadd.s32 %s204, %s205
      %s207 = smul.addr %s206, 8
      %s208 = scalar_lea.vmem %s2, %s207
      %s209 = smul.u32 %s18, 4
      %s210 = ssub.s32 %s209, 1
      %p211 = scmp.gt.s32.totalorder %s210, 0
      %s212 = scalar_select %p211, %s210, 0
      %s213 = smul.u32 16, %s212
      %p214 = scmp.lt.s32.totalorder %s17, 1
      %s215 = scalar_select %p214, %s17, 1
      %p216 = scmp.lt.s32.totalorder %s213, 127
      %s217 = scalar_select %p216, %s213, 127
      %s218 = smul.addr %s215, 128
      %s219 = sadd.s32 %s217, %s218
      %s220 = smul.addr %s219, 8
      %s221 = scalar_lea.vmem %s0, %s220
      %s222 = smul.u32 %s18, 4
      %s223 = ssub.s32 %s222, 1
      %p224 = scmp.gt.s32.totalorder %s223, 0
      %s225 = scalar_select %p224, %s223, 0
      %s226 = smul.u32 16, %s225
      %s227 = smul.u32 64, %s18
      %p228 = scmp.lt.s32.totalorder %s17, 1
      %s229 = scalar_select %p228, %s17, 1
      %p230 = scmp.lt.s32.totalorder %s227, 127
      %s231 = scalar_select %p230, %s227, 127
      %s232 = smul.addr %s229, 128
      %s233 = sadd.s32 %s231, %s232
      %s234 = smul.addr %s233, 8
      %s235 = scalar_lea.vmem %s1, %s234
      %s236 = smul.u32 64, %s18
      %s237 = smul.u32 64, %s18
      %p238 = scmp.lt.s32.totalorder %s17, 1
      %s239 = scalar_select %p238, %s17, 1
      %p240 = scmp.lt.s32.totalorder %s237, 127
      %s241 = scalar_select %p240, %s237, 127
      %s242 = smul.addr %s239, 128
      %s243 = sadd.s32 %s241, %s242
      %s244 = smul.addr %s243, 8
      %s245 = scalar_lea.vmem %s2, %s244
      %s246 = smul.u32 64, %s18
      %v247 = vld [vmem:[%s221] sm:$0xff]
      %v248 = vld [vmem:[%s221 + $0x8] sm:$0xff]
      %v249 = vld [vmem:[%s221 + $0x10] sm:$0xff]
      %v250 = vld [vmem:[%s221 + $0x18] sm:$0xff]
      %v251 = vld [vmem:[%s221 + $0x20] sm:$0xff]
      %v252 = vld [vmem:[%s221 + $0x28] sm:$0xff]
      %v253 = vld [vmem:[%s221 + $0x30] sm:$0xff]
      %v254 = vld [vmem:[%s221 + $0x38] sm:$0xff]
      %v255 = vld [vmem:[%s221 + $0x40] sm:$0xff]
      %v256 = vld [vmem:[%s221 + $0x48] sm:$0xff]
      %v257 = vld [vmem:[%s221 + $0x50] sm:$0xff]
      %v258 = vld [vmem:[%s221 + $0x58] sm:$0xff]
      %v259 = vld [vmem:[%s221 + $0x60] sm:$0xff]
      %v260 = vld [vmem:[%s221 + $0x68] sm:$0xff]
      %v261 = vld [vmem:[%s221 + $0x70] sm:$0xff]
      %v262 = vld [vmem:[%s221 + $0x78] sm:$0xff]
      %v263 = vld [vmem:[%s235] sm:$0xff]
      %v264 = vld [vmem:[%s235 + $0x8] sm:$0xff]
      %v265 = vld [vmem:[%s235 + $0x10] sm:$0xff]
      %v266 = vld [vmem:[%s235 + $0x18] sm:$0xff]
      %v267 = vld [vmem:[%s235 + $0x20] sm:$0xff]
      %v268 = vld [vmem:[%s235 + $0x28] sm:$0xff]
      %v269 = vld [vmem:[%s235 + $0x30] sm:$0xff]
      %v270 = vld [vmem:[%s235 + $0x38] sm:$0xff]
      %v271 = vld [vmem:[%s235 + $0x40] sm:$0xff]
      %v272 = vld [vmem:[%s235 + $0x48] sm:$0xff]
      %v273 = vld [vmem:[%s235 + $0x50] sm:$0xff]
      %v274 = vld [vmem:[%s235 + $0x58] sm:$0xff]
      %v275 = vld [vmem:[%s235 + $0x60] sm:$0xff]
      %v276 = vld [vmem:[%s235 + $0x68] sm:$0xff]
      %v277 = vld [vmem:[%s235 + $0x70] sm:$0xff]
      %v278 = vld [vmem:[%s235 + $0x78] sm:$0xff]
      %vm279 = vcmask 31744
      %v281 = vsel %vm279, %v263, 0
      %v284 = vsel %vm279, %v264, 0
      %v287 = vsel %vm279, %v265, 0
      %v290 = vsel %vm279, %v266, 0
      %v293 = vsel %vm279, %v267, 0
      %v296 = vsel %vm279, %v268, 0
      %v299 = vsel %vm279, %v269, 0
      %v302 = vsel %vm279, %v270, 0
      %v305 = vsel %vm279, %v271, 0
      %v308 = vsel %vm279, %v272, 0
      %v311 = vsel %vm279, %v273, 0
      %v314 = vsel %vm279, %v274, 0
      %v317 = vsel %vm279, %v275, 0
      %v320 = vsel %vm279, %v276, 0
      %v323 = vsel %vm279, %v277, 0
      %v326 = vsel %vm279, %v278, 0
      %v329 = vsel %vm279, %v247, 0
      %v332 = vsel %vm279, %v248, 0
      %v335 = vsel %vm279, %v249, 0
      %v338 = vsel %vm279, %v250, 0
      %v341 = vsel %vm279, %v251, 0
      %v344 = vsel %vm279, %v252, 0
      %v347 = vsel %vm279, %v253, 0
      %v350 = vsel %vm279, %v254, 0
      %v353 = vsel %vm279, %v255, 0
      %v356 = vsel %vm279, %v256, 0
      %v359 = vsel %vm279, %v257, 0
      %v362 = vsel %vm279, %v258, 0
      %v365 = vsel %vm279, %v259, 0
      %v368 = vsel %vm279, %v260, 0
      %v371 = vsel %vm279, %v261, 0
      %v374 = vsel %vm279, %v262, 0
      %376 = vmatpush.xpose.msra.mxu0 %v374
      %377 = vmatpush.xpose.msra.mxu0 %v371
      %378 = vmatpush.xpose.msra.mxu0 %v368
      %379 = vmatpush.xpose.msra.mxu0 %v365
      %380 = vmatpush.xpose.msra.mxu0 %v362
      %381 = vmatpush.xpose.msra.mxu0 %v359
      %382 = vmatpush.xpose.msra.mxu0 %v356
      %383 = vmatpush.xpose.msra.mxu0 %v353
      %384 = vmatpush.xpose.msra.mxu0 %v350
      %385 = vmatpush.xpose.msra.mxu0 %v347
      %386 = vmatpush.xpose.msra.mxu0 %v344
      %387 = vmatpush.xpose.msra.mxu0 %v341
      %388 = vmatpush.xpose.msra.mxu0 %v338
      %389 = vmatpush.xpose.msra.mxu0 %v335
      %390 = vmatpush.xpose.msra.mxu0 %v332
      %391 = vmatpush.xpose.msra.mxu0 %v329
      %392 = vmatmul.f32.gmra.mxu0 %v281
      %v393 = vpop.f32.mrf.mxu0
      %v394 = vadd.f32 0.0, %v393
      %395 = vmatmul.f32.gmra.mxu0 %v284
      %v396 = vpop.f32.mrf.mxu0
      %v397 = vadd.f32 0.0, %v396
      %398 = vmatmul.f32.gmra.mxu0 %v287
      %v399 = vpop.f32.mrf.mxu0
      %v400 = vadd.f32 0.0, %v399
      %401 = vmatmul.f32.gmra.mxu0 %v290
      %v402 = vpop.f32.mrf.mxu0
      %v403 = vadd.f32 0.0, %v402
      %404 = vmatmul.f32.gmra.mxu0 %v293
      %v405 = vpop.f32.mrf.mxu0
      %v406 = vadd.f32 0.0, %v405
      %407 = vmatmul.f32.gmra.mxu0 %v296
      %v408 = vpop.f32.mrf.mxu0
      %v409 = vadd.f32 0.0, %v408
      %410 = vmatmul.f32.gmra.mxu0 %v299
      %v411 = vpop.f32.mrf.mxu0
      %v412 = vadd.f32 0.0, %v411
      %413 = vmatmul.f32.gmra.mxu0 %v302
      %v414 = vpop.f32.mrf.mxu0
      %v415 = vadd.f32 0.0, %v414
      %416 = vmatmul.f32.gmra.mxu0 %v305
      %v417 = vpop.f32.mrf.mxu0
      %v418 = vadd.f32 0.0, %v417
      %419 = vmatmul.f32.gmra.mxu0 %v308
      %v420 = vpop.f32.mrf.mxu0
      %v421 = vadd.f32 0.0, %v420
      %422 = vmatmul.f32.gmra.mxu0 %v311
      %v423 = vpop.f32.mrf.mxu0
      %v424 = vadd.f32 0.0, %v423
      %425 = vmatmul.f32.gmra.mxu0 %v314
      %v426 = vpop.f32.mrf.mxu0
      %v427 = vadd.f32 0.0, %v426
      %428 = vmatmul.f32.gmra.mxu0 %v317
      %v429 = vpop.f32.mrf.mxu0
      %v430 = vadd.f32 0.0, %v429
      %431 = vmatmul.f32.gmra.mxu0 %v320
      %v432 = vpop.f32.mrf.mxu0
      %v433 = vadd.f32 0.0, %v432
      %434 = vmatmul.f32.gmra.mxu0 %v323
      %v435 = vpop.f32.mrf.mxu0
      %v436 = vadd.f32 0.0, %v435
      %437 = vmatmul.f32.gmra.mxu0 %v326
      %v438 = vpop.f32.mrf.mxu0
      %v439 = vadd.f32 0.0, %v438
      %440 = vdwg.mxu0
      %441 = vmatpush.xpose.msra.mxu0 %v326
      %442 = vmatpush.xpose.msra.mxu0 %v323
      %443 = vmatpush.xpose.msra.mxu0 %v320
      %444 = vmatpush.xpose.msra.mxu0 %v317
      %445 = vmatpush.xpose.msra.mxu0 %v314
      %446 = vmatpush.xpose.msra.mxu0 %v311
      %447 = vmatpush.xpose.msra.mxu0 %v308
      %448 = vmatpush.xpose.msra.mxu0 %v305
      %449 = vmatpush.xpose.msra.mxu0 %v302
      %450 = vmatpush.xpose.msra.mxu0 %v299
      %451 = vmatpush.xpose.msra.mxu0 %v296
      %452 = vmatpush.xpose.msra.mxu0 %v293
      %453 = vmatpush.xpose.msra.mxu0 %v290
      %454 = vmatpush.xpose.msra.mxu0 %v287
      %455 = vmatpush.xpose.msra.mxu0 %v284
      %456 = vmatpush.xpose.msra.mxu0 %v281
      %457 = vmatmul.f32.gmra.mxu0 %v281
      %v458 = vpop.f32.mrf.mxu0
      %v459 = vadd.f32 0.0, %v458
      %460 = vmatmul.f32.gmra.mxu0 %v284
      %v461 = vpop.f32.mrf.mxu0
      %v462 = vadd.f32 0.0, %v461
      %463 = vmatmul.f32.gmra.mxu0 %v287
      %v464 = vpop.f32.mrf.mxu0
      %v465 = vadd.f32 0.0, %v464
      %466 = vmatmul.f32.gmra.mxu0 %v290
      %v467 = vpop.f32.mrf.mxu0
      %v468 = vadd.f32 0.0, %v467
      %469 = vmatmul.f32.gmra.mxu0 %v293
      %v470 = vpop.f32.mrf.mxu0
      %v471 = vadd.f32 0.0, %v470
      %472 = vmatmul.f32.gmra.mxu0 %v296
      %v473 = vpop.f32.mrf.mxu0
      %v474 = vadd.f32 0.0, %v473
      %475 = vmatmul.f32.gmra.mxu0 %v299
      %v476 = vpop.f32.mrf.mxu0
      %v477 = vadd.f32 0.0, %v476
      %478 = vmatmul.f32.gmra.mxu0 %v302
      %v479 = vpop.f32.mrf.mxu0
      %v480 = vadd.f32 0.0, %v479
      %481 = vmatmul.f32.gmra.mxu0 %v305
      %v482 = vpop.f32.mrf.mxu0
      %v483 = vadd.f32 0.0, %v482
      %484 = vmatmul.f32.gmra.mxu0 %v308
      %v485 = vpop.f32.mrf.mxu0
      %v486 = vadd.f32 0.0, %v485
      %487 = vmatmul.f32.gmra.mxu0 %v311
      %v488 = vpop.f32.mrf.mxu0
      %v489 = vadd.f32 0.0, %v488
      %490 = vmatmul.f32.gmra.mxu0 %v314
      %v491 = vpop.f32.mrf.mxu0
      %v492 = vadd.f32 0.0, %v491
      %493 = vmatmul.f32.gmra.mxu0 %v317
      %v494 = vpop.f32.mrf.mxu0
      %v495 = vadd.f32 0.0, %v494
      %496 = vmatmul.f32.gmra.mxu0 %v320
      %v497 = vpop.f32.mrf.mxu0
      %v498 = vadd.f32 0.0, %v497
      %499 = vmatmul.f32.gmra.mxu0 %v323
      %v500 = vpop.f32.mrf.mxu0
      %v501 = vadd.f32 0.0, %v500
      %502 = vmatmul.f32.gmra.mxu0 %v326
      %v503 = vpop.f32.mrf.mxu0
      %v504 = vadd.f32 0.0, %v503
      %505 = vdwg.mxu0
      %v506 = vmul.f32 %v394, 2.0
      %v507 = vmul.f32 %v459, 2.0
      %v508 = vmul.f32 %v397, 2.0
      %v509 = vmul.f32 %v462, 2.0
      %v510 = vmul.f32 %v400, 2.0
      %v511 = vmul.f32 %v465, 2.0
      %v512 = vmul.f32 %v403, 2.0
      %v513 = vmul.f32 %v468, 2.0
      %v514 = vmul.f32 %v406, 2.0
      %v515 = vmul.f32 %v471, 2.0
      %v516 = vmul.f32 %v409, 2.0
      %v517 = vmul.f32 %v474, 2.0
      %v518 = vmul.f32 %v412, 2.0
      %v519 = vmul.f32 %v477, 2.0
      %v520 = vmul.f32 %v415, 2.0
      %v521 = vmul.f32 %v480, 2.0
      %v522 = vmul.f32 %v418, 2.0
      %v523 = vmul.f32 %v483, 2.0
      %v524 = vmul.f32 %v421, 2.0
      %v525 = vmul.f32 %v486, 2.0
      %v526 = vmul.f32 %v424, 2.0
      %v527 = vmul.f32 %v489, 2.0
      %v528 = vmul.f32 %v427, 2.0
      %v529 = vmul.f32 %v492, 2.0
      %v530 = vmul.f32 %v430, 2.0
      %v531 = vmul.f32 %v495, 2.0
      %v532 = vmul.f32 %v433, 2.0
      %v533 = vmul.f32 %v498, 2.0
      %v534 = vmul.f32 %v436, 2.0
      %v535 = vmul.f32 %v501, 2.0
      %v536 = vmul.f32 %v439, 2.0
      %v537 = vmul.f32 %v504, 2.0
      %v538 = vsub.f32 2.0, %v506
      %v539 = vsub.f32 2.0, %v507
      %v540 = vsub.f32 2.0, %v508
      %v541 = vsub.f32 2.0, %v509
      %v542 = vsub.f32 2.0, %v510
      %v543 = vsub.f32 2.0, %v511
      %v544 = vsub.f32 2.0, %v512
      %v545 = vsub.f32 2.0, %v513
      %v546 = vsub.f32 2.0, %v514
      %v547 = vsub.f32 2.0, %v515
      %v548 = vsub.f32 2.0, %v516
      %v549 = vsub.f32 2.0, %v517
      %v550 = vsub.f32 2.0, %v518
      %v551 = vsub.f32 2.0, %v519
      %v552 = vsub.f32 2.0, %v520
      %v553 = vsub.f32 2.0, %v521
      %v554 = vsub.f32 2.0, %v522
      %v555 = vsub.f32 2.0, %v523
      %v556 = vsub.f32 2.0, %v524
      %v557 = vsub.f32 2.0, %v525
      %v558 = vsub.f32 2.0, %v526
      %v559 = vsub.f32 2.0, %v527
      %v560 = vsub.f32 2.0, %v528
      %v561 = vsub.f32 2.0, %v529
      %v562 = vsub.f32 2.0, %v530
      %v563 = vsub.f32 2.0, %v531
      %v564 = vsub.f32 2.0, %v532
      %v565 = vsub.f32 2.0, %v533
      %v566 = vsub.f32 2.0, %v534
      %v567 = vsub.f32 2.0, %v535
      %v568 = vsub.f32 2.0, %v536
      %v569 = vsub.f32 2.0, %v537
      %v570 = vmax.f32 %v538, 0.0
      %v571 = vmax.f32 %v539, 0.0
      %v572 = vmax.f32 %v540, 0.0
      %v573 = vmax.f32 %v541, 0.0
      %v574 = vmax.f32 %v542, 0.0
      %v575 = vmax.f32 %v543, 0.0
      %v576 = vmax.f32 %v544, 0.0
      %v577 = vmax.f32 %v545, 0.0
      %v578 = vmax.f32 %v546, 0.0
      %v579 = vmax.f32 %v547, 0.0
      %v580 = vmax.f32 %v548, 0.0
      %v581 = vmax.f32 %v549, 0.0
      %v582 = vmax.f32 %v550, 0.0
      %v583 = vmax.f32 %v551, 0.0
      %v584 = vmax.f32 %v552, 0.0
      %v585 = vmax.f32 %v553, 0.0
      %v586 = vmax.f32 %v554, 0.0
      %v587 = vmax.f32 %v555, 0.0
      %v588 = vmax.f32 %v556, 0.0
      %v589 = vmax.f32 %v557, 0.0
      %v590 = vmax.f32 %v558, 0.0
      %v591 = vmax.f32 %v559, 0.0
      %v592 = vmax.f32 %v560, 0.0
      %v593 = vmax.f32 %v561, 0.0
      %v594 = vmax.f32 %v562, 0.0
      %v595 = vmax.f32 %v563, 0.0
      %v596 = vmax.f32 %v564, 0.0
      %v597 = vmax.f32 %v565, 0.0
      %v598 = vmax.f32 %v566, 0.0
      %v599 = vmax.f32 %v567, 0.0
      %v600 = vmax.f32 %v568, 0.0
      %v601 = vmax.f32 %v569, 0.0
      %v602 = vlaneseq
      %v603 = vand.u32 %v602, 127
      %v604 = vadd.s32 %v603, 128
      %v605 = vlaneseq
      %v606 = vshrl.u32 %v605, 7
      %v607 = vadd.s32 %v606, 8
      %v608 = vadd.s32 %v606, 16
      %v609 = vadd.s32 %v606, 24
      %v610 = vadd.s32 %v606, 32
      %v611 = vadd.s32 %v606, 40
      %v612 = vadd.s32 %v606, 48
      %v613 = vadd.s32 %v606, 56
      %v614 = vadd.s32 %v606, 64
      %v615 = vadd.s32 %v606, 72
      %v616 = vadd.s32 %v606, 80
      %v617 = vadd.s32 %v606, 88
      %v618 = vadd.s32 %v606, 96
      %v619 = vadd.s32 %v606, 104
      %v620 = vadd.s32 %v606, 112
      %v621 = vadd.s32 %v606, 120
      %v622 = vsub.s32 %v603, %v606
      %v623 = vsub.s32 %v604, %v606
      %v624 = vsub.s32 %v603, %v607
      %v625 = vsub.s32 %v604, %v607
      %v626 = vsub.s32 %v603, %v608
      %v627 = vsub.s32 %v604, %v608
      %v628 = vsub.s32 %v603, %v609
      %v629 = vsub.s32 %v604, %v609
      %v630 = vsub.s32 %v603, %v610
      %v631 = vsub.s32 %v604, %v610
      %v632 = vsub.s32 %v603, %v611
      %v633 = vsub.s32 %v604, %v611
      %v634 = vsub.s32 %v603, %v612
      %v635 = vsub.s32 %v604, %v612
      %v636 = vsub.s32 %v603, %v613
      %v637 = vsub.s32 %v604, %v613
      %v638 = vsub.s32 %v603, %v614
      %v639 = vsub.s32 %v604, %v614
      %v640 = vsub.s32 %v603, %v615
      %v641 = vsub.s32 %v604, %v615
      %v642 = vsub.s32 %v603, %v616
      %v643 = vsub.s32 %v604, %v616
      %v644 = vsub.s32 %v603, %v617
      %v645 = vsub.s32 %v604, %v617
      %v646 = vsub.s32 %v603, %v618
      %v647 = vsub.s32 %v604, %v618
      %v648 = vsub.s32 %v603, %v619
      %v649 = vsub.s32 %v604, %v619
      %v650 = vsub.s32 %v603, %v620
      %v651 = vsub.s32 %v604, %v620
      %v652 = vsub.s32 %v603, %v621
      %v653 = vsub.s32 %v604, %v621
      %vm654 = vcmp.le.s32.totalorder %v622, 128
      %vm655 = vcmp.le.s32.totalorder %v623, 128
      %vm656 = vcmp.le.s32.totalorder %v624, 128
      %vm657 = vcmp.le.s32.totalorder %v625, 128
      %vm658 = vcmp.le.s32.totalorder %v626, 128
      %vm659 = vcmp.le.s32.totalorder %v627, 128
      %vm660 = vcmp.le.s32.totalorder %v628, 128
      %vm661 = vcmp.le.s32.totalorder %v629, 128
      %vm662 = vcmp.le.s32.totalorder %v630, 128
      %vm663 = vcmp.le.s32.totalorder %v631, 128
      %vm664 = vcmp.le.s32.totalorder %v632, 128
      %vm665 = vcmp.le.s32.totalorder %v633, 128
      %vm666 = vcmp.le.s32.totalorder %v634, 128
      %vm667 = vcmp.le.s32.totalorder %v635, 128
      %vm668 = vcmp.le.s32.totalorder %v636, 128
      %vm669 = vcmp.le.s32.totalorder %v637, 128
      %vm670 = vcmp.le.s32.totalorder %v638, 128
      %vm671 = vcmp.le.s32.totalorder %v639, 128
      %vm672 = vcmp.le.s32.totalorder %v640, 128
      %vm673 = vcmp.le.s32.totalorder %v641, 128
      %vm674 = vcmp.le.s32.totalorder %v642, 128
      %vm675 = vcmp.le.s32.totalorder %v643, 128
      %vm676 = vcmp.le.s32.totalorder %v644, 128
      %vm677 = vcmp.le.s32.totalorder %v645, 128
      %vm678 = vcmp.le.s32.totalorder %v646, 128
      %vm679 = vcmp.le.s32.totalorder %v647, 128
      %vm680 = vcmp.le.s32.totalorder %v648, 128
      %vm681 = vcmp.le.s32.totalorder %v649, 128
      %vm682 = vcmp.le.s32.totalorder %v650, 128
      %vm683 = vcmp.le.s32.totalorder %v651, 128
      %vm684 = vcmp.le.s32.totalorder %v652, 128
      %vm685 = vcmp.le.s32.totalorder %v653, 128
      %vm686 = vcmp.gt.s32.totalorder %v622, 38
      %vm687 = vcmp.gt.s32.totalorder %v623, 38
      %vm688 = vcmp.gt.s32.totalorder %v624, 38
      %vm689 = vcmp.gt.s32.totalorder %v625, 38
      %vm690 = vcmp.gt.s32.totalorder %v626, 38
      %vm691 = vcmp.gt.s32.totalorder %v627, 38
      %vm692 = vcmp.gt.s32.totalorder %v628, 38
      %vm693 = vcmp.gt.s32.totalorder %v629, 38
      %vm694 = vcmp.gt.s32.totalorder %v630, 38
      %vm695 = vcmp.gt.s32.totalorder %v631, 38
      %vm696 = vcmp.gt.s32.totalorder %v632, 38
      %vm697 = vcmp.gt.s32.totalorder %v633, 38
      %vm698 = vcmp.gt.s32.totalorder %v634, 38
      %vm699 = vcmp.gt.s32.totalorder %v635, 38
      %vm700 = vcmp.gt.s32.totalorder %v636, 38
      %vm701 = vcmp.gt.s32.totalorder %v637, 38
      %vm702 = vcmp.gt.s32.totalorder %v638, 38
      %vm703 = vcmp.gt.s32.totalorder %v639, 38
      %vm704 = vcmp.gt.s32.totalorder %v640, 38
      %vm705 = vcmp.gt.s32.totalorder %v641, 38
      %vm706 = vcmp.gt.s32.totalorder %v642, 38
      %vm707 = vcmp.gt.s32.totalorder %v643, 38
      %vm708 = vcmp.gt.s32.totalorder %v644, 38
      %vm709 = vcmp.gt.s32.totalorder %v645, 38
      %vm710 = vcmp.gt.s32.totalorder %v646, 38
      %vm711 = vcmp.gt.s32.totalorder %v647, 38
      %vm712 = vcmp.gt.s32.totalorder %v648, 38
      %vm713 = vcmp.gt.s32.totalorder %v649, 38
      %vm714 = vcmp.gt.s32.totalorder %v650, 38
      %vm715 = vcmp.gt.s32.totalorder %v651, 38
      %vm716 = vcmp.gt.s32.totalorder %v652, 38
      %vm717 = vcmp.gt.s32.totalorder %v653, 38
      %vm718 = vmand %vm654, %vm686
      %vm719 = vmand %vm655, %vm687
      %vm720 = vmand %vm656, %vm688
      %vm721 = vmand %vm657, %vm689
      %vm722 = vmand %vm658, %vm690
      %vm723 = vmand %vm659, %vm691
      %vm724 = vmand %vm660, %vm692
      %vm725 = vmand %vm661, %vm693
      %vm726 = vmand %vm662, %vm694
      %vm727 = vmand %vm663, %vm695
      %vm728 = vmand %vm664, %vm696
      %vm729 = vmand %vm665, %vm697
      %vm730 = vmand %vm666, %vm698
      %vm731 = vmand %vm667, %vm699
      %vm732 = vmand %vm668, %vm700
      %vm733 = vmand %vm669, %vm701
      %vm734 = vmand %vm670, %vm702
      %vm735 = vmand %vm671, %vm703
      %vm736 = vmand %vm672, %vm704
      %vm737 = vmand %vm673, %vm705
      %vm738 = vmand %vm674, %vm706
      %vm739 = vmand %vm675, %vm707
      %vm740 = vmand %vm676, %vm708
      %vm741 = vmand %vm677, %vm709
      %vm742 = vmand %vm678, %vm710
      %vm743 = vmand %vm679, %vm711
      %vm744 = vmand %vm680, %vm712
      %vm745 = vmand %vm681, %vm713
      %vm746 = vmand %vm682, %vm714
      %vm747 = vmand %vm683, %vm715
      %vm748 = vmand %vm684, %vm716
      %vm749 = vmand %vm685, %vm717
      %vm750 = vcmp.ge.s32.totalorder %v603, 128
      %vm751 = vcmp.ge.s32.totalorder %v604, 128
      %p752 = scmp.gt.s32.totalorder %s18, 0
      %s753 = scalar_select %p752, 1, 0
      %v754 = vstv %s753
      %vm755 = vcmp.eq.s32.totalorder %v754, 1
      %vm756 = vmor %vm750, %vm755
      %vm757 = vmor %vm751, %vm755
      %vm758 = vmand %vm718, %vm756
      %vm759 = vmand %vm719, %vm757
      %vm760 = vmand %vm720, %vm756
      %vm761 = vmand %vm721, %vm757
      %vm762 = vmand %vm722, %vm756
      %vm763 = vmand %vm723, %vm757
      %vm764 = vmand %vm724, %vm756
      %vm765 = vmand %vm725, %vm757
      %vm766 = vmand %vm726, %vm756
      %vm767 = vmand %vm727, %vm757
      %vm768 = vmand %vm728, %vm756
      %vm769 = vmand %vm729, %vm757
      %vm770 = vmand %vm730, %vm756
      %vm771 = vmand %vm731, %vm757
      %vm772 = vmand %vm732, %vm756
      %vm773 = vmand %vm733, %vm757
      %vm774 = vmand %vm734, %vm756
      %vm775 = vmand %vm735, %vm757
      %vm776 = vmand %vm736, %vm756
      %vm777 = vmand %vm737, %vm757
      %vm778 = vmand %vm738, %vm756
      %vm779 = vmand %vm739, %vm757
      %vm780 = vmand %vm740, %vm756
      %vm781 = vmand %vm741, %vm757
      %vm782 = vmand %vm742, %vm756
      %vm783 = vmand %vm743, %vm757
      %vm784 = vmand %vm744, %vm756
      %vm785 = vmand %vm745, %vm757
      %vm786 = vmand %vm746, %vm756
      %vm787 = vmand %vm747, %vm757
      %vm788 = vmand %vm748, %vm756
      %vm789 = vmand %vm749, %vm757
      %v822 = vand.u32 %v570, 4294967040
      %v823 = vand.u32 %v571, 4294967040
      %v824 = vand.u32 %v572, 4294967040
      %v825 = vand.u32 %v573, 4294967040
      %v826 = vand.u32 %v574, 4294967040
      %v827 = vand.u32 %v575, 4294967040
      %v828 = vand.u32 %v576, 4294967040
      %v829 = vand.u32 %v577, 4294967040
      %v830 = vand.u32 %v578, 4294967040
      %v831 = vand.u32 %v579, 4294967040
      %v832 = vand.u32 %v580, 4294967040
      %v833 = vand.u32 %v581, 4294967040
      %v834 = vand.u32 %v582, 4294967040
      %v835 = vand.u32 %v583, 4294967040
      %v836 = vand.u32 %v584, 4294967040
      %v837 = vand.u32 %v585, 4294967040
      %v838 = vand.u32 %v586, 4294967040
      %v839 = vand.u32 %v587, 4294967040
      %v840 = vand.u32 %v588, 4294967040
      %v841 = vand.u32 %v589, 4294967040
      %v842 = vand.u32 %v590, 4294967040
      %v843 = vand.u32 %v591, 4294967040
      %v844 = vand.u32 %v592, 4294967040
      %v845 = vand.u32 %v593, 4294967040
      %v846 = vand.u32 %v594, 4294967040
      %v847 = vand.u32 %v595, 4294967040
      %v848 = vand.u32 %v596, 4294967040
      %v849 = vand.u32 %v597, 4294967040
      %v850 = vand.u32 %v598, 4294967040
      %v851 = vand.u32 %v599, 4294967040
      %v852 = vand.u32 %v600, 4294967040
      %v853 = vand.u32 %v601, 4294967040
      %v854 = vor.u32 %v822, %v603
      %v855 = vor.u32 %v823, %v604
      %v856 = vor.u32 %v824, %v603
      %v857 = vor.u32 %v825, %v604
      %v858 = vor.u32 %v826, %v603
      %v859 = vor.u32 %v827, %v604
      %v860 = vor.u32 %v828, %v603
      %v861 = vor.u32 %v829, %v604
      %v862 = vor.u32 %v830, %v603
      %v863 = vor.u32 %v831, %v604
      %v864 = vor.u32 %v832, %v603
      %v865 = vor.u32 %v833, %v604
      %v866 = vor.u32 %v834, %v603
      %v867 = vor.u32 %v835, %v604
      %v868 = vor.u32 %v836, %v603
      %v869 = vor.u32 %v837, %v604
      %v870 = vor.u32 %v838, %v603
      %v871 = vor.u32 %v839, %v604
      %v872 = vor.u32 %v840, %v603
      %v873 = vor.u32 %v841, %v604
      %v874 = vor.u32 %v842, %v603
      %v875 = vor.u32 %v843, %v604
      %v876 = vor.u32 %v844, %v603
      %v877 = vor.u32 %v845, %v604
      %v878 = vor.u32 %v846, %v603
      %v879 = vor.u32 %v847, %v604
      %v880 = vor.u32 %v848, %v603
      %v881 = vor.u32 %v849, %v604
      %v882 = vor.u32 %v850, %v603
      %v883 = vor.u32 %v851, %v604
      %v884 = vor.u32 %v852, %v603
      %v885 = vor.u32 %v853, %v604
      %v886 = vsel %vm758, %v854, 2147483647
      %v887 = vsel %vm759, %v855, 2147483647
      %v888 = vsel %vm760, %v856, 2147483647
      %v889 = vsel %vm761, %v857, 2147483647
      %v890 = vsel %vm762, %v858, 2147483647
      %v891 = vsel %vm763, %v859, 2147483647
      %v892 = vsel %vm764, %v860, 2147483647
      %v893 = vsel %vm765, %v861, 2147483647
      %v894 = vsel %vm766, %v862, 2147483647
      %v895 = vsel %vm767, %v863, 2147483647
      %v896 = vsel %vm768, %v864, 2147483647
      %v897 = vsel %vm769, %v865, 2147483647
      %v898 = vsel %vm770, %v866, 2147483647
      %v899 = vsel %vm771, %v867, 2147483647
      %v900 = vsel %vm772, %v868, 2147483647
      %v901 = vsel %vm773, %v869, 2147483647
      %v902 = vsel %vm774, %v870, 2147483647
      %v903 = vsel %vm775, %v871, 2147483647
      %v904 = vsel %vm776, %v872, 2147483647
      %v905 = vsel %vm777, %v873, 2147483647
      %v906 = vsel %vm778, %v874, 2147483647
      %v907 = vsel %vm779, %v875, 2147483647
      %v908 = vsel %vm780, %v876, 2147483647
      %v909 = vsel %vm781, %v877, 2147483647
      %v910 = vsel %vm782, %v878, 2147483647
      %v911 = vsel %vm783, %v879, 2147483647
      %v912 = vsel %vm784, %v880, 2147483647
      %v913 = vsel %vm785, %v881, 2147483647
      %v914 = vsel %vm786, %v882, 2147483647
      %v915 = vsel %vm787, %v883, 2147483647
      %v916 = vsel %vm788, %v884, 2147483647
      %v917 = vsel %vm789, %v885, 2147483647
      %vm918 = vcmp.lt.s32.totalorder %v886, %v887
      %v919 = vsel %vm918, %v886, %v887
      %v920 = vand.u32 %v919, 65535
      %v921 = vshra.s32 %v919, 16
      %v922 = vcvt.s32.f32 %v920
      %v923 = vcvt.s32.f32 %v921
      %924 = vmin.xlane.f32.xlu0 %v923
      %v925 = vpop.xlane.xlu0 %924
      %vm926 = vcmp.eq.f32.partialorder %v923, %v925
      %v927 = vsel %vm926, %v922, inf
      %928 = vmin.xlane.f32.xlu0 %v927
      %v929 = vpop.xlane.xlu0 %928
      %v930 = vcvt.f32.s32 %v929
      %v931 = vcvt.f32.s32 %v925
      %v932 = vshll.u32 %v931, 16
      %v933 = vadd.s32 %v932, %v930
      %vm934 = vcmp.lt.s32.totalorder %v888, %v889
      %v935 = vsel %vm934, %v888, %v889
      %v936 = vand.u32 %v935, 65535
      %v937 = vshra.s32 %v935, 16
      %v938 = vcvt.s32.f32 %v936
      %v939 = vcvt.s32.f32 %v937
      %940 = vmin.xlane.f32.xlu0 %v939
      %v941 = vpop.xlane.xlu0 %940
      %vm942 = vcmp.eq.f32.partialorder %v939, %v941
      %v943 = vsel %vm942, %v938, inf
      %944 = vmin.xlane.f32.xlu0 %v943
      %v945 = vpop.xlane.xlu0 %944
      %v946 = vcvt.f32.s32 %v945
      %v947 = vcvt.f32.s32 %v941
      %v948 = vshll.u32 %v947, 16
      %v949 = vadd.s32 %v948, %v946
      %vm950 = vcmp.lt.s32.totalorder %v890, %v891
      %v951 = vsel %vm950, %v890, %v891
      %v952 = vand.u32 %v951, 65535
      %v953 = vshra.s32 %v951, 16
      %v954 = vcvt.s32.f32 %v952
      %v955 = vcvt.s32.f32 %v953
      %956 = vmin.xlane.f32.xlu0 %v955
      %v957 = vpop.xlane.xlu0 %956
      %vm958 = vcmp.eq.f32.partialorder %v955, %v957
      %v959 = vsel %vm958, %v954, inf
      %960 = vmin.xlane.f32.xlu0 %v959
      %v961 = vpop.xlane.xlu0 %960
      %v962 = vcvt.f32.s32 %v961
      %v963 = vcvt.f32.s32 %v957
      %v964 = vshll.u32 %v963, 16
      %v965 = vadd.s32 %v964, %v962
      %vm966 = vcmp.lt.s32.totalorder %v892, %v893
      %v967 = vsel %vm966, %v892, %v893
      %v968 = vand.u32 %v967, 65535
      %v969 = vshra.s32 %v967, 16
      %v970 = vcvt.s32.f32 %v968
      %v971 = vcvt.s32.f32 %v969
      %972 = vmin.xlane.f32.xlu0 %v971
      %v973 = vpop.xlane.xlu0 %972
      %vm974 = vcmp.eq.f32.partialorder %v971, %v973
      %v975 = vsel %vm974, %v970, inf
      %976 = vmin.xlane.f32.xlu0 %v975
      %v977 = vpop.xlane.xlu0 %976
      %v978 = vcvt.f32.s32 %v977
      %v979 = vcvt.f32.s32 %v973
      %v980 = vshll.u32 %v979, 16
      %v981 = vadd.s32 %v980, %v978
      %vm982 = vcmp.lt.s32.totalorder %v894, %v895
      %v983 = vsel %vm982, %v894, %v895
      %v984 = vand.u32 %v983, 65535
      %v985 = vshra.s32 %v983, 16
      %v986 = vcvt.s32.f32 %v984
      %v987 = vcvt.s32.f32 %v985
      %988 = vmin.xlane.f32.xlu0 %v987
      %v989 = vpop.xlane.xlu0 %988
      %vm990 = vcmp.eq.f32.partialorder %v987, %v989
      %v991 = vsel %vm990, %v986, inf
      %992 = vmin.xlane.f32.xlu0 %v991
      %v993 = vpop.xlane.xlu0 %992
      %v994 = vcvt.f32.s32 %v993
      %v995 = vcvt.f32.s32 %v989
      %v996 = vshll.u32 %v995, 16
      %v997 = vadd.s32 %v996, %v994
      %vm998 = vcmp.lt.s32.totalorder %v896, %v897
      %v999 = vsel %vm998, %v896, %v897
      %v1000 = vand.u32 %v999, 65535
      %v1001 = vshra.s32 %v999, 16
      %v1002 = vcvt.s32.f32 %v1000
      %v1003 = vcvt.s32.f32 %v1001
      %1004 = vmin.xlane.f32.xlu0 %v1003
      %v1005 = vpop.xlane.xlu0 %1004
      %vm1006 = vcmp.eq.f32.partialorder %v1003, %v1005
      %v1007 = vsel %vm1006, %v1002, inf
      %1008 = vmin.xlane.f32.xlu0 %v1007
      %v1009 = vpop.xlane.xlu0 %1008
      %v1010 = vcvt.f32.s32 %v1009
      %v1011 = vcvt.f32.s32 %v1005
      %v1012 = vshll.u32 %v1011, 16
      %v1013 = vadd.s32 %v1012, %v1010
      %vm1014 = vcmp.lt.s32.totalorder %v898, %v899
      %v1015 = vsel %vm1014, %v898, %v899
      %v1016 = vand.u32 %v1015, 65535
      %v1017 = vshra.s32 %v1015, 16
      %v1018 = vcvt.s32.f32 %v1016
      %v1019 = vcvt.s32.f32 %v1017
      %1020 = vmin.xlane.f32.xlu0 %v1019
      %v1021 = vpop.xlane.xlu0 %1020
      %vm1022 = vcmp.eq.f32.partialorder %v1019, %v1021
      %v1023 = vsel %vm1022, %v1018, inf
      %1024 = vmin.xlane.f32.xlu0 %v1023
      %v1025 = vpop.xlane.xlu0 %1024
      %v1026 = vcvt.f32.s32 %v1025
      %v1027 = vcvt.f32.s32 %v1021
      %v1028 = vshll.u32 %v1027, 16
      %v1029 = vadd.s32 %v1028, %v1026
      %vm1030 = vcmp.lt.s32.totalorder %v900, %v901
      %v1031 = vsel %vm1030, %v900, %v901
      %v1032 = vand.u32 %v1031, 65535
      %v1033 = vshra.s32 %v1031, 16
      %v1034 = vcvt.s32.f32 %v1032
      %v1035 = vcvt.s32.f32 %v1033
      %1036 = vmin.xlane.f32.xlu0 %v1035
      %v1037 = vpop.xlane.xlu0 %1036
      %vm1038 = vcmp.eq.f32.partialorder %v1035, %v1037
      %v1039 = vsel %vm1038, %v1034, inf
      %1040 = vmin.xlane.f32.xlu0 %v1039
      %v1041 = vpop.xlane.xlu0 %1040
      %v1042 = vcvt.f32.s32 %v1041
      %v1043 = vcvt.f32.s32 %v1037
      %v1044 = vshll.u32 %v1043, 16
      %v1045 = vadd.s32 %v1044, %v1042
      %vm1046 = vcmp.lt.s32.totalorder %v902, %v903
      %v1047 = vsel %vm1046, %v902, %v903
      %v1048 = vand.u32 %v1047, 65535
      %v1049 = vshra.s32 %v1047, 16
      %v1050 = vcvt.s32.f32 %v1048
      %v1051 = vcvt.s32.f32 %v1049
      %1052 = vmin.xlane.f32.xlu0 %v1051
      %v1053 = vpop.xlane.xlu0 %1052
      %vm1054 = vcmp.eq.f32.partialorder %v1051, %v1053
      %v1055 = vsel %vm1054, %v1050, inf
      %1056 = vmin.xlane.f32.xlu0 %v1055
      %v1057 = vpop.xlane.xlu0 %1056
      %v1058 = vcvt.f32.s32 %v1057
      %v1059 = vcvt.f32.s32 %v1053
      %v1060 = vshll.u32 %v1059, 16
      %v1061 = vadd.s32 %v1060, %v1058
      %vm1062 = vcmp.lt.s32.totalorder %v904, %v905
      %v1063 = vsel %vm1062, %v904, %v905
      %v1064 = vand.u32 %v1063, 65535
      %v1065 = vshra.s32 %v1063, 16
      %v1066 = vcvt.s32.f32 %v1064
      %v1067 = vcvt.s32.f32 %v1065
      %1068 = vmin.xlane.f32.xlu0 %v1067
      %v1069 = vpop.xlane.xlu0 %1068
      %vm1070 = vcmp.eq.f32.partialorder %v1067, %v1069
      %v1071 = vsel %vm1070, %v1066, inf
      %1072 = vmin.xlane.f32.xlu0 %v1071
      %v1073 = vpop.xlane.xlu0 %1072
      %v1074 = vcvt.f32.s32 %v1073
      %v1075 = vcvt.f32.s32 %v1069
      %v1076 = vshll.u32 %v1075, 16
      %v1077 = vadd.s32 %v1076, %v1074
      %vm1078 = vcmp.lt.s32.totalorder %v906, %v907
      %v1079 = vsel %vm1078, %v906, %v907
      %v1080 = vand.u32 %v1079, 65535
      %v1081 = vshra.s32 %v1079, 16
      %v1082 = vcvt.s32.f32 %v1080
      %v1083 = vcvt.s32.f32 %v1081
      %1084 = vmin.xlane.f32.xlu0 %v1083
      %v1085 = vpop.xlane.xlu0 %1084
      %vm1086 = vcmp.eq.f32.partialorder %v1083, %v1085
      %v1087 = vsel %vm1086, %v1082, inf
      %1088 = vmin.xlane.f32.xlu0 %v1087
      %v1089 = vpop.xlane.xlu0 %1088
      %v1090 = vcvt.f32.s32 %v1089
      %v1091 = vcvt.f32.s32 %v1085
      %v1092 = vshll.u32 %v1091, 16
      %v1093 = vadd.s32 %v1092, %v1090
      %vm1094 = vcmp.lt.s32.totalorder %v908, %v909
      %v1095 = vsel %vm1094, %v908, %v909
      %v1096 = vand.u32 %v1095, 65535
      %v1097 = vshra.s32 %v1095, 16
      %v1098 = vcvt.s32.f32 %v1096
      %v1099 = vcvt.s32.f32 %v1097
      %1100 = vmin.xlane.f32.xlu0 %v1099
      %v1101 = vpop.xlane.xlu0 %1100
      %vm1102 = vcmp.eq.f32.partialorder %v1099, %v1101
      %v1103 = vsel %vm1102, %v1098, inf
      %1104 = vmin.xlane.f32.xlu0 %v1103
      %v1105 = vpop.xlane.xlu0 %1104
      %v1106 = vcvt.f32.s32 %v1105
      %v1107 = vcvt.f32.s32 %v1101
      %v1108 = vshll.u32 %v1107, 16
      %v1109 = vadd.s32 %v1108, %v1106
      %vm1110 = vcmp.lt.s32.totalorder %v910, %v911
      %v1111 = vsel %vm1110, %v910, %v911
      %v1112 = vand.u32 %v1111, 65535
      %v1113 = vshra.s32 %v1111, 16
      %v1114 = vcvt.s32.f32 %v1112
      %v1115 = vcvt.s32.f32 %v1113
      %1116 = vmin.xlane.f32.xlu0 %v1115
      %v1117 = vpop.xlane.xlu0 %1116
      %vm1118 = vcmp.eq.f32.partialorder %v1115, %v1117
      %v1119 = vsel %vm1118, %v1114, inf
      %1120 = vmin.xlane.f32.xlu0 %v1119
      %v1121 = vpop.xlane.xlu0 %1120
      %v1122 = vcvt.f32.s32 %v1121
      %v1123 = vcvt.f32.s32 %v1117
      %v1124 = vshll.u32 %v1123, 16
      %v1125 = vadd.s32 %v1124, %v1122
      %vm1126 = vcmp.lt.s32.totalorder %v912, %v913
      %v1127 = vsel %vm1126, %v912, %v913
      %v1128 = vand.u32 %v1127, 65535
      %v1129 = vshra.s32 %v1127, 16
      %v1130 = vcvt.s32.f32 %v1128
      %v1131 = vcvt.s32.f32 %v1129
      %1132 = vmin.xlane.f32.xlu0 %v1131
      %v1133 = vpop.xlane.xlu0 %1132
      %vm1134 = vcmp.eq.f32.partialorder %v1131, %v1133
      %v1135 = vsel %vm1134, %v1130, inf
      %1136 = vmin.xlane.f32.xlu0 %v1135
      %v1137 = vpop.xlane.xlu0 %1136
      %v1138 = vcvt.f32.s32 %v1137
      %v1139 = vcvt.f32.s32 %v1133
      %v1140 = vshll.u32 %v1139, 16
      %v1141 = vadd.s32 %v1140, %v1138
      %vm1142 = vcmp.lt.s32.totalorder %v914, %v915
      %v1143 = vsel %vm1142, %v914, %v915
      %v1144 = vand.u32 %v1143, 65535
      %v1145 = vshra.s32 %v1143, 16
      %v1146 = vcvt.s32.f32 %v1144
      %v1147 = vcvt.s32.f32 %v1145
      %1148 = vmin.xlane.f32.xlu0 %v1147
      %v1149 = vpop.xlane.xlu0 %1148
      %vm1150 = vcmp.eq.f32.partialorder %v1147, %v1149
      %v1151 = vsel %vm1150, %v1146, inf
      %1152 = vmin.xlane.f32.xlu0 %v1151
      %v1153 = vpop.xlane.xlu0 %1152
      %v1154 = vcvt.f32.s32 %v1153
      %v1155 = vcvt.f32.s32 %v1149
      %v1156 = vshll.u32 %v1155, 16
      %v1157 = vadd.s32 %v1156, %v1154
      %vm1158 = vcmp.lt.s32.totalorder %v916, %v917
      %v1159 = vsel %vm1158, %v916, %v917
      %v1160 = vand.u32 %v1159, 65535
      %v1161 = vshra.s32 %v1159, 16
      %v1162 = vcvt.s32.f32 %v1160
      %v1163 = vcvt.s32.f32 %v1161
      %1164 = vmin.xlane.f32.xlu0 %v1163
      %v1165 = vpop.xlane.xlu0 %1164
      %vm1166 = vcmp.eq.f32.partialorder %v1163, %v1165
      %v1167 = vsel %vm1166, %v1162, inf
      %1168 = vmin.xlane.f32.xlu0 %v1167
      %v1169 = vpop.xlane.xlu0 %1168
      %v1170 = vcvt.f32.s32 %v1169
      %v1171 = vcvt.f32.s32 %v1165
      %v1172 = vshll.u32 %v1171, 16
      %v1173 = vadd.s32 %v1172, %v1170
      %v1174 = vand.u32 %v933, 255
      %v1175 = vand.u32 %v949, 255
      %v1176 = vand.u32 %v965, 255
      %v1177 = vand.u32 %v981, 255
      %v1178 = vand.u32 %v997, 255
      %v1179 = vand.u32 %v1013, 255
      %v1180 = vand.u32 %v1029, 255
      %v1181 = vand.u32 %v1045, 255
      %v1182 = vand.u32 %v1061, 255
      %v1183 = vand.u32 %v1077, 255
      %v1184 = vand.u32 %v1093, 255
      %v1185 = vand.u32 %v1109, 255
      %v1186 = vand.u32 %v1125, 255
      %v1187 = vand.u32 %v1141, 255
      %v1188 = vand.u32 %v1157, 255
      %v1189 = vand.u32 %v1173, 255
      %vm1190 = vcmask 7168
      %1191 = vst.msk [vmem:[%s245] sm:$0xff] %vm1190, %v1174
      %1192 = vst.msk [vmem:[%s245 + $0x8] sm:$0xff] %vm1190, %v1175
      %1193 = vst.msk [vmem:[%s245 + $0x10] sm:$0xff] %vm1190, %v1176
      %1194 = vst.msk [vmem:[%s245 + $0x18] sm:$0xff] %vm1190, %v1177
      %1195 = vst.msk [vmem:[%s245 + $0x20] sm:$0xff] %vm1190, %v1178
      %1196 = vst.msk [vmem:[%s245 + $0x28] sm:$0xff] %vm1190, %v1179
      %1197 = vst.msk [vmem:[%s245 + $0x30] sm:$0xff] %vm1190, %v1180
      %1198 = vst.msk [vmem:[%s245 + $0x38] sm:$0xff] %vm1190, %v1181
      %1199 = vst.msk [vmem:[%s245 + $0x40] sm:$0xff] %vm1190, %v1182
      %1200 = vst.msk [vmem:[%s245 + $0x48] sm:$0xff] %vm1190, %v1183
      %1201 = vst.msk [vmem:[%s245 + $0x50] sm:$0xff] %vm1190, %v1184
      %1202 = vst.msk [vmem:[%s245 + $0x58] sm:$0xff] %vm1190, %v1185
      %1203 = vst.msk [vmem:[%s245 + $0x60] sm:$0xff] %vm1190, %v1186
      %1204 = vst.msk [vmem:[%s245 + $0x68] sm:$0xff] %vm1190, %v1187
      %1205 = vst.msk [vmem:[%s245 + $0x70] sm:$0xff] %vm1190, %v1188
      %1206 = vst.msk [vmem:[%s245 + $0x78] sm:$0xff] %vm1190, %v1189
      %vm1207 = vcmp.eq.s32.totalorder %v886, %v933
      %vm1208 = vcmp.eq.s32.totalorder %v887, %v933
      %vm1209 = vcmp.eq.s32.totalorder %v888, %v949
      %vm1210 = vcmp.eq.s32.totalorder %v889, %v949
      %vm1211 = vcmp.eq.s32.totalorder %v890, %v965
      %vm1212 = vcmp.eq.s32.totalorder %v891, %v965
      %vm1213 = vcmp.eq.s32.totalorder %v892, %v981
      %vm1214 = vcmp.eq.s32.totalorder %v893, %v981
      %vm1215 = vcmp.eq.s32.totalorder %v894, %v997
      %vm1216 = vcmp.eq.s32.totalorder %v895, %v997
      %vm1217 = vcmp.eq.s32.totalorder %v896, %v1013
      %vm1218 = vcmp.eq.s32.totalorder %v897, %v1013
      %vm1219 = vcmp.eq.s32.totalorder %v898, %v1029
      %vm1220 = vcmp.eq.s32.totalorder %v899, %v1029
      %vm1221 = vcmp.eq.s32.totalorder %v900, %v1045
      %vm1222 = vcmp.eq.s32.totalorder %v901, %v1045
      %vm1223 = vcmp.eq.s32.totalorder %v902, %v1061
      %vm1224 = vcmp.eq.s32.totalorder %v903, %v1061
      %vm1225 = vcmp.eq.s32.totalorder %v904, %v1077
      %vm1226 = vcmp.eq.s32.totalorder %v905, %v1077
      %vm1227 = vcmp.eq.s32.totalorder %v906, %v1093
      %vm1228 = vcmp.eq.s32.totalorder %v907, %v1093
      %vm1229 = vcmp.eq.s32.totalorder %v908, %v1109
      %vm1230 = vcmp.eq.s32.totalorder %v909, %v1109
      %vm1231 = vcmp.eq.s32.totalorder %v910, %v1125
      %vm1232 = vcmp.eq.s32.totalorder %v911, %v1125
      %vm1233 = vcmp.eq.s32.totalorder %v912, %v1141
      %vm1234 = vcmp.eq.s32.totalorder %v913, %v1141
      %vm1235 = vcmp.eq.s32.totalorder %v914, %v1157
      %vm1236 = vcmp.eq.s32.totalorder %v915, %v1157
      %vm1237 = vcmp.eq.s32.totalorder %v916, %v1173
      %vm1238 = vcmp.eq.s32.totalorder %v917, %v1173
      %v1239 = vsel %vm1207, 2147483647, %v886
      %v1240 = vsel %vm1208, 2147483647, %v887
      %v1241 = vsel %vm1209, 2147483647, %v888
      %v1242 = vsel %vm1210, 2147483647, %v889
      %v1243 = vsel %vm1211, 2147483647, %v890
      %v1244 = vsel %vm1212, 2147483647, %v891
      %v1245 = vsel %vm1213, 2147483647, %v892
      %v1246 = vsel %vm1214, 2147483647, %v893
      %v1247 = vsel %vm1215, 2147483647, %v894
      %v1248 = vsel %vm1216, 2147483647, %v895
      %v1249 = vsel %vm1217, 2147483647, %v896
      %v1250 = vsel %vm1218, 2147483647, %v897
      %v1251 = vsel %vm1219, 2147483647, %v898
      %v1252 = vsel %vm1220, 2147483647, %v899
      %v1253 = vsel %vm1221, 2147483647, %v900
      %v1254 = vsel %vm1222, 2147483647, %v901
      %v1255 = vsel %vm1223, 2147483647, %v902
      %v1256 = vsel %vm1224, 2147483647, %v903
      %v1257 = vsel %vm1225, 2147483647, %v904
      %v1258 = vsel %vm1226, 2147483647, %v905
      %v1259 = vsel %vm1227, 2147483647, %v906
      %v1260 = vsel %vm1228, 2147483647, %v907
      %v1261 = vsel %vm1229, 2147483647, %v908
      %v1262 = vsel %vm1230, 2147483647, %v909
      %v1263 = vsel %vm1231, 2147483647, %v910
      %v1264 = vsel %vm1232, 2147483647, %v911
      %v1265 = vsel %vm1233, 2147483647, %v912
      %v1266 = vsel %vm1234, 2147483647, %v913
      %v1267 = vsel %vm1235, 2147483647, %v914
      %v1268 = vsel %vm1236, 2147483647, %v915
      %v1269 = vsel %vm1237, 2147483647, %v916
      %v1270 = vsel %vm1238, 2147483647, %v917
      %vm1271 = vcmp.lt.s32.totalorder %v1239, %v1240
      %v1272 = vsel %vm1271, %v1239, %v1240
      %v1273 = vand.u32 %v1272, 65535
      %v1274 = vshra.s32 %v1272, 16
      %v1275 = vcvt.s32.f32 %v1273
      %v1276 = vcvt.s32.f32 %v1274
      %1277 = vmin.xlane.f32.xlu0 %v1276
      %v1278 = vpop.xlane.xlu0 %1277
      %vm1279 = vcmp.eq.f32.partialorder %v1276, %v1278
      %v1280 = vsel %vm1279, %v1275, inf
      %1281 = vmin.xlane.f32.xlu0 %v1280
      %v1282 = vpop.xlane.xlu0 %1281
      %v1283 = vcvt.f32.s32 %v1282
      %v1284 = vcvt.f32.s32 %v1278
      %v1285 = vshll.u32 %v1284, 16
      %v1286 = vadd.s32 %v1285, %v1283
      %vm1287 = vcmp.lt.s32.totalorder %v1241, %v1242
      %v1288 = vsel %vm1287, %v1241, %v1242
      %v1289 = vand.u32 %v1288, 65535
      %v1290 = vshra.s32 %v1288, 16
      %v1291 = vcvt.s32.f32 %v1289
      %v1292 = vcvt.s32.f32 %v1290
      %1293 = vmin.xlane.f32.xlu0 %v1292
      %v1294 = vpop.xlane.xlu0 %1293
      %vm1295 = vcmp.eq.f32.partialorder %v1292, %v1294
      %v1296 = vsel %vm1295, %v1291, inf
      %1297 = vmin.xlane.f32.xlu0 %v1296
      %v1298 = vpop.xlane.xlu0 %1297
      %v1299 = vcvt.f32.s32 %v1298
      %v1300 = vcvt.f32.s32 %v1294
      %v1301 = vshll.u32 %v1300, 16
      %v1302 = vadd.s32 %v1301, %v1299
      %vm1303 = vcmp.lt.s32.totalorder %v1243, %v1244
      %v1304 = vsel %vm1303, %v1243, %v1244
      %v1305 = vand.u32 %v1304, 65535
      %v1306 = vshra.s32 %v1304, 16
      %v1307 = vcvt.s32.f32 %v1305
      %v1308 = vcvt.s32.f32 %v1306
      %1309 = vmin.xlane.f32.xlu0 %v1308
      %v1310 = vpop.xlane.xlu0 %1309
      %vm1311 = vcmp.eq.f32.partialorder %v1308, %v1310
      %v1312 = vsel %vm1311, %v1307, inf
      %1313 = vmin.xlane.f32.xlu0 %v1312
      %v1314 = vpop.xlane.xlu0 %1313
      %v1315 = vcvt.f32.s32 %v1314
      %v1316 = vcvt.f32.s32 %v1310
      %v1317 = vshll.u32 %v1316, 16
      %v1318 = vadd.s32 %v1317, %v1315
      %vm1319 = vcmp.lt.s32.totalorder %v1245, %v1246
      %v1320 = vsel %vm1319, %v1245, %v1246
      %v1321 = vand.u32 %v1320, 65535
      %v1322 = vshra.s32 %v1320, 16
      %v1323 = vcvt.s32.f32 %v1321
      %v1324 = vcvt.s32.f32 %v1322
      %1325 = vmin.xlane.f32.xlu0 %v1324
      %v1326 = vpop.xlane.xlu0 %1325
      %vm1327 = vcmp.eq.f32.partialorder %v1324, %v1326
      %v1328 = vsel %vm1327, %v1323, inf
      %1329 = vmin.xlane.f32.xlu0 %v1328
      %v1330 = vpop.xlane.xlu0 %1329
      %v1331 = vcvt.f32.s32 %v1330
      %v1332 = vcvt.f32.s32 %v1326
      %v1333 = vshll.u32 %v1332, 16
      %v1334 = vadd.s32 %v1333, %v1331
      %vm1335 = vcmp.lt.s32.totalorder %v1247, %v1248
      %v1336 = vsel %vm1335, %v1247, %v1248
      %v1337 = vand.u32 %v1336, 65535
      %v1338 = vshra.s32 %v1336, 16
      %v1339 = vcvt.s32.f32 %v1337
      %v1340 = vcvt.s32.f32 %v1338
      %1341 = vmin.xlane.f32.xlu0 %v1340
      %v1342 = vpop.xlane.xlu0 %1341
      %vm1343 = vcmp.eq.f32.partialorder %v1340, %v1342
      %v1344 = vsel %vm1343, %v1339, inf
      %1345 = vmin.xlane.f32.xlu0 %v1344
      %v1346 = vpop.xlane.xlu0 %1345
      %v1347 = vcvt.f32.s32 %v1346
      %v1348 = vcvt.f32.s32 %v1342
      %v1349 = vshll.u32 %v1348, 16
      %v1350 = vadd.s32 %v1349, %v1347
      %vm1351 = vcmp.lt.s32.totalorder %v1249, %v1250
      %v1352 = vsel %vm1351, %v1249, %v1250
      %v1353 = vand.u32 %v1352, 65535
      %v1354 = vshra.s32 %v1352, 16
      %v1355 = vcvt.s32.f32 %v1353
      %v1356 = vcvt.s32.f32 %v1354
      %1357 = vmin.xlane.f32.xlu0 %v1356
      %v1358 = vpop.xlane.xlu0 %1357
      %vm1359 = vcmp.eq.f32.partialorder %v1356, %v1358
      %v1360 = vsel %vm1359, %v1355, inf
      %1361 = vmin.xlane.f32.xlu0 %v1360
      %v1362 = vpop.xlane.xlu0 %1361
      %v1363 = vcvt.f32.s32 %v1362
      %v1364 = vcvt.f32.s32 %v1358
      %v1365 = vshll.u32 %v1364, 16
      %v1366 = vadd.s32 %v1365, %v1363
      %vm1367 = vcmp.lt.s32.totalorder %v1251, %v1252
      %v1368 = vsel %vm1367, %v1251, %v1252
      %v1369 = vand.u32 %v1368, 65535
      %v1370 = vshra.s32 %v1368, 16
      %v1371 = vcvt.s32.f32 %v1369
      %v1372 = vcvt.s32.f32 %v1370
      %1373 = vmin.xlane.f32.xlu0 %v1372
      %v1374 = vpop.xlane.xlu0 %1373
      %vm1375 = vcmp.eq.f32.partialorder %v1372, %v1374
      %v1376 = vsel %vm1375, %v1371, inf
      %1377 = vmin.xlane.f32.xlu0 %v1376
      %v1378 = vpop.xlane.xlu0 %1377
      %v1379 = vcvt.f32.s32 %v1378
      %v1380 = vcvt.f32.s32 %v1374
      %v1381 = vshll.u32 %v1380, 16
      %v1382 = vadd.s32 %v1381, %v1379
      %vm1383 = vcmp.lt.s32.totalorder %v1253, %v1254
      %v1384 = vsel %vm1383, %v1253, %v1254
      %v1385 = vand.u32 %v1384, 65535
      %v1386 = vshra.s32 %v1384, 16
      %v1387 = vcvt.s32.f32 %v1385
      %v1388 = vcvt.s32.f32 %v1386
      %1389 = vmin.xlane.f32.xlu0 %v1388
      %v1390 = vpop.xlane.xlu0 %1389
      %vm1391 = vcmp.eq.f32.partialorder %v1388, %v1390
      %v1392 = vsel %vm1391, %v1387, inf
      %1393 = vmin.xlane.f32.xlu0 %v1392
      %v1394 = vpop.xlane.xlu0 %1393
      %v1395 = vcvt.f32.s32 %v1394
      %v1396 = vcvt.f32.s32 %v1390
      %v1397 = vshll.u32 %v1396, 16
      %v1398 = vadd.s32 %v1397, %v1395
      %vm1399 = vcmp.lt.s32.totalorder %v1255, %v1256
      %v1400 = vsel %vm1399, %v1255, %v1256
      %v1401 = vand.u32 %v1400, 65535
      %v1402 = vshra.s32 %v1400, 16
      %v1403 = vcvt.s32.f32 %v1401
      %v1404 = vcvt.s32.f32 %v1402
      %1405 = vmin.xlane.f32.xlu0 %v1404
      %v1406 = vpop.xlane.xlu0 %1405
      %vm1407 = vcmp.eq.f32.partialorder %v1404, %v1406
      %v1408 = vsel %vm1407, %v1403, inf
      %1409 = vmin.xlane.f32.xlu0 %v1408
      %v1410 = vpop.xlane.xlu0 %1409
      %v1411 = vcvt.f32.s32 %v1410
      %v1412 = vcvt.f32.s32 %v1406
      %v1413 = vshll.u32 %v1412, 16
      %v1414 = vadd.s32 %v1413, %v1411
      %vm1415 = vcmp.lt.s32.totalorder %v1257, %v1258
      %v1416 = vsel %vm1415, %v1257, %v1258
      %v1417 = vand.u32 %v1416, 65535
      %v1418 = vshra.s32 %v1416, 16
      %v1419 = vcvt.s32.f32 %v1417
      %v1420 = vcvt.s32.f32 %v1418
      %1421 = vmin.xlane.f32.xlu0 %v1420
      %v1422 = vpop.xlane.xlu0 %1421
      %vm1423 = vcmp.eq.f32.partialorder %v1420, %v1422
      %v1424 = vsel %vm1423, %v1419, inf
      %1425 = vmin.xlane.f32.xlu0 %v1424
      %v1426 = vpop.xlane.xlu0 %1425
      %v1427 = vcvt.f32.s32 %v1426
      %v1428 = vcvt.f32.s32 %v1422
      %v1429 = vshll.u32 %v1428, 16
      %v1430 = vadd.s32 %v1429, %v1427
      %vm1431 = vcmp.lt.s32.totalorder %v1259, %v1260
      %v1432 = vsel %vm1431, %v1259, %v1260
      %v1433 = vand.u32 %v1432, 65535
      %v1434 = vshra.s32 %v1432, 16
      %v1435 = vcvt.s32.f32 %v1433
      %v1436 = vcvt.s32.f32 %v1434
      %1437 = vmin.xlane.f32.xlu0 %v1436
      %v1438 = vpop.xlane.xlu0 %1437
      %vm1439 = vcmp.eq.f32.partialorder %v1436, %v1438
      %v1440 = vsel %vm1439, %v1435, inf
      %1441 = vmin.xlane.f32.xlu0 %v1440
      %v1442 = vpop.xlane.xlu0 %1441
      %v1443 = vcvt.f32.s32 %v1442
      %v1444 = vcvt.f32.s32 %v1438
      %v1445 = vshll.u32 %v1444, 16
      %v1446 = vadd.s32 %v1445, %v1443
      %vm1447 = vcmp.lt.s32.totalorder %v1261, %v1262
      %v1448 = vsel %vm1447, %v1261, %v1262
      %v1449 = vand.u32 %v1448, 65535
      %v1450 = vshra.s32 %v1448, 16
      %v1451 = vcvt.s32.f32 %v1449
      %v1452 = vcvt.s32.f32 %v1450
      %1453 = vmin.xlane.f32.xlu0 %v1452
      %v1454 = vpop.xlane.xlu0 %1453
      %vm1455 = vcmp.eq.f32.partialorder %v1452, %v1454
      %v1456 = vsel %vm1455, %v1451, inf
      %1457 = vmin.xlane.f32.xlu0 %v1456
      %v1458 = vpop.xlane.xlu0 %1457
      %v1459 = vcvt.f32.s32 %v1458
      %v1460 = vcvt.f32.s32 %v1454
      %v1461 = vshll.u32 %v1460, 16
      %v1462 = vadd.s32 %v1461, %v1459
      %vm1463 = vcmp.lt.s32.totalorder %v1263, %v1264
      %v1464 = vsel %vm1463, %v1263, %v1264
      %v1465 = vand.u32 %v1464, 65535
      %v1466 = vshra.s32 %v1464, 16
      %v1467 = vcvt.s32.f32 %v1465
      %v1468 = vcvt.s32.f32 %v1466
      %1469 = vmin.xlane.f32.xlu0 %v1468
      %v1470 = vpop.xlane.xlu0 %1469
      %vm1471 = vcmp.eq.f32.partialorder %v1468, %v1470
      %v1472 = vsel %vm1471, %v1467, inf
      %1473 = vmin.xlane.f32.xlu0 %v1472
      %v1474 = vpop.xlane.xlu0 %1473
      %v1475 = vcvt.f32.s32 %v1474
      %v1476 = vcvt.f32.s32 %v1470
      %v1477 = vshll.u32 %v1476, 16
      %v1478 = vadd.s32 %v1477, %v1475
      %vm1479 = vcmp.lt.s32.totalorder %v1265, %v1266
      %v1480 = vsel %vm1479, %v1265, %v1266
      %v1481 = vand.u32 %v1480, 65535
      %v1482 = vshra.s32 %v1480, 16
      %v1483 = vcvt.s32.f32 %v1481
      %v1484 = vcvt.s32.f32 %v1482
      %1485 = vmin.xlane.f32.xlu0 %v1484
      %v1486 = vpop.xlane.xlu0 %1485
      %vm1487 = vcmp.eq.f32.partialorder %v1484, %v1486
      %v1488 = vsel %vm1487, %v1483, inf
      %1489 = vmin.xlane.f32.xlu0 %v1488
      %v1490 = vpop.xlane.xlu0 %1489
      %v1491 = vcvt.f32.s32 %v1490
      %v1492 = vcvt.f32.s32 %v1486
      %v1493 = vshll.u32 %v1492, 16
      %v1494 = vadd.s32 %v1493, %v1491
      %vm1495 = vcmp.lt.s32.totalorder %v1267, %v1268
      %v1496 = vsel %vm1495, %v1267, %v1268
      %v1497 = vand.u32 %v1496, 65535
      %v1498 = vshra.s32 %v1496, 16
      %v1499 = vcvt.s32.f32 %v1497
      %v1500 = vcvt.s32.f32 %v1498
      %1501 = vmin.xlane.f32.xlu0 %v1500
      %v1502 = vpop.xlane.xlu0 %1501
      %vm1503 = vcmp.eq.f32.partialorder %v1500, %v1502
      %v1504 = vsel %vm1503, %v1499, inf
      %1505 = vmin.xlane.f32.xlu0 %v1504
      %v1506 = vpop.xlane.xlu0 %1505
      %v1507 = vcvt.f32.s32 %v1506
      %v1508 = vcvt.f32.s32 %v1502
      %v1509 = vshll.u32 %v1508, 16
      %v1510 = vadd.s32 %v1509, %v1507
      %vm1511 = vcmp.lt.s32.totalorder %v1269, %v1270
      %v1512 = vsel %vm1511, %v1269, %v1270
      %v1513 = vand.u32 %v1512, 65535
      %v1514 = vshra.s32 %v1512, 16
      %v1515 = vcvt.s32.f32 %v1513
      %v1516 = vcvt.s32.f32 %v1514
      %1517 = vmin.xlane.f32.xlu0 %v1516
      %v1518 = vpop.xlane.xlu0 %1517
      %vm1519 = vcmp.eq.f32.partialorder %v1516, %v1518
      %v1520 = vsel %vm1519, %v1515, inf
      %1521 = vmin.xlane.f32.xlu0 %v1520
      %v1522 = vpop.xlane.xlu0 %1521
      %v1523 = vcvt.f32.s32 %v1522
      %v1524 = vcvt.f32.s32 %v1518
      %v1525 = vshll.u32 %v1524, 16
      %v1526 = vadd.s32 %v1525, %v1523
      %v1527 = vand.u32 %v1286, 255
      %v1528 = vand.u32 %v1302, 255
      %v1529 = vand.u32 %v1318, 255
      %v1530 = vand.u32 %v1334, 255
      %v1531 = vand.u32 %v1350, 255
      %v1532 = vand.u32 %v1366, 255
      %v1533 = vand.u32 %v1382, 255
      %v1534 = vand.u32 %v1398, 255
      %v1535 = vand.u32 %v1414, 255
      %v1536 = vand.u32 %v1430, 255
      %v1537 = vand.u32 %v1446, 255
      %v1538 = vand.u32 %v1462, 255
      %v1539 = vand.u32 %v1478, 255
      %v1540 = vand.u32 %v1494, 255
      %v1541 = vand.u32 %v1510, 255
      %v1542 = vand.u32 %v1526, 255
      %vm1543 = vcmask 15368
      %1544 = vst.msk [vmem:[%s245] sm:$0xff] %vm1543, %v1527
      %1545 = vst.msk [vmem:[%s245 + $0x8] sm:$0xff] %vm1543, %v1528
      %1546 = vst.msk [vmem:[%s245 + $0x10] sm:$0xff] %vm1543, %v1529
      %1547 = vst.msk [vmem:[%s245 + $0x18] sm:$0xff] %vm1543, %v1530
      %1548 = vst.msk [vmem:[%s245 + $0x20] sm:$0xff] %vm1543, %v1531
      %1549 = vst.msk [vmem:[%s245 + $0x28] sm:$0xff] %vm1543, %v1532
      %1550 = vst.msk [vmem:[%s245 + $0x30] sm:$0xff] %vm1543, %v1533
      %1551 = vst.msk [vmem:[%s245 + $0x38] sm:$0xff] %vm1543, %v1534
      %1552 = vst.msk [vmem:[%s245 + $0x40] sm:$0xff] %vm1543, %v1535
      %1553 = vst.msk [vmem:[%s245 + $0x48] sm:$0xff] %vm1543, %v1536
      %1554 = vst.msk [vmem:[%s245 + $0x50] sm:$0xff] %vm1543, %v1537
      %1555 = vst.msk [vmem:[%s245 + $0x58] sm:$0xff] %vm1543, %v1538
      %1556 = vst.msk [vmem:[%s245 + $0x60] sm:$0xff] %vm1543, %v1539
      %1557 = vst.msk [vmem:[%s245 + $0x68] sm:$0xff] %vm1543, %v1540
      %1558 = vst.msk [vmem:[%s245 + $0x70] sm:$0xff] %vm1543, %v1541
      %1559 = vst.msk [vmem:[%s245 + $0x78] sm:$0xff] %vm1543, %v1542
      %vm1560 = vcmp.eq.s32.totalorder %v1239, %v1286
      %vm1561 = vcmp.eq.s32.totalorder %v1240, %v1286
      %vm1562 = vcmp.eq.s32.totalorder %v1241, %v1302
      %vm1563 = vcmp.eq.s32.totalorder %v1242, %v1302
      %vm1564 = vcmp.eq.s32.totalorder %v1243, %v1318
      %vm1565 = vcmp.eq.s32.totalorder %v1244, %v1318
      %vm1566 = vcmp.eq.s32.totalorder %v1245, %v1334
      %vm1567 = vcmp.eq.s32.totalorder %v1246, %v1334
      %vm1568 = vcmp.eq.s32.totalorder %v1247, %v1350
      %vm1569 = vcmp.eq.s32.totalorder %v1248, %v1350
      %vm1570 = vcmp.eq.s32.totalorder %v1249, %v1366
      %vm1571 = vcmp.eq.s32.totalorder %v1250, %v1366
      %vm1572 = vcmp.eq.s32.totalorder %v1251, %v1382
      %vm1573 = vcmp.eq.s32.totalorder %v1252, %v1382
      %vm1574 = vcmp.eq.s32.totalorder %v1253, %v1398
      %vm1575 = vcmp.eq.s32.totalorder %v1254, %v1398
      %vm1576 = vcmp.eq.s32.totalorder %v1255, %v1414
      %vm1577 = vcmp.eq.s32.totalorder %v1256, %v1414
      %vm1578 = vcmp.eq.s32.totalorder %v1257, %v1430
      %vm1579 = vcmp.eq.s32.totalorder %v1258, %v1430
      %vm1580 = vcmp.eq.s32.totalorder %v1259, %v1446
      %vm1581 = vcmp.eq.s32.totalorder %v1260, %v1446
      %vm1582 = vcmp.eq.s32.totalorder %v1261, %v1462
      %vm1583 = vcmp.eq.s32.totalorder %v1262, %v1462
      %vm1584 = vcmp.eq.s32.totalorder %v1263, %v1478
      %vm1585 = vcmp.eq.s32.totalorder %v1264, %v1478
      %vm1586 = vcmp.eq.s32.totalorder %v1265, %v1494
      %vm1587 = vcmp.eq.s32.totalorder %v1266, %v1494
      %vm1588 = vcmp.eq.s32.totalorder %v1267, %v1510
      %vm1589 = vcmp.eq.s32.totalorder %v1268, %v1510
      %vm1590 = vcmp.eq.s32.totalorder %v1269, %v1526
      %vm1591 = vcmp.eq.s32.totalorder %v1270, %v1526
      %v1592 = vsel %vm1560, 2147483647, %v1239
      %v1593 = vsel %vm1561, 2147483647, %v1240
      %v1594 = vsel %vm1562, 2147483647, %v1241
      %v1595 = vsel %vm1563, 2147483647, %v1242
      %v1596 = vsel %vm1564, 2147483647, %v1243
      %v1597 = vsel %vm1565, 2147483647, %v1244
      %v1598 = vsel %vm1566, 2147483647, %v1245
      %v1599 = vsel %vm1567, 2147483647, %v1246
      %v1600 = vsel %vm1568, 2147483647, %v1247
      %v1601 = vsel %vm1569, 2147483647, %v1248
      %v1602 = vsel %vm1570, 2147483647, %v1249
      %v1603 = vsel %vm1571, 2147483647, %v1250
      %v1604 = vsel %vm1572, 2147483647, %v1251
      %v1605 = vsel %vm1573, 2147483647, %v1252
      %v1606 = vsel %vm1574, 2147483647, %v1253
      %v1607 = vsel %vm1575, 2147483647, %v1254
      %v1608 = vsel %vm1576, 2147483647, %v1255
      %v1609 = vsel %vm1577, 2147483647, %v1256
      %v1610 = vsel %vm1578, 2147483647, %v1257
      %v1611 = vsel %vm1579, 2147483647, %v1258
      %v1612 = vsel %vm1580, 2147483647, %v1259
      %v1613 = vsel %vm1581, 2147483647, %v1260
      %v1614 = vsel %vm1582, 2147483647, %v1261
      %v1615 = vsel %vm1583, 2147483647, %v1262
      %v1616 = vsel %vm1584, 2147483647, %v1263
      %v1617 = vsel %vm1585, 2147483647, %v1264
      %v1618 = vsel %vm1586, 2147483647, %v1265
      %v1619 = vsel %vm1587, 2147483647, %v1266
      %v1620 = vsel %vm1588, 2147483647, %v1267
      %v1621 = vsel %vm1589, 2147483647, %v1268
      %v1622 = vsel %vm1590, 2147483647, %v1269
      %v1623 = vsel %vm1591, 2147483647, %v1270
      %vm1624 = vcmp.lt.s32.totalorder %v1592, %v1593
      %v1625 = vsel %vm1624, %v1592, %v1593
      %v1626 = vand.u32 %v1625, 65535
      %v1627 = vshra.s32 %v1625, 16
      %v1628 = vcvt.s32.f32 %v1626
      %v1629 = vcvt.s32.f32 %v1627
      %1630 = vmin.xlane.f32.xlu0 %v1629
      %v1631 = vpop.xlane.xlu0 %1630
      %vm1632 = vcmp.eq.f32.partialorder %v1629, %v1631
      %v1633 = vsel %vm1632, %v1628, inf
      %1634 = vmin.xlane.f32.xlu0 %v1633
      %v1635 = vpop.xlane.xlu0 %1634
      %v1636 = vcvt.f32.s32 %v1635
      %v1637 = vcvt.f32.s32 %v1631
      %v1638 = vshll.u32 %v1637, 16
      %v1639 = vadd.s32 %v1638, %v1636
      %vm1640 = vcmp.lt.s32.totalorder %v1594, %v1595
      %v1641 = vsel %vm1640, %v1594, %v1595
      %v1642 = vand.u32 %v1641, 65535
      %v1643 = vshra.s32 %v1641, 16
      %v1644 = vcvt.s32.f32 %v1642
      %v1645 = vcvt.s32.f32 %v1643
      %1646 = vmin.xlane.f32.xlu0 %v1645
      %v1647 = vpop.xlane.xlu0 %1646
      %vm1648 = vcmp.eq.f32.partialorder %v1645, %v1647
      %v1649 = vsel %vm1648, %v1644, inf
      %1650 = vmin.xlane.f32.xlu0 %v1649
      %v1651 = vpop.xlane.xlu0 %1650
      %v1652 = vcvt.f32.s32 %v1651
      %v1653 = vcvt.f32.s32 %v1647
      %v1654 = vshll.u32 %v1653, 16
      %v1655 = vadd.s32 %v1654, %v1652
      %vm1656 = vcmp.lt.s32.totalorder %v1596, %v1597
      %v1657 = vsel %vm1656, %v1596, %v1597
      %v1658 = vand.u32 %v1657, 65535
      %v1659 = vshra.s32 %v1657, 16
      %v1660 = vcvt.s32.f32 %v1658
      %v1661 = vcvt.s32.f32 %v1659
      %1662 = vmin.xlane.f32.xlu0 %v1661
      %v1663 = vpop.xlane.xlu0 %1662
      %vm1664 = vcmp.eq.f32.partialorder %v1661, %v1663
      %v1665 = vsel %vm1664, %v1660, inf
      %1666 = vmin.xlane.f32.xlu0 %v1665
      %v1667 = vpop.xlane.xlu0 %1666
      %v1668 = vcvt.f32.s32 %v1667
      %v1669 = vcvt.f32.s32 %v1663
      %v1670 = vshll.u32 %v1669, 16
      %v1671 = vadd.s32 %v1670, %v1668
      %vm1672 = vcmp.lt.s32.totalorder %v1598, %v1599
      %v1673 = vsel %vm1672, %v1598, %v1599
      %v1674 = vand.u32 %v1673, 65535
      %v1675 = vshra.s32 %v1673, 16
      %v1676 = vcvt.s32.f32 %v1674
      %v1677 = vcvt.s32.f32 %v1675
      %1678 = vmin.xlane.f32.xlu0 %v1677
      %v1679 = vpop.xlane.xlu0 %1678
      %vm1680 = vcmp.eq.f32.partialorder %v1677, %v1679
      %v1681 = vsel %vm1680, %v1676, inf
      %1682 = vmin.xlane.f32.xlu0 %v1681
      %v1683 = vpop.xlane.xlu0 %1682
      %v1684 = vcvt.f32.s32 %v1683
      %v1685 = vcvt.f32.s32 %v1679
      %v1686 = vshll.u32 %v1685, 16
      %v1687 = vadd.s32 %v1686, %v1684
      %vm1688 = vcmp.lt.s32.totalorder %v1600, %v1601
      %v1689 = vsel %vm1688, %v1600, %v1601
      %v1690 = vand.u32 %v1689, 65535
      %v1691 = vshra.s32 %v1689, 16
      %v1692 = vcvt.s32.f32 %v1690
      %v1693 = vcvt.s32.f32 %v1691
      %1694 = vmin.xlane.f32.xlu0 %v1693
      %v1695 = vpop.xlane.xlu0 %1694
      %vm1696 = vcmp.eq.f32.partialorder %v1693, %v1695
      %v1697 = vsel %vm1696, %v1692, inf
      %1698 = vmin.xlane.f32.xlu0 %v1697
      %v1699 = vpop.xlane.xlu0 %1698
      %v1700 = vcvt.f32.s32 %v1699
      %v1701 = vcvt.f32.s32 %v1695
      %v1702 = vshll.u32 %v1701, 16
      %v1703 = vadd.s32 %v1702, %v1700
      %vm1704 = vcmp.lt.s32.totalorder %v1602, %v1603
      %v1705 = vsel %vm1704, %v1602, %v1603
      %v1706 = vand.u32 %v1705, 65535
      %v1707 = vshra.s32 %v1705, 16
      %v1708 = vcvt.s32.f32 %v1706
      %v1709 = vcvt.s32.f32 %v1707
      %1710 = vmin.xlane.f32.xlu0 %v1709
      %v1711 = vpop.xlane.xlu0 %1710
      %vm1712 = vcmp.eq.f32.partialorder %v1709, %v1711
      %v1713 = vsel %vm1712, %v1708, inf
      %1714 = vmin.xlane.f32.xlu0 %v1713
      %v1715 = vpop.xlane.xlu0 %1714
      %v1716 = vcvt.f32.s32 %v1715
      %v1717 = vcvt.f32.s32 %v1711
      %v1718 = vshll.u32 %v1717, 16
      %v1719 = vadd.s32 %v1718, %v1716
      %vm1720 = vcmp.lt.s32.totalorder %v1604, %v1605
      %v1721 = vsel %vm1720, %v1604, %v1605
      %v1722 = vand.u32 %v1721, 65535
      %v1723 = vshra.s32 %v1721, 16
      %v1724 = vcvt.s32.f32 %v1722
      %v1725 = vcvt.s32.f32 %v1723
      %1726 = vmin.xlane.f32.xlu0 %v1725
      %v1727 = vpop.xlane.xlu0 %1726
      %vm1728 = vcmp.eq.f32.partialorder %v1725, %v1727
      %v1729 = vsel %vm1728, %v1724, inf
      %1730 = vmin.xlane.f32.xlu0 %v1729
      %v1731 = vpop.xlane.xlu0 %1730
      %v1732 = vcvt.f32.s32 %v1731
      %v1733 = vcvt.f32.s32 %v1727
      %v1734 = vshll.u32 %v1733, 16
      %v1735 = vadd.s32 %v1734, %v1732
      %vm1736 = vcmp.lt.s32.totalorder %v1606, %v1607
      %v1737 = vsel %vm1736, %v1606, %v1607
      %v1738 = vand.u32 %v1737, 65535
      %v1739 = vshra.s32 %v1737, 16
      %v1740 = vcvt.s32.f32 %v1738
      %v1741 = vcvt.s32.f32 %v1739
      %1742 = vmin.xlane.f32.xlu0 %v1741
      %v1743 = vpop.xlane.xlu0 %1742
      %vm1744 = vcmp.eq.f32.partialorder %v1741, %v1743
      %v1745 = vsel %vm1744, %v1740, inf
      %1746 = vmin.xlane.f32.xlu0 %v1745
      %v1747 = vpop.xlane.xlu0 %1746
      %v1748 = vcvt.f32.s32 %v1747
      %v1749 = vcvt.f32.s32 %v1743
      %v1750 = vshll.u32 %v1749, 16
      %v1751 = vadd.s32 %v1750, %v1748
      %vm1752 = vcmp.lt.s32.totalorder %v1608, %v1609
      %v1753 = vsel %vm1752, %v1608, %v1609
      %v1754 = vand.u32 %v1753, 65535
      %v1755 = vshra.s32 %v1753, 16
      %v1756 = vcvt.s32.f32 %v1754
      %v1757 = vcvt.s32.f32 %v1755
      %1758 = vmin.xlane.f32.xlu0 %v1757
      %v1759 = vpop.xlane.xlu0 %1758
      %vm1760 = vcmp.eq.f32.partialorder %v1757, %v1759
      %v1761 = vsel %vm1760, %v1756, inf
      %1762 = vmin.xlane.f32.xlu0 %v1761
      %v1763 = vpop.xlane.xlu0 %1762
      %v1764 = vcvt.f32.s32 %v1763
      %v1765 = vcvt.f32.s32 %v1759
      %v1766 = vshll.u32 %v1765, 16
      %v1767 = vadd.s32 %v1766, %v1764
      %vm1768 = vcmp.lt.s32.totalorder %v1610, %v1611
      %v1769 = vsel %vm1768, %v1610, %v1611
      %v1770 = vand.u32 %v1769, 65535
      %v1771 = vshra.s32 %v1769, 16
      %v1772 = vcvt.s32.f32 %v1770
      %v1773 = vcvt.s32.f32 %v1771
      %1774 = vmin.xlane.f32.xlu0 %v1773
      %v1775 = vpop.xlane.xlu0 %1774
      %vm1776 = vcmp.eq.f32.partialorder %v1773, %v1775
      %v1777 = vsel %vm1776, %v1772, inf
      %1778 = vmin.xlane.f32.xlu0 %v1777
      %v1779 = vpop.xlane.xlu0 %1778
      %v1780 = vcvt.f32.s32 %v1779
      %v1781 = vcvt.f32.s32 %v1775
      %v1782 = vshll.u32 %v1781, 16
      %v1783 = vadd.s32 %v1782, %v1780
      %vm1784 = vcmp.lt.s32.totalorder %v1612, %v1613
      %v1785 = vsel %vm1784, %v1612, %v1613
      %v1786 = vand.u32 %v1785, 65535
      %v1787 = vshra.s32 %v1785, 16
      %v1788 = vcvt.s32.f32 %v1786
      %v1789 = vcvt.s32.f32 %v1787
      %1790 = vmin.xlane.f32.xlu0 %v1789
      %v1791 = vpop.xlane.xlu0 %1790
      %vm1792 = vcmp.eq.f32.partialorder %v1789, %v1791
      %v1793 = vsel %vm1792, %v1788, inf
      %1794 = vmin.xlane.f32.xlu0 %v1793
      %v1795 = vpop.xlane.xlu0 %1794
      %v1796 = vcvt.f32.s32 %v1795
      %v1797 = vcvt.f32.s32 %v1791
      %v1798 = vshll.u32 %v1797, 16
      %v1799 = vadd.s32 %v1798, %v1796
      %vm1800 = vcmp.lt.s32.totalorder %v1614, %v1615
      %v1801 = vsel %vm1800, %v1614, %v1615
      %v1802 = vand.u32 %v1801, 65535
      %v1803 = vshra.s32 %v1801, 16
      %v1804 = vcvt.s32.f32 %v1802
      %v1805 = vcvt.s32.f32 %v1803
      %1806 = vmin.xlane.f32.xlu0 %v1805
      %v1807 = vpop.xlane.xlu0 %1806
      %vm1808 = vcmp.eq.f32.partialorder %v1805, %v1807
      %v1809 = vsel %vm1808, %v1804, inf
      %1810 = vmin.xlane.f32.xlu0 %v1809
      %v1811 = vpop.xlane.xlu0 %1810
      %v1812 = vcvt.f32.s32 %v1811
      %v1813 = vcvt.f32.s32 %v1807
      %v1814 = vshll.u32 %v1813, 16
      %v1815 = vadd.s32 %v1814, %v1812
      %vm1816 = vcmp.lt.s32.totalorder %v1616, %v1617
      %v1817 = vsel %vm1816, %v1616, %v1617
      %v1818 = vand.u32 %v1817, 65535
      %v1819 = vshra.s32 %v1817, 16
      %v1820 = vcvt.s32.f32 %v1818
      %v1821 = vcvt.s32.f32 %v1819
      %1822 = vmin.xlane.f32.xlu0 %v1821
      %v1823 = vpop.xlane.xlu0 %1822
      %vm1824 = vcmp.eq.f32.partialorder %v1821, %v1823
      %v1825 = vsel %vm1824, %v1820, inf
      %1826 = vmin.xlane.f32.xlu0 %v1825
      %v1827 = vpop.xlane.xlu0 %1826
      %v1828 = vcvt.f32.s32 %v1827
      %v1829 = vcvt.f32.s32 %v1823
      %v1830 = vshll.u32 %v1829, 16
      %v1831 = vadd.s32 %v1830, %v1828
      %vm1832 = vcmp.lt.s32.totalorder %v1618, %v1619
      %v1833 = vsel %vm1832, %v1618, %v1619
      %v1834 = vand.u32 %v1833, 65535
      %v1835 = vshra.s32 %v1833, 16
      %v1836 = vcvt.s32.f32 %v1834
      %v1837 = vcvt.s32.f32 %v1835
      %1838 = vmin.xlane.f32.xlu0 %v1837
      %v1839 = vpop.xlane.xlu0 %1838
      %vm1840 = vcmp.eq.f32.partialorder %v1837, %v1839
      %v1841 = vsel %vm1840, %v1836, inf
      %1842 = vmin.xlane.f32.xlu0 %v1841
      %v1843 = vpop.xlane.xlu0 %1842
      %v1844 = vcvt.f32.s32 %v1843
      %v1845 = vcvt.f32.s32 %v1839
      %v1846 = vshll.u32 %v1845, 16
      %v1847 = vadd.s32 %v1846, %v1844
      %vm1848 = vcmp.lt.s32.totalorder %v1620, %v1621
      %v1849 = vsel %vm1848, %v1620, %v1621
      %v1850 = vand.u32 %v1849, 65535
      %v1851 = vshra.s32 %v1849, 16
      %v1852 = vcvt.s32.f32 %v1850
      %v1853 = vcvt.s32.f32 %v1851
      %1854 = vmin.xlane.f32.xlu0 %v1853
      %v1855 = vpop.xlane.xlu0 %1854
      %vm1856 = vcmp.eq.f32.partialorder %v1853, %v1855
      %v1857 = vsel %vm1856, %v1852, inf
      %1858 = vmin.xlane.f32.xlu0 %v1857
      %v1859 = vpop.xlane.xlu0 %1858
      %v1860 = vcvt.f32.s32 %v1859
      %v1861 = vcvt.f32.s32 %v1855
      %v1862 = vshll.u32 %v1861, 16
      %v1863 = vadd.s32 %v1862, %v1860
      %vm1864 = vcmp.lt.s32.totalorder %v1622, %v1623
      %v1865 = vsel %vm1864, %v1622, %v1623
      %v1866 = vand.u32 %v1865, 65535
      %v1867 = vshra.s32 %v1865, 16
      %v1868 = vcvt.s32.f32 %v1866
      %v1869 = vcvt.s32.f32 %v1867
      %1870 = vmin.xlane.f32.xlu0 %v1869
      %v1871 = vpop.xlane.xlu0 %1870
      %vm1872 = vcmp.eq.f32.partialorder %v1869, %v1871
      %v1873 = vsel %vm1872, %v1868, inf
      %1874 = vmin.xlane.f32.xlu0 %v1873
      %v1875 = vpop.xlane.xlu0 %1874
      %v1876 = vcvt.f32.s32 %v1875
      %v1877 = vcvt.f32.s32 %v1871
      %v1878 = vshll.u32 %v1877, 16
      %v1879 = vadd.s32 %v1878, %v1876
      %v1880 = vand.u32 %v1639, 255
      %v1881 = vand.u32 %v1655, 255
      %v1882 = vand.u32 %v1671, 255
      %v1883 = vand.u32 %v1687, 255
      %v1884 = vand.u32 %v1703, 255
      %v1885 = vand.u32 %v1719, 255
      %v1886 = vand.u32 %v1735, 255
      %v1887 = vand.u32 %v1751, 255
      %v1888 = vand.u32 %v1767, 255
      %v1889 = vand.u32 %v1783, 255
      %v1890 = vand.u32 %v1799, 255
      %v1891 = vand.u32 %v1815, 255
      %v1892 = vand.u32 %v1831, 255
      %v1893 = vand.u32 %v1847, 255
      %v1894 = vand.u32 %v1863, 255
      %v1895 = vand.u32 %v1879, 255
      %vm1896 = vcmask 23568
      %1897 = vst.msk [vmem:[%s245] sm:$0xff] %vm1896, %v1880
      %1898 = vst.msk [vmem:[%s245 + $0x8] sm:$0xff] %vm1896, %v1881
      %1899 = vst.msk [vmem:[%s245 + $0x10] sm:$0xff] %vm1896, %v1882
      %1900 = vst.msk [vmem:[%s245 + $0x18] sm:$0xff] %vm1896, %v1883
      %1901 = vst.msk [vmem:[%s245 + $0x20] sm:$0xff] %vm1896, %v1884
      %1902 = vst.msk [vmem:[%s245 + $0x28] sm:$0xff] %vm1896, %v1885
      %1903 = vst.msk [vmem:[%s245 + $0x30] sm:$0xff] %vm1896, %v1886
      %1904 = vst.msk [vmem:[%s245 + $0x38] sm:$0xff] %vm1896, %v1887
      %1905 = vst.msk [vmem:[%s245 + $0x40] sm:$0xff] %vm1896, %v1888
      %1906 = vst.msk [vmem:[%s245 + $0x48] sm:$0xff] %vm1896, %v1889
      %1907 = vst.msk [vmem:[%s245 + $0x50] sm:$0xff] %vm1896, %v1890
      %1908 = vst.msk [vmem:[%s245 + $0x58] sm:$0xff] %vm1896, %v1891
      %1909 = vst.msk [vmem:[%s245 + $0x60] sm:$0xff] %vm1896, %v1892
      %1910 = vst.msk [vmem:[%s245 + $0x68] sm:$0xff] %vm1896, %v1893
      %1911 = vst.msk [vmem:[%s245 + $0x70] sm:$0xff] %vm1896, %v1894
      %1912 = vst.msk [vmem:[%s245 + $0x78] sm:$0xff] %vm1896, %v1895
      %vm1913 = vcmp.eq.s32.totalorder %v1592, %v1639
      %vm1914 = vcmp.eq.s32.totalorder %v1593, %v1639
      %vm1915 = vcmp.eq.s32.totalorder %v1594, %v1655
      %vm1916 = vcmp.eq.s32.totalorder %v1595, %v1655
      %vm1917 = vcmp.eq.s32.totalorder %v1596, %v1671
      %vm1918 = vcmp.eq.s32.totalorder %v1597, %v1671
      %vm1919 = vcmp.eq.s32.totalorder %v1598, %v1687
      %vm1920 = vcmp.eq.s32.totalorder %v1599, %v1687
      %vm1921 = vcmp.eq.s32.totalorder %v1600, %v1703
      %vm1922 = vcmp.eq.s32.totalorder %v1601, %v1703
      %vm1923 = vcmp.eq.s32.totalorder %v1602, %v1719
      %vm1924 = vcmp.eq.s32.totalorder %v1603, %v1719
      %vm1925 = vcmp.eq.s32.totalorder %v1604, %v1735
      %vm1926 = vcmp.eq.s32.totalorder %v1605, %v1735
      %vm1927 = vcmp.eq.s32.totalorder %v1606, %v1751
      %vm1928 = vcmp.eq.s32.totalorder %v1607, %v1751
      %vm1929 = vcmp.eq.s32.totalorder %v1608, %v1767
      %vm1930 = vcmp.eq.s32.totalorder %v1609, %v1767
      %vm1931 = vcmp.eq.s32.totalorder %v1610, %v1783
      %vm1932 = vcmp.eq.s32.totalorder %v1611, %v1783
      %vm1933 = vcmp.eq.s32.totalorder %v1612, %v1799
      %vm1934 = vcmp.eq.s32.totalorder %v1613, %v1799
      %vm1935 = vcmp.eq.s32.totalorder %v1614, %v1815
      %vm1936 = vcmp.eq.s32.totalorder %v1615, %v1815
      %vm1937 = vcmp.eq.s32.totalorder %v1616, %v1831
      %vm1938 = vcmp.eq.s32.totalorder %v1617, %v1831
      %vm1939 = vcmp.eq.s32.totalorder %v1618, %v1847
      %vm1940 = vcmp.eq.s32.totalorder %v1619, %v1847
      %vm1941 = vcmp.eq.s32.totalorder %v1620, %v1863
      %vm1942 = vcmp.eq.s32.totalorder %v1621, %v1863
      %vm1943 = vcmp.eq.s32.totalorder %v1622, %v1879
      %vm1944 = vcmp.eq.s32.totalorder %v1623, %v1879
      %v1945 = vsel %vm1913, 2147483647, %v1592
      %v1946 = vsel %vm1914, 2147483647, %v1593
      %v1947 = vsel %vm1915, 2147483647, %v1594
      %v1948 = vsel %vm1916, 2147483647, %v1595
      %v1949 = vsel %vm1917, 2147483647, %v1596
      %v1950 = vsel %vm1918, 2147483647, %v1597
      %v1951 = vsel %vm1919, 2147483647, %v1598
      %v1952 = vsel %vm1920, 2147483647, %v1599
      %v1953 = vsel %vm1921, 2147483647, %v1600
      %v1954 = vsel %vm1922, 2147483647, %v1601
      %v1955 = vsel %vm1923, 2147483647, %v1602
      %v1956 = vsel %vm1924, 2147483647, %v1603
      %v1957 = vsel %vm1925, 2147483647, %v1604
      %v1958 = vsel %vm1926, 2147483647, %v1605
      %v1959 = vsel %vm1927, 2147483647, %v1606
      %v1960 = vsel %vm1928, 2147483647, %v1607
      %v1961 = vsel %vm1929, 2147483647, %v1608
      %v1962 = vsel %vm1930, 2147483647, %v1609
      %v1963 = vsel %vm1931, 2147483647, %v1610
      %v1964 = vsel %vm1932, 2147483647, %v1611
      %v1965 = vsel %vm1933, 2147483647, %v1612
      %v1966 = vsel %vm1934, 2147483647, %v1613
      %v1967 = vsel %vm1935, 2147483647, %v1614
      %v1968 = vsel %vm1936, 2147483647, %v1615
      %v1969 = vsel %vm1937, 2147483647, %v1616
      %v1970 = vsel %vm1938, 2147483647, %v1617
      %v1971 = vsel %vm1939, 2147483647, %v1618
      %v1972 = vsel %vm1940, 2147483647, %v1619
      %v1973 = vsel %vm1941, 2147483647, %v1620
      %v1974 = vsel %vm1942, 2147483647, %v1621
      %v1975 = vsel %vm1943, 2147483647, %v1622
      %v1976 = vsel %vm1944, 2147483647, %v1623
      %vm1977 = vcmp.lt.s32.totalorder %v1945, %v1946
      %v1978 = vsel %vm1977, %v1945, %v1946
      %v1979 = vand.u32 %v1978, 65535
      %v1980 = vshra.s32 %v1978, 16
      %v1981 = vcvt.s32.f32 %v1979
      %v1982 = vcvt.s32.f32 %v1980
      %1983 = vmin.xlane.f32.xlu0 %v1982
      %v1984 = vpop.xlane.xlu0 %1983
      %vm1985 = vcmp.eq.f32.partialorder %v1982, %v1984
      %v1986 = vsel %vm1985, %v1981, inf
      %1987 = vmin.xlane.f32.xlu0 %v1986
      %v1988 = vpop.xlane.xlu0 %1987
      %v1989 = vcvt.f32.s32 %v1988
      %v1990 = vcvt.f32.s32 %v1984
      %v1991 = vshll.u32 %v1990, 16
      %v1992 = vadd.s32 %v1991, %v1989
      %vm1993 = vcmp.lt.s32.totalorder %v1947, %v1948
      %v1994 = vsel %vm1993, %v1947, %v1948
      %v1995 = vand.u32 %v1994, 65535
      %v1996 = vshra.s32 %v1994, 16
      %v1997 = vcvt.s32.f32 %v1995
      %v1998 = vcvt.s32.f32 %v1996
      %1999 = vmin.xlane.f32.xlu0 %v1998
      %v2000 = vpop.xlane.xlu0 %1999
      %vm2001 = vcmp.eq.f32.partialorder %v1998, %v2000
      %v2002 = vsel %vm2001, %v1997, inf
      %2003 = vmin.xlane.f32.xlu0 %v2002
      %v2004 = vpop.xlane.xlu0 %2003
      %v2005 = vcvt.f32.s32 %v2004
      %v2006 = vcvt.f32.s32 %v2000
      %v2007 = vshll.u32 %v2006, 16
      %v2008 = vadd.s32 %v2007, %v2005
      %vm2009 = vcmp.lt.s32.totalorder %v1949, %v1950
      %v2010 = vsel %vm2009, %v1949, %v1950
      %v2011 = vand.u32 %v2010, 65535
      %v2012 = vshra.s32 %v2010, 16
      %v2013 = vcvt.s32.f32 %v2011
      %v2014 = vcvt.s32.f32 %v2012
      %2015 = vmin.xlane.f32.xlu0 %v2014
      %v2016 = vpop.xlane.xlu0 %2015
      %vm2017 = vcmp.eq.f32.partialorder %v2014, %v2016
      %v2018 = vsel %vm2017, %v2013, inf
      %2019 = vmin.xlane.f32.xlu0 %v2018
      %v2020 = vpop.xlane.xlu0 %2019
      %v2021 = vcvt.f32.s32 %v2020
      %v2022 = vcvt.f32.s32 %v2016
      %v2023 = vshll.u32 %v2022, 16
      %v2024 = vadd.s32 %v2023, %v2021
      %vm2025 = vcmp.lt.s32.totalorder %v1951, %v1952
      %v2026 = vsel %vm2025, %v1951, %v1952
      %v2027 = vand.u32 %v2026, 65535
      %v2028 = vshra.s32 %v2026, 16
      %v2029 = vcvt.s32.f32 %v2027
      %v2030 = vcvt.s32.f32 %v2028
      %2031 = vmin.xlane.f32.xlu0 %v2030
      %v2032 = vpop.xlane.xlu0 %2031
      %vm2033 = vcmp.eq.f32.partialorder %v2030, %v2032
      %v2034 = vsel %vm2033, %v2029, inf
      %2035 = vmin.xlane.f32.xlu0 %v2034
      %v2036 = vpop.xlane.xlu0 %2035
      %v2037 = vcvt.f32.s32 %v2036
      %v2038 = vcvt.f32.s32 %v2032
      %v2039 = vshll.u32 %v2038, 16
      %v2040 = vadd.s32 %v2039, %v2037
      %vm2041 = vcmp.lt.s32.totalorder %v1953, %v1954
      %v2042 = vsel %vm2041, %v1953, %v1954
      %v2043 = vand.u32 %v2042, 65535
      %v2044 = vshra.s32 %v2042, 16
      %v2045 = vcvt.s32.f32 %v2043
      %v2046 = vcvt.s32.f32 %v2044
      %2047 = vmin.xlane.f32.xlu0 %v2046
      %v2048 = vpop.xlane.xlu0 %2047
      %vm2049 = vcmp.eq.f32.partialorder %v2046, %v2048
      %v2050 = vsel %vm2049, %v2045, inf
      %2051 = vmin.xlane.f32.xlu0 %v2050
      %v2052 = vpop.xlane.xlu0 %2051
      %v2053 = vcvt.f32.s32 %v2052
      %v2054 = vcvt.f32.s32 %v2048
      %v2055 = vshll.u32 %v2054, 16
      %v2056 = vadd.s32 %v2055, %v2053
      %vm2057 = vcmp.lt.s32.totalorder %v1955, %v1956
      %v2058 = vsel %vm2057, %v1955, %v1956
      %v2059 = vand.u32 %v2058, 65535
      %v2060 = vshra.s32 %v2058, 16
      %v2061 = vcvt.s32.f32 %v2059
      %v2062 = vcvt.s32.f32 %v2060
      %2063 = vmin.xlane.f32.xlu0 %v2062
      %v2064 = vpop.xlane.xlu0 %2063
      %vm2065 = vcmp.eq.f32.partialorder %v2062, %v2064
      %v2066 = vsel %vm2065, %v2061, inf
      %2067 = vmin.xlane.f32.xlu0 %v2066
      %v2068 = vpop.xlane.xlu0 %2067
      %v2069 = vcvt.f32.s32 %v2068
      %v2070 = vcvt.f32.s32 %v2064
      %v2071 = vshll.u32 %v2070, 16
      %v2072 = vadd.s32 %v2071, %v2069
      %vm2073 = vcmp.lt.s32.totalorder %v1957, %v1958
      %v2074 = vsel %vm2073, %v1957, %v1958
      %v2075 = vand.u32 %v2074, 65535
      %v2076 = vshra.s32 %v2074, 16
      %v2077 = vcvt.s32.f32 %v2075
      %v2078 = vcvt.s32.f32 %v2076
      %2079 = vmin.xlane.f32.xlu0 %v2078
      %v2080 = vpop.xlane.xlu0 %2079
      %vm2081 = vcmp.eq.f32.partialorder %v2078, %v2080
      %v2082 = vsel %vm2081, %v2077, inf
      %2083 = vmin.xlane.f32.xlu0 %v2082
      %v2084 = vpop.xlane.xlu0 %2083
      %v2085 = vcvt.f32.s32 %v2084
      %v2086 = vcvt.f32.s32 %v2080
      %v2087 = vshll.u32 %v2086, 16
      %v2088 = vadd.s32 %v2087, %v2085
      %vm2089 = vcmp.lt.s32.totalorder %v1959, %v1960
      %v2090 = vsel %vm2089, %v1959, %v1960
      %v2091 = vand.u32 %v2090, 65535
      %v2092 = vshra.s32 %v2090, 16
      %v2093 = vcvt.s32.f32 %v2091
      %v2094 = vcvt.s32.f32 %v2092
      %2095 = vmin.xlane.f32.xlu0 %v2094
      %v2096 = vpop.xlane.xlu0 %2095
      %vm2097 = vcmp.eq.f32.partialorder %v2094, %v2096
      %v2098 = vsel %vm2097, %v2093, inf
      %2099 = vmin.xlane.f32.xlu0 %v2098
      %v2100 = vpop.xlane.xlu0 %2099
      %v2101 = vcvt.f32.s32 %v2100
      %v2102 = vcvt.f32.s32 %v2096
      %v2103 = vshll.u32 %v2102, 16
      %v2104 = vadd.s32 %v2103, %v2101
      %vm2105 = vcmp.lt.s32.totalorder %v1961, %v1962
      %v2106 = vsel %vm2105, %v1961, %v1962
      %v2107 = vand.u32 %v2106, 65535
      %v2108 = vshra.s32 %v2106, 16
      %v2109 = vcvt.s32.f32 %v2107
      %v2110 = vcvt.s32.f32 %v2108
      %2111 = vmin.xlane.f32.xlu0 %v2110
      %v2112 = vpop.xlane.xlu0 %2111
      %vm2113 = vcmp.eq.f32.partialorder %v2110, %v2112
      %v2114 = vsel %vm2113, %v2109, inf
      %2115 = vmin.xlane.f32.xlu0 %v2114
      %v2116 = vpop.xlane.xlu0 %2115
      %v2117 = vcvt.f32.s32 %v2116
      %v2118 = vcvt.f32.s32 %v2112
      %v2119 = vshll.u32 %v2118, 16
      %v2120 = vadd.s32 %v2119, %v2117
      %vm2121 = vcmp.lt.s32.totalorder %v1963, %v1964
      %v2122 = vsel %vm2121, %v1963, %v1964
      %v2123 = vand.u32 %v2122, 65535
      %v2124 = vshra.s32 %v2122, 16
      %v2125 = vcvt.s32.f32 %v2123
      %v2126 = vcvt.s32.f32 %v2124
      %2127 = vmin.xlane.f32.xlu0 %v2126
      %v2128 = vpop.xlane.xlu0 %2127
      %vm2129 = vcmp.eq.f32.partialorder %v2126, %v2128
      %v2130 = vsel %vm2129, %v2125, inf
      %2131 = vmin.xlane.f32.xlu0 %v2130
      %v2132 = vpop.xlane.xlu0 %2131
      %v2133 = vcvt.f32.s32 %v2132
      %v2134 = vcvt.f32.s32 %v2128
      %v2135 = vshll.u32 %v2134, 16
      %v2136 = vadd.s32 %v2135, %v2133
      %vm2137 = vcmp.lt.s32.totalorder %v1965, %v1966
      %v2138 = vsel %vm2137, %v1965, %v1966
      %v2139 = vand.u32 %v2138, 65535
      %v2140 = vshra.s32 %v2138, 16
      %v2141 = vcvt.s32.f32 %v2139
      %v2142 = vcvt.s32.f32 %v2140
      %2143 = vmin.xlane.f32.xlu0 %v2142
      %v2144 = vpop.xlane.xlu0 %2143
      %vm2145 = vcmp.eq.f32.partialorder %v2142, %v2144
      %v2146 = vsel %vm2145, %v2141, inf
      %2147 = vmin.xlane.f32.xlu0 %v2146
      %v2148 = vpop.xlane.xlu0 %2147
      %v2149 = vcvt.f32.s32 %v2148
      %v2150 = vcvt.f32.s32 %v2144
      %v2151 = vshll.u32 %v2150, 16
      %v2152 = vadd.s32 %v2151, %v2149
      %vm2153 = vcmp.lt.s32.totalorder %v1967, %v1968
      %v2154 = vsel %vm2153, %v1967, %v1968
      %v2155 = vand.u32 %v2154, 65535
      %v2156 = vshra.s32 %v2154, 16
      %v2157 = vcvt.s32.f32 %v2155
      %v2158 = vcvt.s32.f32 %v2156
      %2159 = vmin.xlane.f32.xlu0 %v2158
      %v2160 = vpop.xlane.xlu0 %2159
      %vm2161 = vcmp.eq.f32.partialorder %v2158, %v2160
      %v2162 = vsel %vm2161, %v2157, inf
      %2163 = vmin.xlane.f32.xlu0 %v2162
      %v2164 = vpop.xlane.xlu0 %2163
      %v2165 = vcvt.f32.s32 %v2164
      %v2166 = vcvt.f32.s32 %v2160
      %v2167 = vshll.u32 %v2166, 16
      %v2168 = vadd.s32 %v2167, %v2165
      %vm2169 = vcmp.lt.s32.totalorder %v1969, %v1970
      %v2170 = vsel %vm2169, %v1969, %v1970
      %v2171 = vand.u32 %v2170, 65535
      %v2172 = vshra.s32 %v2170, 16
      %v2173 = vcvt.s32.f32 %v2171
      %v2174 = vcvt.s32.f32 %v2172
      %2175 = vmin.xlane.f32.xlu0 %v2174
      %v2176 = vpop.xlane.xlu0 %2175
      %vm2177 = vcmp.eq.f32.partialorder %v2174, %v2176
      %v2178 = vsel %vm2177, %v2173, inf
      %2179 = vmin.xlane.f32.xlu0 %v2178
      %v2180 = vpop.xlane.xlu0 %2179
      %v2181 = vcvt.f32.s32 %v2180
      %v2182 = vcvt.f32.s32 %v2176
      %v2183 = vshll.u32 %v2182, 16
      %v2184 = vadd.s32 %v2183, %v2181
      %vm2185 = vcmp.lt.s32.totalorder %v1971, %v1972
      %v2186 = vsel %vm2185, %v1971, %v1972
      %v2187 = vand.u32 %v2186, 65535
      %v2188 = vshra.s32 %v2186, 16
      %v2189 = vcvt.s32.f32 %v2187
      %v2190 = vcvt.s32.f32 %v2188
      %2191 = vmin.xlane.f32.xlu0 %v2190
      %v2192 = vpop.xlane.xlu0 %2191
      %vm2193 = vcmp.eq.f32.partialorder %v2190, %v2192
      %v2194 = vsel %vm2193, %v2189, inf
      %2195 = vmin.xlane.f32.xlu0 %v2194
      %v2196 = vpop.xlane.xlu0 %2195
      %v2197 = vcvt.f32.s32 %v2196
      %v2198 = vcvt.f32.s32 %v2192
      %v2199 = vshll.u32 %v2198, 16
      %v2200 = vadd.s32 %v2199, %v2197
      %vm2201 = vcmp.lt.s32.totalorder %v1973, %v1974
      %v2202 = vsel %vm2201, %v1973, %v1974
      %v2203 = vand.u32 %v2202, 65535
      %v2204 = vshra.s32 %v2202, 16
      %v2205 = vcvt.s32.f32 %v2203
      %v2206 = vcvt.s32.f32 %v2204
      %2207 = vmin.xlane.f32.xlu0 %v2206
      %v2208 = vpop.xlane.xlu0 %2207
      %vm2209 = vcmp.eq.f32.partialorder %v2206, %v2208
      %v2210 = vsel %vm2209, %v2205, inf
      %2211 = vmin.xlane.f32.xlu0 %v2210
      %v2212 = vpop.xlane.xlu0 %2211
      %v2213 = vcvt.f32.s32 %v2212
      %v2214 = vcvt.f32.s32 %v2208
      %v2215 = vshll.u32 %v2214, 16
      %v2216 = vadd.s32 %v2215, %v2213
      %vm2217 = vcmp.lt.s32.totalorder %v1975, %v1976
      %v2218 = vsel %vm2217, %v1975, %v1976
      %v2219 = vand.u32 %v2218, 65535
      %v2220 = vshra.s32 %v2218, 16
      %v2221 = vcvt.s32.f32 %v2219
      %v2222 = vcvt.s32.f32 %v2220
      %2223 = vmin.xlane.f32.xlu0 %v2222
      %v2224 = vpop.xlane.xlu0 %2223
      %vm2225 = vcmp.eq.f32.partialorder %v2222, %v2224
      %v2226 = vsel %vm2225, %v2221, inf
      %2227 = vmin.xlane.f32.xlu0 %v2226
      %v2228 = vpop.xlane.xlu0 %2227
      %v2229 = vcvt.f32.s32 %v2228
      %v2230 = vcvt.f32.s32 %v2224
      %v2231 = vshll.u32 %v2230, 16
      %v2232 = vadd.s32 %v2231, %v2229
      %v2233 = vand.u32 %v1992, 255
      %v2234 = vand.u32 %v2008, 255
      %v2235 = vand.u32 %v2024, 255
      %v2236 = vand.u32 %v2040, 255
      %v2237 = vand.u32 %v2056, 255
      %v2238 = vand.u32 %v2072, 255
      %v2239 = vand.u32 %v2088, 255
      %v2240 = vand.u32 %v2104, 255
      %v2241 = vand.u32 %v2120, 255
      %v2242 = vand.u32 %v2136, 255
      %v2243 = vand.u32 %v2152, 255
      %v2244 = vand.u32 %v2168, 255
      %v2245 = vand.u32 %v2184, 255
      %v2246 = vand.u32 %v2200, 255
      %v2247 = vand.u32 %v2216, 255
      %v2248 = vand.u32 %v2232, 255
      %vm2249 = vcmask 31768
      %2250 = vst.msk [vmem:[%s245] sm:$0xff] %vm2249, %v2233
      %2251 = vst.msk [vmem:[%s245 + $0x8] sm:$0xff] %vm2249, %v2234
      %2252 = vst.msk [vmem:[%s245 + $0x10] sm:$0xff] %vm2249, %v2235
      %2253 = vst.msk [vmem:[%s245 + $0x18] sm:$0xff] %vm2249, %v2236
      %2254 = vst.msk [vmem:[%s245 + $0x20] sm:$0xff] %vm2249, %v2237
      %2255 = vst.msk [vmem:[%s245 + $0x28] sm:$0xff] %vm2249, %v2238
      %2256 = vst.msk [vmem:[%s245 + $0x30] sm:$0xff] %vm2249, %v2239
      %2257 = vst.msk [vmem:[%s245 + $0x38] sm:$0xff] %vm2249, %v2240
      %2258 = vst.msk [vmem:[%s245 + $0x40] sm:$0xff] %vm2249, %v2241
      %2259 = vst.msk [vmem:[%s245 + $0x48] sm:$0xff] %vm2249, %v2242
      %2260 = vst.msk [vmem:[%s245 + $0x50] sm:$0xff] %vm2249, %v2243
      %2261 = vst.msk [vmem:[%s245 + $0x58] sm:$0xff] %vm2249, %v2244
      %2262 = vst.msk [vmem:[%s245 + $0x60] sm:$0xff] %vm2249, %v2245
      %2263 = vst.msk [vmem:[%s245 + $0x68] sm:$0xff] %vm2249, %v2246
      %2264 = vst.msk [vmem:[%s245 + $0x70] sm:$0xff] %vm2249, %v2247
      %2265 = vst.msk [vmem:[%s245 + $0x78] sm:$0xff] %vm2249, %v2248
      %vm2266 = vcmp.eq.s32.totalorder %v1945, %v1992
      %vm2267 = vcmp.eq.s32.totalorder %v1946, %v1992
      %vm2268 = vcmp.eq.s32.totalorder %v1947, %v2008
      %vm2269 = vcmp.eq.s32.totalorder %v1948, %v2008
      %vm2270 = vcmp.eq.s32.totalorder %v1949, %v2024
      %vm2271 = vcmp.eq.s32.totalorder %v1950, %v2024
      %vm2272 = vcmp.eq.s32.totalorder %v1951, %v2040
      %vm2273 = vcmp.eq.s32.totalorder %v1952, %v2040
      %vm2274 = vcmp.eq.s32.totalorder %v1953, %v2056
      %vm2275 = vcmp.eq.s32.totalorder %v1954, %v2056
      %vm2276 = vcmp.eq.s32.totalorder %v1955, %v2072
      %vm2277 = vcmp.eq.s32.totalorder %v1956, %v2072
      %vm2278 = vcmp.eq.s32.totalorder %v1957, %v2088
      %vm2279 = vcmp.eq.s32.totalorder %v1958, %v2088
      %vm2280 = vcmp.eq.s32.totalorder %v1959, %v2104
      %vm2281 = vcmp.eq.s32.totalorder %v1960, %v2104
      %vm2282 = vcmp.eq.s32.totalorder %v1961, %v2120
      %vm2283 = vcmp.eq.s32.totalorder %v1962, %v2120
      %vm2284 = vcmp.eq.s32.totalorder %v1963, %v2136
      %vm2285 = vcmp.eq.s32.totalorder %v1964, %v2136
      %vm2286 = vcmp.eq.s32.totalorder %v1965, %v2152
      %vm2287 = vcmp.eq.s32.totalorder %v1966, %v2152
      %vm2288 = vcmp.eq.s32.totalorder %v1967, %v2168
      %vm2289 = vcmp.eq.s32.totalorder %v1968, %v2168
      %vm2290 = vcmp.eq.s32.totalorder %v1969, %v2184
      %vm2291 = vcmp.eq.s32.totalorder %v1970, %v2184
      %vm2292 = vcmp.eq.s32.totalorder %v1971, %v2200
      %vm2293 = vcmp.eq.s32.totalorder %v1972, %v2200
      %vm2294 = vcmp.eq.s32.totalorder %v1973, %v2216
      %vm2295 = vcmp.eq.s32.totalorder %v1974, %v2216
      %vm2296 = vcmp.eq.s32.totalorder %v1975, %v2232
      %vm2297 = vcmp.eq.s32.totalorder %v1976, %v2232
      %v2298 = vsel %vm2266, 2147483647, %v1945
      %v2299 = vsel %vm2267, 2147483647, %v1946
      %v2300 = vsel %vm2268, 2147483647, %v1947
      %v2301 = vsel %vm2269, 2147483647, %v1948
      %v2302 = vsel %vm2270, 2147483647, %v1949
      %v2303 = vsel %vm2271, 2147483647, %v1950
      %v2304 = vsel %vm2272, 2147483647, %v1951
      %v2305 = vsel %vm2273, 2147483647, %v1952
      %v2306 = vsel %vm2274, 2147483647, %v1953
      %v2307 = vsel %vm2275, 2147483647, %v1954
      %v2308 = vsel %vm2276, 2147483647, %v1955
      %v2309 = vsel %vm2277, 2147483647, %v1956
      %v2310 = vsel %vm2278, 2147483647, %v1957
      %v2311 = vsel %vm2279, 2147483647, %v1958
      %v2312 = vsel %vm2280, 2147483647, %v1959
      %v2313 = vsel %vm2281, 2147483647, %v1960
      %v2314 = vsel %vm2282, 2147483647, %v1961
      %v2315 = vsel %vm2283, 2147483647, %v1962
      %v2316 = vsel %vm2284, 2147483647, %v1963
      %v2317 = vsel %vm2285, 2147483647, %v1964
      %v2318 = vsel %vm2286, 2147483647, %v1965
      %v2319 = vsel %vm2287, 2147483647, %v1966
      %v2320 = vsel %vm2288, 2147483647, %v1967
      %v2321 = vsel %vm2289, 2147483647, %v1968
      %v2322 = vsel %vm2290, 2147483647, %v1969
      %v2323 = vsel %vm2291, 2147483647, %v1970
      %v2324 = vsel %vm2292, 2147483647, %v1971
      %v2325 = vsel %vm2293, 2147483647, %v1972
      %v2326 = vsel %vm2294, 2147483647, %v1973
      %v2327 = vsel %vm2295, 2147483647, %v1974
      %v2328 = vsel %vm2296, 2147483647, %v1975
      %v2329 = vsel %vm2297, 2147483647, %v1976
      %vm2330 = vcmp.lt.s32.totalorder %v2298, %v2299
      %v2331 = vsel %vm2330, %v2298, %v2299
      %v2332 = vand.u32 %v2331, 65535
      %v2333 = vshra.s32 %v2331, 16
      %v2334 = vcvt.s32.f32 %v2332
      %v2335 = vcvt.s32.f32 %v2333
      %2336 = vmin.xlane.f32.xlu0 %v2335
      %v2337 = vpop.xlane.xlu0 %2336
      %vm2338 = vcmp.eq.f32.partialorder %v2335, %v2337
      %v2339 = vsel %vm2338, %v2334, inf
      %2340 = vmin.xlane.f32.xlu0 %v2339
      %v2341 = vpop.xlane.xlu0 %2340
      %v2342 = vcvt.f32.s32 %v2341
      %v2343 = vcvt.f32.s32 %v2337
      %v2344 = vshll.u32 %v2343, 16
      %v2345 = vadd.s32 %v2344, %v2342
      %vm2346 = vcmp.lt.s32.totalorder %v2300, %v2301
      %v2347 = vsel %vm2346, %v2300, %v2301
      %v2348 = vand.u32 %v2347, 65535
      %v2349 = vshra.s32 %v2347, 16
      %v2350 = vcvt.s32.f32 %v2348
      %v2351 = vcvt.s32.f32 %v2349
      %2352 = vmin.xlane.f32.xlu0 %v2351
      %v2353 = vpop.xlane.xlu0 %2352
      %vm2354 = vcmp.eq.f32.partialorder %v2351, %v2353
      %v2355 = vsel %vm2354, %v2350, inf
      %2356 = vmin.xlane.f32.xlu0 %v2355
      %v2357 = vpop.xlane.xlu0 %2356
      %v2358 = vcvt.f32.s32 %v2357
      %v2359 = vcvt.f32.s32 %v2353
      %v2360 = vshll.u32 %v2359, 16
      %v2361 = vadd.s32 %v2360, %v2358
      %vm2362 = vcmp.lt.s32.totalorder %v2302, %v2303
      %v2363 = vsel %vm2362, %v2302, %v2303
      %v2364 = vand.u32 %v2363, 65535
      %v2365 = vshra.s32 %v2363, 16
      %v2366 = vcvt.s32.f32 %v2364
      %v2367 = vcvt.s32.f32 %v2365
      %2368 = vmin.xlane.f32.xlu0 %v2367
      %v2369 = vpop.xlane.xlu0 %2368
      %vm2370 = vcmp.eq.f32.partialorder %v2367, %v2369
      %v2371 = vsel %vm2370, %v2366, inf
      %2372 = vmin.xlane.f32.xlu0 %v2371
      %v2373 = vpop.xlane.xlu0 %2372
      %v2374 = vcvt.f32.s32 %v2373
      %v2375 = vcvt.f32.s32 %v2369
      %v2376 = vshll.u32 %v2375, 16
      %v2377 = vadd.s32 %v2376, %v2374
      %vm2378 = vcmp.lt.s32.totalorder %v2304, %v2305
      %v2379 = vsel %vm2378, %v2304, %v2305
      %v2380 = vand.u32 %v2379, 65535
      %v2381 = vshra.s32 %v2379, 16
      %v2382 = vcvt.s32.f32 %v2380
      %v2383 = vcvt.s32.f32 %v2381
      %2384 = vmin.xlane.f32.xlu0 %v2383
      %v2385 = vpop.xlane.xlu0 %2384
      %vm2386 = vcmp.eq.f32.partialorder %v2383, %v2385
      %v2387 = vsel %vm2386, %v2382, inf
      %2388 = vmin.xlane.f32.xlu0 %v2387
      %v2389 = vpop.xlane.xlu0 %2388
      %v2390 = vcvt.f32.s32 %v2389
      %v2391 = vcvt.f32.s32 %v2385
      %v2392 = vshll.u32 %v2391, 16
      %v2393 = vadd.s32 %v2392, %v2390
      %vm2394 = vcmp.lt.s32.totalorder %v2306, %v2307
      %v2395 = vsel %vm2394, %v2306, %v2307
      %v2396 = vand.u32 %v2395, 65535
      %v2397 = vshra.s32 %v2395, 16
      %v2398 = vcvt.s32.f32 %v2396
      %v2399 = vcvt.s32.f32 %v2397
      %2400 = vmin.xlane.f32.xlu0 %v2399
      %v2401 = vpop.xlane.xlu0 %2400
      %vm2402 = vcmp.eq.f32.partialorder %v2399, %v2401
      %v2403 = vsel %vm2402, %v2398, inf
      %2404 = vmin.xlane.f32.xlu0 %v2403
      %v2405 = vpop.xlane.xlu0 %2404
      %v2406 = vcvt.f32.s32 %v2405
      %v2407 = vcvt.f32.s32 %v2401
      %v2408 = vshll.u32 %v2407, 16
      %v2409 = vadd.s32 %v2408, %v2406
      %vm2410 = vcmp.lt.s32.totalorder %v2308, %v2309
      %v2411 = vsel %vm2410, %v2308, %v2309
      %v2412 = vand.u32 %v2411, 65535
      %v2413 = vshra.s32 %v2411, 16
      %v2414 = vcvt.s32.f32 %v2412
      %v2415 = vcvt.s32.f32 %v2413
      %2416 = vmin.xlane.f32.xlu0 %v2415
      %v2417 = vpop.xlane.xlu0 %2416
      %vm2418 = vcmp.eq.f32.partialorder %v2415, %v2417
      %v2419 = vsel %vm2418, %v2414, inf
      %2420 = vmin.xlane.f32.xlu0 %v2419
      %v2421 = vpop.xlane.xlu0 %2420
      %v2422 = vcvt.f32.s32 %v2421
      %v2423 = vcvt.f32.s32 %v2417
      %v2424 = vshll.u32 %v2423, 16
      %v2425 = vadd.s32 %v2424, %v2422
      %vm2426 = vcmp.lt.s32.totalorder %v2310, %v2311
      %v2427 = vsel %vm2426, %v2310, %v2311
      %v2428 = vand.u32 %v2427, 65535
      %v2429 = vshra.s32 %v2427, 16
      %v2430 = vcvt.s32.f32 %v2428
      %v2431 = vcvt.s32.f32 %v2429
      %2432 = vmin.xlane.f32.xlu0 %v2431
      %v2433 = vpop.xlane.xlu0 %2432
      %vm2434 = vcmp.eq.f32.partialorder %v2431, %v2433
      %v2435 = vsel %vm2434, %v2430, inf
      %2436 = vmin.xlane.f32.xlu0 %v2435
      %v2437 = vpop.xlane.xlu0 %2436
      %v2438 = vcvt.f32.s32 %v2437
      %v2439 = vcvt.f32.s32 %v2433
      %v2440 = vshll.u32 %v2439, 16
      %v2441 = vadd.s32 %v2440, %v2438
      %vm2442 = vcmp.lt.s32.totalorder %v2312, %v2313
      %v2443 = vsel %vm2442, %v2312, %v2313
      %v2444 = vand.u32 %v2443, 65535
      %v2445 = vshra.s32 %v2443, 16
      %v2446 = vcvt.s32.f32 %v2444
      %v2447 = vcvt.s32.f32 %v2445
      %2448 = vmin.xlane.f32.xlu0 %v2447
      %v2449 = vpop.xlane.xlu0 %2448
      %vm2450 = vcmp.eq.f32.partialorder %v2447, %v2449
      %v2451 = vsel %vm2450, %v2446, inf
      %2452 = vmin.xlane.f32.xlu0 %v2451
      %v2453 = vpop.xlane.xlu0 %2452
      %v2454 = vcvt.f32.s32 %v2453
      %v2455 = vcvt.f32.s32 %v2449
      %v2456 = vshll.u32 %v2455, 16
      %v2457 = vadd.s32 %v2456, %v2454
      %vm2458 = vcmp.lt.s32.totalorder %v2314, %v2315
      %v2459 = vsel %vm2458, %v2314, %v2315
      %v2460 = vand.u32 %v2459, 65535
      %v2461 = vshra.s32 %v2459, 16
      %v2462 = vcvt.s32.f32 %v2460
      %v2463 = vcvt.s32.f32 %v2461
      %2464 = vmin.xlane.f32.xlu0 %v2463
      %v2465 = vpop.xlane.xlu0 %2464
      %vm2466 = vcmp.eq.f32.partialorder %v2463, %v2465
      %v2467 = vsel %vm2466, %v2462, inf
      %2468 = vmin.xlane.f32.xlu0 %v2467
      %v2469 = vpop.xlane.xlu0 %2468
      %v2470 = vcvt.f32.s32 %v2469
      %v2471 = vcvt.f32.s32 %v2465
      %v2472 = vshll.u32 %v2471, 16
      %v2473 = vadd.s32 %v2472, %v2470
      %vm2474 = vcmp.lt.s32.totalorder %v2316, %v2317
      %v2475 = vsel %vm2474, %v2316, %v2317
      %v2476 = vand.u32 %v2475, 65535
      %v2477 = vshra.s32 %v2475, 16
      %v2478 = vcvt.s32.f32 %v2476
      %v2479 = vcvt.s32.f32 %v2477
      %2480 = vmin.xlane.f32.xlu0 %v2479
      %v2481 = vpop.xlane.xlu0 %2480
      %vm2482 = vcmp.eq.f32.partialorder %v2479, %v2481
      %v2483 = vsel %vm2482, %v2478, inf
      %2484 = vmin.xlane.f32.xlu0 %v2483
      %v2485 = vpop.xlane.xlu0 %2484
      %v2486 = vcvt.f32.s32 %v2485
      %v2487 = vcvt.f32.s32 %v2481
      %v2488 = vshll.u32 %v2487, 16
      %v2489 = vadd.s32 %v2488, %v2486
      %vm2490 = vcmp.lt.s32.totalorder %v2318, %v2319
      %v2491 = vsel %vm2490, %v2318, %v2319
      %v2492 = vand.u32 %v2491, 65535
      %v2493 = vshra.s32 %v2491, 16
      %v2494 = vcvt.s32.f32 %v2492
      %v2495 = vcvt.s32.f32 %v2493
      %2496 = vmin.xlane.f32.xlu0 %v2495
      %v2497 = vpop.xlane.xlu0 %2496
      %vm2498 = vcmp.eq.f32.partialorder %v2495, %v2497
      %v2499 = vsel %vm2498, %v2494, inf
      %2500 = vmin.xlane.f32.xlu0 %v2499
      %v2501 = vpop.xlane.xlu0 %2500
      %v2502 = vcvt.f32.s32 %v2501
      %v2503 = vcvt.f32.s32 %v2497
      %v2504 = vshll.u32 %v2503, 16
      %v2505 = vadd.s32 %v2504, %v2502
      %vm2506 = vcmp.lt.s32.totalorder %v2320, %v2321
      %v2507 = vsel %vm2506, %v2320, %v2321
      %v2508 = vand.u32 %v2507, 65535
      %v2509 = vshra.s32 %v2507, 16
      %v2510 = vcvt.s32.f32 %v2508
      %v2511 = vcvt.s32.f32 %v2509
      %2512 = vmin.xlane.f32.xlu0 %v2511
      %v2513 = vpop.xlane.xlu0 %2512
      %vm2514 = vcmp.eq.f32.partialorder %v2511, %v2513
      %v2515 = vsel %vm2514, %v2510, inf
      %2516 = vmin.xlane.f32.xlu0 %v2515
      %v2517 = vpop.xlane.xlu0 %2516
      %v2518 = vcvt.f32.s32 %v2517
      %v2519 = vcvt.f32.s32 %v2513
      %v2520 = vshll.u32 %v2519, 16
      %v2521 = vadd.s32 %v2520, %v2518
      %vm2522 = vcmp.lt.s32.totalorder %v2322, %v2323
      %v2523 = vsel %vm2522, %v2322, %v2323
      %v2524 = vand.u32 %v2523, 65535
      %v2525 = vshra.s32 %v2523, 16
      %v2526 = vcvt.s32.f32 %v2524
      %v2527 = vcvt.s32.f32 %v2525
      %2528 = vmin.xlane.f32.xlu0 %v2527
      %v2529 = vpop.xlane.xlu0 %2528
      %vm2530 = vcmp.eq.f32.partialorder %v2527, %v2529
      %v2531 = vsel %vm2530, %v2526, inf
      %2532 = vmin.xlane.f32.xlu0 %v2531
      %v2533 = vpop.xlane.xlu0 %2532
      %v2534 = vcvt.f32.s32 %v2533
      %v2535 = vcvt.f32.s32 %v2529
      %v2536 = vshll.u32 %v2535, 16
      %v2537 = vadd.s32 %v2536, %v2534
      %vm2538 = vcmp.lt.s32.totalorder %v2324, %v2325
      %v2539 = vsel %vm2538, %v2324, %v2325
      %v2540 = vand.u32 %v2539, 65535
      %v2541 = vshra.s32 %v2539, 16
      %v2542 = vcvt.s32.f32 %v2540
      %v2543 = vcvt.s32.f32 %v2541
      %2544 = vmin.xlane.f32.xlu0 %v2543
      %v2545 = vpop.xlane.xlu0 %2544
      %vm2546 = vcmp.eq.f32.partialorder %v2543, %v2545
      %v2547 = vsel %vm2546, %v2542, inf
      %2548 = vmin.xlane.f32.xlu0 %v2547
      %v2549 = vpop.xlane.xlu0 %2548
      %v2550 = vcvt.f32.s32 %v2549
      %v2551 = vcvt.f32.s32 %v2545
      %v2552 = vshll.u32 %v2551, 16
      %v2553 = vadd.s32 %v2552, %v2550
      %vm2554 = vcmp.lt.s32.totalorder %v2326, %v2327
      %v2555 = vsel %vm2554, %v2326, %v2327
      %v2556 = vand.u32 %v2555, 65535
      %v2557 = vshra.s32 %v2555, 16
      %v2558 = vcvt.s32.f32 %v2556
      %v2559 = vcvt.s32.f32 %v2557
      %2560 = vmin.xlane.f32.xlu0 %v2559
      %v2561 = vpop.xlane.xlu0 %2560
      %vm2562 = vcmp.eq.f32.partialorder %v2559, %v2561
      %v2563 = vsel %vm2562, %v2558, inf
      %2564 = vmin.xlane.f32.xlu0 %v2563
      %v2565 = vpop.xlane.xlu0 %2564
      %v2566 = vcvt.f32.s32 %v2565
      %v2567 = vcvt.f32.s32 %v2561
      %v2568 = vshll.u32 %v2567, 16
      %v2569 = vadd.s32 %v2568, %v2566
      %vm2570 = vcmp.lt.s32.totalorder %v2328, %v2329
      %v2571 = vsel %vm2570, %v2328, %v2329
      %v2572 = vand.u32 %v2571, 65535
      %v2573 = vshra.s32 %v2571, 16
      %v2574 = vcvt.s32.f32 %v2572
      %v2575 = vcvt.s32.f32 %v2573
      %2576 = vmin.xlane.f32.xlu0 %v2575
      %v2577 = vpop.xlane.xlu0 %2576
      %vm2578 = vcmp.eq.f32.partialorder %v2575, %v2577
      %v2579 = vsel %vm2578, %v2574, inf
      %2580 = vmin.xlane.f32.xlu0 %v2579
      %v2581 = vpop.xlane.xlu0 %2580
      %v2582 = vcvt.f32.s32 %v2581
      %v2583 = vcvt.f32.s32 %v2577
      %v2584 = vshll.u32 %v2583, 16
      %v2585 = vadd.s32 %v2584, %v2582
      %v2586 = vand.u32 %v2345, 255
      %v2587 = vand.u32 %v2361, 255
      %v2588 = vand.u32 %v2377, 255
      %v2589 = vand.u32 %v2393, 255
      %v2590 = vand.u32 %v2409, 255
      %v2591 = vand.u32 %v2425, 255
      %v2592 = vand.u32 %v2441, 255
      %v2593 = vand.u32 %v2457, 255
      %v2594 = vand.u32 %v2473, 255
      %v2595 = vand.u32 %v2489, 255
      %v2596 = vand.u32 %v2505, 255
      %v2597 = vand.u32 %v2521, 255
      %v2598 = vand.u32 %v2537, 255
      %v2599 = vand.u32 %v2553, 255
      %v2600 = vand.u32 %v2569, 255
      %v2601 = vand.u32 %v2585, 255
      %vm2602 = vcmask 39968
      %2603 = vst.msk [vmem:[%s245] sm:$0xff] %vm2602, %v2586
      %2604 = vst.msk [vmem:[%s245 + $0x8] sm:$0xff] %vm2602, %v2587
      %2605 = vst.msk [vmem:[%s245 + $0x10] sm:$0xff] %vm2602, %v2588
      %2606 = vst.msk [vmem:[%s245 + $0x18] sm:$0xff] %vm2602, %v2589
      %2607 = vst.msk [vmem:[%s245 + $0x20] sm:$0xff] %vm2602, %v2590
      %2608 = vst.msk [vmem:[%s245 + $0x28] sm:$0xff] %vm2602, %v2591
      %2609 = vst.msk [vmem:[%s245 + $0x30] sm:$0xff] %vm2602, %v2592
      %2610 = vst.msk [vmem:[%s245 + $0x38] sm:$0xff] %vm2602, %v2593
      %2611 = vst.msk [vmem:[%s245 + $0x40] sm:$0xff] %vm2602, %v2594
      %2612 = vst.msk [vmem:[%s245 + $0x48] sm:$0xff] %vm2602, %v2595
      %2613 = vst.msk [vmem:[%s245 + $0x50] sm:$0xff] %vm2602, %v2596
      %2614 = vst.msk [vmem:[%s245 + $0x58] sm:$0xff] %vm2602, %v2597
      %2615 = vst.msk [vmem:[%s245 + $0x60] sm:$0xff] %vm2602, %v2598
      %2616 = vst.msk [vmem:[%s245 + $0x68] sm:$0xff] %vm2602, %v2599
      %2617 = vst.msk [vmem:[%s245 + $0x70] sm:$0xff] %vm2602, %v2600
      %2618 = vst.msk [vmem:[%s245 + $0x78] sm:$0xff] %vm2602, %v2601
      %vm2619 = vcmp.eq.s32.totalorder %v2298, %v2345
      %vm2620 = vcmp.eq.s32.totalorder %v2299, %v2345
      %vm2621 = vcmp.eq.s32.totalorder %v2300, %v2361
      %vm2622 = vcmp.eq.s32.totalorder %v2301, %v2361
      %vm2623 = vcmp.eq.s32.totalorder %v2302, %v2377
      %vm2624 = vcmp.eq.s32.totalorder %v2303, %v2377
      %vm2625 = vcmp.eq.s32.totalorder %v2304, %v2393
      %vm2626 = vcmp.eq.s32.totalorder %v2305, %v2393
      %vm2627 = vcmp.eq.s32.totalorder %v2306, %v2409
      %vm2628 = vcmp.eq.s32.totalorder %v2307, %v2409
      %vm2629 = vcmp.eq.s32.totalorder %v2308, %v2425
      %vm2630 = vcmp.eq.s32.totalorder %v2309, %v2425
      %vm2631 = vcmp.eq.s32.totalorder %v2310, %v2441
      %vm2632 = vcmp.eq.s32.totalorder %v2311, %v2441
      %vm2633 = vcmp.eq.s32.totalorder %v2312, %v2457
      %vm2634 = vcmp.eq.s32.totalorder %v2313, %v2457
      %vm2635 = vcmp.eq.s32.totalorder %v2314, %v2473
      %vm2636 = vcmp.eq.s32.totalorder %v2315, %v2473
      %vm2637 = vcmp.eq.s32.totalorder %v2316, %v2489
      %vm2638 = vcmp.eq.s32.totalorder %v2317, %v2489
      %vm2639 = vcmp.eq.s32.totalorder %v2318, %v2505
      %vm2640 = vcmp.eq.s32.totalorder %v2319, %v2505
      %vm2641 = vcmp.eq.s32.totalorder %v2320, %v2521
      %vm2642 = vcmp.eq.s32.totalorder %v2321, %v2521
      %vm2643 = vcmp.eq.s32.totalorder %v2322, %v2537
      %vm2644 = vcmp.eq.s32.totalorder %v2323, %v2537
      %vm2645 = vcmp.eq.s32.totalorder %v2324, %v2553
      %vm2646 = vcmp.eq.s32.totalorder %v2325, %v2553
      %vm2647 = vcmp.eq.s32.totalorder %v2326, %v2569
      %vm2648 = vcmp.eq.s32.totalorder %v2327, %v2569
      %vm2649 = vcmp.eq.s32.totalorder %v2328, %v2585
      %vm2650 = vcmp.eq.s32.totalorder %v2329, %v2585
      %v2651 = vsel %vm2619, 2147483647, %v2298
      %v2652 = vsel %vm2620, 2147483647, %v2299
      %v2653 = vsel %vm2621, 2147483647, %v2300
      %v2654 = vsel %vm2622, 2147483647, %v2301
      %v2655 = vsel %vm2623, 2147483647, %v2302
      %v2656 = vsel %vm2624, 2147483647, %v2303
      %v2657 = vsel %vm2625, 2147483647, %v2304
      %v2658 = vsel %vm2626, 2147483647, %v2305
      %v2659 = vsel %vm2627, 2147483647, %v2306
      %v2660 = vsel %vm2628, 2147483647, %v2307
      %v2661 = vsel %vm2629, 2147483647, %v2308
      %v2662 = vsel %vm2630, 2147483647, %v2309
      %v2663 = vsel %vm2631, 2147483647, %v2310
      %v2664 = vsel %vm2632, 2147483647, %v2311
      %v2665 = vsel %vm2633, 2147483647, %v2312
      %v2666 = vsel %vm2634, 2147483647, %v2313
      %v2667 = vsel %vm2635, 2147483647, %v2314
      %v2668 = vsel %vm2636, 2147483647, %v2315
      %v2669 = vsel %vm2637, 2147483647, %v2316
      %v2670 = vsel %vm2638, 2147483647, %v2317
      %v2671 = vsel %vm2639, 2147483647, %v2318
      %v2672 = vsel %vm2640, 2147483647, %v2319
      %v2673 = vsel %vm2641, 2147483647, %v2320
      %v2674 = vsel %vm2642, 2147483647, %v2321
      %v2675 = vsel %vm2643, 2147483647, %v2322
      %v2676 = vsel %vm2644, 2147483647, %v2323
      %v2677 = vsel %vm2645, 2147483647, %v2324
      %v2678 = vsel %vm2646, 2147483647, %v2325
      %v2679 = vsel %vm2647, 2147483647, %v2326
      %v2680 = vsel %vm2648, 2147483647, %v2327
      %v2681 = vsel %vm2649, 2147483647, %v2328
      %v2682 = vsel %vm2650, 2147483647, %v2329
      %vm2683 = vcmp.lt.s32.totalorder %v2651, %v2652
      %v2684 = vsel %vm2683, %v2651, %v2652
      %v2685 = vand.u32 %v2684, 65535
      %v2686 = vshra.s32 %v2684, 16
      %v2687 = vcvt.s32.f32 %v2685
      %v2688 = vcvt.s32.f32 %v2686
      %2689 = vmin.xlane.f32.xlu0 %v2688
      %v2690 = vpop.xlane.xlu0 %2689
      %vm2691 = vcmp.eq.f32.partialorder %v2688, %v2690
      %v2692 = vsel %vm2691, %v2687, inf
      %2693 = vmin.xlane.f32.xlu0 %v2692
      %v2694 = vpop.xlane.xlu0 %2693
      %v2695 = vcvt.f32.s32 %v2694
      %v2696 = vcvt.f32.s32 %v2690
      %v2697 = vshll.u32 %v2696, 16
      %v2698 = vadd.s32 %v2697, %v2695
      %vm2699 = vcmp.lt.s32.totalorder %v2653, %v2654
      %v2700 = vsel %vm2699, %v2653, %v2654
      %v2701 = vand.u32 %v2700, 65535
      %v2702 = vshra.s32 %v2700, 16
      %v2703 = vcvt.s32.f32 %v2701
      %v2704 = vcvt.s32.f32 %v2702
      %2705 = vmin.xlane.f32.xlu0 %v2704
      %v2706 = vpop.xlane.xlu0 %2705
      %vm2707 = vcmp.eq.f32.partialorder %v2704, %v2706
      %v2708 = vsel %vm2707, %v2703, inf
      %2709 = vmin.xlane.f32.xlu0 %v2708
      %v2710 = vpop.xlane.xlu0 %2709
      %v2711 = vcvt.f32.s32 %v2710
      %v2712 = vcvt.f32.s32 %v2706
      %v2713 = vshll.u32 %v2712, 16
      %v2714 = vadd.s32 %v2713, %v2711
      %vm2715 = vcmp.lt.s32.totalorder %v2655, %v2656
      %v2716 = vsel %vm2715, %v2655, %v2656
      %v2717 = vand.u32 %v2716, 65535
      %v2718 = vshra.s32 %v2716, 16
      %v2719 = vcvt.s32.f32 %v2717
      %v2720 = vcvt.s32.f32 %v2718
      %2721 = vmin.xlane.f32.xlu0 %v2720
      %v2722 = vpop.xlane.xlu0 %2721
      %vm2723 = vcmp.eq.f32.partialorder %v2720, %v2722
      %v2724 = vsel %vm2723, %v2719, inf
      %2725 = vmin.xlane.f32.xlu0 %v2724
      %v2726 = vpop.xlane.xlu0 %2725
      %v2727 = vcvt.f32.s32 %v2726
      %v2728 = vcvt.f32.s32 %v2722
      %v2729 = vshll.u32 %v2728, 16
      %v2730 = vadd.s32 %v2729, %v2727
      %vm2731 = vcmp.lt.s32.totalorder %v2657, %v2658
      %v2732 = vsel %vm2731, %v2657, %v2658
      %v2733 = vand.u32 %v2732, 65535
      %v2734 = vshra.s32 %v2732, 16
      %v2735 = vcvt.s32.f32 %v2733
      %v2736 = vcvt.s32.f32 %v2734
      %2737 = vmin.xlane.f32.xlu0 %v2736
      %v2738 = vpop.xlane.xlu0 %2737
      %vm2739 = vcmp.eq.f32.partialorder %v2736, %v2738
      %v2740 = vsel %vm2739, %v2735, inf
      %2741 = vmin.xlane.f32.xlu0 %v2740
      %v2742 = vpop.xlane.xlu0 %2741
      %v2743 = vcvt.f32.s32 %v2742
      %v2744 = vcvt.f32.s32 %v2738
      %v2745 = vshll.u32 %v2744, 16
      %v2746 = vadd.s32 %v2745, %v2743
      %vm2747 = vcmp.lt.s32.totalorder %v2659, %v2660
      %v2748 = vsel %vm2747, %v2659, %v2660
      %v2749 = vand.u32 %v2748, 65535
      %v2750 = vshra.s32 %v2748, 16
      %v2751 = vcvt.s32.f32 %v2749
      %v2752 = vcvt.s32.f32 %v2750
      %2753 = vmin.xlane.f32.xlu0 %v2752
      %v2754 = vpop.xlane.xlu0 %2753
      %vm2755 = vcmp.eq.f32.partialorder %v2752, %v2754
      %v2756 = vsel %vm2755, %v2751, inf
      %2757 = vmin.xlane.f32.xlu0 %v2756
      %v2758 = vpop.xlane.xlu0 %2757
      %v2759 = vcvt.f32.s32 %v2758
      %v2760 = vcvt.f32.s32 %v2754
      %v2761 = vshll.u32 %v2760, 16
      %v2762 = vadd.s32 %v2761, %v2759
      %vm2763 = vcmp.lt.s32.totalorder %v2661, %v2662
      %v2764 = vsel %vm2763, %v2661, %v2662
      %v2765 = vand.u32 %v2764, 65535
      %v2766 = vshra.s32 %v2764, 16
      %v2767 = vcvt.s32.f32 %v2765
      %v2768 = vcvt.s32.f32 %v2766
      %2769 = vmin.xlane.f32.xlu0 %v2768
      %v2770 = vpop.xlane.xlu0 %2769
      %vm2771 = vcmp.eq.f32.partialorder %v2768, %v2770
      %v2772 = vsel %vm2771, %v2767, inf
      %2773 = vmin.xlane.f32.xlu0 %v2772
      %v2774 = vpop.xlane.xlu0 %2773
      %v2775 = vcvt.f32.s32 %v2774
      %v2776 = vcvt.f32.s32 %v2770
      %v2777 = vshll.u32 %v2776, 16
      %v2778 = vadd.s32 %v2777, %v2775
      %vm2779 = vcmp.lt.s32.totalorder %v2663, %v2664
      %v2780 = vsel %vm2779, %v2663, %v2664
      %v2781 = vand.u32 %v2780, 65535
      %v2782 = vshra.s32 %v2780, 16
      %v2783 = vcvt.s32.f32 %v2781
      %v2784 = vcvt.s32.f32 %v2782
      %2785 = vmin.xlane.f32.xlu0 %v2784
      %v2786 = vpop.xlane.xlu0 %2785
      %vm2787 = vcmp.eq.f32.partialorder %v2784, %v2786
      %v2788 = vsel %vm2787, %v2783, inf
      %2789 = vmin.xlane.f32.xlu0 %v2788
      %v2790 = vpop.xlane.xlu0 %2789
      %v2791 = vcvt.f32.s32 %v2790
      %v2792 = vcvt.f32.s32 %v2786
      %v2793 = vshll.u32 %v2792, 16
      %v2794 = vadd.s32 %v2793, %v2791
      %vm2795 = vcmp.lt.s32.totalorder %v2665, %v2666
      %v2796 = vsel %vm2795, %v2665, %v2666
      %v2797 = vand.u32 %v2796, 65535
      %v2798 = vshra.s32 %v2796, 16
      %v2799 = vcvt.s32.f32 %v2797
      %v2800 = vcvt.s32.f32 %v2798
      %2801 = vmin.xlane.f32.xlu0 %v2800
      %v2802 = vpop.xlane.xlu0 %2801
      %vm2803 = vcmp.eq.f32.partialorder %v2800, %v2802
      %v2804 = vsel %vm2803, %v2799, inf
      %2805 = vmin.xlane.f32.xlu0 %v2804
      %v2806 = vpop.xlane.xlu0 %2805
      %v2807 = vcvt.f32.s32 %v2806
      %v2808 = vcvt.f32.s32 %v2802
      %v2809 = vshll.u32 %v2808, 16
      %v2810 = vadd.s32 %v2809, %v2807
      %vm2811 = vcmp.lt.s32.totalorder %v2667, %v2668
      %v2812 = vsel %vm2811, %v2667, %v2668
      %v2813 = vand.u32 %v2812, 65535
      %v2814 = vshra.s32 %v2812, 16
      %v2815 = vcvt.s32.f32 %v2813
      %v2816 = vcvt.s32.f32 %v2814
      %2817 = vmin.xlane.f32.xlu0 %v2816
      %v2818 = vpop.xlane.xlu0 %2817
      %vm2819 = vcmp.eq.f32.partialorder %v2816, %v2818
      %v2820 = vsel %vm2819, %v2815, inf
      %2821 = vmin.xlane.f32.xlu0 %v2820
      %v2822 = vpop.xlane.xlu0 %2821
      %v2823 = vcvt.f32.s32 %v2822
      %v2824 = vcvt.f32.s32 %v2818
      %v2825 = vshll.u32 %v2824, 16
      %v2826 = vadd.s32 %v2825, %v2823
      %vm2827 = vcmp.lt.s32.totalorder %v2669, %v2670
      %v2828 = vsel %vm2827, %v2669, %v2670
      %v2829 = vand.u32 %v2828, 65535
      %v2830 = vshra.s32 %v2828, 16
      %v2831 = vcvt.s32.f32 %v2829
      %v2832 = vcvt.s32.f32 %v2830
      %2833 = vmin.xlane.f32.xlu0 %v2832
      %v2834 = vpop.xlane.xlu0 %2833
      %vm2835 = vcmp.eq.f32.partialorder %v2832, %v2834
      %v2836 = vsel %vm2835, %v2831, inf
      %2837 = vmin.xlane.f32.xlu0 %v2836
      %v2838 = vpop.xlane.xlu0 %2837
      %v2839 = vcvt.f32.s32 %v2838
      %v2840 = vcvt.f32.s32 %v2834
      %v2841 = vshll.u32 %v2840, 16
      %v2842 = vadd.s32 %v2841, %v2839
      %vm2843 = vcmp.lt.s32.totalorder %v2671, %v2672
      %v2844 = vsel %vm2843, %v2671, %v2672
      %v2845 = vand.u32 %v2844, 65535
      %v2846 = vshra.s32 %v2844, 16
      %v2847 = vcvt.s32.f32 %v2845
      %v2848 = vcvt.s32.f32 %v2846
      %2849 = vmin.xlane.f32.xlu0 %v2848
      %v2850 = vpop.xlane.xlu0 %2849
      %vm2851 = vcmp.eq.f32.partialorder %v2848, %v2850
      %v2852 = vsel %vm2851, %v2847, inf
      %2853 = vmin.xlane.f32.xlu0 %v2852
      %v2854 = vpop.xlane.xlu0 %2853
      %v2855 = vcvt.f32.s32 %v2854
      %v2856 = vcvt.f32.s32 %v2850
      %v2857 = vshll.u32 %v2856, 16
      %v2858 = vadd.s32 %v2857, %v2855
      %vm2859 = vcmp.lt.s32.totalorder %v2673, %v2674
      %v2860 = vsel %vm2859, %v2673, %v2674
      %v2861 = vand.u32 %v2860, 65535
      %v2862 = vshra.s32 %v2860, 16
      %v2863 = vcvt.s32.f32 %v2861
      %v2864 = vcvt.s32.f32 %v2862
      %2865 = vmin.xlane.f32.xlu0 %v2864
      %v2866 = vpop.xlane.xlu0 %2865
      %vm2867 = vcmp.eq.f32.partialorder %v2864, %v2866
      %v2868 = vsel %vm2867, %v2863, inf
      %2869 = vmin.xlane.f32.xlu0 %v2868
      %v2870 = vpop.xlane.xlu0 %2869
      %v2871 = vcvt.f32.s32 %v2870
      %v2872 = vcvt.f32.s32 %v2866
      %v2873 = vshll.u32 %v2872, 16
      %v2874 = vadd.s32 %v2873, %v2871
      %vm2875 = vcmp.lt.s32.totalorder %v2675, %v2676
      %v2876 = vsel %vm2875, %v2675, %v2676
      %v2877 = vand.u32 %v2876, 65535
      %v2878 = vshra.s32 %v2876, 16
      %v2879 = vcvt.s32.f32 %v2877
      %v2880 = vcvt.s32.f32 %v2878
      %2881 = vmin.xlane.f32.xlu0 %v2880
      %v2882 = vpop.xlane.xlu0 %2881
      %vm2883 = vcmp.eq.f32.partialorder %v2880, %v2882
      %v2884 = vsel %vm2883, %v2879, inf
      %2885 = vmin.xlane.f32.xlu0 %v2884
      %v2886 = vpop.xlane.xlu0 %2885
      %v2887 = vcvt.f32.s32 %v2886
      %v2888 = vcvt.f32.s32 %v2882
      %v2889 = vshll.u32 %v2888, 16
      %v2890 = vadd.s32 %v2889, %v2887
      %vm2891 = vcmp.lt.s32.totalorder %v2677, %v2678
      %v2892 = vsel %vm2891, %v2677, %v2678
      %v2893 = vand.u32 %v2892, 65535
      %v2894 = vshra.s32 %v2892, 16
      %v2895 = vcvt.s32.f32 %v2893
      %v2896 = vcvt.s32.f32 %v2894
      %2897 = vmin.xlane.f32.xlu0 %v2896
      %v2898 = vpop.xlane.xlu0 %2897
      %vm2899 = vcmp.eq.f32.partialorder %v2896, %v2898
      %v2900 = vsel %vm2899, %v2895, inf
      %2901 = vmin.xlane.f32.xlu0 %v2900
      %v2902 = vpop.xlane.xlu0 %2901
      %v2903 = vcvt.f32.s32 %v2902
      %v2904 = vcvt.f32.s32 %v2898
      %v2905 = vshll.u32 %v2904, 16
      %v2906 = vadd.s32 %v2905, %v2903
      %vm2907 = vcmp.lt.s32.totalorder %v2679, %v2680
      %v2908 = vsel %vm2907, %v2679, %v2680
      %v2909 = vand.u32 %v2908, 65535
      %v2910 = vshra.s32 %v2908, 16
      %v2911 = vcvt.s32.f32 %v2909
      %v2912 = vcvt.s32.f32 %v2910
      %2913 = vmin.xlane.f32.xlu0 %v2912
      %v2914 = vpop.xlane.xlu0 %2913
      %vm2915 = vcmp.eq.f32.partialorder %v2912, %v2914
      %v2916 = vsel %vm2915, %v2911, inf
      %2917 = vmin.xlane.f32.xlu0 %v2916
      %v2918 = vpop.xlane.xlu0 %2917
      %v2919 = vcvt.f32.s32 %v2918
      %v2920 = vcvt.f32.s32 %v2914
      %v2921 = vshll.u32 %v2920, 16
      %v2922 = vadd.s32 %v2921, %v2919
      %vm2923 = vcmp.lt.s32.totalorder %v2681, %v2682
      %v2924 = vsel %vm2923, %v2681, %v2682
      %v2925 = vand.u32 %v2924, 65535
      %v2926 = vshra.s32 %v2924, 16
      %v2927 = vcvt.s32.f32 %v2925
      %v2928 = vcvt.s32.f32 %v2926
      %2929 = vmin.xlane.f32.xlu0 %v2928
      %v2930 = vpop.xlane.xlu0 %2929
      %vm2931 = vcmp.eq.f32.partialorder %v2928, %v2930
      %v2932 = vsel %vm2931, %v2927, inf
      %2933 = vmin.xlane.f32.xlu0 %v2932
      %v2934 = vpop.xlane.xlu0 %2933
      %v2935 = vcvt.f32.s32 %v2934
      %v2936 = vcvt.f32.s32 %v2930
      %v2937 = vshll.u32 %v2936, 16
      %v2938 = vadd.s32 %v2937, %v2935
      %v2939 = vand.u32 %v2698, 255
      %v2940 = vand.u32 %v2714, 255
      %v2941 = vand.u32 %v2730, 255
      %v2942 = vand.u32 %v2746, 255
      %v2943 = vand.u32 %v2762, 255
      %v2944 = vand.u32 %v2778, 255
      %v2945 = vand.u32 %v2794, 255
      %v2946 = vand.u32 %v2810, 255
      %v2947 = vand.u32 %v2826, 255
      %v2948 = vand.u32 %v2842, 255
      %v2949 = vand.u32 %v2858, 255
      %v2950 = vand.u32 %v2874, 255
      %v2951 = vand.u32 %v2890, 255
      %v2952 = vand.u32 %v2906, 255
      %v2953 = vand.u32 %v2922, 255
      %v2954 = vand.u32 %v2938, 255
      %vm2955 = vcmask 48168
      %2956 = vst.msk [vmem:[%s245] sm:$0xff] %vm2955, %v2939
      %2957 = vst.msk [vmem:[%s245 + $0x8] sm:$0xff] %vm2955, %v2940
      %2958 = vst.msk [vmem:[%s245 + $0x10] sm:$0xff] %vm2955, %v2941
      %2959 = vst.msk [vmem:[%s245 + $0x18] sm:$0xff] %vm2955, %v2942
      %2960 = vst.msk [vmem:[%s245 + $0x20] sm:$0xff] %vm2955, %v2943
      %2961 = vst.msk [vmem:[%s245 + $0x28] sm:$0xff] %vm2955, %v2944
      %2962 = vst.msk [vmem:[%s245 + $0x30] sm:$0xff] %vm2955, %v2945
      %2963 = vst.msk [vmem:[%s245 + $0x38] sm:$0xff] %vm2955, %v2946
      %2964 = vst.msk [vmem:[%s245 + $0x40] sm:$0xff] %vm2955, %v2947
      %2965 = vst.msk [vmem:[%s245 + $0x48] sm:$0xff] %vm2955, %v2948
      %2966 = vst.msk [vmem:[%s245 + $0x50] sm:$0xff] %vm2955, %v2949
      %2967 = vst.msk [vmem:[%s245 + $0x58] sm:$0xff] %vm2955, %v2950
      %2968 = vst.msk [vmem:[%s245 + $0x60] sm:$0xff] %vm2955, %v2951
      %2969 = vst.msk [vmem:[%s245 + $0x68] sm:$0xff] %vm2955, %v2952
      %2970 = vst.msk [vmem:[%s245 + $0x70] sm:$0xff] %vm2955, %v2953
      %2971 = vst.msk [vmem:[%s245 + $0x78] sm:$0xff] %vm2955, %v2954
      %vm2972 = vcmp.eq.s32.totalorder %v2651, %v2698
      %vm2973 = vcmp.eq.s32.totalorder %v2652, %v2698
      %vm2974 = vcmp.eq.s32.totalorder %v2653, %v2714
      %vm2975 = vcmp.eq.s32.totalorder %v2654, %v2714
      %vm2976 = vcmp.eq.s32.totalorder %v2655, %v2730
      %vm2977 = vcmp.eq.s32.totalorder %v2656, %v2730
      %vm2978 = vcmp.eq.s32.totalorder %v2657, %v2746
      %vm2979 = vcmp.eq.s32.totalorder %v2658, %v2746
      %vm2980 = vcmp.eq.s32.totalorder %v2659, %v2762
      %vm2981 = vcmp.eq.s32.totalorder %v2660, %v2762
      %vm2982 = vcmp.eq.s32.totalorder %v2661, %v2778
      %vm2983 = vcmp.eq.s32.totalorder %v2662, %v2778
      %vm2984 = vcmp.eq.s32.totalorder %v2663, %v2794
      %vm2985 = vcmp.eq.s32.totalorder %v2664, %v2794
      %vm2986 = vcmp.eq.s32.totalorder %v2665, %v2810
      %vm2987 = vcmp.eq.s32.totalorder %v2666, %v2810
      %vm2988 = vcmp.eq.s32.totalorder %v2667, %v2826
      %vm2989 = vcmp.eq.s32.totalorder %v2668, %v2826
      %vm2990 = vcmp.eq.s32.totalorder %v2669, %v2842
      %vm2991 = vcmp.eq.s32.totalorder %v2670, %v2842
      %vm2992 = vcmp.eq.s32.totalorder %v2671, %v2858
      %vm2993 = vcmp.eq.s32.totalorder %v2672, %v2858
      %vm2994 = vcmp.eq.s32.totalorder %v2673, %v2874
      %vm2995 = vcmp.eq.s32.totalorder %v2674, %v2874
      %vm2996 = vcmp.eq.s32.totalorder %v2675, %v2890
      %vm2997 = vcmp.eq.s32.totalorder %v2676, %v2890
      %vm2998 = vcmp.eq.s32.totalorder %v2677, %v2906
      %vm2999 = vcmp.eq.s32.totalorder %v2678, %v2906
      %vm3000 = vcmp.eq.s32.totalorder %v2679, %v2922
      %vm3001 = vcmp.eq.s32.totalorder %v2680, %v2922
      %vm3002 = vcmp.eq.s32.totalorder %v2681, %v2938
      %vm3003 = vcmp.eq.s32.totalorder %v2682, %v2938
      %v3004 = vsel %vm2972, 2147483647, %v2651
      %v3005 = vsel %vm2973, 2147483647, %v2652
      %v3006 = vsel %vm2974, 2147483647, %v2653
      %v3007 = vsel %vm2975, 2147483647, %v2654
      %v3008 = vsel %vm2976, 2147483647, %v2655
      %v3009 = vsel %vm2977, 2147483647, %v2656
      %v3010 = vsel %vm2978, 2147483647, %v2657
      %v3011 = vsel %vm2979, 2147483647, %v2658
      %v3012 = vsel %vm2980, 2147483647, %v2659
      %v3013 = vsel %vm2981, 2147483647, %v2660
      %v3014 = vsel %vm2982, 2147483647, %v2661
      %v3015 = vsel %vm2983, 2147483647, %v2662
      %v3016 = vsel %vm2984, 2147483647, %v2663
      %v3017 = vsel %vm2985, 2147483647, %v2664
      %v3018 = vsel %vm2986, 2147483647, %v2665
      %v3019 = vsel %vm2987, 2147483647, %v2666
      %v3020 = vsel %vm2988, 2147483647, %v2667
      %v3021 = vsel %vm2989, 2147483647, %v2668
      %v3022 = vsel %vm2990, 2147483647, %v2669
      %v3023 = vsel %vm2991, 2147483647, %v2670
      %v3024 = vsel %vm2992, 2147483647, %v2671
      %v3025 = vsel %vm2993, 2147483647, %v2672
      %v3026 = vsel %vm2994, 2147483647, %v2673
      %v3027 = vsel %vm2995, 2147483647, %v2674
      %v3028 = vsel %vm2996, 2147483647, %v2675
      %v3029 = vsel %vm2997, 2147483647, %v2676
      %v3030 = vsel %vm2998, 2147483647, %v2677
      %v3031 = vsel %vm2999, 2147483647, %v2678
      %v3032 = vsel %vm3000, 2147483647, %v2679
      %v3033 = vsel %vm3001, 2147483647, %v2680
      %v3034 = vsel %vm3002, 2147483647, %v2681
      %v3035 = vsel %vm3003, 2147483647, %v2682
      %vm3036 = vcmp.lt.s32.totalorder %v3004, %v3005
      %v3037 = vsel %vm3036, %v3004, %v3005
      %v3038 = vand.u32 %v3037, 65535
      %v3039 = vshra.s32 %v3037, 16
      %v3040 = vcvt.s32.f32 %v3038
      %v3041 = vcvt.s32.f32 %v3039
      %3042 = vmin.xlane.f32.xlu0 %v3041
      %v3043 = vpop.xlane.xlu0 %3042
      %vm3044 = vcmp.eq.f32.partialorder %v3041, %v3043
      %v3045 = vsel %vm3044, %v3040, inf
      %3046 = vmin.xlane.f32.xlu0 %v3045
      %v3047 = vpop.xlane.xlu0 %3046
      %v3048 = vcvt.f32.s32 %v3047
      %v3049 = vcvt.f32.s32 %v3043
      %v3050 = vshll.u32 %v3049, 16
      %v3051 = vadd.s32 %v3050, %v3048
      %vm3052 = vcmp.lt.s32.totalorder %v3006, %v3007
      %v3053 = vsel %vm3052, %v3006, %v3007
      %v3054 = vand.u32 %v3053, 65535
      %v3055 = vshra.s32 %v3053, 16
      %v3056 = vcvt.s32.f32 %v3054
      %v3057 = vcvt.s32.f32 %v3055
      %3058 = vmin.xlane.f32.xlu0 %v3057
      %v3059 = vpop.xlane.xlu0 %3058
      %vm3060 = vcmp.eq.f32.partialorder %v3057, %v3059
      %v3061 = vsel %vm3060, %v3056, inf
      %3062 = vmin.xlane.f32.xlu0 %v3061
      %v3063 = vpop.xlane.xlu0 %3062
      %v3064 = vcvt.f32.s32 %v3063
      %v3065 = vcvt.f32.s32 %v3059
      %v3066 = vshll.u32 %v3065, 16
      %v3067 = vadd.s32 %v3066, %v3064
      %vm3068 = vcmp.lt.s32.totalorder %v3008, %v3009
      %v3069 = vsel %vm3068, %v3008, %v3009
      %v3070 = vand.u32 %v3069, 65535
      %v3071 = vshra.s32 %v3069, 16
      %v3072 = vcvt.s32.f32 %v3070
      %v3073 = vcvt.s32.f32 %v3071
      %3074 = vmin.xlane.f32.xlu0 %v3073
      %v3075 = vpop.xlane.xlu0 %3074
      %vm3076 = vcmp.eq.f32.partialorder %v3073, %v3075
      %v3077 = vsel %vm3076, %v3072, inf
      %3078 = vmin.xlane.f32.xlu0 %v3077
      %v3079 = vpop.xlane.xlu0 %3078
      %v3080 = vcvt.f32.s32 %v3079
      %v3081 = vcvt.f32.s32 %v3075
      %v3082 = vshll.u32 %v3081, 16
      %v3083 = vadd.s32 %v3082, %v3080
      %vm3084 = vcmp.lt.s32.totalorder %v3010, %v3011
      %v3085 = vsel %vm3084, %v3010, %v3011
      %v3086 = vand.u32 %v3085, 65535
      %v3087 = vshra.s32 %v3085, 16
      %v3088 = vcvt.s32.f32 %v3086
      %v3089 = vcvt.s32.f32 %v3087
      %3090 = vmin.xlane.f32.xlu0 %v3089
      %v3091 = vpop.xlane.xlu0 %3090
      %vm3092 = vcmp.eq.f32.partialorder %v3089, %v3091
      %v3093 = vsel %vm3092, %v3088, inf
      %3094 = vmin.xlane.f32.xlu0 %v3093
      %v3095 = vpop.xlane.xlu0 %3094
      %v3096 = vcvt.f32.s32 %v3095
      %v3097 = vcvt.f32.s32 %v3091
      %v3098 = vshll.u32 %v3097, 16
      %v3099 = vadd.s32 %v3098, %v3096
      %vm3100 = vcmp.lt.s32.totalorder %v3012, %v3013
      %v3101 = vsel %vm3100, %v3012, %v3013
      %v3102 = vand.u32 %v3101, 65535
      %v3103 = vshra.s32 %v3101, 16
      %v3104 = vcvt.s32.f32 %v3102
      %v3105 = vcvt.s32.f32 %v3103
      %3106 = vmin.xlane.f32.xlu0 %v3105
      %v3107 = vpop.xlane.xlu0 %3106
      %vm3108 = vcmp.eq.f32.partialorder %v3105, %v3107
      %v3109 = vsel %vm3108, %v3104, inf
      %3110 = vmin.xlane.f32.xlu0 %v3109
      %v3111 = vpop.xlane.xlu0 %3110
      %v3112 = vcvt.f32.s32 %v3111
      %v3113 = vcvt.f32.s32 %v3107
      %v3114 = vshll.u32 %v3113, 16
      %v3115 = vadd.s32 %v3114, %v3112
      %vm3116 = vcmp.lt.s32.totalorder %v3014, %v3015
      %v3117 = vsel %vm3116, %v3014, %v3015
      %v3118 = vand.u32 %v3117, 65535
      %v3119 = vshra.s32 %v3117, 16
      %v3120 = vcvt.s32.f32 %v3118
      %v3121 = vcvt.s32.f32 %v3119
      %3122 = vmin.xlane.f32.xlu0 %v3121
      %v3123 = vpop.xlane.xlu0 %3122
      %vm3124 = vcmp.eq.f32.partialorder %v3121, %v3123
      %v3125 = vsel %vm3124, %v3120, inf
      %3126 = vmin.xlane.f32.xlu0 %v3125
      %v3127 = vpop.xlane.xlu0 %3126
      %v3128 = vcvt.f32.s32 %v3127
      %v3129 = vcvt.f32.s32 %v3123
      %v3130 = vshll.u32 %v3129, 16
      %v3131 = vadd.s32 %v3130, %v3128
      %vm3132 = vcmp.lt.s32.totalorder %v3016, %v3017
      %v3133 = vsel %vm3132, %v3016, %v3017
      %v3134 = vand.u32 %v3133, 65535
      %v3135 = vshra.s32 %v3133, 16
      %v3136 = vcvt.s32.f32 %v3134
      %v3137 = vcvt.s32.f32 %v3135
      %3138 = vmin.xlane.f32.xlu0 %v3137
      %v3139 = vpop.xlane.xlu0 %3138
      %vm3140 = vcmp.eq.f32.partialorder %v3137, %v3139
      %v3141 = vsel %vm3140, %v3136, inf
      %3142 = vmin.xlane.f32.xlu0 %v3141
      %v3143 = vpop.xlane.xlu0 %3142
      %v3144 = vcvt.f32.s32 %v3143
      %v3145 = vcvt.f32.s32 %v3139
      %v3146 = vshll.u32 %v3145, 16
      %v3147 = vadd.s32 %v3146, %v3144
      %vm3148 = vcmp.lt.s32.totalorder %v3018, %v3019
      %v3149 = vsel %vm3148, %v3018, %v3019
      %v3150 = vand.u32 %v3149, 65535
      %v3151 = vshra.s32 %v3149, 16
      %v3152 = vcvt.s32.f32 %v3150
      %v3153 = vcvt.s32.f32 %v3151
      %3154 = vmin.xlane.f32.xlu0 %v3153
      %v3155 = vpop.xlane.xlu0 %3154
      %vm3156 = vcmp.eq.f32.partialorder %v3153, %v3155
      %v3157 = vsel %vm3156, %v3152, inf
      %3158 = vmin.xlane.f32.xlu0 %v3157
      %v3159 = vpop.xlane.xlu0 %3158
      %v3160 = vcvt.f32.s32 %v3159
      %v3161 = vcvt.f32.s32 %v3155
      %v3162 = vshll.u32 %v3161, 16
      %v3163 = vadd.s32 %v3162, %v3160
      %vm3164 = vcmp.lt.s32.totalorder %v3020, %v3021
      %v3165 = vsel %vm3164, %v3020, %v3021
      %v3166 = vand.u32 %v3165, 65535
      %v3167 = vshra.s32 %v3165, 16
      %v3168 = vcvt.s32.f32 %v3166
      %v3169 = vcvt.s32.f32 %v3167
      %3170 = vmin.xlane.f32.xlu0 %v3169
      %v3171 = vpop.xlane.xlu0 %3170
      %vm3172 = vcmp.eq.f32.partialorder %v3169, %v3171
      %v3173 = vsel %vm3172, %v3168, inf
      %3174 = vmin.xlane.f32.xlu0 %v3173
      %v3175 = vpop.xlane.xlu0 %3174
      %v3176 = vcvt.f32.s32 %v3175
      %v3177 = vcvt.f32.s32 %v3171
      %v3178 = vshll.u32 %v3177, 16
      %v3179 = vadd.s32 %v3178, %v3176
      %vm3180 = vcmp.lt.s32.totalorder %v3022, %v3023
      %v3181 = vsel %vm3180, %v3022, %v3023
      %v3182 = vand.u32 %v3181, 65535
      %v3183 = vshra.s32 %v3181, 16
      %v3184 = vcvt.s32.f32 %v3182
      %v3185 = vcvt.s32.f32 %v3183
      %3186 = vmin.xlane.f32.xlu0 %v3185
      %v3187 = vpop.xlane.xlu0 %3186
      %vm3188 = vcmp.eq.f32.partialorder %v3185, %v3187
      %v3189 = vsel %vm3188, %v3184, inf
      %3190 = vmin.xlane.f32.xlu0 %v3189
      %v3191 = vpop.xlane.xlu0 %3190
      %v3192 = vcvt.f32.s32 %v3191
      %v3193 = vcvt.f32.s32 %v3187
      %v3194 = vshll.u32 %v3193, 16
      %v3195 = vadd.s32 %v3194, %v3192
      %vm3196 = vcmp.lt.s32.totalorder %v3024, %v3025
      %v3197 = vsel %vm3196, %v3024, %v3025
      %v3198 = vand.u32 %v3197, 65535
      %v3199 = vshra.s32 %v3197, 16
      %v3200 = vcvt.s32.f32 %v3198
      %v3201 = vcvt.s32.f32 %v3199
      %3202 = vmin.xlane.f32.xlu0 %v3201
      %v3203 = vpop.xlane.xlu0 %3202
      %vm3204 = vcmp.eq.f32.partialorder %v3201, %v3203
      %v3205 = vsel %vm3204, %v3200, inf
      %3206 = vmin.xlane.f32.xlu0 %v3205
      %v3207 = vpop.xlane.xlu0 %3206
      %v3208 = vcvt.f32.s32 %v3207
      %v3209 = vcvt.f32.s32 %v3203
      %v3210 = vshll.u32 %v3209, 16
      %v3211 = vadd.s32 %v3210, %v3208
      %vm3212 = vcmp.lt.s32.totalorder %v3026, %v3027
      %v3213 = vsel %vm3212, %v3026, %v3027
      %v3214 = vand.u32 %v3213, 65535
      %v3215 = vshra.s32 %v3213, 16
      %v3216 = vcvt.s32.f32 %v3214
      %v3217 = vcvt.s32.f32 %v3215
      %3218 = vmin.xlane.f32.xlu0 %v3217
      %v3219 = vpop.xlane.xlu0 %3218
      %vm3220 = vcmp.eq.f32.partialorder %v3217, %v3219
      %v3221 = vsel %vm3220, %v3216, inf
      %3222 = vmin.xlane.f32.xlu0 %v3221
      %v3223 = vpop.xlane.xlu0 %3222
      %v3224 = vcvt.f32.s32 %v3223
      %v3225 = vcvt.f32.s32 %v3219
      %v3226 = vshll.u32 %v3225, 16
      %v3227 = vadd.s32 %v3226, %v3224
      %vm3228 = vcmp.lt.s32.totalorder %v3028, %v3029
      %v3229 = vsel %vm3228, %v3028, %v3029
      %v3230 = vand.u32 %v3229, 65535
      %v3231 = vshra.s32 %v3229, 16
      %v3232 = vcvt.s32.f32 %v3230
      %v3233 = vcvt.s32.f32 %v3231
      %3234 = vmin.xlane.f32.xlu0 %v3233
      %v3235 = vpop.xlane.xlu0 %3234
      %vm3236 = vcmp.eq.f32.partialorder %v3233, %v3235
      %v3237 = vsel %vm3236, %v3232, inf
      %3238 = vmin.xlane.f32.xlu0 %v3237
      %v3239 = vpop.xlane.xlu0 %3238
      %v3240 = vcvt.f32.s32 %v3239
      %v3241 = vcvt.f32.s32 %v3235
      %v3242 = vshll.u32 %v3241, 16
      %v3243 = vadd.s32 %v3242, %v3240
      %vm3244 = vcmp.lt.s32.totalorder %v3030, %v3031
      %v3245 = vsel %vm3244, %v3030, %v3031
      %v3246 = vand.u32 %v3245, 65535
      %v3247 = vshra.s32 %v3245, 16
      %v3248 = vcvt.s32.f32 %v3246
      %v3249 = vcvt.s32.f32 %v3247
      %3250 = vmin.xlane.f32.xlu0 %v3249
      %v3251 = vpop.xlane.xlu0 %3250
      %vm3252 = vcmp.eq.f32.partialorder %v3249, %v3251
      %v3253 = vsel %vm3252, %v3248, inf
      %3254 = vmin.xlane.f32.xlu0 %v3253
      %v3255 = vpop.xlane.xlu0 %3254
      %v3256 = vcvt.f32.s32 %v3255
      %v3257 = vcvt.f32.s32 %v3251
      %v3258 = vshll.u32 %v3257, 16
      %v3259 = vadd.s32 %v3258, %v3256
      %vm3260 = vcmp.lt.s32.totalorder %v3032, %v3033
      %v3261 = vsel %vm3260, %v3032, %v3033
      %v3262 = vand.u32 %v3261, 65535
      %v3263 = vshra.s32 %v3261, 16
      %v3264 = vcvt.s32.f32 %v3262
      %v3265 = vcvt.s32.f32 %v3263
      %3266 = vmin.xlane.f32.xlu0 %v3265
      %v3267 = vpop.xlane.xlu0 %3266
      %vm3268 = vcmp.eq.f32.partialorder %v3265, %v3267
      %v3269 = vsel %vm3268, %v3264, inf
      %3270 = vmin.xlane.f32.xlu0 %v3269
      %v3271 = vpop.xlane.xlu0 %3270
      %v3272 = vcvt.f32.s32 %v3271
      %v3273 = vcvt.f32.s32 %v3267
      %v3274 = vshll.u32 %v3273, 16
      %v3275 = vadd.s32 %v3274, %v3272
      %vm3276 = vcmp.lt.s32.totalorder %v3034, %v3035
      %v3277 = vsel %vm3276, %v3034, %v3035
      %v3278 = vand.u32 %v3277, 65535
      %v3279 = vshra.s32 %v3277, 16
      %v3280 = vcvt.s32.f32 %v3278
      %v3281 = vcvt.s32.f32 %v3279
      %3282 = vmin.xlane.f32.xlu0 %v3281
      %v3283 = vpop.xlane.xlu0 %3282
      %vm3284 = vcmp.eq.f32.partialorder %v3281, %v3283
      %v3285 = vsel %vm3284, %v3280, inf
      %3286 = vmin.xlane.f32.xlu0 %v3285
      %v3287 = vpop.xlane.xlu0 %3286
      %v3288 = vcvt.f32.s32 %v3287
      %v3289 = vcvt.f32.s32 %v3283
      %v3290 = vshll.u32 %v3289, 16
      %v3291 = vadd.s32 %v3290, %v3288
      %v3292 = vand.u32 %v3051, 255
      %v3293 = vand.u32 %v3067, 255
      %v3294 = vand.u32 %v3083, 255
      %v3295 = vand.u32 %v3099, 255
      %v3296 = vand.u32 %v3115, 255
      %v3297 = vand.u32 %v3131, 255
      %v3298 = vand.u32 %v3147, 255
      %v3299 = vand.u32 %v3163, 255
      %v3300 = vand.u32 %v3179, 255
      %v3301 = vand.u32 %v3195, 255
      %v3302 = vand.u32 %v3211, 255
      %v3303 = vand.u32 %v3227, 255
      %v3304 = vand.u32 %v3243, 255
      %v3305 = vand.u32 %v3259, 255
      %v3306 = vand.u32 %v3275, 255
      %v3307 = vand.u32 %v3291, 255
      %vm3308 = vcmask 56368
      %3309 = vst.msk [vmem:[%s245] sm:$0xff] %vm3308, %v3292
      %3310 = vst.msk [vmem:[%s245 + $0x8] sm:$0xff] %vm3308, %v3293
      %3311 = vst.msk [vmem:[%s245 + $0x10] sm:$0xff] %vm3308, %v3294
      %3312 = vst.msk [vmem:[%s245 + $0x18] sm:$0xff] %vm3308, %v3295
      %3313 = vst.msk [vmem:[%s245 + $0x20] sm:$0xff] %vm3308, %v3296
      %3314 = vst.msk [vmem:[%s245 + $0x28] sm:$0xff] %vm3308, %v3297
      %3315 = vst.msk [vmem:[%s245 + $0x30] sm:$0xff] %vm3308, %v3298
      %3316 = vst.msk [vmem:[%s245 + $0x38] sm:$0xff] %vm3308, %v3299
      %3317 = vst.msk [vmem:[%s245 + $0x40] sm:$0xff] %vm3308, %v3300
      %3318 = vst.msk [vmem:[%s245 + $0x48] sm:$0xff] %vm3308, %v3301
      %3319 = vst.msk [vmem:[%s245 + $0x50] sm:$0xff] %vm3308, %v3302
      %3320 = vst.msk [vmem:[%s245 + $0x58] sm:$0xff] %vm3308, %v3303
      %3321 = vst.msk [vmem:[%s245 + $0x60] sm:$0xff] %vm3308, %v3304
      %3322 = vst.msk [vmem:[%s245 + $0x68] sm:$0xff] %vm3308, %v3305
      %3323 = vst.msk [vmem:[%s245 + $0x70] sm:$0xff] %vm3308, %v3306
      %3324 = vst.msk [vmem:[%s245 + $0x78] sm:$0xff] %vm3308, %v3307
      %vm3325 = vcmp.eq.s32.totalorder %v3004, %v3051
      %vm3326 = vcmp.eq.s32.totalorder %v3005, %v3051
      %vm3327 = vcmp.eq.s32.totalorder %v3006, %v3067
      %vm3328 = vcmp.eq.s32.totalorder %v3007, %v3067
      %vm3329 = vcmp.eq.s32.totalorder %v3008, %v3083
      %vm3330 = vcmp.eq.s32.totalorder %v3009, %v3083
      %vm3331 = vcmp.eq.s32.totalorder %v3010, %v3099
      %vm3332 = vcmp.eq.s32.totalorder %v3011, %v3099
      %vm3333 = vcmp.eq.s32.totalorder %v3012, %v3115
      %vm3334 = vcmp.eq.s32.totalorder %v3013, %v3115
      %vm3335 = vcmp.eq.s32.totalorder %v3014, %v3131
      %vm3336 = vcmp.eq.s32.totalorder %v3015, %v3131
      %vm3337 = vcmp.eq.s32.totalorder %v3016, %v3147
      %vm3338 = vcmp.eq.s32.totalorder %v3017, %v3147
      %vm3339 = vcmp.eq.s32.totalorder %v3018, %v3163
      %vm3340 = vcmp.eq.s32.totalorder %v3019, %v3163
      %vm3341 = vcmp.eq.s32.totalorder %v3020, %v3179
      %vm3342 = vcmp.eq.s32.totalorder %v3021, %v3179
      %vm3343 = vcmp.eq.s32.totalorder %v3022, %v3195
      %vm3344 = vcmp.eq.s32.totalorder %v3023, %v3195
      %vm3345 = vcmp.eq.s32.totalorder %v3024, %v3211
      %vm3346 = vcmp.eq.s32.totalorder %v3025, %v3211
      %vm3347 = vcmp.eq.s32.totalorder %v3026, %v3227
      %vm3348 = vcmp.eq.s32.totalorder %v3027, %v3227
      %vm3349 = vcmp.eq.s32.totalorder %v3028, %v3243
      %vm3350 = vcmp.eq.s32.totalorder %v3029, %v3243
      %vm3351 = vcmp.eq.s32.totalorder %v3030, %v3259
      %vm3352 = vcmp.eq.s32.totalorder %v3031, %v3259
      %vm3353 = vcmp.eq.s32.totalorder %v3032, %v3275
      %vm3354 = vcmp.eq.s32.totalorder %v3033, %v3275
      %vm3355 = vcmp.eq.s32.totalorder %v3034, %v3291
      %vm3356 = vcmp.eq.s32.totalorder %v3035, %v3291
      %v3357 = vsel %vm3325, 2147483647, %v3004
      %v3358 = vsel %vm3326, 2147483647, %v3005
      %v3359 = vsel %vm3327, 2147483647, %v3006
      %v3360 = vsel %vm3328, 2147483647, %v3007
      %v3361 = vsel %vm3329, 2147483647, %v3008
      %v3362 = vsel %vm3330, 2147483647, %v3009
      %v3363 = vsel %vm3331, 2147483647, %v3010
      %v3364 = vsel %vm3332, 2147483647, %v3011
      %v3365 = vsel %vm3333, 2147483647, %v3012
      %v3366 = vsel %vm3334, 2147483647, %v3013
      %v3367 = vsel %vm3335, 2147483647, %v3014
      %v3368 = vsel %vm3336, 2147483647, %v3015
      %v3369 = vsel %vm3337, 2147483647, %v3016
      %v3370 = vsel %vm3338, 2147483647, %v3017
      %v3371 = vsel %vm3339, 2147483647, %v3018
      %v3372 = vsel %vm3340, 2147483647, %v3019
      %v3373 = vsel %vm3341, 2147483647, %v3020
      %v3374 = vsel %vm3342, 2147483647, %v3021
      %v3375 = vsel %vm3343, 2147483647, %v3022
      %v3376 = vsel %vm3344, 2147483647, %v3023
      %v3377 = vsel %vm3345, 2147483647, %v3024
      %v3378 = vsel %vm3346, 2147483647, %v3025
      %v3379 = vsel %vm3347, 2147483647, %v3026
      %v3380 = vsel %vm3348, 2147483647, %v3027
      %v3381 = vsel %vm3349, 2147483647, %v3028
      %v3382 = vsel %vm3350, 2147483647, %v3029
      %v3383 = vsel %vm3351, 2147483647, %v3030
      %v3384 = vsel %vm3352, 2147483647, %v3031
      %v3385 = vsel %vm3353, 2147483647, %v3032
      %v3386 = vsel %vm3354, 2147483647, %v3033
      %v3387 = vsel %vm3355, 2147483647, %v3034
      %v3388 = vsel %vm3356, 2147483647, %v3035
      %vm3389 = vcmp.lt.s32.totalorder %v3357, %v3358
      %v3390 = vsel %vm3389, %v3357, %v3358
      %v3391 = vand.u32 %v3390, 65535
      %v3392 = vshra.s32 %v3390, 16
      %v3393 = vcvt.s32.f32 %v3391
      %v3394 = vcvt.s32.f32 %v3392
      %3395 = vmin.xlane.f32.xlu0 %v3394
      %v3396 = vpop.xlane.xlu0 %3395
      %vm3397 = vcmp.eq.f32.partialorder %v3394, %v3396
      %v3398 = vsel %vm3397, %v3393, inf
      %3399 = vmin.xlane.f32.xlu0 %v3398
      %v3400 = vpop.xlane.xlu0 %3399
      %v3401 = vcvt.f32.s32 %v3400
      %v3402 = vcvt.f32.s32 %v3396
      %v3403 = vshll.u32 %v3402, 16
      %v3404 = vadd.s32 %v3403, %v3401
      %vm3405 = vcmp.lt.s32.totalorder %v3359, %v3360
      %v3406 = vsel %vm3405, %v3359, %v3360
      %v3407 = vand.u32 %v3406, 65535
      %v3408 = vshra.s32 %v3406, 16
      %v3409 = vcvt.s32.f32 %v3407
      %v3410 = vcvt.s32.f32 %v3408
      %3411 = vmin.xlane.f32.xlu0 %v3410
      %v3412 = vpop.xlane.xlu0 %3411
      %vm3413 = vcmp.eq.f32.partialorder %v3410, %v3412
      %v3414 = vsel %vm3413, %v3409, inf
      %3415 = vmin.xlane.f32.xlu0 %v3414
      %v3416 = vpop.xlane.xlu0 %3415
      %v3417 = vcvt.f32.s32 %v3416
      %v3418 = vcvt.f32.s32 %v3412
      %v3419 = vshll.u32 %v3418, 16
      %v3420 = vadd.s32 %v3419, %v3417
      %vm3421 = vcmp.lt.s32.totalorder %v3361, %v3362
      %v3422 = vsel %vm3421, %v3361, %v3362
      %v3423 = vand.u32 %v3422, 65535
      %v3424 = vshra.s32 %v3422, 16
      %v3425 = vcvt.s32.f32 %v3423
      %v3426 = vcvt.s32.f32 %v3424
      %3427 = vmin.xlane.f32.xlu0 %v3426
      %v3428 = vpop.xlane.xlu0 %3427
      %vm3429 = vcmp.eq.f32.partialorder %v3426, %v3428
      %v3430 = vsel %vm3429, %v3425, inf
      %3431 = vmin.xlane.f32.xlu0 %v3430
      %v3432 = vpop.xlane.xlu0 %3431
      %v3433 = vcvt.f32.s32 %v3432
      %v3434 = vcvt.f32.s32 %v3428
      %v3435 = vshll.u32 %v3434, 16
      %v3436 = vadd.s32 %v3435, %v3433
      %vm3437 = vcmp.lt.s32.totalorder %v3363, %v3364
      %v3438 = vsel %vm3437, %v3363, %v3364
      %v3439 = vand.u32 %v3438, 65535
      %v3440 = vshra.s32 %v3438, 16
      %v3441 = vcvt.s32.f32 %v3439
      %v3442 = vcvt.s32.f32 %v3440
      %3443 = vmin.xlane.f32.xlu0 %v3442
      %v3444 = vpop.xlane.xlu0 %3443
      %vm3445 = vcmp.eq.f32.partialorder %v3442, %v3444
      %v3446 = vsel %vm3445, %v3441, inf
      %3447 = vmin.xlane.f32.xlu0 %v3446
      %v3448 = vpop.xlane.xlu0 %3447
      %v3449 = vcvt.f32.s32 %v3448
      %v3450 = vcvt.f32.s32 %v3444
      %v3451 = vshll.u32 %v3450, 16
      %v3452 = vadd.s32 %v3451, %v3449
      %vm3453 = vcmp.lt.s32.totalorder %v3365, %v3366
      %v3454 = vsel %vm3453, %v3365, %v3366
      %v3455 = vand.u32 %v3454, 65535
      %v3456 = vshra.s32 %v3454, 16
      %v3457 = vcvt.s32.f32 %v3455
      %v3458 = vcvt.s32.f32 %v3456
      %3459 = vmin.xlane.f32.xlu0 %v3458
      %v3460 = vpop.xlane.xlu0 %3459
      %vm3461 = vcmp.eq.f32.partialorder %v3458, %v3460
      %v3462 = vsel %vm3461, %v3457, inf
      %3463 = vmin.xlane.f32.xlu0 %v3462
      %v3464 = vpop.xlane.xlu0 %3463
      %v3465 = vcvt.f32.s32 %v3464
      %v3466 = vcvt.f32.s32 %v3460
      %v3467 = vshll.u32 %v3466, 16
      %v3468 = vadd.s32 %v3467, %v3465
      %vm3469 = vcmp.lt.s32.totalorder %v3367, %v3368
      %v3470 = vsel %vm3469, %v3367, %v3368
      %v3471 = vand.u32 %v3470, 65535
      %v3472 = vshra.s32 %v3470, 16
      %v3473 = vcvt.s32.f32 %v3471
      %v3474 = vcvt.s32.f32 %v3472
      %3475 = vmin.xlane.f32.xlu0 %v3474
      %v3476 = vpop.xlane.xlu0 %3475
      %vm3477 = vcmp.eq.f32.partialorder %v3474, %v3476
      %v3478 = vsel %vm3477, %v3473, inf
      %3479 = vmin.xlane.f32.xlu0 %v3478
      %v3480 = vpop.xlane.xlu0 %3479
      %v3481 = vcvt.f32.s32 %v3480
      %v3482 = vcvt.f32.s32 %v3476
      %v3483 = vshll.u32 %v3482, 16
      %v3484 = vadd.s32 %v3483, %v3481
      %vm3485 = vcmp.lt.s32.totalorder %v3369, %v3370
      %v3486 = vsel %vm3485, %v3369, %v3370
      %v3487 = vand.u32 %v3486, 65535
      %v3488 = vshra.s32 %v3486, 16
      %v3489 = vcvt.s32.f32 %v3487
      %v3490 = vcvt.s32.f32 %v3488
      %3491 = vmin.xlane.f32.xlu0 %v3490
      %v3492 = vpop.xlane.xlu0 %3491
      %vm3493 = vcmp.eq.f32.partialorder %v3490, %v3492
      %v3494 = vsel %vm3493, %v3489, inf
      %3495 = vmin.xlane.f32.xlu0 %v3494
      %v3496 = vpop.xlane.xlu0 %3495
      %v3497 = vcvt.f32.s32 %v3496
      %v3498 = vcvt.f32.s32 %v3492
      %v3499 = vshll.u32 %v3498, 16
      %v3500 = vadd.s32 %v3499, %v3497
      %vm3501 = vcmp.lt.s32.totalorder %v3371, %v3372
      %v3502 = vsel %vm3501, %v3371, %v3372
      %v3503 = vand.u32 %v3502, 65535
      %v3504 = vshra.s32 %v3502, 16
      %v3505 = vcvt.s32.f32 %v3503
      %v3506 = vcvt.s32.f32 %v3504
      %3507 = vmin.xlane.f32.xlu0 %v3506
      %v3508 = vpop.xlane.xlu0 %3507
      %vm3509 = vcmp.eq.f32.partialorder %v3506, %v3508
      %v3510 = vsel %vm3509, %v3505, inf
      %3511 = vmin.xlane.f32.xlu0 %v3510
      %v3512 = vpop.xlane.xlu0 %3511
      %v3513 = vcvt.f32.s32 %v3512
      %v3514 = vcvt.f32.s32 %v3508
      %v3515 = vshll.u32 %v3514, 16
      %v3516 = vadd.s32 %v3515, %v3513
      %vm3517 = vcmp.lt.s32.totalorder %v3373, %v3374
      %v3518 = vsel %vm3517, %v3373, %v3374
      %v3519 = vand.u32 %v3518, 65535
      %v3520 = vshra.s32 %v3518, 16
      %v3521 = vcvt.s32.f32 %v3519
      %v3522 = vcvt.s32.f32 %v3520
      %3523 = vmin.xlane.f32.xlu0 %v3522
      %v3524 = vpop.xlane.xlu0 %3523
      %vm3525 = vcmp.eq.f32.partialorder %v3522, %v3524
      %v3526 = vsel %vm3525, %v3521, inf
      %3527 = vmin.xlane.f32.xlu0 %v3526
      %v3528 = vpop.xlane.xlu0 %3527
      %v3529 = vcvt.f32.s32 %v3528
      %v3530 = vcvt.f32.s32 %v3524
      %v3531 = vshll.u32 %v3530, 16
      %v3532 = vadd.s32 %v3531, %v3529
      %vm3533 = vcmp.lt.s32.totalorder %v3375, %v3376
      %v3534 = vsel %vm3533, %v3375, %v3376
      %v3535 = vand.u32 %v3534, 65535
      %v3536 = vshra.s32 %v3534, 16
      %v3537 = vcvt.s32.f32 %v3535
      %v3538 = vcvt.s32.f32 %v3536
      %3539 = vmin.xlane.f32.xlu0 %v3538
      %v3540 = vpop.xlane.xlu0 %3539
      %vm3541 = vcmp.eq.f32.partialorder %v3538, %v3540
      %v3542 = vsel %vm3541, %v3537, inf
      %3543 = vmin.xlane.f32.xlu0 %v3542
      %v3544 = vpop.xlane.xlu0 %3543
      %v3545 = vcvt.f32.s32 %v3544
      %v3546 = vcvt.f32.s32 %v3540
      %v3547 = vshll.u32 %v3546, 16
      %v3548 = vadd.s32 %v3547, %v3545
      %vm3549 = vcmp.lt.s32.totalorder %v3377, %v3378
      %v3550 = vsel %vm3549, %v3377, %v3378
      %v3551 = vand.u32 %v3550, 65535
      %v3552 = vshra.s32 %v3550, 16
      %v3553 = vcvt.s32.f32 %v3551
      %v3554 = vcvt.s32.f32 %v3552
      %3555 = vmin.xlane.f32.xlu0 %v3554
      %v3556 = vpop.xlane.xlu0 %3555
      %vm3557 = vcmp.eq.f32.partialorder %v3554, %v3556
      %v3558 = vsel %vm3557, %v3553, inf
      %3559 = vmin.xlane.f32.xlu0 %v3558
      %v3560 = vpop.xlane.xlu0 %3559
      %v3561 = vcvt.f32.s32 %v3560
      %v3562 = vcvt.f32.s32 %v3556
      %v3563 = vshll.u32 %v3562, 16
      %v3564 = vadd.s32 %v3563, %v3561
      %vm3565 = vcmp.lt.s32.totalorder %v3379, %v3380
      %v3566 = vsel %vm3565, %v3379, %v3380
      %v3567 = vand.u32 %v3566, 65535
      %v3568 = vshra.s32 %v3566, 16
      %v3569 = vcvt.s32.f32 %v3567
      %v3570 = vcvt.s32.f32 %v3568
      %3571 = vmin.xlane.f32.xlu0 %v3570
      %v3572 = vpop.xlane.xlu0 %3571
      %vm3573 = vcmp.eq.f32.partialorder %v3570, %v3572
      %v3574 = vsel %vm3573, %v3569, inf
      %3575 = vmin.xlane.f32.xlu0 %v3574
      %v3576 = vpop.xlane.xlu0 %3575
      %v3577 = vcvt.f32.s32 %v3576
      %v3578 = vcvt.f32.s32 %v3572
      %v3579 = vshll.u32 %v3578, 16
      %v3580 = vadd.s32 %v3579, %v3577
      %vm3581 = vcmp.lt.s32.totalorder %v3381, %v3382
      %v3582 = vsel %vm3581, %v3381, %v3382
      %v3583 = vand.u32 %v3582, 65535
      %v3584 = vshra.s32 %v3582, 16
      %v3585 = vcvt.s32.f32 %v3583
      %v3586 = vcvt.s32.f32 %v3584
      %3587 = vmin.xlane.f32.xlu0 %v3586
      %v3588 = vpop.xlane.xlu0 %3587
      %vm3589 = vcmp.eq.f32.partialorder %v3586, %v3588
      %v3590 = vsel %vm3589, %v3585, inf
      %3591 = vmin.xlane.f32.xlu0 %v3590
      %v3592 = vpop.xlane.xlu0 %3591
      %v3593 = vcvt.f32.s32 %v3592
      %v3594 = vcvt.f32.s32 %v3588
      %v3595 = vshll.u32 %v3594, 16
      %v3596 = vadd.s32 %v3595, %v3593
      %vm3597 = vcmp.lt.s32.totalorder %v3383, %v3384
      %v3598 = vsel %vm3597, %v3383, %v3384
      %v3599 = vand.u32 %v3598, 65535
      %v3600 = vshra.s32 %v3598, 16
      %v3601 = vcvt.s32.f32 %v3599
      %v3602 = vcvt.s32.f32 %v3600
      %3603 = vmin.xlane.f32.xlu0 %v3602
      %v3604 = vpop.xlane.xlu0 %3603
      %vm3605 = vcmp.eq.f32.partialorder %v3602, %v3604
      %v3606 = vsel %vm3605, %v3601, inf
      %3607 = vmin.xlane.f32.xlu0 %v3606
      %v3608 = vpop.xlane.xlu0 %3607
      %v3609 = vcvt.f32.s32 %v3608
      %v3610 = vcvt.f32.s32 %v3604
      %v3611 = vshll.u32 %v3610, 16
      %v3612 = vadd.s32 %v3611, %v3609
      %vm3613 = vcmp.lt.s32.totalorder %v3385, %v3386
      %v3614 = vsel %vm3613, %v3385, %v3386
      %v3615 = vand.u32 %v3614, 65535
      %v3616 = vshra.s32 %v3614, 16
      %v3617 = vcvt.s32.f32 %v3615
      %v3618 = vcvt.s32.f32 %v3616
      %3619 = vmin.xlane.f32.xlu0 %v3618
      %v3620 = vpop.xlane.xlu0 %3619
      %vm3621 = vcmp.eq.f32.partialorder %v3618, %v3620
      %v3622 = vsel %vm3621, %v3617, inf
      %3623 = vmin.xlane.f32.xlu0 %v3622
      %v3624 = vpop.xlane.xlu0 %3623
      %v3625 = vcvt.f32.s32 %v3624
      %v3626 = vcvt.f32.s32 %v3620
      %v3627 = vshll.u32 %v3626, 16
      %v3628 = vadd.s32 %v3627, %v3625
      %vm3629 = vcmp.lt.s32.totalorder %v3387, %v3388
      %v3630 = vsel %vm3629, %v3387, %v3388
      %v3631 = vand.u32 %v3630, 65535
      %v3632 = vshra.s32 %v3630, 16
      %v3633 = vcvt.s32.f32 %v3631
      %v3634 = vcvt.s32.f32 %v3632
      %3635 = vmin.xlane.f32.xlu0 %v3634
      %v3636 = vpop.xlane.xlu0 %3635
      %vm3637 = vcmp.eq.f32.partialorder %v3634, %v3636
      %v3638 = vsel %vm3637, %v3633, inf
      %3639 = vmin.xlane.f32.xlu0 %v3638
      %v3640 = vpop.xlane.xlu0 %3639
      %v3641 = vcvt.f32.s32 %v3640
      %v3642 = vcvt.f32.s32 %v3636
      %v3643 = vshll.u32 %v3642, 16
      %v3644 = vadd.s32 %v3643, %v3641
      %v3645 = vand.u32 %v3404, 255
      %v3646 = vand.u32 %v3420, 255
      %v3647 = vand.u32 %v3436, 255
      %v3648 = vand.u32 %v3452, 255
      %v3649 = vand.u32 %v3468, 255
      %v3650 = vand.u32 %v3484, 255
      %v3651 = vand.u32 %v3500, 255
      %v3652 = vand.u32 %v3516, 255
      %v3653 = vand.u32 %v3532, 255
      %v3654 = vand.u32 %v3548, 255
      %v3655 = vand.u32 %v3564, 255
      %v3656 = vand.u32 %v3580, 255
      %v3657 = vand.u32 %v3596, 255
      %v3658 = vand.u32 %v3612, 255
      %v3659 = vand.u32 %v3628, 255
      %v3660 = vand.u32 %v3644, 255
      %vm3661 = vcmask 64568
      %3662 = vst.msk [vmem:[%s245] sm:$0xff] %vm3661, %v3645
      %3663 = vst.msk [vmem:[%s245 + $0x8] sm:$0xff] %vm3661, %v3646
      %3664 = vst.msk [vmem:[%s245 + $0x10] sm:$0xff] %vm3661, %v3647
      %3665 = vst.msk [vmem:[%s245 + $0x18] sm:$0xff] %vm3661, %v3648
      %3666 = vst.msk [vmem:[%s245 + $0x20] sm:$0xff] %vm3661, %v3649
      %3667 = vst.msk [vmem:[%s245 + $0x28] sm:$0xff] %vm3661, %v3650
      %3668 = vst.msk [vmem:[%s245 + $0x30] sm:$0xff] %vm3661, %v3651
      %3669 = vst.msk [vmem:[%s245 + $0x38] sm:$0xff] %vm3661, %v3652
      %3670 = vst.msk [vmem:[%s245 + $0x40] sm:$0xff] %vm3661, %v3653
      %3671 = vst.msk [vmem:[%s245 + $0x48] sm:$0xff] %vm3661, %v3654
      %3672 = vst.msk [vmem:[%s245 + $0x50] sm:$0xff] %vm3661, %v3655
      %3673 = vst.msk [vmem:[%s245 + $0x58] sm:$0xff] %vm3661, %v3656
      %3674 = vst.msk [vmem:[%s245 + $0x60] sm:$0xff] %vm3661, %v3657
      %3675 = vst.msk [vmem:[%s245 + $0x68] sm:$0xff] %vm3661, %v3658
      %3676 = vst.msk [vmem:[%s245 + $0x70] sm:$0xff] %vm3661, %v3659
      %3677 = vst.msk [vmem:[%s245 + $0x78] sm:$0xff] %vm3661, %v3660
      %vm3678 = vcmp.eq.s32.totalorder %v3357, %v3404
      %vm3679 = vcmp.eq.s32.totalorder %v3358, %v3404
      %vm3680 = vcmp.eq.s32.totalorder %v3359, %v3420
      %vm3681 = vcmp.eq.s32.totalorder %v3360, %v3420
      %vm3682 = vcmp.eq.s32.totalorder %v3361, %v3436
      %vm3683 = vcmp.eq.s32.totalorder %v3362, %v3436
      %vm3684 = vcmp.eq.s32.totalorder %v3363, %v3452
      %vm3685 = vcmp.eq.s32.totalorder %v3364, %v3452
      %vm3686 = vcmp.eq.s32.totalorder %v3365, %v3468
      %vm3687 = vcmp.eq.s32.totalorder %v3366, %v3468
      %vm3688 = vcmp.eq.s32.totalorder %v3367, %v3484
      %vm3689 = vcmp.eq.s32.totalorder %v3368, %v3484
      %vm3690 = vcmp.eq.s32.totalorder %v3369, %v3500
      %vm3691 = vcmp.eq.s32.totalorder %v3370, %v3500
      %vm3692 = vcmp.eq.s32.totalorder %v3371, %v3516
      %vm3693 = vcmp.eq.s32.totalorder %v3372, %v3516
      %vm3694 = vcmp.eq.s32.totalorder %v3373, %v3532
      %vm3695 = vcmp.eq.s32.totalorder %v3374, %v3532
      %vm3696 = vcmp.eq.s32.totalorder %v3375, %v3548
      %vm3697 = vcmp.eq.s32.totalorder %v3376, %v3548
      %vm3698 = vcmp.eq.s32.totalorder %v3377, %v3564
      %vm3699 = vcmp.eq.s32.totalorder %v3378, %v3564
      %vm3700 = vcmp.eq.s32.totalorder %v3379, %v3580
      %vm3701 = vcmp.eq.s32.totalorder %v3380, %v3580
      %vm3702 = vcmp.eq.s32.totalorder %v3381, %v3596
      %vm3703 = vcmp.eq.s32.totalorder %v3382, %v3596
      %vm3704 = vcmp.eq.s32.totalorder %v3383, %v3612
      %vm3705 = vcmp.eq.s32.totalorder %v3384, %v3612
      %vm3706 = vcmp.eq.s32.totalorder %v3385, %v3628
      %vm3707 = vcmp.eq.s32.totalorder %v3386, %v3628
      %vm3708 = vcmp.eq.s32.totalorder %v3387, %v3644
      %vm3709 = vcmp.eq.s32.totalorder %v3388, %v3644
      %v3710 = vsel %vm3678, 2147483647, %v3357
      %v3711 = vsel %vm3679, 2147483647, %v3358
      %v3712 = vsel %vm3680, 2147483647, %v3359
      %v3713 = vsel %vm3681, 2147483647, %v3360
      %v3714 = vsel %vm3682, 2147483647, %v3361
      %v3715 = vsel %vm3683, 2147483647, %v3362
      %v3716 = vsel %vm3684, 2147483647, %v3363
      %v3717 = vsel %vm3685, 2147483647, %v3364
      %v3718 = vsel %vm3686, 2147483647, %v3365
      %v3719 = vsel %vm3687, 2147483647, %v3366
      %v3720 = vsel %vm3688, 2147483647, %v3367
      %v3721 = vsel %vm3689, 2147483647, %v3368
      %v3722 = vsel %vm3690, 2147483647, %v3369
      %v3723 = vsel %vm3691, 2147483647, %v3370
      %v3724 = vsel %vm3692, 2147483647, %v3371
      %v3725 = vsel %vm3693, 2147483647, %v3372
      %v3726 = vsel %vm3694, 2147483647, %v3373
      %v3727 = vsel %vm3695, 2147483647, %v3374
      %v3728 = vsel %vm3696, 2147483647, %v3375
      %v3729 = vsel %vm3697, 2147483647, %v3376
      %v3730 = vsel %vm3698, 2147483647, %v3377
      %v3731 = vsel %vm3699, 2147483647, %v3378
      %v3732 = vsel %vm3700, 2147483647, %v3379
      %v3733 = vsel %vm3701, 2147483647, %v3380
      %v3734 = vsel %vm3702, 2147483647, %v3381
      %v3735 = vsel %vm3703, 2147483647, %v3382
      %v3736 = vsel %vm3704, 2147483647, %v3383
      %v3737 = vsel %vm3705, 2147483647, %v3384
      %v3738 = vsel %vm3706, 2147483647, %v3385
      %v3739 = vsel %vm3707, 2147483647, %v3386
      %v3740 = vsel %vm3708, 2147483647, %v3387
      %v3741 = vsel %vm3709, 2147483647, %v3388
      %vm3742 = vcmp.lt.s32.totalorder %v3710, %v3711
      %v3743 = vsel %vm3742, %v3710, %v3711
      %v3744 = vand.u32 %v3743, 65535
      %v3745 = vshra.s32 %v3743, 16
      %v3746 = vcvt.s32.f32 %v3744
      %v3747 = vcvt.s32.f32 %v3745
      %3748 = vmin.xlane.f32.xlu0 %v3747
      %v3749 = vpop.xlane.xlu0 %3748
      %vm3750 = vcmp.eq.f32.partialorder %v3747, %v3749
      %v3751 = vsel %vm3750, %v3746, inf
      %3752 = vmin.xlane.f32.xlu0 %v3751
      %v3753 = vpop.xlane.xlu0 %3752
      %v3754 = vcvt.f32.s32 %v3753
      %v3755 = vcvt.f32.s32 %v3749
      %v3756 = vshll.u32 %v3755, 16
      %v3757 = vadd.s32 %v3756, %v3754
      %vm3758 = vcmp.lt.s32.totalorder %v3712, %v3713
      %v3759 = vsel %vm3758, %v3712, %v3713
      %v3760 = vand.u32 %v3759, 65535
      %v3761 = vshra.s32 %v3759, 16
      %v3762 = vcvt.s32.f32 %v3760
      %v3763 = vcvt.s32.f32 %v3761
      %3764 = vmin.xlane.f32.xlu0 %v3763
      %v3765 = vpop.xlane.xlu0 %3764
      %vm3766 = vcmp.eq.f32.partialorder %v3763, %v3765
      %v3767 = vsel %vm3766, %v3762, inf
      %3768 = vmin.xlane.f32.xlu0 %v3767
      %v3769 = vpop.xlane.xlu0 %3768
      %v3770 = vcvt.f32.s32 %v3769
      %v3771 = vcvt.f32.s32 %v3765
      %v3772 = vshll.u32 %v3771, 16
      %v3773 = vadd.s32 %v3772, %v3770
      %vm3774 = vcmp.lt.s32.totalorder %v3714, %v3715
      %v3775 = vsel %vm3774, %v3714, %v3715
      %v3776 = vand.u32 %v3775, 65535
      %v3777 = vshra.s32 %v3775, 16
      %v3778 = vcvt.s32.f32 %v3776
      %v3779 = vcvt.s32.f32 %v3777
      %3780 = vmin.xlane.f32.xlu0 %v3779
      %v3781 = vpop.xlane.xlu0 %3780
      %vm3782 = vcmp.eq.f32.partialorder %v3779, %v3781
      %v3783 = vsel %vm3782, %v3778, inf
      %3784 = vmin.xlane.f32.xlu0 %v3783
      %v3785 = vpop.xlane.xlu0 %3784
      %v3786 = vcvt.f32.s32 %v3785
      %v3787 = vcvt.f32.s32 %v3781
      %v3788 = vshll.u32 %v3787, 16
      %v3789 = vadd.s32 %v3788, %v3786
      %vm3790 = vcmp.lt.s32.totalorder %v3716, %v3717
      %v3791 = vsel %vm3790, %v3716, %v3717
      %v3792 = vand.u32 %v3791, 65535
      %v3793 = vshra.s32 %v3791, 16
      %v3794 = vcvt.s32.f32 %v3792
      %v3795 = vcvt.s32.f32 %v3793
      %3796 = vmin.xlane.f32.xlu0 %v3795
      %v3797 = vpop.xlane.xlu0 %3796
      %vm3798 = vcmp.eq.f32.partialorder %v3795, %v3797
      %v3799 = vsel %vm3798, %v3794, inf
      %3800 = vmin.xlane.f32.xlu0 %v3799
      %v3801 = vpop.xlane.xlu0 %3800
      %v3802 = vcvt.f32.s32 %v3801
      %v3803 = vcvt.f32.s32 %v3797
      %v3804 = vshll.u32 %v3803, 16
      %v3805 = vadd.s32 %v3804, %v3802
      %vm3806 = vcmp.lt.s32.totalorder %v3718, %v3719
      %v3807 = vsel %vm3806, %v3718, %v3719
      %v3808 = vand.u32 %v3807, 65535
      %v3809 = vshra.s32 %v3807, 16
      %v3810 = vcvt.s32.f32 %v3808
      %v3811 = vcvt.s32.f32 %v3809
      %3812 = vmin.xlane.f32.xlu0 %v3811
      %v3813 = vpop.xlane.xlu0 %3812
      %vm3814 = vcmp.eq.f32.partialorder %v3811, %v3813
      %v3815 = vsel %vm3814, %v3810, inf
      %3816 = vmin.xlane.f32.xlu0 %v3815
      %v3817 = vpop.xlane.xlu0 %3816
      %v3818 = vcvt.f32.s32 %v3817
      %v3819 = vcvt.f32.s32 %v3813
      %v3820 = vshll.u32 %v3819, 16
      %v3821 = vadd.s32 %v3820, %v3818
      %vm3822 = vcmp.lt.s32.totalorder %v3720, %v3721
      %v3823 = vsel %vm3822, %v3720, %v3721
      %v3824 = vand.u32 %v3823, 65535
      %v3825 = vshra.s32 %v3823, 16
      %v3826 = vcvt.s32.f32 %v3824
      %v3827 = vcvt.s32.f32 %v3825
      %3828 = vmin.xlane.f32.xlu0 %v3827
      %v3829 = vpop.xlane.xlu0 %3828
      %vm3830 = vcmp.eq.f32.partialorder %v3827, %v3829
      %v3831 = vsel %vm3830, %v3826, inf
      %3832 = vmin.xlane.f32.xlu0 %v3831
      %v3833 = vpop.xlane.xlu0 %3832
      %v3834 = vcvt.f32.s32 %v3833
      %v3835 = vcvt.f32.s32 %v3829
      %v3836 = vshll.u32 %v3835, 16
      %v3837 = vadd.s32 %v3836, %v3834
      %vm3838 = vcmp.lt.s32.totalorder %v3722, %v3723
      %v3839 = vsel %vm3838, %v3722, %v3723
      %v3840 = vand.u32 %v3839, 65535
      %v3841 = vshra.s32 %v3839, 16
      %v3842 = vcvt.s32.f32 %v3840
      %v3843 = vcvt.s32.f32 %v3841
      %3844 = vmin.xlane.f32.xlu0 %v3843
      %v3845 = vpop.xlane.xlu0 %3844
      %vm3846 = vcmp.eq.f32.partialorder %v3843, %v3845
      %v3847 = vsel %vm3846, %v3842, inf
      %3848 = vmin.xlane.f32.xlu0 %v3847
      %v3849 = vpop.xlane.xlu0 %3848
      %v3850 = vcvt.f32.s32 %v3849
      %v3851 = vcvt.f32.s32 %v3845
      %v3852 = vshll.u32 %v3851, 16
      %v3853 = vadd.s32 %v3852, %v3850
      %vm3854 = vcmp.lt.s32.totalorder %v3724, %v3725
      %v3855 = vsel %vm3854, %v3724, %v3725
      %v3856 = vand.u32 %v3855, 65535
      %v3857 = vshra.s32 %v3855, 16
      %v3858 = vcvt.s32.f32 %v3856
      %v3859 = vcvt.s32.f32 %v3857
      %3860 = vmin.xlane.f32.xlu0 %v3859
      %v3861 = vpop.xlane.xlu0 %3860
      %vm3862 = vcmp.eq.f32.partialorder %v3859, %v3861
      %v3863 = vsel %vm3862, %v3858, inf
      %3864 = vmin.xlane.f32.xlu0 %v3863
      %v3865 = vpop.xlane.xlu0 %3864
      %v3866 = vcvt.f32.s32 %v3865
      %v3867 = vcvt.f32.s32 %v3861
      %v3868 = vshll.u32 %v3867, 16
      %v3869 = vadd.s32 %v3868, %v3866
      %vm3870 = vcmp.lt.s32.totalorder %v3726, %v3727
      %v3871 = vsel %vm3870, %v3726, %v3727
      %v3872 = vand.u32 %v3871, 65535
      %v3873 = vshra.s32 %v3871, 16
      %v3874 = vcvt.s32.f32 %v3872
      %v3875 = vcvt.s32.f32 %v3873
      %3876 = vmin.xlane.f32.xlu0 %v3875
      %v3877 = vpop.xlane.xlu0 %3876
      %vm3878 = vcmp.eq.f32.partialorder %v3875, %v3877
      %v3879 = vsel %vm3878, %v3874, inf
      %3880 = vmin.xlane.f32.xlu0 %v3879
      %v3881 = vpop.xlane.xlu0 %3880
      %v3882 = vcvt.f32.s32 %v3881
      %v3883 = vcvt.f32.s32 %v3877
      %v3884 = vshll.u32 %v3883, 16
      %v3885 = vadd.s32 %v3884, %v3882
      %vm3886 = vcmp.lt.s32.totalorder %v3728, %v3729
      %v3887 = vsel %vm3886, %v3728, %v3729
      %v3888 = vand.u32 %v3887, 65535
      %v3889 = vshra.s32 %v3887, 16
      %v3890 = vcvt.s32.f32 %v3888
      %v3891 = vcvt.s32.f32 %v3889
      %3892 = vmin.xlane.f32.xlu0 %v3891
      %v3893 = vpop.xlane.xlu0 %3892
      %vm3894 = vcmp.eq.f32.partialorder %v3891, %v3893
      %v3895 = vsel %vm3894, %v3890, inf
      %3896 = vmin.xlane.f32.xlu0 %v3895
      %v3897 = vpop.xlane.xlu0 %3896
      %v3898 = vcvt.f32.s32 %v3897
      %v3899 = vcvt.f32.s32 %v3893
      %v3900 = vshll.u32 %v3899, 16
      %v3901 = vadd.s32 %v3900, %v3898
      %vm3902 = vcmp.lt.s32.totalorder %v3730, %v3731
      %v3903 = vsel %vm3902, %v3730, %v3731
      %v3904 = vand.u32 %v3903, 65535
      %v3905 = vshra.s32 %v3903, 16
      %v3906 = vcvt.s32.f32 %v3904
      %v3907 = vcvt.s32.f32 %v3905
      %3908 = vmin.xlane.f32.xlu0 %v3907
      %v3909 = vpop.xlane.xlu0 %3908
      %vm3910 = vcmp.eq.f32.partialorder %v3907, %v3909
      %v3911 = vsel %vm3910, %v3906, inf
      %3912 = vmin.xlane.f32.xlu0 %v3911
      %v3913 = vpop.xlane.xlu0 %3912
      %v3914 = vcvt.f32.s32 %v3913
      %v3915 = vcvt.f32.s32 %v3909
      %v3916 = vshll.u32 %v3915, 16
      %v3917 = vadd.s32 %v3916, %v3914
      %vm3918 = vcmp.lt.s32.totalorder %v3732, %v3733
      %v3919 = vsel %vm3918, %v3732, %v3733
      %v3920 = vand.u32 %v3919, 65535
      %v3921 = vshra.s32 %v3919, 16
      %v3922 = vcvt.s32.f32 %v3920
      %v3923 = vcvt.s32.f32 %v3921
      %3924 = vmin.xlane.f32.xlu0 %v3923
      %v3925 = vpop.xlane.xlu0 %3924
      %vm3926 = vcmp.eq.f32.partialorder %v3923, %v3925
      %v3927 = vsel %vm3926, %v3922, inf
      %3928 = vmin.xlane.f32.xlu0 %v3927
      %v3929 = vpop.xlane.xlu0 %3928
      %v3930 = vcvt.f32.s32 %v3929
      %v3931 = vcvt.f32.s32 %v3925
      %v3932 = vshll.u32 %v3931, 16
      %v3933 = vadd.s32 %v3932, %v3930
      %vm3934 = vcmp.lt.s32.totalorder %v3734, %v3735
      %v3935 = vsel %vm3934, %v3734, %v3735
      %v3936 = vand.u32 %v3935, 65535
      %v3937 = vshra.s32 %v3935, 16
      %v3938 = vcvt.s32.f32 %v3936
      %v3939 = vcvt.s32.f32 %v3937
      %3940 = vmin.xlane.f32.xlu0 %v3939
      %v3941 = vpop.xlane.xlu0 %3940
      %vm3942 = vcmp.eq.f32.partialorder %v3939, %v3941
      %v3943 = vsel %vm3942, %v3938, inf
      %3944 = vmin.xlane.f32.xlu0 %v3943
      %v3945 = vpop.xlane.xlu0 %3944
      %v3946 = vcvt.f32.s32 %v3945
      %v3947 = vcvt.f32.s32 %v3941
      %v3948 = vshll.u32 %v3947, 16
      %v3949 = vadd.s32 %v3948, %v3946
      %vm3950 = vcmp.lt.s32.totalorder %v3736, %v3737
      %v3951 = vsel %vm3950, %v3736, %v3737
      %v3952 = vand.u32 %v3951, 65535
      %v3953 = vshra.s32 %v3951, 16
      %v3954 = vcvt.s32.f32 %v3952
      %v3955 = vcvt.s32.f32 %v3953
      %3956 = vmin.xlane.f32.xlu0 %v3955
      %v3957 = vpop.xlane.xlu0 %3956
      %vm3958 = vcmp.eq.f32.partialorder %v3955, %v3957
      %v3959 = vsel %vm3958, %v3954, inf
      %3960 = vmin.xlane.f32.xlu0 %v3959
      %v3961 = vpop.xlane.xlu0 %3960
      %v3962 = vcvt.f32.s32 %v3961
      %v3963 = vcvt.f32.s32 %v3957
      %v3964 = vshll.u32 %v3963, 16
      %v3965 = vadd.s32 %v3964, %v3962
      %vm3966 = vcmp.lt.s32.totalorder %v3738, %v3739
      %v3967 = vsel %vm3966, %v3738, %v3739
      %v3968 = vand.u32 %v3967, 65535
      %v3969 = vshra.s32 %v3967, 16
      %v3970 = vcvt.s32.f32 %v3968
      %v3971 = vcvt.s32.f32 %v3969
      %3972 = vmin.xlane.f32.xlu0 %v3971
      %v3973 = vpop.xlane.xlu0 %3972
      %vm3974 = vcmp.eq.f32.partialorder %v3971, %v3973
      %v3975 = vsel %vm3974, %v3970, inf
      %3976 = vmin.xlane.f32.xlu0 %v3975
      %v3977 = vpop.xlane.xlu0 %3976
      %v3978 = vcvt.f32.s32 %v3977
      %v3979 = vcvt.f32.s32 %v3973
      %v3980 = vshll.u32 %v3979, 16
      %v3981 = vadd.s32 %v3980, %v3978
      %vm3982 = vcmp.lt.s32.totalorder %v3740, %v3741
      %v3983 = vsel %vm3982, %v3740, %v3741
      %v3984 = vand.u32 %v3983, 65535
      %v3985 = vshra.s32 %v3983, 16
      %v3986 = vcvt.s32.f32 %v3984
      %v3987 = vcvt.s32.f32 %v3985
      %3988 = vmin.xlane.f32.xlu0 %v3987
      %v3989 = vpop.xlane.xlu0 %3988
      %vm3990 = vcmp.eq.f32.partialorder %v3987, %v3989
      %v3991 = vsel %vm3990, %v3986, inf
      %3992 = vmin.xlane.f32.xlu0 %v3991
      %v3993 = vpop.xlane.xlu0 %3992
      %v3994 = vcvt.f32.s32 %v3993
      %v3995 = vcvt.f32.s32 %v3989
      %v3996 = vshll.u32 %v3995, 16
      %v3997 = vadd.s32 %v3996, %v3994
      %v3998 = vand.u32 %v3757, 255
      %v3999 = vand.u32 %v3773, 255
      %v4000 = vand.u32 %v3789, 255
      %v4001 = vand.u32 %v3805, 255
      %v4002 = vand.u32 %v3821, 255
      %v4003 = vand.u32 %v3837, 255
      %v4004 = vand.u32 %v3853, 255
      %v4005 = vand.u32 %v3869, 255
      %v4006 = vand.u32 %v3885, 255
      %v4007 = vand.u32 %v3901, 255
      %v4008 = vand.u32 %v3917, 255
      %v4009 = vand.u32 %v3933, 255
      %v4010 = vand.u32 %v3949, 255
      %v4011 = vand.u32 %v3965, 255
      %v4012 = vand.u32 %v3981, 255
      %v4013 = vand.u32 %v3997, 255
      %vm4014 = vcmask 72768
      %4015 = vst.msk [vmem:[%s245] sm:$0xff] %vm4014, %v3998
      %4016 = vst.msk [vmem:[%s245 + $0x8] sm:$0xff] %vm4014, %v3999
      %4017 = vst.msk [vmem:[%s245 + $0x10] sm:$0xff] %vm4014, %v4000
      %4018 = vst.msk [vmem:[%s245 + $0x18] sm:$0xff] %vm4014, %v4001
      %4019 = vst.msk [vmem:[%s245 + $0x20] sm:$0xff] %vm4014, %v4002
      %4020 = vst.msk [vmem:[%s245 + $0x28] sm:$0xff] %vm4014, %v4003
      %4021 = vst.msk [vmem:[%s245 + $0x30] sm:$0xff] %vm4014, %v4004
      %4022 = vst.msk [vmem:[%s245 + $0x38] sm:$0xff] %vm4014, %v4005
      %4023 = vst.msk [vmem:[%s245 + $0x40] sm:$0xff] %vm4014, %v4006
      %4024 = vst.msk [vmem:[%s245 + $0x48] sm:$0xff] %vm4014, %v4007
      %4025 = vst.msk [vmem:[%s245 + $0x50] sm:$0xff] %vm4014, %v4008
      %4026 = vst.msk [vmem:[%s245 + $0x58] sm:$0xff] %vm4014, %v4009
      %4027 = vst.msk [vmem:[%s245 + $0x60] sm:$0xff] %vm4014, %v4010
      %4028 = vst.msk [vmem:[%s245 + $0x68] sm:$0xff] %vm4014, %v4011
      %4029 = vst.msk [vmem:[%s245 + $0x70] sm:$0xff] %vm4014, %v4012
      %4030 = vst.msk [vmem:[%s245 + $0x78] sm:$0xff] %vm4014, %v4013
      loop: start=0, step=1, limit=3
      $region29: #{tpu_custom_call.1} parent=27 // loop_pre_header
        _
      $region30: #{tpu_custom_call.1} parent=27 // loop_header
        %s4032 = sphi 0, %s4036
        %p4033 = scmp.ge.s32.totalorder %s4032, 3
      $region31: #{tpu_custom_call.1} parent=27 // loop_header_branch
        %4035 = sbr.rel (%p4033) target = $region35
      $region32: #{tpu_custom_call.1} parent=27 // loop_body
        %s4037 = sadd.s32 %s4032, 1
        %s4038 = smul.u32 %s4037, 128
        %s4039 = smul.u32 %s4032, 128
        %s4040 = scalar_lea.vmem %s235, %s4039
        %v4041 = vld [vmem:[%s4040] sm:$0xff]
        %v4042 = vld [vmem:[%s4040 + $0x8] sm:$0xff]
        %v4043 = vld [vmem:[%s4040 + $0x10] sm:$0xff]
        %v4044 = vld [vmem:[%s4040 + $0x18] sm:$0xff]
        %v4045 = vld [vmem:[%s4040 + $0x20] sm:$0xff]
        %v4046 = vld [vmem:[%s4040 + $0x28] sm:$0xff]
        %v4047 = vld [vmem:[%s4040 + $0x30] sm:$0xff]
        %v4048 = vld [vmem:[%s4040 + $0x38] sm:$0xff]
        %v4049 = vld [vmem:[%s4040 + $0x40] sm:$0xff]
        %v4050 = vld [vmem:[%s4040 + $0x48] sm:$0xff]
        %v4051 = vld [vmem:[%s4040 + $0x50] sm:$0xff]
        %v4052 = vld [vmem:[%s4040 + $0x58] sm:$0xff]
        %v4053 = vld [vmem:[%s4040 + $0x60] sm:$0xff]
        %v4054 = vld [vmem:[%s4040 + $0x68] sm:$0xff]
        %v4055 = vld [vmem:[%s4040 + $0x70] sm:$0xff]
        %v4056 = vld [vmem:[%s4040 + $0x78] sm:$0xff]
        %s4057 = scalar_lea.vmem %s235, %s4038
        %v4058 = vld [vmem:[%s4057] sm:$0xff]
        %v4059 = vld [vmem:[%s4057 + $0x8] sm:$0xff]
        %v4060 = vld [vmem:[%s4057 + $0x10] sm:$0xff]
        %v4061 = vld [vmem:[%s4057 + $0x18] sm:$0xff]
        %v4062 = vld [vmem:[%s4057 + $0x20] sm:$0xff]
        %v4063 = vld [vmem:[%s4057 + $0x28] sm:$0xff]
        %v4064 = vld [vmem:[%s4057 + $0x30] sm:$0xff]
        %v4065 = vld [vmem:[%s4057 + $0x38] sm:$0xff]
        %v4066 = vld [vmem:[%s4057 + $0x40] sm:$0xff]
        %v4067 = vld [vmem:[%s4057 + $0x48] sm:$0xff]
        %v4068 = vld [vmem:[%s4057 + $0x50] sm:$0xff]
        %v4069 = vld [vmem:[%s4057 + $0x58] sm:$0xff]
        %v4070 = vld [vmem:[%s4057 + $0x60] sm:$0xff]
        %v4071 = vld [vmem:[%s4057 + $0x68] sm:$0xff]
        %v4072 = vld [vmem:[%s4057 + $0x70] sm:$0xff]
        %v4073 = vld [vmem:[%s4057 + $0x78] sm:$0xff]
        %v4075 = vsel %vm279, %v4058, 0
        %v4078 = vsel %vm279, %v4059, 0
        %v4081 = vsel %vm279, %v4060, 0
        %v4084 = vsel %vm279, %v4061, 0
        %v4087 = vsel %vm279, %v4062, 0
        %v4090 = vsel %vm279, %v4063, 0
        %v4093 = vsel %vm279, %v4064, 0
        %v4096 = vsel %vm279, %v4065, 0
        %v4099 = vsel %vm279, %v4066, 0
        %v4102 = vsel %vm279, %v4067, 0
        %v4105 = vsel %vm279, %v4068, 0
        %v4108 = vsel %vm279, %v4069, 0
        %v4111 = vsel %vm279, %v4070, 0
        %v4114 = vsel %vm279, %v4071, 0
        %v4117 = vsel %vm279, %v4072, 0
        %v4120 = vsel %vm279, %v4073, 0
        %v4123 = vsel %vm279, %v4041, 0
        %v4126 = vsel %vm279, %v4042, 0
        %v4129 = vsel %vm279, %v4043, 0
        %v4132 = vsel %vm279, %v4044, 0
        %v4135 = vsel %vm279, %v4045, 0
        %v4138 = vsel %vm279, %v4046, 0
        %v4141 = vsel %vm279, %v4047, 0
        %v4144 = vsel %vm279, %v4048, 0
        %v4147 = vsel %vm279, %v4049, 0
        %v4150 = vsel %vm279, %v4050, 0
        %v4153 = vsel %vm279, %v4051, 0
        %v4156 = vsel %vm279, %v4052, 0
        %v4159 = vsel %vm279, %v4053, 0
        %v4162 = vsel %vm279, %v4054, 0
        %v4165 = vsel %vm279, %v4055, 0
        %v4168 = vsel %vm279, %v4056, 0
        %4170 = vmatpush.xpose.msra.mxu0 %v4168
        %4171 = vmatpush.xpose.msra.mxu0 %v4165
        %4172 = vmatpush.xpose.msra.mxu0 %v4162
        %4173 = vmatpush.xpose.msra.mxu0 %v4159
        %4174 = vmatpush.xpose.msra.mxu0 %v4156
        %4175 = vmatpush.xpose.msra.mxu0 %v4153
        %4176 = vmatpush.xpose.msra.mxu0 %v4150
        %4177 = vmatpush.xpose.msra.mxu0 %v4147
        %4178 = vmatpush.xpose.msra.mxu0 %v4144
        %4179 = vmatpush.xpose.msra.mxu0 %v4141
        %4180 = vmatpush.xpose.msra.mxu0 %v4138
        %4181 = vmatpush.xpose.msra.mxu0 %v4135
        %4182 = vmatpush.xpose.msra.mxu0 %v4132
        %4183 = vmatpush.xpose.msra.mxu0 %v4129
        %4184 = vmatpush.xpose.msra.mxu0 %v4126
        %4185 = vmatpush.xpose.msra.mxu0 %v4123
        %4186 = vmatmul.f32.gmra.mxu0 %v4075
        %v4187 = vpop.f32.mrf.mxu0
        %v4188 = vadd.f32 0.0, %v4187
        %4189 = vmatmul.f32.gmra.mxu0 %v4078
        %v4190 = vpop.f32.mrf.mxu0
        %v4191 = vadd.f32 0.0, %v4190
        %4192 = vmatmul.f32.gmra.mxu0 %v4081
        %v4193 = vpop.f32.mrf.mxu0
        %v4194 = vadd.f32 0.0, %v4193
        %4195 = vmatmul.f32.gmra.mxu0 %v4084
        %v4196 = vpop.f32.mrf.mxu0
        %v4197 = vadd.f32 0.0, %v4196
        %4198 = vmatmul.f32.gmra.mxu0 %v4087
        %v4199 = vpop.f32.mrf.mxu0
        %v4200 = vadd.f32 0.0, %v4199
        %4201 = vmatmul.f32.gmra.mxu0 %v4090
        %v4202 = vpop.f32.mrf.mxu0
        %v4203 = vadd.f32 0.0, %v4202
        %4204 = vmatmul.f32.gmra.mxu0 %v4093
        %v4205 = vpop.f32.mrf.mxu0
        %v4206 = vadd.f32 0.0, %v4205
        %4207 = vmatmul.f32.gmra.mxu0 %v4096
        %v4208 = vpop.f32.mrf.mxu0
        %v4209 = vadd.f32 0.0, %v4208
        %4210 = vmatmul.f32.gmra.mxu0 %v4099
        %v4211 = vpop.f32.mrf.mxu0
        %v4212 = vadd.f32 0.0, %v4211
        %4213 = vmatmul.f32.gmra.mxu0 %v4102
        %v4214 = vpop.f32.mrf.mxu0
        %v4215 = vadd.f32 0.0, %v4214
        %4216 = vmatmul.f32.gmra.mxu0 %v4105
        %v4217 = vpop.f32.mrf.mxu0
        %v4218 = vadd.f32 0.0, %v4217
        %4219 = vmatmul.f32.gmra.mxu0 %v4108
        %v4220 = vpop.f32.mrf.mxu0
        %v4221 = vadd.f32 0.0, %v4220
        %4222 = vmatmul.f32.gmra.mxu0 %v4111
        %v4223 = vpop.f32.mrf.mxu0
        %v4224 = vadd.f32 0.0, %v4223
        %4225 = vmatmul.f32.gmra.mxu0 %v4114
        %v4226 = vpop.f32.mrf.mxu0
        %v4227 = vadd.f32 0.0, %v4226
        %4228 = vmatmul.f32.gmra.mxu0 %v4117
        %v4229 = vpop.f32.mrf.mxu0
        %v4230 = vadd.f32 0.0, %v4229
        %4231 = vmatmul.f32.gmra.mxu0 %v4120
        %v4232 = vpop.f32.mrf.mxu0
        %v4233 = vadd.f32 0.0, %v4232
        %4234 = vdwg.mxu0
        %4235 = vmatpush.xpose.msra.mxu0 %v4120
        %4236 = vmatpush.xpose.msra.mxu0 %v4117
        %4237 = vmatpush.xpose.msra.mxu0 %v4114
        %4238 = vmatpush.xpose.msra.mxu0 %v4111
        %4239 = vmatpush.xpose.msra.mxu0 %v4108
        %4240 = vmatpush.xpose.msra.mxu0 %v4105
        %4241 = vmatpush.xpose.msra.mxu0 %v4102
        %4242 = vmatpush.xpose.msra.mxu0 %v4099
        %4243 = vmatpush.xpose.msra.mxu0 %v4096
        %4244 = vmatpush.xpose.msra.mxu0 %v4093
        %4245 = vmatpush.xpose.msra.mxu0 %v4090
        %4246 = vmatpush.xpose.msra.mxu0 %v4087
        %4247 = vmatpush.xpose.msra.mxu0 %v4084
        %4248 = vmatpush.xpose.msra.mxu0 %v4081
        %4249 = vmatpush.xpose.msra.mxu0 %v4078
        %4250 = vmatpush.xpose.msra.mxu0 %v4075
        %4251 = vmatmul.f32.gmra.mxu0 %v4075
        %v4252 = vpop.f32.mrf.mxu0
        %v4253 = vadd.f32 0.0, %v4252
        %4254 = vmatmul.f32.gmra.mxu0 %v4078
        %v4255 = vpop.f32.mrf.mxu0
        %v4256 = vadd.f32 0.0, %v4255
        %4257 = vmatmul.f32.gmra.mxu0 %v4081
        %v4258 = vpop.f32.mrf.mxu0
        %v4259 = vadd.f32 0.0, %v4258
        %4260 = vmatmul.f32.gmra.mxu0 %v4084
        %v4261 = vpop.f32.mrf.mxu0
        %v4262 = vadd.f32 0.0, %v4261
        %4263 = vmatmul.f32.gmra.mxu0 %v4087
        %v4264 = vpop.f32.mrf.mxu0
        %v4265 = vadd.f32 0.0, %v4264
        %4266 = vmatmul.f32.gmra.mxu0 %v4090
        %v4267 = vpop.f32.mrf.mxu0
        %v4268 = vadd.f32 0.0, %v4267
        %4269 = vmatmul.f32.gmra.mxu0 %v4093
        %v4270 = vpop.f32.mrf.mxu0
        %v4271 = vadd.f32 0.0, %v4270
        %4272 = vmatmul.f32.gmra.mxu0 %v4096
        %v4273 = vpop.f32.mrf.mxu0
        %v4274 = vadd.f32 0.0, %v4273
        %4275 = vmatmul.f32.gmra.mxu0 %v4099
        %v4276 = vpop.f32.mrf.mxu0
        %v4277 = vadd.f32 0.0, %v4276
        %4278 = vmatmul.f32.gmra.mxu0 %v4102
        %v4279 = vpop.f32.mrf.mxu0
        %v4280 = vadd.f32 0.0, %v4279
        %4281 = vmatmul.f32.gmra.mxu0 %v4105
        %v4282 = vpop.f32.mrf.mxu0
        %v4283 = vadd.f32 0.0, %v4282
        %4284 = vmatmul.f32.gmra.mxu0 %v4108
        %v4285 = vpop.f32.mrf.mxu0
        %v4286 = vadd.f32 0.0, %v4285
        %4287 = vmatmul.f32.gmra.mxu0 %v4111
        %v4288 = vpop.f32.mrf.mxu0
        %v4289 = vadd.f32 0.0, %v4288
        %4290 = vmatmul.f32.gmra.mxu0 %v4114
        %v4291 = vpop.f32.mrf.mxu0
        %v4292 = vadd.f32 0.0, %v4291
        %4293 = vmatmul.f32.gmra.mxu0 %v4117
        %v4294 = vpop.f32.mrf.mxu0
        %v4295 = vadd.f32 0.0, %v4294
        %4296 = vmatmul.f32.gmra.mxu0 %v4120
        %v4297 = vpop.f32.mrf.mxu0
        %v4298 = vadd.f32 0.0, %v4297
        %4299 = vdwg.mxu0
        %v4300 = vmul.f32 %v4188, 2.0
        %v4301 = vmul.f32 %v4253, 2.0
        %v4302 = vmul.f32 %v4191, 2.0
        %v4303 = vmul.f32 %v4256, 2.0
        %v4304 = vmul.f32 %v4194, 2.0
        %v4305 = vmul.f32 %v4259, 2.0
        %v4306 = vmul.f32 %v4197, 2.0
        %v4307 = vmul.f32 %v4262, 2.0
        %v4308 = vmul.f32 %v4200, 2.0
        %v4309 = vmul.f32 %v4265, 2.0
        %v4310 = vmul.f32 %v4203, 2.0
        %v4311 = vmul.f32 %v4268, 2.0
        %v4312 = vmul.f32 %v4206, 2.0
        %v4313 = vmul.f32 %v4271, 2.0
        %v4314 = vmul.f32 %v4209, 2.0
        %v4315 = vmul.f32 %v4274, 2.0
        %v4316 = vmul.f32 %v4212, 2.0
        %v4317 = vmul.f32 %v4277, 2.0
        %v4318 = vmul.f32 %v4215, 2.0
        %v4319 = vmul.f32 %v4280, 2.0
        %v4320 = vmul.f32 %v4218, 2.0
        %v4321 = vmul.f32 %v4283, 2.0
        %v4322 = vmul.f32 %v4221, 2.0
        %v4323 = vmul.f32 %v4286, 2.0
        %v4324 = vmul.f32 %v4224, 2.0
        %v4325 = vmul.f32 %v4289, 2.0
        %v4326 = vmul.f32 %v4227, 2.0
        %v4327 = vmul.f32 %v4292, 2.0
        %v4328 = vmul.f32 %v4230, 2.0
        %v4329 = vmul.f32 %v4295, 2.0
        %v4330 = vmul.f32 %v4233, 2.0
        %v4331 = vmul.f32 %v4298, 2.0
        %v4332 = vsub.f32 2.0, %v4300
        %v4333 = vsub.f32 2.0, %v4301
        %v4334 = vsub.f32 2.0, %v4302
        %v4335 = vsub.f32 2.0, %v4303
        %v4336 = vsub.f32 2.0, %v4304
        %v4337 = vsub.f32 2.0, %v4305
        %v4338 = vsub.f32 2.0, %v4306
        %v4339 = vsub.f32 2.0, %v4307
        %v4340 = vsub.f32 2.0, %v4308
        %v4341 = vsub.f32 2.0, %v4309
        %v4342 = vsub.f32 2.0, %v4310
        %v4343 = vsub.f32 2.0, %v4311
        %v4344 = vsub.f32 2.0, %v4312
        %v4345 = vsub.f32 2.0, %v4313
        %v4346 = vsub.f32 2.0, %v4314
        %v4347 = vsub.f32 2.0, %v4315
        %v4348 = vsub.f32 2.0, %v4316
        %v4349 = vsub.f32 2.0, %v4317
        %v4350 = vsub.f32 2.0, %v4318
        %v4351 = vsub.f32 2.0, %v4319
        %v4352 = vsub.f32 2.0, %v4320
        %v4353 = vsub.f32 2.0, %v4321
        %v4354 = vsub.f32 2.0, %v4322
        %v4355 = vsub.f32 2.0, %v4323
        %v4356 = vsub.f32 2.0, %v4324
        %v4357 = vsub.f32 2.0, %v4325
        %v4358 = vsub.f32 2.0, %v4326
        %v4359 = vsub.f32 2.0, %v4327
        %v4360 = vsub.f32 2.0, %v4328
        %v4361 = vsub.f32 2.0, %v4329
        %v4362 = vsub.f32 2.0, %v4330
        %v4363 = vsub.f32 2.0, %v4331
        %v4364 = vmax.f32 %v4332, 0.0
        %v4365 = vmax.f32 %v4333, 0.0
        %v4366 = vmax.f32 %v4334, 0.0
        %v4367 = vmax.f32 %v4335, 0.0
        %v4368 = vmax.f32 %v4336, 0.0
        %v4369 = vmax.f32 %v4337, 0.0
        %v4370 = vmax.f32 %v4338, 0.0
        %v4371 = vmax.f32 %v4339, 0.0
        %v4372 = vmax.f32 %v4340, 0.0
        %v4373 = vmax.f32 %v4341, 0.0
        %v4374 = vmax.f32 %v4342, 0.0
        %v4375 = vmax.f32 %v4343, 0.0
        %v4376 = vmax.f32 %v4344, 0.0
        %v4377 = vmax.f32 %v4345, 0.0
        %v4378 = vmax.f32 %v4346, 0.0
        %v4379 = vmax.f32 %v4347, 0.0
        %v4380 = vmax.f32 %v4348, 0.0
        %v4381 = vmax.f32 %v4349, 0.0
        %v4382 = vmax.f32 %v4350, 0.0
        %v4383 = vmax.f32 %v4351, 0.0
        %v4384 = vmax.f32 %v4352, 0.0
        %v4385 = vmax.f32 %v4353, 0.0
        %v4386 = vmax.f32 %v4354, 0.0
        %v4387 = vmax.f32 %v4355, 0.0
        %v4388 = vmax.f32 %v4356, 0.0
        %v4389 = vmax.f32 %v4357, 0.0
        %v4390 = vmax.f32 %v4358, 0.0
        %v4391 = vmax.f32 %v4359, 0.0
        %v4392 = vmax.f32 %v4360, 0.0
        %v4393 = vmax.f32 %v4361, 0.0
        %v4394 = vmax.f32 %v4362, 0.0
        %v4395 = vmax.f32 %v4363, 0.0
        %v4428 = vand.u32 %v4364, 4294967040
        %v4429 = vand.u32 %v4365, 4294967040
        %v4430 = vand.u32 %v4366, 4294967040
        %v4431 = vand.u32 %v4367, 4294967040
        %v4432 = vand.u32 %v4368, 4294967040
        %v4433 = vand.u32 %v4369, 4294967040
        %v4434 = vand.u32 %v4370, 4294967040
        %v4435 = vand.u32 %v4371, 4294967040
        %v4436 = vand.u32 %v4372, 4294967040
        %v4437 = vand.u32 %v4373, 4294967040
        %v4438 = vand.u32 %v4374, 4294967040
        %v4439 = vand.u32 %v4375, 4294967040
        %v4440 = vand.u32 %v4376, 4294967040
        %v4441 = vand.u32 %v4377, 4294967040
        %v4442 = vand.u32 %v4378, 4294967040
        %v4443 = vand.u32 %v4379, 4294967040
        %v4444 = vand.u32 %v4380, 4294967040
        %v4445 = vand.u32 %v4381, 4294967040
        %v4446 = vand.u32 %v4382, 4294967040
        %v4447 = vand.u32 %v4383, 4294967040
        %v4448 = vand.u32 %v4384, 4294967040
        %v4449 = vand.u32 %v4385, 4294967040
        %v4450 = vand.u32 %v4386, 4294967040
        %v4451 = vand.u32 %v4387, 4294967040
        %v4452 = vand.u32 %v4388, 4294967040
        %v4453 = vand.u32 %v4389, 4294967040
        %v4454 = vand.u32 %v4390, 4294967040
        %v4455 = vand.u32 %v4391, 4294967040
        %v4456 = vand.u32 %v4392, 4294967040
        %v4457 = vand.u32 %v4393, 4294967040
        %v4458 = vand.u32 %v4394, 4294967040
        %v4459 = vand.u32 %v4395, 4294967040
        %v4460 = vor.u32 %v4428, %v603
        %v4461 = vor.u32 %v4429, %v604
        %v4462 = vor.u32 %v4430, %v603
        %v4463 = vor.u32 %v4431, %v604
        %v4464 = vor.u32 %v4432, %v603
        %v4465 = vor.u32 %v4433, %v604
        %v4466 = vor.u32 %v4434, %v603
        %v4467 = vor.u32 %v4435, %v604
        %v4468 = vor.u32 %v4436, %v603
        %v4469 = vor.u32 %v4437, %v604
        %v4470 = vor.u32 %v4438, %v603
        %v4471 = vor.u32 %v4439, %v604
        %v4472 = vor.u32 %v4440, %v603
        %v4473 = vor.u32 %v4441, %v604
        %v4474 = vor.u32 %v4442, %v603
        %v4475 = vor.u32 %v4443, %v604
        %v4476 = vor.u32 %v4444, %v603
        %v4477 = vor.u32 %v4445, %v604
        %v4478 = vor.u32 %v4446, %v603
        %v4479 = vor.u32 %v4447, %v604
        %v4480 = vor.u32 %v4448, %v603
        %v4481 = vor.u32 %v4449, %v604
        %v4482 = vor.u32 %v4450, %v603
        %v4483 = vor.u32 %v4451, %v604
        %v4484 = vor.u32 %v4452, %v603
        %v4485 = vor.u32 %v4453, %v604
        %v4486 = vor.u32 %v4454, %v603
        %v4487 = vor.u32 %v4455, %v604
        %v4488 = vor.u32 %v4456, %v603
        %v4489 = vor.u32 %v4457, %v604
        %v4490 = vor.u32 %v4458, %v603
        %v4491 = vor.u32 %v4459, %v604
        %v4492 = vsel %vm718, %v4460, 2147483647
        %v4493 = vsel %vm719, %v4461, 2147483647
        %v4494 = vsel %vm720, %v4462, 2147483647
        %v4495 = vsel %vm721, %v4463, 2147483647
        %v4496 = vsel %vm722, %v4464, 2147483647
        %v4497 = vsel %vm723, %v4465, 2147483647
        %v4498 = vsel %vm724, %v4466, 2147483647
        %v4499 = vsel %vm725, %v4467, 2147483647
        %v4500 = vsel %vm726, %v4468, 2147483647
        %v4501 = vsel %vm727, %v4469, 2147483647
        %v4502 = vsel %vm728, %v4470, 2147483647
        %v4503 = vsel %vm729, %v4471, 2147483647
        %v4504 = vsel %vm730, %v4472, 2147483647
        %v4505 = vsel %vm731, %v4473, 2147483647
        %v4506 = vsel %vm732, %v4474, 2147483647
        %v4507 = vsel %vm733, %v4475, 2147483647
        %v4508 = vsel %vm734, %v4476, 2147483647
        %v4509 = vsel %vm735, %v4477, 2147483647
        %v4510 = vsel %vm736, %v4478, 2147483647
        %v4511 = vsel %vm737, %v4479, 2147483647
        %v4512 = vsel %vm738, %v4480, 2147483647
        %v4513 = vsel %vm739, %v4481, 2147483647
        %v4514 = vsel %vm740, %v4482, 2147483647
        %v4515 = vsel %vm741, %v4483, 2147483647
        %v4516 = vsel %vm742, %v4484, 2147483647
        %v4517 = vsel %vm743, %v4485, 2147483647
        %v4518 = vsel %vm744, %v4486, 2147483647
        %v4519 = vsel %vm745, %v4487, 2147483647
        %v4520 = vsel %vm746, %v4488, 2147483647
        %v4521 = vsel %vm747, %v4489, 2147483647
        %v4522 = vsel %vm748, %v4490, 2147483647
        %v4523 = vsel %vm749, %v4491, 2147483647
        %vm4524 = vcmp.lt.s32.totalorder %v4492, %v4493
        %v4525 = vsel %vm4524, %v4492, %v4493
        %v4526 = vand.u32 %v4525, 65535
        %v4527 = vshra.s32 %v4525, 16
        %v4528 = vcvt.s32.f32 %v4526
        %v4529 = vcvt.s32.f32 %v4527
        %4530 = vmin.xlane.f32.xlu0 %v4529
        %v4531 = vpop.xlane.xlu0 %4530
        %vm4532 = vcmp.eq.f32.partialorder %v4529, %v4531
        %v4533 = vsel %vm4532, %v4528, inf
        %4534 = vmin.xlane.f32.xlu0 %v4533
        %v4535 = vpop.xlane.xlu0 %4534
        %v4536 = vcvt.f32.s32 %v4535
        %v4537 = vcvt.f32.s32 %v4531
        %v4538 = vshll.u32 %v4537, 16
        %v4539 = vadd.s32 %v4538, %v4536
        %vm4540 = vcmp.lt.s32.totalorder %v4494, %v4495
        %v4541 = vsel %vm4540, %v4494, %v4495
        %v4542 = vand.u32 %v4541, 65535
        %v4543 = vshra.s32 %v4541, 16
        %v4544 = vcvt.s32.f32 %v4542
        %v4545 = vcvt.s32.f32 %v4543
        %4546 = vmin.xlane.f32.xlu0 %v4545
        %v4547 = vpop.xlane.xlu0 %4546
        %vm4548 = vcmp.eq.f32.partialorder %v4545, %v4547
        %v4549 = vsel %vm4548, %v4544, inf
        %4550 = vmin.xlane.f32.xlu0 %v4549
        %v4551 = vpop.xlane.xlu0 %4550
        %v4552 = vcvt.f32.s32 %v4551
        %v4553 = vcvt.f32.s32 %v4547
        %v4554 = vshll.u32 %v4553, 16
        %v4555 = vadd.s32 %v4554, %v4552
        %vm4556 = vcmp.lt.s32.totalorder %v4496, %v4497
        %v4557 = vsel %vm4556, %v4496, %v4497
        %v4558 = vand.u32 %v4557, 65535
        %v4559 = vshra.s32 %v4557, 16
        %v4560 = vcvt.s32.f32 %v4558
        %v4561 = vcvt.s32.f32 %v4559
        %4562 = vmin.xlane.f32.xlu0 %v4561
        %v4563 = vpop.xlane.xlu0 %4562
        %vm4564 = vcmp.eq.f32.partialorder %v4561, %v4563
        %v4565 = vsel %vm4564, %v4560, inf
        %4566 = vmin.xlane.f32.xlu0 %v4565
        %v4567 = vpop.xlane.xlu0 %4566
        %v4568 = vcvt.f32.s32 %v4567
        %v4569 = vcvt.f32.s32 %v4563
        %v4570 = vshll.u32 %v4569, 16
        %v4571 = vadd.s32 %v4570, %v4568
        %vm4572 = vcmp.lt.s32.totalorder %v4498, %v4499
        %v4573 = vsel %vm4572, %v4498, %v4499
        %v4574 = vand.u32 %v4573, 65535
        %v4575 = vshra.s32 %v4573, 16
        %v4576 = vcvt.s32.f32 %v4574
        %v4577 = vcvt.s32.f32 %v4575
        %4578 = vmin.xlane.f32.xlu0 %v4577
        %v4579 = vpop.xlane.xlu0 %4578
        %vm4580 = vcmp.eq.f32.partialorder %v4577, %v4579
        %v4581 = vsel %vm4580, %v4576, inf
        %4582 = vmin.xlane.f32.xlu0 %v4581
        %v4583 = vpop.xlane.xlu0 %4582
        %v4584 = vcvt.f32.s32 %v4583
        %v4585 = vcvt.f32.s32 %v4579
        %v4586 = vshll.u32 %v4585, 16
        %v4587 = vadd.s32 %v4586, %v4584
        %vm4588 = vcmp.lt.s32.totalorder %v4500, %v4501
        %v4589 = vsel %vm4588, %v4500, %v4501
        %v4590 = vand.u32 %v4589, 65535
        %v4591 = vshra.s32 %v4589, 16
        %v4592 = vcvt.s32.f32 %v4590
        %v4593 = vcvt.s32.f32 %v4591
        %4594 = vmin.xlane.f32.xlu0 %v4593
        %v4595 = vpop.xlane.xlu0 %4594
        %vm4596 = vcmp.eq.f32.partialorder %v4593, %v4595
        %v4597 = vsel %vm4596, %v4592, inf
        %4598 = vmin.xlane.f32.xlu0 %v4597
        %v4599 = vpop.xlane.xlu0 %4598
        %v4600 = vcvt.f32.s32 %v4599
        %v4601 = vcvt.f32.s32 %v4595
        %v4602 = vshll.u32 %v4601, 16
        %v4603 = vadd.s32 %v4602, %v4600
        %vm4604 = vcmp.lt.s32.totalorder %v4502, %v4503
        %v4605 = vsel %vm4604, %v4502, %v4503
        %v4606 = vand.u32 %v4605, 65535
        %v4607 = vshra.s32 %v4605, 16
        %v4608 = vcvt.s32.f32 %v4606
        %v4609 = vcvt.s32.f32 %v4607
        %4610 = vmin.xlane.f32.xlu0 %v4609
        %v4611 = vpop.xlane.xlu0 %4610
        %vm4612 = vcmp.eq.f32.partialorder %v4609, %v4611
        %v4613 = vsel %vm4612, %v4608, inf
        %4614 = vmin.xlane.f32.xlu0 %v4613
        %v4615 = vpop.xlane.xlu0 %4614
        %v4616 = vcvt.f32.s32 %v4615
        %v4617 = vcvt.f32.s32 %v4611
        %v4618 = vshll.u32 %v4617, 16
        %v4619 = vadd.s32 %v4618, %v4616
        %vm4620 = vcmp.lt.s32.totalorder %v4504, %v4505
        %v4621 = vsel %vm4620, %v4504, %v4505
        %v4622 = vand.u32 %v4621, 65535
        %v4623 = vshra.s32 %v4621, 16
        %v4624 = vcvt.s32.f32 %v4622
        %v4625 = vcvt.s32.f32 %v4623
        %4626 = vmin.xlane.f32.xlu0 %v4625
        %v4627 = vpop.xlane.xlu0 %4626
        %vm4628 = vcmp.eq.f32.partialorder %v4625, %v4627
        %v4629 = vsel %vm4628, %v4624, inf
        %4630 = vmin.xlane.f32.xlu0 %v4629
        %v4631 = vpop.xlane.xlu0 %4630
        %v4632 = vcvt.f32.s32 %v4631
        %v4633 = vcvt.f32.s32 %v4627
        %v4634 = vshll.u32 %v4633, 16
        %v4635 = vadd.s32 %v4634, %v4632
        %vm4636 = vcmp.lt.s32.totalorder %v4506, %v4507
        %v4637 = vsel %vm4636, %v4506, %v4507
        %v4638 = vand.u32 %v4637, 65535
        %v4639 = vshra.s32 %v4637, 16
        %v4640 = vcvt.s32.f32 %v4638
        %v4641 = vcvt.s32.f32 %v4639
        %4642 = vmin.xlane.f32.xlu0 %v4641
        %v4643 = vpop.xlane.xlu0 %4642
        %vm4644 = vcmp.eq.f32.partialorder %v4641, %v4643
        %v4645 = vsel %vm4644, %v4640, inf
        %4646 = vmin.xlane.f32.xlu0 %v4645
        %v4647 = vpop.xlane.xlu0 %4646
        %v4648 = vcvt.f32.s32 %v4647
        %v4649 = vcvt.f32.s32 %v4643
        %v4650 = vshll.u32 %v4649, 16
        %v4651 = vadd.s32 %v4650, %v4648
        %vm4652 = vcmp.lt.s32.totalorder %v4508, %v4509
        %v4653 = vsel %vm4652, %v4508, %v4509
        %v4654 = vand.u32 %v4653, 65535
        %v4655 = vshra.s32 %v4653, 16
        %v4656 = vcvt.s32.f32 %v4654
        %v4657 = vcvt.s32.f32 %v4655
        %4658 = vmin.xlane.f32.xlu0 %v4657
        %v4659 = vpop.xlane.xlu0 %4658
        %vm4660 = vcmp.eq.f32.partialorder %v4657, %v4659
        %v4661 = vsel %vm4660, %v4656, inf
        %4662 = vmin.xlane.f32.xlu0 %v4661
        %v4663 = vpop.xlane.xlu0 %4662
        %v4664 = vcvt.f32.s32 %v4663
        %v4665 = vcvt.f32.s32 %v4659
        %v4666 = vshll.u32 %v4665, 16
        %v4667 = vadd.s32 %v4666, %v4664
        %vm4668 = vcmp.lt.s32.totalorder %v4510, %v4511
        %v4669 = vsel %vm4668, %v4510, %v4511
        %v4670 = vand.u32 %v4669, 65535
        %v4671 = vshra.s32 %v4669, 16
        %v4672 = vcvt.s32.f32 %v4670
        %v4673 = vcvt.s32.f32 %v4671
        %4674 = vmin.xlane.f32.xlu0 %v4673
        %v4675 = vpop.xlane.xlu0 %4674
        %vm4676 = vcmp.eq.f32.partialorder %v4673, %v4675
        %v4677 = vsel %vm4676, %v4672, inf
        %4678 = vmin.xlane.f32.xlu0 %v4677
        %v4679 = vpop.xlane.xlu0 %4678
        %v4680 = vcvt.f32.s32 %v4679
        %v4681 = vcvt.f32.s32 %v4675
        %v4682 = vshll.u32 %v4681, 16
        %v4683 = vadd.s32 %v4682, %v4680
        %vm4684 = vcmp.lt.s32.totalorder %v4512, %v4513
        %v4685 = vsel %vm4684, %v4512, %v4513
        %v4686 = vand.u32 %v4685, 65535
        %v4687 = vshra.s32 %v4685, 16
        %v4688 = vcvt.s32.f32 %v4686
        %v4689 = vcvt.s32.f32 %v4687
        %4690 = vmin.xlane.f32.xlu0 %v4689
        %v4691 = vpop.xlane.xlu0 %4690
        %vm4692 = vcmp.eq.f32.partialorder %v4689, %v4691
        %v4693 = vsel %vm4692, %v4688, inf
        %4694 = vmin.xlane.f32.xlu0 %v4693
        %v4695 = vpop.xlane.xlu0 %4694
        %v4696 = vcvt.f32.s32 %v4695
        %v4697 = vcvt.f32.s32 %v4691
        %v4698 = vshll.u32 %v4697, 16
        %v4699 = vadd.s32 %v4698, %v4696
        %vm4700 = vcmp.lt.s32.totalorder %v4514, %v4515
        %v4701 = vsel %vm4700, %v4514, %v4515
        %v4702 = vand.u32 %v4701, 65535
        %v4703 = vshra.s32 %v4701, 16
        %v4704 = vcvt.s32.f32 %v4702
        %v4705 = vcvt.s32.f32 %v4703
        %4706 = vmin.xlane.f32.xlu0 %v4705
        %v4707 = vpop.xlane.xlu0 %4706
        %vm4708 = vcmp.eq.f32.partialorder %v4705, %v4707
        %v4709 = vsel %vm4708, %v4704, inf
        %4710 = vmin.xlane.f32.xlu0 %v4709
        %v4711 = vpop.xlane.xlu0 %4710
        %v4712 = vcvt.f32.s32 %v4711
        %v4713 = vcvt.f32.s32 %v4707
        %v4714 = vshll.u32 %v4713, 16
        %v4715 = vadd.s32 %v4714, %v4712
        %vm4716 = vcmp.lt.s32.totalorder %v4516, %v4517
        %v4717 = vsel %vm4716, %v4516, %v4517
        %v4718 = vand.u32 %v4717, 65535
        %v4719 = vshra.s32 %v4717, 16
        %v4720 = vcvt.s32.f32 %v4718
        %v4721 = vcvt.s32.f32 %v4719
        %4722 = vmin.xlane.f32.xlu0 %v4721
        %v4723 = vpop.xlane.xlu0 %4722
        %vm4724 = vcmp.eq.f32.partialorder %v4721, %v4723
        %v4725 = vsel %vm4724, %v4720, inf
        %4726 = vmin.xlane.f32.xlu0 %v4725
        %v4727 = vpop.xlane.xlu0 %4726
        %v4728 = vcvt.f32.s32 %v4727
        %v4729 = vcvt.f32.s32 %v4723
        %v4730 = vshll.u32 %v4729, 16
        %v4731 = vadd.s32 %v4730, %v4728
        %vm4732 = vcmp.lt.s32.totalorder %v4518, %v4519
        %v4733 = vsel %vm4732, %v4518, %v4519
        %v4734 = vand.u32 %v4733, 65535
        %v4735 = vshra.s32 %v4733, 16
        %v4736 = vcvt.s32.f32 %v4734
        %v4737 = vcvt.s32.f32 %v4735
        %4738 = vmin.xlane.f32.xlu0 %v4737
        %v4739 = vpop.xlane.xlu0 %4738
        %vm4740 = vcmp.eq.f32.partialorder %v4737, %v4739
        %v4741 = vsel %vm4740, %v4736, inf
        %4742 = vmin.xlane.f32.xlu0 %v4741
        %v4743 = vpop.xlane.xlu0 %4742
        %v4744 = vcvt.f32.s32 %v4743
        %v4745 = vcvt.f32.s32 %v4739
        %v4746 = vshll.u32 %v4745, 16
        %v4747 = vadd.s32 %v4746, %v4744
        %vm4748 = vcmp.lt.s32.totalorder %v4520, %v4521
        %v4749 = vsel %vm4748, %v4520, %v4521
        %v4750 = vand.u32 %v4749, 65535
        %v4751 = vshra.s32 %v4749, 16
        %v4752 = vcvt.s32.f32 %v4750
        %v4753 = vcvt.s32.f32 %v4751
        %4754 = vmin.xlane.f32.xlu0 %v4753
        %v4755 = vpop.xlane.xlu0 %4754
        %vm4756 = vcmp.eq.f32.partialorder %v4753, %v4755
        %v4757 = vsel %vm4756, %v4752, inf
        %4758 = vmin.xlane.f32.xlu0 %v4757
        %v4759 = vpop.xlane.xlu0 %4758
        %v4760 = vcvt.f32.s32 %v4759
        %v4761 = vcvt.f32.s32 %v4755
        %v4762 = vshll.u32 %v4761, 16
        %v4763 = vadd.s32 %v4762, %v4760
        %vm4764 = vcmp.lt.s32.totalorder %v4522, %v4523
        %v4765 = vsel %vm4764, %v4522, %v4523
        %v4766 = vand.u32 %v4765, 65535
        %v4767 = vshra.s32 %v4765, 16
        %v4768 = vcvt.s32.f32 %v4766
        %v4769 = vcvt.s32.f32 %v4767
        %4770 = vmin.xlane.f32.xlu0 %v4769
        %v4771 = vpop.xlane.xlu0 %4770
        %vm4772 = vcmp.eq.f32.partialorder %v4769, %v4771
        %v4773 = vsel %vm4772, %v4768, inf
        %4774 = vmin.xlane.f32.xlu0 %v4773
        %v4775 = vpop.xlane.xlu0 %4774
        %v4776 = vcvt.f32.s32 %v4775
        %v4777 = vcvt.f32.s32 %v4771
        %v4778 = vshll.u32 %v4777, 16
        %v4779 = vadd.s32 %v4778, %v4776
        %v4780 = vand.u32 %v4539, 255
        %v4781 = vand.u32 %v4555, 255
        %v4782 = vand.u32 %v4571, 255
        %v4783 = vand.u32 %v4587, 255
        %v4784 = vand.u32 %v4603, 255
        %v4785 = vand.u32 %v4619, 255
        %v4786 = vand.u32 %v4635, 255
        %v4787 = vand.u32 %v4651, 255
        %v4788 = vand.u32 %v4667, 255
        %v4789 = vand.u32 %v4683, 255
        %v4790 = vand.u32 %v4699, 255
        %v4791 = vand.u32 %v4715, 255
        %v4792 = vand.u32 %v4731, 255
        %v4793 = vand.u32 %v4747, 255
        %v4794 = vand.u32 %v4763, 255
        %v4795 = vand.u32 %v4779, 255
        %s4796 = scalar_lea.vmem %s245, %s4038
        %4797 = vst.msk [vmem:[%s4796] sm:$0xff] %vm1190, %v4780
        %4798 = vst.msk [vmem:[%s4796 + $0x8] sm:$0xff] %vm1190, %v4781
        %4799 = vst.msk [vmem:[%s4796 + $0x10] sm:$0xff] %vm1190, %v4782
        %4800 = vst.msk [vmem:[%s4796 + $0x18] sm:$0xff] %vm1190, %v4783
        %4801 = vst.msk [vmem:[%s4796 + $0x20] sm:$0xff] %vm1190, %v4784
        %4802 = vst.msk [vmem:[%s4796 + $0x28] sm:$0xff] %vm1190, %v4785
        %4803 = vst.msk [vmem:[%s4796 + $0x30] sm:$0xff] %vm1190, %v4786
        %4804 = vst.msk [vmem:[%s4796 + $0x38] sm:$0xff] %vm1190, %v4787
        %4805 = vst.msk [vmem:[%s4796 + $0x40] sm:$0xff] %vm1190, %v4788
        %4806 = vst.msk [vmem:[%s4796 + $0x48] sm:$0xff] %vm1190, %v4789
        %4807 = vst.msk [vmem:[%s4796 + $0x50] sm:$0xff] %vm1190, %v4790
        %4808 = vst.msk [vmem:[%s4796 + $0x58] sm:$0xff] %vm1190, %v4791
        %4809 = vst.msk [vmem:[%s4796 + $0x60] sm:$0xff] %vm1190, %v4792
        %4810 = vst.msk [vmem:[%s4796 + $0x68] sm:$0xff] %vm1190, %v4793
        %4811 = vst.msk [vmem:[%s4796 + $0x70] sm:$0xff] %vm1190, %v4794
        %4812 = vst.msk [vmem:[%s4796 + $0x78] sm:$0xff] %vm1190, %v4795
        %vm4813 = vcmp.eq.s32.totalorder %v4492, %v4539
        %vm4814 = vcmp.eq.s32.totalorder %v4493, %v4539
        %vm4815 = vcmp.eq.s32.totalorder %v4494, %v4555
        %vm4816 = vcmp.eq.s32.totalorder %v4495, %v4555
        %vm4817 = vcmp.eq.s32.totalorder %v4496, %v4571
        %vm4818 = vcmp.eq.s32.totalorder %v4497, %v4571
        %vm4819 = vcmp.eq.s32.totalorder %v4498, %v4587
        %vm4820 = vcmp.eq.s32.totalorder %v4499, %v4587
        %vm4821 = vcmp.eq.s32.totalorder %v4500, %v4603
        %vm4822 = vcmp.eq.s32.totalorder %v4501, %v4603
        %vm4823 = vcmp.eq.s32.totalorder %v4502, %v4619
        %vm4824 = vcmp.eq.s32.totalorder %v4503, %v4619
        %vm4825 = vcmp.eq.s32.totalorder %v4504, %v4635
        %vm4826 = vcmp.eq.s32.totalorder %v4505, %v4635
        %vm4827 = vcmp.eq.s32.totalorder %v4506, %v4651
        %vm4828 = vcmp.eq.s32.totalorder %v4507, %v4651
        %vm4829 = vcmp.eq.s32.totalorder %v4508, %v4667
        %vm4830 = vcmp.eq.s32.totalorder %v4509, %v4667
        %vm4831 = vcmp.eq.s32.totalorder %v4510, %v4683
        %vm4832 = vcmp.eq.s32.totalorder %v4511, %v4683
        %vm4833 = vcmp.eq.s32.totalorder %v4512, %v4699
        %vm4834 = vcmp.eq.s32.totalorder %v4513, %v4699
        %vm4835 = vcmp.eq.s32.totalorder %v4514, %v4715
        %vm4836 = vcmp.eq.s32.totalorder %v4515, %v4715
        %vm4837 = vcmp.eq.s32.totalorder %v4516, %v4731
        %vm4838 = vcmp.eq.s32.totalorder %v4517, %v4731
        %vm4839 = vcmp.eq.s32.totalorder %v4518, %v4747
        %vm4840 = vcmp.eq.s32.totalorder %v4519, %v4747
        %vm4841 = vcmp.eq.s32.totalorder %v4520, %v4763
        %vm4842 = vcmp.eq.s32.totalorder %v4521, %v4763
        %vm4843 = vcmp.eq.s32.totalorder %v4522, %v4779
        %vm4844 = vcmp.eq.s32.totalorder %v4523, %v4779
        %v4845 = vsel %vm4813, 2147483647, %v4492
        %v4846 = vsel %vm4814, 2147483647, %v4493
        %v4847 = vsel %vm4815, 2147483647, %v4494
        %v4848 = vsel %vm4816, 2147483647, %v4495
        %v4849 = vsel %vm4817, 2147483647, %v4496
        %v4850 = vsel %vm4818, 2147483647, %v4497
        %v4851 = vsel %vm4819, 2147483647, %v4498
        %v4852 = vsel %vm4820, 2147483647, %v4499
        %v4853 = vsel %vm4821, 2147483647, %v4500
        %v4854 = vsel %vm4822, 2147483647, %v4501
        %v4855 = vsel %vm4823, 2147483647, %v4502
        %v4856 = vsel %vm4824, 2147483647, %v4503
        %v4857 = vsel %vm4825, 2147483647, %v4504
        %v4858 = vsel %vm4826, 2147483647, %v4505
        %v4859 = vsel %vm4827, 2147483647, %v4506
        %v4860 = vsel %vm4828, 2147483647, %v4507
        %v4861 = vsel %vm4829, 2147483647, %v4508
        %v4862 = vsel %vm4830, 2147483647, %v4509
        %v4863 = vsel %vm4831, 2147483647, %v4510
        %v4864 = vsel %vm4832, 2147483647, %v4511
        %v4865 = vsel %vm4833, 2147483647, %v4512
        %v4866 = vsel %vm4834, 2147483647, %v4513
        %v4867 = vsel %vm4835, 2147483647, %v4514
        %v4868 = vsel %vm4836, 2147483647, %v4515
        %v4869 = vsel %vm4837, 2147483647, %v4516
        %v4870 = vsel %vm4838, 2147483647, %v4517
        %v4871 = vsel %vm4839, 2147483647, %v4518
        %v4872 = vsel %vm4840, 2147483647, %v4519
        %v4873 = vsel %vm4841, 2147483647, %v4520
        %v4874 = vsel %vm4842, 2147483647, %v4521
        %v4875 = vsel %vm4843, 2147483647, %v4522
        %v4876 = vsel %vm4844, 2147483647, %v4523
        %vm4877 = vcmp.lt.s32.totalorder %v4845, %v4846
        %v4878 = vsel %vm4877, %v4845, %v4846
        %v4879 = vand.u32 %v4878, 65535
        %v4880 = vshra.s32 %v4878, 16
        %v4881 = vcvt.s32.f32 %v4879
        %v4882 = vcvt.s32.f32 %v4880
        %4883 = vmin.xlane.f32.xlu0 %v4882
        %v4884 = vpop.xlane.xlu0 %4883
        %vm4885 = vcmp.eq.f32.partialorder %v4882, %v4884
        %v4886 = vsel %vm4885, %v4881, inf
        %4887 = vmin.xlane.f32.xlu0 %v4886
        %v4888 = vpop.xlane.xlu0 %4887
        %v4889 = vcvt.f32.s32 %v4888
        %v4890 = vcvt.f32.s32 %v4884
        %v4891 = vshll.u32 %v4890, 16
        %v4892 = vadd.s32 %v4891, %v4889
        %vm4893 = vcmp.lt.s32.totalorder %v4847, %v4848
        %v4894 = vsel %vm4893, %v4847, %v4848
        %v4895 = vand.u32 %v4894, 65535
        %v4896 = vshra.s32 %v4894, 16
        %v4897 = vcvt.s32.f32 %v4895
        %v4898 = vcvt.s32.f32 %v4896
        %4899 = vmin.xlane.f32.xlu0 %v4898
        %v4900 = vpop.xlane.xlu0 %4899
        %vm4901 = vcmp.eq.f32.partialorder %v4898, %v4900
        %v4902 = vsel %vm4901, %v4897, inf
        %4903 = vmin.xlane.f32.xlu0 %v4902
        %v4904 = vpop.xlane.xlu0 %4903
        %v4905 = vcvt.f32.s32 %v4904
        %v4906 = vcvt.f32.s32 %v4900
        %v4907 = vshll.u32 %v4906, 16
        %v4908 = vadd.s32 %v4907, %v4905
        %vm4909 = vcmp.lt.s32.totalorder %v4849, %v4850
        %v4910 = vsel %vm4909, %v4849, %v4850
        %v4911 = vand.u32 %v4910, 65535
        %v4912 = vshra.s32 %v4910, 16
        %v4913 = vcvt.s32.f32 %v4911
        %v4914 = vcvt.s32.f32 %v4912
        %4915 = vmin.xlane.f32.xlu0 %v4914
        %v4916 = vpop.xlane.xlu0 %4915
        %vm4917 = vcmp.eq.f32.partialorder %v4914, %v4916
        %v4918 = vsel %vm4917, %v4913, inf
        %4919 = vmin.xlane.f32.xlu0 %v4918
        %v4920 = vpop.xlane.xlu0 %4919
        %v4921 = vcvt.f32.s32 %v4920
        %v4922 = vcvt.f32.s32 %v4916
        %v4923 = vshll.u32 %v4922, 16
        %v4924 = vadd.s32 %v4923, %v4921
        %vm4925 = vcmp.lt.s32.totalorder %v4851, %v4852
        %v4926 = vsel %vm4925, %v4851, %v4852
        %v4927 = vand.u32 %v4926, 65535
        %v4928 = vshra.s32 %v4926, 16
        %v4929 = vcvt.s32.f32 %v4927
        %v4930 = vcvt.s32.f32 %v4928
        %4931 = vmin.xlane.f32.xlu0 %v4930
        %v4932 = vpop.xlane.xlu0 %4931
        %vm4933 = vcmp.eq.f32.partialorder %v4930, %v4932
        %v4934 = vsel %vm4933, %v4929, inf
        %4935 = vmin.xlane.f32.xlu0 %v4934
        %v4936 = vpop.xlane.xlu0 %4935
        %v4937 = vcvt.f32.s32 %v4936
        %v4938 = vcvt.f32.s32 %v4932
        %v4939 = vshll.u32 %v4938, 16
        %v4940 = vadd.s32 %v4939, %v4937
        %vm4941 = vcmp.lt.s32.totalorder %v4853, %v4854
        %v4942 = vsel %vm4941, %v4853, %v4854
        %v4943 = vand.u32 %v4942, 65535
        %v4944 = vshra.s32 %v4942, 16
        %v4945 = vcvt.s32.f32 %v4943
        %v4946 = vcvt.s32.f32 %v4944
        %4947 = vmin.xlane.f32.xlu0 %v4946
        %v4948 = vpop.xlane.xlu0 %4947
        %vm4949 = vcmp.eq.f32.partialorder %v4946, %v4948
        %v4950 = vsel %vm4949, %v4945, inf
        %4951 = vmin.xlane.f32.xlu0 %v4950
        %v4952 = vpop.xlane.xlu0 %4951
        %v4953 = vcvt.f32.s32 %v4952
        %v4954 = vcvt.f32.s32 %v4948
        %v4955 = vshll.u32 %v4954, 16
        %v4956 = vadd.s32 %v4955, %v4953
        %vm4957 = vcmp.lt.s32.totalorder %v4855, %v4856
        %v4958 = vsel %vm4957, %v4855, %v4856
        %v4959 = vand.u32 %v4958, 65535
        %v4960 = vshra.s32 %v4958, 16
        %v4961 = vcvt.s32.f32 %v4959
        %v4962 = vcvt.s32.f32 %v4960
        %4963 = vmin.xlane.f32.xlu0 %v4962
        %v4964 = vpop.xlane.xlu0 %4963
        %vm4965 = vcmp.eq.f32.partialorder %v4962, %v4964
        %v4966 = vsel %vm4965, %v4961, inf
        %4967 = vmin.xlane.f32.xlu0 %v4966
        %v4968 = vpop.xlane.xlu0 %4967
        %v4969 = vcvt.f32.s32 %v4968
        %v4970 = vcvt.f32.s32 %v4964
        %v4971 = vshll.u32 %v4970, 16
        %v4972 = vadd.s32 %v4971, %v4969
        %vm4973 = vcmp.lt.s32.totalorder %v4857, %v4858
        %v4974 = vsel %vm4973, %v4857, %v4858
        %v4975 = vand.u32 %v4974, 65535
        %v4976 = vshra.s32 %v4974, 16
        %v4977 = vcvt.s32.f32 %v4975
        %v4978 = vcvt.s32.f32 %v4976
        %4979 = vmin.xlane.f32.xlu0 %v4978
        %v4980 = vpop.xlane.xlu0 %4979
        %vm4981 = vcmp.eq.f32.partialorder %v4978, %v4980
        %v4982 = vsel %vm4981, %v4977, inf
        %4983 = vmin.xlane.f32.xlu0 %v4982
        %v4984 = vpop.xlane.xlu0 %4983
        %v4985 = vcvt.f32.s32 %v4984
        %v4986 = vcvt.f32.s32 %v4980
        %v4987 = vshll.u32 %v4986, 16
        %v4988 = vadd.s32 %v4987, %v4985
        %vm4989 = vcmp.lt.s32.totalorder %v4859, %v4860
        %v4990 = vsel %vm4989, %v4859, %v4860
        %v4991 = vand.u32 %v4990, 65535
        %v4992 = vshra.s32 %v4990, 16
        %v4993 = vcvt.s32.f32 %v4991
        %v4994 = vcvt.s32.f32 %v4992
        %4995 = vmin.xlane.f32.xlu0 %v4994
        %v4996 = vpop.xlane.xlu0 %4995
        %vm4997 = vcmp.eq.f32.partialorder %v4994, %v4996
        %v4998 = vsel %vm4997, %v4993, inf
        %4999 = vmin.xlane.f32.xlu0 %v4998
        %v5000 = vpop.xlane.xlu0 %4999
        %v5001 = vcvt.f32.s32 %v5000
        %v5002 = vcvt.f32.s32 %v4996
        %v5003 = vshll.u32 %v5002, 16
        %v5004 = vadd.s32 %v5003, %v5001
        %vm5005 = vcmp.lt.s32.totalorder %v4861, %v4862
        %v5006 = vsel %vm5005, %v4861, %v4862
        %v5007 = vand.u32 %v5006, 65535
        %v5008 = vshra.s32 %v5006, 16
        %v5009 = vcvt.s32.f32 %v5007
        %v5010 = vcvt.s32.f32 %v5008
        %5011 = vmin.xlane.f32.xlu0 %v5010
        %v5012 = vpop.xlane.xlu0 %5011
        %vm5013 = vcmp.eq.f32.partialorder %v5010, %v5012
        %v5014 = vsel %vm5013, %v5009, inf
        %5015 = vmin.xlane.f32.xlu0 %v5014
        %v5016 = vpop.xlane.xlu0 %5015
        %v5017 = vcvt.f32.s32 %v5016
        %v5018 = vcvt.f32.s32 %v5012
        %v5019 = vshll.u32 %v5018, 16
        %v5020 = vadd.s32 %v5019, %v5017
        %vm5021 = vcmp.lt.s32.totalorder %v4863, %v4864
        %v5022 = vsel %vm5021, %v4863, %v4864
        %v5023 = vand.u32 %v5022, 65535
        %v5024 = vshra.s32 %v5022, 16
        %v5025 = vcvt.s32.f32 %v5023
        %v5026 = vcvt.s32.f32 %v5024
        %5027 = vmin.xlane.f32.xlu0 %v5026
        %v5028 = vpop.xlane.xlu0 %5027
        %vm5029 = vcmp.eq.f32.partialorder %v5026, %v5028
        %v5030 = vsel %vm5029, %v5025, inf
        %5031 = vmin.xlane.f32.xlu0 %v5030
        %v5032 = vpop.xlane.xlu0 %5031
        %v5033 = vcvt.f32.s32 %v5032
        %v5034 = vcvt.f32.s32 %v5028
        %v5035 = vshll.u32 %v5034, 16
        %v5036 = vadd.s32 %v5035, %v5033
        %vm5037 = vcmp.lt.s32.totalorder %v4865, %v4866
        %v5038 = vsel %vm5037, %v4865, %v4866
        %v5039 = vand.u32 %v5038, 65535
        %v5040 = vshra.s32 %v5038, 16
        %v5041 = vcvt.s32.f32 %v5039
        %v5042 = vcvt.s32.f32 %v5040
        %5043 = vmin.xlane.f32.xlu0 %v5042
        %v5044 = vpop.xlane.xlu0 %5043
        %vm5045 = vcmp.eq.f32.partialorder %v5042, %v5044
        %v5046 = vsel %vm5045, %v5041, inf
        %5047 = vmin.xlane.f32.xlu0 %v5046
        %v5048 = vpop.xlane.xlu0 %5047
        %v5049 = vcvt.f32.s32 %v5048
        %v5050 = vcvt.f32.s32 %v5044
        %v5051 = vshll.u32 %v5050, 16
        %v5052 = vadd.s32 %v5051, %v5049
        %vm5053 = vcmp.lt.s32.totalorder %v4867, %v4868
        %v5054 = vsel %vm5053, %v4867, %v4868
        %v5055 = vand.u32 %v5054, 65535
        %v5056 = vshra.s32 %v5054, 16
        %v5057 = vcvt.s32.f32 %v5055
        %v5058 = vcvt.s32.f32 %v5056
        %5059 = vmin.xlane.f32.xlu0 %v5058
        %v5060 = vpop.xlane.xlu0 %5059
        %vm5061 = vcmp.eq.f32.partialorder %v5058, %v5060
        %v5062 = vsel %vm5061, %v5057, inf
        %5063 = vmin.xlane.f32.xlu0 %v5062
        %v5064 = vpop.xlane.xlu0 %5063
        %v5065 = vcvt.f32.s32 %v5064
        %v5066 = vcvt.f32.s32 %v5060
        %v5067 = vshll.u32 %v5066, 16
        %v5068 = vadd.s32 %v5067, %v5065
        %vm5069 = vcmp.lt.s32.totalorder %v4869, %v4870
        %v5070 = vsel %vm5069, %v4869, %v4870
        %v5071 = vand.u32 %v5070, 65535
        %v5072 = vshra.s32 %v5070, 16
        %v5073 = vcvt.s32.f32 %v5071
        %v5074 = vcvt.s32.f32 %v5072
        %5075 = vmin.xlane.f32.xlu0 %v5074
        %v5076 = vpop.xlane.xlu0 %5075
        %vm5077 = vcmp.eq.f32.partialorder %v5074, %v5076
        %v5078 = vsel %vm5077, %v5073, inf
        %5079 = vmin.xlane.f32.xlu0 %v5078
        %v5080 = vpop.xlane.xlu0 %5079
        %v5081 = vcvt.f32.s32 %v5080
        %v5082 = vcvt.f32.s32 %v5076
        %v5083 = vshll.u32 %v5082, 16
        %v5084 = vadd.s32 %v5083, %v5081
        %vm5085 = vcmp.lt.s32.totalorder %v4871, %v4872
        %v5086 = vsel %vm5085, %v4871, %v4872
        %v5087 = vand.u32 %v5086, 65535
        %v5088 = vshra.s32 %v5086, 16
        %v5089 = vcvt.s32.f32 %v5087
        %v5090 = vcvt.s32.f32 %v5088
        %5091 = vmin.xlane.f32.xlu0 %v5090
        %v5092 = vpop.xlane.xlu0 %5091
        %vm5093 = vcmp.eq.f32.partialorder %v5090, %v5092
        %v5094 = vsel %vm5093, %v5089, inf
        %5095 = vmin.xlane.f32.xlu0 %v5094
        %v5096 = vpop.xlane.xlu0 %5095
        %v5097 = vcvt.f32.s32 %v5096
        %v5098 = vcvt.f32.s32 %v5092
        %v5099 = vshll.u32 %v5098, 16
        %v5100 = vadd.s32 %v5099, %v5097
        %vm5101 = vcmp.lt.s32.totalorder %v4873, %v4874
        %v5102 = vsel %vm5101, %v4873, %v4874
        %v5103 = vand.u32 %v5102, 65535
        %v5104 = vshra.s32 %v5102, 16
        %v5105 = vcvt.s32.f32 %v5103
        %v5106 = vcvt.s32.f32 %v5104
        %5107 = vmin.xlane.f32.xlu0 %v5106
        %v5108 = vpop.xlane.xlu0 %5107
        %vm5109 = vcmp.eq.f32.partialorder %v5106, %v5108
        %v5110 = vsel %vm5109, %v5105, inf
        %5111 = vmin.xlane.f32.xlu0 %v5110
        %v5112 = vpop.xlane.xlu0 %5111
        %v5113 = vcvt.f32.s32 %v5112
        %v5114 = vcvt.f32.s32 %v5108
        %v5115 = vshll.u32 %v5114, 16
        %v5116 = vadd.s32 %v5115, %v5113
        %vm5117 = vcmp.lt.s32.totalorder %v4875, %v4876
        %v5118 = vsel %vm5117, %v4875, %v4876
        %v5119 = vand.u32 %v5118, 65535
        %v5120 = vshra.s32 %v5118, 16
        %v5121 = vcvt.s32.f32 %v5119
        %v5122 = vcvt.s32.f32 %v5120
        %5123 = vmin.xlane.f32.xlu0 %v5122
        %v5124 = vpop.xlane.xlu0 %5123
        %vm5125 = vcmp.eq.f32.partialorder %v5122, %v5124
        %v5126 = vsel %vm5125, %v5121, inf
        %5127 = vmin.xlane.f32.xlu0 %v5126
        %v5128 = vpop.xlane.xlu0 %5127
        %v5129 = vcvt.f32.s32 %v5128
        %v5130 = vcvt.f32.s32 %v5124
        %v5131 = vshll.u32 %v5130, 16
        %v5132 = vadd.s32 %v5131, %v5129
        %v5133 = vand.u32 %v4892, 255
        %v5134 = vand.u32 %v4908, 255
        %v5135 = vand.u32 %v4924, 255
        %v5136 = vand.u32 %v4940, 255
        %v5137 = vand.u32 %v4956, 255
        %v5138 = vand.u32 %v4972, 255
        %v5139 = vand.u32 %v4988, 255
        %v5140 = vand.u32 %v5004, 255
        %v5141 = vand.u32 %v5020, 255
        %v5142 = vand.u32 %v5036, 255
        %v5143 = vand.u32 %v5052, 255
        %v5144 = vand.u32 %v5068, 255
        %v5145 = vand.u32 %v5084, 255
        %v5146 = vand.u32 %v5100, 255
        %v5147 = vand.u32 %v5116, 255
        %v5148 = vand.u32 %v5132, 255
        %5149 = vst.msk [vmem:[%s4796] sm:$0xff] %vm1543, %v5133
        %5150 = vst.msk [vmem:[%s4796 + $0x8] sm:$0xff] %vm1543, %v5134
        %5151 = vst.msk [vmem:[%s4796 + $0x10] sm:$0xff] %vm1543, %v5135
        %5152 = vst.msk [vmem:[%s4796 + $0x18] sm:$0xff] %vm1543, %v5136
        %5153 = vst.msk [vmem:[%s4796 + $0x20] sm:$0xff] %vm1543, %v5137
        %5154 = vst.msk [vmem:[%s4796 + $0x28] sm:$0xff] %vm1543, %v5138
        %5155 = vst.msk [vmem:[%s4796 + $0x30] sm:$0xff] %vm1543, %v5139
        %5156 = vst.msk [vmem:[%s4796 + $0x38] sm:$0xff] %vm1543, %v5140
        %5157 = vst.msk [vmem:[%s4796 + $0x40] sm:$0xff] %vm1543, %v5141
        %5158 = vst.msk [vmem:[%s4796 + $0x48] sm:$0xff] %vm1543, %v5142
        %5159 = vst.msk [vmem:[%s4796 + $0x50] sm:$0xff] %vm1543, %v5143
        %5160 = vst.msk [vmem:[%s4796 + $0x58] sm:$0xff] %vm1543, %v5144
        %5161 = vst.msk [vmem:[%s4796 + $0x60] sm:$0xff] %vm1543, %v5145
        %5162 = vst.msk [vmem:[%s4796 + $0x68] sm:$0xff] %vm1543, %v5146
        %5163 = vst.msk [vmem:[%s4796 + $0x70] sm:$0xff] %vm1543, %v5147
        %5164 = vst.msk [vmem:[%s4796 + $0x78] sm:$0xff] %vm1543, %v5148
        %vm5165 = vcmp.eq.s32.totalorder %v4845, %v4892
        %vm5166 = vcmp.eq.s32.totalorder %v4846, %v4892
        %vm5167 = vcmp.eq.s32.totalorder %v4847, %v4908
        %vm5168 = vcmp.eq.s32.totalorder %v4848, %v4908
        %vm5169 = vcmp.eq.s32.totalorder %v4849, %v4924
        %vm5170 = vcmp.eq.s32.totalorder %v4850, %v4924
        %vm5171 = vcmp.eq.s32.totalorder %v4851, %v4940
        %vm5172 = vcmp.eq.s32.totalorder %v4852, %v4940
        %vm5173 = vcmp.eq.s32.totalorder %v4853, %v4956
        %vm5174 = vcmp.eq.s32.totalorder %v4854, %v4956
        %vm5175 = vcmp.eq.s32.totalorder %v4855, %v4972
        %vm5176 = vcmp.eq.s32.totalorder %v4856, %v4972
        %vm5177 = vcmp.eq.s32.totalorder %v4857, %v4988
        %vm5178 = vcmp.eq.s32.totalorder %v4858, %v4988
        %vm5179 = vcmp.eq.s32.totalorder %v4859, %v5004
        %vm5180 = vcmp.eq.s32.totalorder %v4860, %v5004
        %vm5181 = vcmp.eq.s32.totalorder %v4861, %v5020
        %vm5182 = vcmp.eq.s32.totalorder %v4862, %v5020
        %vm5183 = vcmp.eq.s32.totalorder %v4863, %v5036
        %vm5184 = vcmp.eq.s32.totalorder %v4864, %v5036
        %vm5185 = vcmp.eq.s32.totalorder %v4865, %v5052
        %vm5186 = vcmp.eq.s32.totalorder %v4866, %v5052
        %vm5187 = vcmp.eq.s32.totalorder %v4867, %v5068
        %vm5188 = vcmp.eq.s32.totalorder %v4868, %v5068
        %vm5189 = vcmp.eq.s32.totalorder %v4869, %v5084
        %vm5190 = vcmp.eq.s32.totalorder %v4870, %v5084
        %vm5191 = vcmp.eq.s32.totalorder %v4871, %v5100
        %vm5192 = vcmp.eq.s32.totalorder %v4872, %v5100
        %vm5193 = vcmp.eq.s32.totalorder %v4873, %v5116
        %vm5194 = vcmp.eq.s32.totalorder %v4874, %v5116
        %vm5195 = vcmp.eq.s32.totalorder %v4875, %v5132
        %vm5196 = vcmp.eq.s32.totalorder %v4876, %v5132
        %v5197 = vsel %vm5165, 2147483647, %v4845
        %v5198 = vsel %vm5166, 2147483647, %v4846
        %v5199 = vsel %vm5167, 2147483647, %v4847
        %v5200 = vsel %vm5168, 2147483647, %v4848
        %v5201 = vsel %vm5169, 2147483647, %v4849
        %v5202 = vsel %vm5170, 2147483647, %v4850
        %v5203 = vsel %vm5171, 2147483647, %v4851
        %v5204 = vsel %vm5172, 2147483647, %v4852
        %v5205 = vsel %vm5173, 2147483647, %v4853
        %v5206 = vsel %vm5174, 2147483647, %v4854
        %v5207 = vsel %vm5175, 2147483647, %v4855
        %v5208 = vsel %vm5176, 2147483647, %v4856
        %v5209 = vsel %vm5177, 2147483647, %v4857
        %v5210 = vsel %vm5178, 2147483647, %v4858
        %v5211 = vsel %vm5179, 2147483647, %v4859
        %v5212 = vsel %vm5180, 2147483647, %v4860
        %v5213 = vsel %vm5181, 2147483647, %v4861
        %v5214 = vsel %vm5182, 2147483647, %v4862
        %v5215 = vsel %vm5183, 2147483647, %v4863
        %v5216 = vsel %vm5184, 2147483647, %v4864
        %v5217 = vsel %vm5185, 2147483647, %v4865
        %v5218 = vsel %vm5186, 2147483647, %v4866
        %v5219 = vsel %vm5187, 2147483647, %v4867
        %v5220 = vsel %vm5188, 2147483647, %v4868
        %v5221 = vsel %vm5189, 2147483647, %v4869
        %v5222 = vsel %vm5190, 2147483647, %v4870
        %v5223 = vsel %vm5191, 2147483647, %v4871
        %v5224 = vsel %vm5192, 2147483647, %v4872
        %v5225 = vsel %vm5193, 2147483647, %v4873
        %v5226 = vsel %vm5194, 2147483647, %v4874
        %v5227 = vsel %vm5195, 2147483647, %v4875
        %v5228 = vsel %vm5196, 2147483647, %v4876
        %vm5229 = vcmp.lt.s32.totalorder %v5197, %v5198
        %v5230 = vsel %vm5229, %v5197, %v5198
        %v5231 = vand.u32 %v5230, 65535
        %v5232 = vshra.s32 %v5230, 16
        %v5233 = vcvt.s32.f32 %v5231
        %v5234 = vcvt.s32.f32 %v5232
        %5235 = vmin.xlane.f32.xlu0 %v5234
        %v5236 = vpop.xlane.xlu0 %5235
        %vm5237 = vcmp.eq.f32.partialorder %v5234, %v5236
        %v5238 = vsel %vm5237, %v5233, inf
        %5239 = vmin.xlane.f32.xlu0 %v5238
        %v5240 = vpop.xlane.xlu0 %5239
        %v5241 = vcvt.f32.s32 %v5240
        %v5242 = vcvt.f32.s32 %v5236
        %v5243 = vshll.u32 %v5242, 16
        %v5244 = vadd.s32 %v5243, %v5241
        %vm5245 = vcmp.lt.s32.totalorder %v5199, %v5200
        %v5246 = vsel %vm5245, %v5199, %v5200
        %v5247 = vand.u32 %v5246, 65535
        %v5248 = vshra.s32 %v5246, 16
        %v5249 = vcvt.s32.f32 %v5247
        %v5250 = vcvt.s32.f32 %v5248
        %5251 = vmin.xlane.f32.xlu0 %v5250
        %v5252 = vpop.xlane.xlu0 %5251
        %vm5253 = vcmp.eq.f32.partialorder %v5250, %v5252
        %v5254 = vsel %vm5253, %v5249, inf
        %5255 = vmin.xlane.f32.xlu0 %v5254
        %v5256 = vpop.xlane.xlu0 %5255
        %v5257 = vcvt.f32.s32 %v5256
        %v5258 = vcvt.f32.s32 %v5252
        %v5259 = vshll.u32 %v5258, 16
        %v5260 = vadd.s32 %v5259, %v5257
        %vm5261 = vcmp.lt.s32.totalorder %v5201, %v5202
        %v5262 = vsel %vm5261, %v5201, %v5202
        %v5263 = vand.u32 %v5262, 65535
        %v5264 = vshra.s32 %v5262, 16
        %v5265 = vcvt.s32.f32 %v5263
        %v5266 = vcvt.s32.f32 %v5264
        %5267 = vmin.xlane.f32.xlu0 %v5266
        %v5268 = vpop.xlane.xlu0 %5267
        %vm5269 = vcmp.eq.f32.partialorder %v5266, %v5268
        %v5270 = vsel %vm5269, %v5265, inf
        %5271 = vmin.xlane.f32.xlu0 %v5270
        %v5272 = vpop.xlane.xlu0 %5271
        %v5273 = vcvt.f32.s32 %v5272
        %v5274 = vcvt.f32.s32 %v5268
        %v5275 = vshll.u32 %v5274, 16
        %v5276 = vadd.s32 %v5275, %v5273
        %vm5277 = vcmp.lt.s32.totalorder %v5203, %v5204
        %v5278 = vsel %vm5277, %v5203, %v5204
        %v5279 = vand.u32 %v5278, 65535
        %v5280 = vshra.s32 %v5278, 16
        %v5281 = vcvt.s32.f32 %v5279
        %v5282 = vcvt.s32.f32 %v5280
        %5283 = vmin.xlane.f32.xlu0 %v5282
        %v5284 = vpop.xlane.xlu0 %5283
        %vm5285 = vcmp.eq.f32.partialorder %v5282, %v5284
        %v5286 = vsel %vm5285, %v5281, inf
        %5287 = vmin.xlane.f32.xlu0 %v5286
        %v5288 = vpop.xlane.xlu0 %5287
        %v5289 = vcvt.f32.s32 %v5288
        %v5290 = vcvt.f32.s32 %v5284
        %v5291 = vshll.u32 %v5290, 16
        %v5292 = vadd.s32 %v5291, %v5289
        %vm5293 = vcmp.lt.s32.totalorder %v5205, %v5206
        %v5294 = vsel %vm5293, %v5205, %v5206
        %v5295 = vand.u32 %v5294, 65535
        %v5296 = vshra.s32 %v5294, 16
        %v5297 = vcvt.s32.f32 %v5295
        %v5298 = vcvt.s32.f32 %v5296
        %5299 = vmin.xlane.f32.xlu0 %v5298
        %v5300 = vpop.xlane.xlu0 %5299
        %vm5301 = vcmp.eq.f32.partialorder %v5298, %v5300
        %v5302 = vsel %vm5301, %v5297, inf
        %5303 = vmin.xlane.f32.xlu0 %v5302
        %v5304 = vpop.xlane.xlu0 %5303
        %v5305 = vcvt.f32.s32 %v5304
        %v5306 = vcvt.f32.s32 %v5300
        %v5307 = vshll.u32 %v5306, 16
        %v5308 = vadd.s32 %v5307, %v5305
        %vm5309 = vcmp.lt.s32.totalorder %v5207, %v5208
        %v5310 = vsel %vm5309, %v5207, %v5208
        %v5311 = vand.u32 %v5310, 65535
        %v5312 = vshra.s32 %v5310, 16
        %v5313 = vcvt.s32.f32 %v5311
        %v5314 = vcvt.s32.f32 %v5312
        %5315 = vmin.xlane.f32.xlu0 %v5314
        %v5316 = vpop.xlane.xlu0 %5315
        %vm5317 = vcmp.eq.f32.partialorder %v5314, %v5316
        %v5318 = vsel %vm5317, %v5313, inf
        %5319 = vmin.xlane.f32.xlu0 %v5318
        %v5320 = vpop.xlane.xlu0 %5319
        %v5321 = vcvt.f32.s32 %v5320
        %v5322 = vcvt.f32.s32 %v5316
        %v5323 = vshll.u32 %v5322, 16
        %v5324 = vadd.s32 %v5323, %v5321
        %vm5325 = vcmp.lt.s32.totalorder %v5209, %v5210
        %v5326 = vsel %vm5325, %v5209, %v5210
        %v5327 = vand.u32 %v5326, 65535
        %v5328 = vshra.s32 %v5326, 16
        %v5329 = vcvt.s32.f32 %v5327
        %v5330 = vcvt.s32.f32 %v5328
        %5331 = vmin.xlane.f32.xlu0 %v5330
        %v5332 = vpop.xlane.xlu0 %5331
        %vm5333 = vcmp.eq.f32.partialorder %v5330, %v5332
        %v5334 = vsel %vm5333, %v5329, inf
        %5335 = vmin.xlane.f32.xlu0 %v5334
        %v5336 = vpop.xlane.xlu0 %5335
        %v5337 = vcvt.f32.s32 %v5336
        %v5338 = vcvt.f32.s32 %v5332
        %v5339 = vshll.u32 %v5338, 16
        %v5340 = vadd.s32 %v5339, %v5337
        %vm5341 = vcmp.lt.s32.totalorder %v5211, %v5212
        %v5342 = vsel %vm5341, %v5211, %v5212
        %v5343 = vand.u32 %v5342, 65535
        %v5344 = vshra.s32 %v5342, 16
        %v5345 = vcvt.s32.f32 %v5343
        %v5346 = vcvt.s32.f32 %v5344
        %5347 = vmin.xlane.f32.xlu0 %v5346
        %v5348 = vpop.xlane.xlu0 %5347
        %vm5349 = vcmp.eq.f32.partialorder %v5346, %v5348
        %v5350 = vsel %vm5349, %v5345, inf
        %5351 = vmin.xlane.f32.xlu0 %v5350
        %v5352 = vpop.xlane.xlu0 %5351
        %v5353 = vcvt.f32.s32 %v5352
        %v5354 = vcvt.f32.s32 %v5348
        %v5355 = vshll.u32 %v5354, 16
        %v5356 = vadd.s32 %v5355, %v5353
        %vm5357 = vcmp.lt.s32.totalorder %v5213, %v5214
        %v5358 = vsel %vm5357, %v5213, %v5214
        %v5359 = vand.u32 %v5358, 65535
        %v5360 = vshra.s32 %v5358, 16
        %v5361 = vcvt.s32.f32 %v5359
        %v5362 = vcvt.s32.f32 %v5360
        %5363 = vmin.xlane.f32.xlu0 %v5362
        %v5364 = vpop.xlane.xlu0 %5363
        %vm5365 = vcmp.eq.f32.partialorder %v5362, %v5364
        %v5366 = vsel %vm5365, %v5361, inf
        %5367 = vmin.xlane.f32.xlu0 %v5366
        %v5368 = vpop.xlane.xlu0 %5367
        %v5369 = vcvt.f32.s32 %v5368
        %v5370 = vcvt.f32.s32 %v5364
        %v5371 = vshll.u32 %v5370, 16
        %v5372 = vadd.s32 %v5371, %v5369
        %vm5373 = vcmp.lt.s32.totalorder %v5215, %v5216
        %v5374 = vsel %vm5373, %v5215, %v5216
        %v5375 = vand.u32 %v5374, 65535
        %v5376 = vshra.s32 %v5374, 16
        %v5377 = vcvt.s32.f32 %v5375
        %v5378 = vcvt.s32.f32 %v5376
        %5379 = vmin.xlane.f32.xlu0 %v5378
        %v5380 = vpop.xlane.xlu0 %5379
        %vm5381 = vcmp.eq.f32.partialorder %v5378, %v5380
        %v5382 = vsel %vm5381, %v5377, inf
        %5383 = vmin.xlane.f32.xlu0 %v5382
        %v5384 = vpop.xlane.xlu0 %5383
        %v5385 = vcvt.f32.s32 %v5384
        %v5386 = vcvt.f32.s32 %v5380
        %v5387 = vshll.u32 %v5386, 16
        %v5388 = vadd.s32 %v5387, %v5385
        %vm5389 = vcmp.lt.s32.totalorder %v5217, %v5218
        %v5390 = vsel %vm5389, %v5217, %v5218
        %v5391 = vand.u32 %v5390, 65535
        %v5392 = vshra.s32 %v5390, 16
        %v5393 = vcvt.s32.f32 %v5391
        %v5394 = vcvt.s32.f32 %v5392
        %5395 = vmin.xlane.f32.xlu0 %v5394
        %v5396 = vpop.xlane.xlu0 %5395
        %vm5397 = vcmp.eq.f32.partialorder %v5394, %v5396
        %v5398 = vsel %vm5397, %v5393, inf
        %5399 = vmin.xlane.f32.xlu0 %v5398
        %v5400 = vpop.xlane.xlu0 %5399
        %v5401 = vcvt.f32.s32 %v5400
        %v5402 = vcvt.f32.s32 %v5396
        %v5403 = vshll.u32 %v5402, 16
        %v5404 = vadd.s32 %v5403, %v5401
        %vm5405 = vcmp.lt.s32.totalorder %v5219, %v5220
        %v5406 = vsel %vm5405, %v5219, %v5220
        %v5407 = vand.u32 %v5406, 65535
        %v5408 = vshra.s32 %v5406, 16
        %v5409 = vcvt.s32.f32 %v5407
        %v5410 = vcvt.s32.f32 %v5408
        %5411 = vmin.xlane.f32.xlu0 %v5410
        %v5412 = vpop.xlane.xlu0 %5411
        %vm5413 = vcmp.eq.f32.partialorder %v5410, %v5412
        %v5414 = vsel %vm5413, %v5409, inf
        %5415 = vmin.xlane.f32.xlu0 %v5414
        %v5416 = vpop.xlane.xlu0 %5415
        %v5417 = vcvt.f32.s32 %v5416
        %v5418 = vcvt.f32.s32 %v5412
        %v5419 = vshll.u32 %v5418, 16
        %v5420 = vadd.s32 %v5419, %v5417
        %vm5421 = vcmp.lt.s32.totalorder %v5221, %v5222
        %v5422 = vsel %vm5421, %v5221, %v5222
        %v5423 = vand.u32 %v5422, 65535
        %v5424 = vshra.s32 %v5422, 16
        %v5425 = vcvt.s32.f32 %v5423
        %v5426 = vcvt.s32.f32 %v5424
        %5427 = vmin.xlane.f32.xlu0 %v5426
        %v5428 = vpop.xlane.xlu0 %5427
        %vm5429 = vcmp.eq.f32.partialorder %v5426, %v5428
        %v5430 = vsel %vm5429, %v5425, inf
        %5431 = vmin.xlane.f32.xlu0 %v5430
        %v5432 = vpop.xlane.xlu0 %5431
        %v5433 = vcvt.f32.s32 %v5432
        %v5434 = vcvt.f32.s32 %v5428
        %v5435 = vshll.u32 %v5434, 16
        %v5436 = vadd.s32 %v5435, %v5433
        %vm5437 = vcmp.lt.s32.totalorder %v5223, %v5224
        %v5438 = vsel %vm5437, %v5223, %v5224
        %v5439 = vand.u32 %v5438, 65535
        %v5440 = vshra.s32 %v5438, 16
        %v5441 = vcvt.s32.f32 %v5439
        %v5442 = vcvt.s32.f32 %v5440
        %5443 = vmin.xlane.f32.xlu0 %v5442
        %v5444 = vpop.xlane.xlu0 %5443
        %vm5445 = vcmp.eq.f32.partialorder %v5442, %v5444
        %v5446 = vsel %vm5445, %v5441, inf
        %5447 = vmin.xlane.f32.xlu0 %v5446
        %v5448 = vpop.xlane.xlu0 %5447
        %v5449 = vcvt.f32.s32 %v5448
        %v5450 = vcvt.f32.s32 %v5444
        %v5451 = vshll.u32 %v5450, 16
        %v5452 = vadd.s32 %v5451, %v5449
        %vm5453 = vcmp.lt.s32.totalorder %v5225, %v5226
        %v5454 = vsel %vm5453, %v5225, %v5226
        %v5455 = vand.u32 %v5454, 65535
        %v5456 = vshra.s32 %v5454, 16
        %v5457 = vcvt.s32.f32 %v5455
        %v5458 = vcvt.s32.f32 %v5456
        %5459 = vmin.xlane.f32.xlu0 %v5458
        %v5460 = vpop.xlane.xlu0 %5459
        %vm5461 = vcmp.eq.f32.partialorder %v5458, %v5460
        %v5462 = vsel %vm5461, %v5457, inf
        %5463 = vmin.xlane.f32.xlu0 %v5462
        %v5464 = vpop.xlane.xlu0 %5463
        %v5465 = vcvt.f32.s32 %v5464
        %v5466 = vcvt.f32.s32 %v5460
        %v5467 = vshll.u32 %v5466, 16
        %v5468 = vadd.s32 %v5467, %v5465
        %vm5469 = vcmp.lt.s32.totalorder %v5227, %v5228
        %v5470 = vsel %vm5469, %v5227, %v5228
        %v5471 = vand.u32 %v5470, 65535
        %v5472 = vshra.s32 %v5470, 16
        %v5473 = vcvt.s32.f32 %v5471
        %v5474 = vcvt.s32.f32 %v5472
        %5475 = vmin.xlane.f32.xlu0 %v5474
        %v5476 = vpop.xlane.xlu0 %5475
        %vm5477 = vcmp.eq.f32.partialorder %v5474, %v5476
        %v5478 = vsel %vm5477, %v5473, inf
        %5479 = vmin.xlane.f32.xlu0 %v5478
        %v5480 = vpop.xlane.xlu0 %5479
        %v5481 = vcvt.f32.s32 %v5480
        %v5482 = vcvt.f32.s32 %v5476
        %v5483 = vshll.u32 %v5482, 16
        %v5484 = vadd.s32 %v5483, %v5481
        %v5485 = vand.u32 %v5244, 255
        %v5486 = vand.u32 %v5260, 255
        %v5487 = vand.u32 %v5276, 255
        %v5488 = vand.u32 %v5292, 255
        %v5489 = vand.u32 %v5308, 255
        %v5490 = vand.u32 %v5324, 255
        %v5491 = vand.u32 %v5340, 255
        %v5492 = vand.u32 %v5356, 255
        %v5493 = vand.u32 %v5372, 255
        %v5494 = vand.u32 %v5388, 255
        %v5495 = vand.u32 %v5404, 255
        %v5496 = vand.u32 %v5420, 255
        %v5497 = vand.u32 %v5436, 255
        %v5498 = vand.u32 %v5452, 255
        %v5499 = vand.u32 %v5468, 255
        %v5500 = vand.u32 %v5484, 255
        %5501 = vst.msk [vmem:[%s4796] sm:$0xff] %vm1896, %v5485
        %5502 = vst.msk [vmem:[%s4796 + $0x8] sm:$0xff] %vm1896, %v5486
        %5503 = vst.msk [vmem:[%s4796 + $0x10] sm:$0xff] %vm1896, %v5487
        %5504 = vst.msk [vmem:[%s4796 + $0x18] sm:$0xff] %vm1896, %v5488
        %5505 = vst.msk [vmem:[%s4796 + $0x20] sm:$0xff] %vm1896, %v5489
        %5506 = vst.msk [vmem:[%s4796 + $0x28] sm:$0xff] %vm1896, %v5490
        %5507 = vst.msk [vmem:[%s4796 + $0x30] sm:$0xff] %vm1896, %v5491
        %5508 = vst.msk [vmem:[%s4796 + $0x38] sm:$0xff] %vm1896, %v5492
        %5509 = vst.msk [vmem:[%s4796 + $0x40] sm:$0xff] %vm1896, %v5493
        %5510 = vst.msk [vmem:[%s4796 + $0x48] sm:$0xff] %vm1896, %v5494
        %5511 = vst.msk [vmem:[%s4796 + $0x50] sm:$0xff] %vm1896, %v5495
        %5512 = vst.msk [vmem:[%s4796 + $0x58] sm:$0xff] %vm1896, %v5496
        %5513 = vst.msk [vmem:[%s4796 + $0x60] sm:$0xff] %vm1896, %v5497
        %5514 = vst.msk [vmem:[%s4796 + $0x68] sm:$0xff] %vm1896, %v5498
        %5515 = vst.msk [vmem:[%s4796 + $0x70] sm:$0xff] %vm1896, %v5499
        %5516 = vst.msk [vmem:[%s4796 + $0x78] sm:$0xff] %vm1896, %v5500
        %vm5517 = vcmp.eq.s32.totalorder %v5197, %v5244
        %vm5518 = vcmp.eq.s32.totalorder %v5198, %v5244
        %vm5519 = vcmp.eq.s32.totalorder %v5199, %v5260
        %vm5520 = vcmp.eq.s32.totalorder %v5200, %v5260
        %vm5521 = vcmp.eq.s32.totalorder %v5201, %v5276
        %vm5522 = vcmp.eq.s32.totalorder %v5202, %v5276
        %vm5523 = vcmp.eq.s32.totalorder %v5203, %v5292
        %vm5524 = vcmp.eq.s32.totalorder %v5204, %v5292
        %vm5525 = vcmp.eq.s32.totalorder %v5205, %v5308
        %vm5526 = vcmp.eq.s32.totalorder %v5206, %v5308
        %vm5527 = vcmp.eq.s32.totalorder %v5207, %v5324
        %vm5528 = vcmp.eq.s32.totalorder %v5208, %v5324
        %vm5529 = vcmp.eq.s32.totalorder %v5209, %v5340
        %vm5530 = vcmp.eq.s32.totalorder %v5210, %v5340
        %vm5531 = vcmp.eq.s32.totalorder %v5211, %v5356
        %vm5532 = vcmp.eq.s32.totalorder %v5212, %v5356
        %vm5533 = vcmp.eq.s32.totalorder %v5213, %v5372
        %vm5534 = vcmp.eq.s32.totalorder %v5214, %v5372
        %vm5535 = vcmp.eq.s32.totalorder %v5215, %v5388
        %vm5536 = vcmp.eq.s32.totalorder %v5216, %v5388
        %vm5537 = vcmp.eq.s32.totalorder %v5217, %v5404
        %vm5538 = vcmp.eq.s32.totalorder %v5218, %v5404
        %vm5539 = vcmp.eq.s32.totalorder %v5219, %v5420
        %vm5540 = vcmp.eq.s32.totalorder %v5220, %v5420
        %vm5541 = vcmp.eq.s32.totalorder %v5221, %v5436
        %vm5542 = vcmp.eq.s32.totalorder %v5222, %v5436
        %vm5543 = vcmp.eq.s32.totalorder %v5223, %v5452
        %vm5544 = vcmp.eq.s32.totalorder %v5224, %v5452
        %vm5545 = vcmp.eq.s32.totalorder %v5225, %v5468
        %vm5546 = vcmp.eq.s32.totalorder %v5226, %v5468
        %vm5547 = vcmp.eq.s32.totalorder %v5227, %v5484
        %vm5548 = vcmp.eq.s32.totalorder %v5228, %v5484
        %v5549 = vsel %vm5517, 2147483647, %v5197
        %v5550 = vsel %vm5518, 2147483647, %v5198
        %v5551 = vsel %vm5519, 2147483647, %v5199
        %v5552 = vsel %vm5520, 2147483647, %v5200
        %v5553 = vsel %vm5521, 2147483647, %v5201
        %v5554 = vsel %vm5522, 2147483647, %v5202
        %v5555 = vsel %vm5523, 2147483647, %v5203
        %v5556 = vsel %vm5524, 2147483647, %v5204
        %v5557 = vsel %vm5525, 2147483647, %v5205
        %v5558 = vsel %vm5526, 2147483647, %v5206
        %v5559 = vsel %vm5527, 2147483647, %v5207
        %v5560 = vsel %vm5528, 2147483647, %v5208
        %v5561 = vsel %vm5529, 2147483647, %v5209
        %v5562 = vsel %vm5530, 2147483647, %v5210
        %v5563 = vsel %vm5531, 2147483647, %v5211
        %v5564 = vsel %vm5532, 2147483647, %v5212
        %v5565 = vsel %vm5533, 2147483647, %v5213
        %v5566 = vsel %vm5534, 2147483647, %v5214
        %v5567 = vsel %vm5535, 2147483647, %v5215
        %v5568 = vsel %vm5536, 2147483647, %v5216
        %v5569 = vsel %vm5537, 2147483647, %v5217
        %v5570 = vsel %vm5538, 2147483647, %v5218
        %v5571 = vsel %vm5539, 2147483647, %v5219
        %v5572 = vsel %vm5540, 2147483647, %v5220
        %v5573 = vsel %vm5541, 2147483647, %v5221
        %v5574 = vsel %vm5542, 2147483647, %v5222
        %v5575 = vsel %vm5543, 2147483647, %v5223
        %v5576 = vsel %vm5544, 2147483647, %v5224
        %v5577 = vsel %vm5545, 2147483647, %v5225
        %v5578 = vsel %vm5546, 2147483647, %v5226
        %v5579 = vsel %vm5547, 2147483647, %v5227
        %v5580 = vsel %vm5548, 2147483647, %v5228
        %vm5581 = vcmp.lt.s32.totalorder %v5549, %v5550
        %v5582 = vsel %vm5581, %v5549, %v5550
        %v5583 = vand.u32 %v5582, 65535
        %v5584 = vshra.s32 %v5582, 16
        %v5585 = vcvt.s32.f32 %v5583
        %v5586 = vcvt.s32.f32 %v5584
        %5587 = vmin.xlane.f32.xlu0 %v5586
        %v5588 = vpop.xlane.xlu0 %5587
        %vm5589 = vcmp.eq.f32.partialorder %v5586, %v5588
        %v5590 = vsel %vm5589, %v5585, inf
        %5591 = vmin.xlane.f32.xlu0 %v5590
        %v5592 = vpop.xlane.xlu0 %5591
        %v5593 = vcvt.f32.s32 %v5592
        %v5594 = vcvt.f32.s32 %v5588
        %v5595 = vshll.u32 %v5594, 16
        %v5596 = vadd.s32 %v5595, %v5593
        %vm5597 = vcmp.lt.s32.totalorder %v5551, %v5552
        %v5598 = vsel %vm5597, %v5551, %v5552
        %v5599 = vand.u32 %v5598, 65535
        %v5600 = vshra.s32 %v5598, 16
        %v5601 = vcvt.s32.f32 %v5599
        %v5602 = vcvt.s32.f32 %v5600
        %5603 = vmin.xlane.f32.xlu0 %v5602
        %v5604 = vpop.xlane.xlu0 %5603
        %vm5605 = vcmp.eq.f32.partialorder %v5602, %v5604
        %v5606 = vsel %vm5605, %v5601, inf
        %5607 = vmin.xlane.f32.xlu0 %v5606
        %v5608 = vpop.xlane.xlu0 %5607
        %v5609 = vcvt.f32.s32 %v5608
        %v5610 = vcvt.f32.s32 %v5604
        %v5611 = vshll.u32 %v5610, 16
        %v5612 = vadd.s32 %v5611, %v5609
        %vm5613 = vcmp.lt.s32.totalorder %v5553, %v5554
        %v5614 = vsel %vm5613, %v5553, %v5554
        %v5615 = vand.u32 %v5614, 65535
        %v5616 = vshra.s32 %v5614, 16
        %v5617 = vcvt.s32.f32 %v5615
        %v5618 = vcvt.s32.f32 %v5616
        %5619 = vmin.xlane.f32.xlu0 %v5618
        %v5620 = vpop.xlane.xlu0 %5619
        %vm5621 = vcmp.eq.f32.partialorder %v5618, %v5620
        %v5622 = vsel %vm5621, %v5617, inf
        %5623 = vmin.xlane.f32.xlu0 %v5622
        %v5624 = vpop.xlane.xlu0 %5623
        %v5625 = vcvt.f32.s32 %v5624
        %v5626 = vcvt.f32.s32 %v5620
        %v5627 = vshll.u32 %v5626, 16
        %v5628 = vadd.s32 %v5627, %v5625
        %vm5629 = vcmp.lt.s32.totalorder %v5555, %v5556
        %v5630 = vsel %vm5629, %v5555, %v5556
        %v5631 = vand.u32 %v5630, 65535
        %v5632 = vshra.s32 %v5630, 16
        %v5633 = vcvt.s32.f32 %v5631
        %v5634 = vcvt.s32.f32 %v5632
        %5635 = vmin.xlane.f32.xlu0 %v5634
        %v5636 = vpop.xlane.xlu0 %5635
        %vm5637 = vcmp.eq.f32.partialorder %v5634, %v5636
        %v5638 = vsel %vm5637, %v5633, inf
        %5639 = vmin.xlane.f32.xlu0 %v5638
        %v5640 = vpop.xlane.xlu0 %5639
        %v5641 = vcvt.f32.s32 %v5640
        %v5642 = vcvt.f32.s32 %v5636
        %v5643 = vshll.u32 %v5642, 16
        %v5644 = vadd.s32 %v5643, %v5641
        %vm5645 = vcmp.lt.s32.totalorder %v5557, %v5558
        %v5646 = vsel %vm5645, %v5557, %v5558
        %v5647 = vand.u32 %v5646, 65535
        %v5648 = vshra.s32 %v5646, 16
        %v5649 = vcvt.s32.f32 %v5647
        %v5650 = vcvt.s32.f32 %v5648
        %5651 = vmin.xlane.f32.xlu0 %v5650
        %v5652 = vpop.xlane.xlu0 %5651
        %vm5653 = vcmp.eq.f32.partialorder %v5650, %v5652
        %v5654 = vsel %vm5653, %v5649, inf
        %5655 = vmin.xlane.f32.xlu0 %v5654
        %v5656 = vpop.xlane.xlu0 %5655
        %v5657 = vcvt.f32.s32 %v5656
        %v5658 = vcvt.f32.s32 %v5652
        %v5659 = vshll.u32 %v5658, 16
        %v5660 = vadd.s32 %v5659, %v5657
        %vm5661 = vcmp.lt.s32.totalorder %v5559, %v5560
        %v5662 = vsel %vm5661, %v5559, %v5560
        %v5663 = vand.u32 %v5662, 65535
        %v5664 = vshra.s32 %v5662, 16
        %v5665 = vcvt.s32.f32 %v5663
        %v5666 = vcvt.s32.f32 %v5664
        %5667 = vmin.xlane.f32.xlu0 %v5666
        %v5668 = vpop.xlane.xlu0 %5667
        %vm5669 = vcmp.eq.f32.partialorder %v5666, %v5668
        %v5670 = vsel %vm5669, %v5665, inf
        %5671 = vmin.xlane.f32.xlu0 %v5670
        %v5672 = vpop.xlane.xlu0 %5671
        %v5673 = vcvt.f32.s32 %v5672
        %v5674 = vcvt.f32.s32 %v5668
        %v5675 = vshll.u32 %v5674, 16
        %v5676 = vadd.s32 %v5675, %v5673
        %vm5677 = vcmp.lt.s32.totalorder %v5561, %v5562
        %v5678 = vsel %vm5677, %v5561, %v5562
        %v5679 = vand.u32 %v5678, 65535
        %v5680 = vshra.s32 %v5678, 16
        %v5681 = vcvt.s32.f32 %v5679
        %v5682 = vcvt.s32.f32 %v5680
        %5683 = vmin.xlane.f32.xlu0 %v5682
        %v5684 = vpop.xlane.xlu0 %5683
        %vm5685 = vcmp.eq.f32.partialorder %v5682, %v5684
        %v5686 = vsel %vm5685, %v5681, inf
        %5687 = vmin.xlane.f32.xlu0 %v5686
        %v5688 = vpop.xlane.xlu0 %5687
        %v5689 = vcvt.f32.s32 %v5688
        %v5690 = vcvt.f32.s32 %v5684
        %v5691 = vshll.u32 %v5690, 16
        %v5692 = vadd.s32 %v5691, %v5689
        %vm5693 = vcmp.lt.s32.totalorder %v5563, %v5564
        %v5694 = vsel %vm5693, %v5563, %v5564
        %v5695 = vand.u32 %v5694, 65535
        %v5696 = vshra.s32 %v5694, 16
        %v5697 = vcvt.s32.f32 %v5695
        %v5698 = vcvt.s32.f32 %v5696
        %5699 = vmin.xlane.f32.xlu0 %v5698
        %v5700 = vpop.xlane.xlu0 %5699
        %vm5701 = vcmp.eq.f32.partialorder %v5698, %v5700
        %v5702 = vsel %vm5701, %v5697, inf
        %5703 = vmin.xlane.f32.xlu0 %v5702
        %v5704 = vpop.xlane.xlu0 %5703
        %v5705 = vcvt.f32.s32 %v5704
        %v5706 = vcvt.f32.s32 %v5700
        %v5707 = vshll.u32 %v5706, 16
        %v5708 = vadd.s32 %v5707, %v5705
        %vm5709 = vcmp.lt.s32.totalorder %v5565, %v5566
        %v5710 = vsel %vm5709, %v5565, %v5566
        %v5711 = vand.u32 %v5710, 65535
        %v5712 = vshra.s32 %v5710, 16
        %v5713 = vcvt.s32.f32 %v5711
        %v5714 = vcvt.s32.f32 %v5712
        %5715 = vmin.xlane.f32.xlu0 %v5714
        %v5716 = vpop.xlane.xlu0 %5715
        %vm5717 = vcmp.eq.f32.partialorder %v5714, %v5716
        %v5718 = vsel %vm5717, %v5713, inf
        %5719 = vmin.xlane.f32.xlu0 %v5718
        %v5720 = vpop.xlane.xlu0 %5719
        %v5721 = vcvt.f32.s32 %v5720
        %v5722 = vcvt.f32.s32 %v5716
        %v5723 = vshll.u32 %v5722, 16
        %v5724 = vadd.s32 %v5723, %v5721
        %vm5725 = vcmp.lt.s32.totalorder %v5567, %v5568
        %v5726 = vsel %vm5725, %v5567, %v5568
        %v5727 = vand.u32 %v5726, 65535
        %v5728 = vshra.s32 %v5726, 16
        %v5729 = vcvt.s32.f32 %v5727
        %v5730 = vcvt.s32.f32 %v5728
        %5731 = vmin.xlane.f32.xlu0 %v5730
        %v5732 = vpop.xlane.xlu0 %5731
        %vm5733 = vcmp.eq.f32.partialorder %v5730, %v5732
        %v5734 = vsel %vm5733, %v5729, inf
        %5735 = vmin.xlane.f32.xlu0 %v5734
        %v5736 = vpop.xlane.xlu0 %5735
        %v5737 = vcvt.f32.s32 %v5736
        %v5738 = vcvt.f32.s32 %v5732
        %v5739 = vshll.u32 %v5738, 16
        %v5740 = vadd.s32 %v5739, %v5737
        %vm5741 = vcmp.lt.s32.totalorder %v5569, %v5570
        %v5742 = vsel %vm5741, %v5569, %v5570
        %v5743 = vand.u32 %v5742, 65535
        %v5744 = vshra.s32 %v5742, 16
        %v5745 = vcvt.s32.f32 %v5743
        %v5746 = vcvt.s32.f32 %v5744
        %5747 = vmin.xlane.f32.xlu0 %v5746
        %v5748 = vpop.xlane.xlu0 %5747
        %vm5749 = vcmp.eq.f32.partialorder %v5746, %v5748
        %v5750 = vsel %vm5749, %v5745, inf
        %5751 = vmin.xlane.f32.xlu0 %v5750
        %v5752 = vpop.xlane.xlu0 %5751
        %v5753 = vcvt.f32.s32 %v5752
        %v5754 = vcvt.f32.s32 %v5748
        %v5755 = vshll.u32 %v5754, 16
        %v5756 = vadd.s32 %v5755, %v5753
        %vm5757 = vcmp.lt.s32.totalorder %v5571, %v5572
        %v5758 = vsel %vm5757, %v5571, %v5572
        %v5759 = vand.u32 %v5758, 65535
        %v5760 = vshra.s32 %v5758, 16
        %v5761 = vcvt.s32.f32 %v5759
        %v5762 = vcvt.s32.f32 %v5760
        %5763 = vmin.xlane.f32.xlu0 %v5762
        %v5764 = vpop.xlane.xlu0 %5763
        %vm5765 = vcmp.eq.f32.partialorder %v5762, %v5764
        %v5766 = vsel %vm5765, %v5761, inf
        %5767 = vmin.xlane.f32.xlu0 %v5766
        %v5768 = vpop.xlane.xlu0 %5767
        %v5769 = vcvt.f32.s32 %v5768
        %v5770 = vcvt.f32.s32 %v5764
        %v5771 = vshll.u32 %v5770, 16
        %v5772 = vadd.s32 %v5771, %v5769
        %vm5773 = vcmp.lt.s32.totalorder %v5573, %v5574
        %v5774 = vsel %vm5773, %v5573, %v5574
        %v5775 = vand.u32 %v5774, 65535
        %v5776 = vshra.s32 %v5774, 16
        %v5777 = vcvt.s32.f32 %v5775
        %v5778 = vcvt.s32.f32 %v5776
        %5779 = vmin.xlane.f32.xlu0 %v5778
        %v5780 = vpop.xlane.xlu0 %5779
        %vm5781 = vcmp.eq.f32.partialorder %v5778, %v5780
        %v5782 = vsel %vm5781, %v5777, inf
        %5783 = vmin.xlane.f32.xlu0 %v5782
        %v5784 = vpop.xlane.xlu0 %5783
        %v5785 = vcvt.f32.s32 %v5784
        %v5786 = vcvt.f32.s32 %v5780
        %v5787 = vshll.u32 %v5786, 16
        %v5788 = vadd.s32 %v5787, %v5785
        %vm5789 = vcmp.lt.s32.totalorder %v5575, %v5576
        %v5790 = vsel %vm5789, %v5575, %v5576
        %v5791 = vand.u32 %v5790, 65535
        %v5792 = vshra.s32 %v5790, 16
        %v5793 = vcvt.s32.f32 %v5791
        %v5794 = vcvt.s32.f32 %v5792
        %5795 = vmin.xlane.f32.xlu0 %v5794
        %v5796 = vpop.xlane.xlu0 %5795
        %vm5797 = vcmp.eq.f32.partialorder %v5794, %v5796
        %v5798 = vsel %vm5797, %v5793, inf
        %5799 = vmin.xlane.f32.xlu0 %v5798
        %v5800 = vpop.xlane.xlu0 %5799
        %v5801 = vcvt.f32.s32 %v5800
        %v5802 = vcvt.f32.s32 %v5796
        %v5803 = vshll.u32 %v5802, 16
        %v5804 = vadd.s32 %v5803, %v5801
        %vm5805 = vcmp.lt.s32.totalorder %v5577, %v5578
        %v5806 = vsel %vm5805, %v5577, %v5578
        %v5807 = vand.u32 %v5806, 65535
        %v5808 = vshra.s32 %v5806, 16
        %v5809 = vcvt.s32.f32 %v5807
        %v5810 = vcvt.s32.f32 %v5808
        %5811 = vmin.xlane.f32.xlu0 %v5810
        %v5812 = vpop.xlane.xlu0 %5811
        %vm5813 = vcmp.eq.f32.partialorder %v5810, %v5812
        %v5814 = vsel %vm5813, %v5809, inf
        %5815 = vmin.xlane.f32.xlu0 %v5814
        %v5816 = vpop.xlane.xlu0 %5815
        %v5817 = vcvt.f32.s32 %v5816
        %v5818 = vcvt.f32.s32 %v5812
        %v5819 = vshll.u32 %v5818, 16
        %v5820 = vadd.s32 %v5819, %v5817
        %vm5821 = vcmp.lt.s32.totalorder %v5579, %v5580
        %v5822 = vsel %vm5821, %v5579, %v5580
        %v5823 = vand.u32 %v5822, 65535
        %v5824 = vshra.s32 %v5822, 16
        %v5825 = vcvt.s32.f32 %v5823
        %v5826 = vcvt.s32.f32 %v5824
        %5827 = vmin.xlane.f32.xlu0 %v5826
        %v5828 = vpop.xlane.xlu0 %5827
        %vm5829 = vcmp.eq.f32.partialorder %v5826, %v5828
        %v5830 = vsel %vm5829, %v5825, inf
        %5831 = vmin.xlane.f32.xlu0 %v5830
        %v5832 = vpop.xlane.xlu0 %5831
        %v5833 = vcvt.f32.s32 %v5832
        %v5834 = vcvt.f32.s32 %v5828
        %v5835 = vshll.u32 %v5834, 16
        %v5836 = vadd.s32 %v5835, %v5833
        %v5837 = vand.u32 %v5596, 255
        %v5838 = vand.u32 %v5612, 255
        %v5839 = vand.u32 %v5628, 255
        %v5840 = vand.u32 %v5644, 255
        %v5841 = vand.u32 %v5660, 255
        %v5842 = vand.u32 %v5676, 255
        %v5843 = vand.u32 %v5692, 255
        %v5844 = vand.u32 %v5708, 255
        %v5845 = vand.u32 %v5724, 255
        %v5846 = vand.u32 %v5740, 255
        %v5847 = vand.u32 %v5756, 255
        %v5848 = vand.u32 %v5772, 255
        %v5849 = vand.u32 %v5788, 255
        %v5850 = vand.u32 %v5804, 255
        %v5851 = vand.u32 %v5820, 255
        %v5852 = vand.u32 %v5836, 255
        %5853 = vst.msk [vmem:[%s4796] sm:$0xff] %vm2249, %v5837
        %5854 = vst.msk [vmem:[%s4796 + $0x8] sm:$0xff] %vm2249, %v5838
        %5855 = vst.msk [vmem:[%s4796 + $0x10] sm:$0xff] %vm2249, %v5839
        %5856 = vst.msk [vmem:[%s4796 + $0x18] sm:$0xff] %vm2249, %v5840
        %5857 = vst.msk [vmem:[%s4796 + $0x20] sm:$0xff] %vm2249, %v5841
        %5858 = vst.msk [vmem:[%s4796 + $0x28] sm:$0xff] %vm2249, %v5842
        %5859 = vst.msk [vmem:[%s4796 + $0x30] sm:$0xff] %vm2249, %v5843
        %5860 = vst.msk [vmem:[%s4796 + $0x38] sm:$0xff] %vm2249, %v5844
        %5861 = vst.msk [vmem:[%s4796 + $0x40] sm:$0xff] %vm2249, %v5845
        %5862 = vst.msk [vmem:[%s4796 + $0x48] sm:$0xff] %vm2249, %v5846
        %5863 = vst.msk [vmem:[%s4796 + $0x50] sm:$0xff] %vm2249, %v5847
        %5864 = vst.msk [vmem:[%s4796 + $0x58] sm:$0xff] %vm2249, %v5848
        %5865 = vst.msk [vmem:[%s4796 + $0x60] sm:$0xff] %vm2249, %v5849
        %5866 = vst.msk [vmem:[%s4796 + $0x68] sm:$0xff] %vm2249, %v5850
        %5867 = vst.msk [vmem:[%s4796 + $0x70] sm:$0xff] %vm2249, %v5851
        %5868 = vst.msk [vmem:[%s4796 + $0x78] sm:$0xff] %vm2249, %v5852
        %vm5869 = vcmp.eq.s32.totalorder %v5549, %v5596
        %vm5870 = vcmp.eq.s32.totalorder %v5550, %v5596
        %vm5871 = vcmp.eq.s32.totalorder %v5551, %v5612
        %vm5872 = vcmp.eq.s32.totalorder %v5552, %v5612
        %vm5873 = vcmp.eq.s32.totalorder %v5553, %v5628
        %vm5874 = vcmp.eq.s32.totalorder %v5554, %v5628
        %vm5875 = vcmp.eq.s32.totalorder %v5555, %v5644
        %vm5876 = vcmp.eq.s32.totalorder %v5556, %v5644
        %vm5877 = vcmp.eq.s32.totalorder %v5557, %v5660
        %vm5878 = vcmp.eq.s32.totalorder %v5558, %v5660
        %vm5879 = vcmp.eq.s32.totalorder %v5559, %v5676
        %vm5880 = vcmp.eq.s32.totalorder %v5560, %v5676
        %vm5881 = vcmp.eq.s32.totalorder %v5561, %v5692
        %vm5882 = vcmp.eq.s32.totalorder %v5562, %v5692
        %vm5883 = vcmp.eq.s32.totalorder %v5563, %v5708
        %vm5884 = vcmp.eq.s32.totalorder %v5564, %v5708
        %vm5885 = vcmp.eq.s32.totalorder %v5565, %v5724
        %vm5886 = vcmp.eq.s32.totalorder %v5566, %v5724
        %vm5887 = vcmp.eq.s32.totalorder %v5567, %v5740
        %vm5888 = vcmp.eq.s32.totalorder %v5568, %v5740
        %vm5889 = vcmp.eq.s32.totalorder %v5569, %v5756
        %vm5890 = vcmp.eq.s32.totalorder %v5570, %v5756
        %vm5891 = vcmp.eq.s32.totalorder %v5571, %v5772
        %vm5892 = vcmp.eq.s32.totalorder %v5572, %v5772
        %vm5893 = vcmp.eq.s32.totalorder %v5573, %v5788
        %vm5894 = vcmp.eq.s32.totalorder %v5574, %v5788
        %vm5895 = vcmp.eq.s32.totalorder %v5575, %v5804
        %vm5896 = vcmp.eq.s32.totalorder %v5576, %v5804
        %vm5897 = vcmp.eq.s32.totalorder %v5577, %v5820
        %vm5898 = vcmp.eq.s32.totalorder %v5578, %v5820
        %vm5899 = vcmp.eq.s32.totalorder %v5579, %v5836
        %vm5900 = vcmp.eq.s32.totalorder %v5580, %v5836
        %v5901 = vsel %vm5869, 2147483647, %v5549
        %v5902 = vsel %vm5870, 2147483647, %v5550
        %v5903 = vsel %vm5871, 2147483647, %v5551
        %v5904 = vsel %vm5872, 2147483647, %v5552
        %v5905 = vsel %vm5873, 2147483647, %v5553
        %v5906 = vsel %vm5874, 2147483647, %v5554
        %v5907 = vsel %vm5875, 2147483647, %v5555
        %v5908 = vsel %vm5876, 2147483647, %v5556
        %v5909 = vsel %vm5877, 2147483647, %v5557
        %v5910 = vsel %vm5878, 2147483647, %v5558
        %v5911 = vsel %vm5879, 2147483647, %v5559
        %v5912 = vsel %vm5880, 2147483647, %v5560
        %v5913 = vsel %vm5881, 2147483647, %v5561
        %v5914 = vsel %vm5882, 2147483647, %v5562
        %v5915 = vsel %vm5883, 2147483647, %v5563
        %v5916 = vsel %vm5884, 2147483647, %v5564
        %v5917 = vsel %vm5885, 2147483647, %v5565
        %v5918 = vsel %vm5886, 2147483647, %v5566
        %v5919 = vsel %vm5887, 2147483647, %v5567
        %v5920 = vsel %vm5888, 2147483647, %v5568
        %v5921 = vsel %vm5889, 2147483647, %v5569
        %v5922 = vsel %vm5890, 2147483647, %v5570
        %v5923 = vsel %vm5891, 2147483647, %v5571
        %v5924 = vsel %vm5892, 2147483647, %v5572
        %v5925 = vsel %vm5893, 2147483647, %v5573
        %v5926 = vsel %vm5894, 2147483647, %v5574
        %v5927 = vsel %vm5895, 2147483647, %v5575
        %v5928 = vsel %vm5896, 2147483647, %v5576
        %v5929 = vsel %vm5897, 2147483647, %v5577
        %v5930 = vsel %vm5898, 2147483647, %v5578
        %v5931 = vsel %vm5899, 2147483647, %v5579
        %v5932 = vsel %vm5900, 2147483647, %v5580
        %vm5933 = vcmp.lt.s32.totalorder %v5901, %v5902
        %v5934 = vsel %vm5933, %v5901, %v5902
        %v5935 = vand.u32 %v5934, 65535
        %v5936 = vshra.s32 %v5934, 16
        %v5937 = vcvt.s32.f32 %v5935
        %v5938 = vcvt.s32.f32 %v5936
        %5939 = vmin.xlane.f32.xlu0 %v5938
        %v5940 = vpop.xlane.xlu0 %5939
        %vm5941 = vcmp.eq.f32.partialorder %v5938, %v5940
        %v5942 = vsel %vm5941, %v5937, inf
        %5943 = vmin.xlane.f32.xlu0 %v5942
        %v5944 = vpop.xlane.xlu0 %5943
        %v5945 = vcvt.f32.s32 %v5944
        %v5946 = vcvt.f32.s32 %v5940
        %v5947 = vshll.u32 %v5946, 16
        %v5948 = vadd.s32 %v5947, %v5945
        %vm5949 = vcmp.lt.s32.totalorder %v5903, %v5904
        %v5950 = vsel %vm5949, %v5903, %v5904
        %v5951 = vand.u32 %v5950, 65535
        %v5952 = vshra.s32 %v5950, 16
        %v5953 = vcvt.s32.f32 %v5951
        %v5954 = vcvt.s32.f32 %v5952
        %5955 = vmin.xlane.f32.xlu0 %v5954
        %v5956 = vpop.xlane.xlu0 %5955
        %vm5957 = vcmp.eq.f32.partialorder %v5954, %v5956
        %v5958 = vsel %vm5957, %v5953, inf
        %5959 = vmin.xlane.f32.xlu0 %v5958
        %v5960 = vpop.xlane.xlu0 %5959
        %v5961 = vcvt.f32.s32 %v5960
        %v5962 = vcvt.f32.s32 %v5956
        %v5963 = vshll.u32 %v5962, 16
        %v5964 = vadd.s32 %v5963, %v5961
        %vm5965 = vcmp.lt.s32.totalorder %v5905, %v5906
        %v5966 = vsel %vm5965, %v5905, %v5906
        %v5967 = vand.u32 %v5966, 65535
        %v5968 = vshra.s32 %v5966, 16
        %v5969 = vcvt.s32.f32 %v5967
        %v5970 = vcvt.s32.f32 %v5968
        %5971 = vmin.xlane.f32.xlu0 %v5970
        %v5972 = vpop.xlane.xlu0 %5971
        %vm5973 = vcmp.eq.f32.partialorder %v5970, %v5972
        %v5974 = vsel %vm5973, %v5969, inf
        %5975 = vmin.xlane.f32.xlu0 %v5974
        %v5976 = vpop.xlane.xlu0 %5975
        %v5977 = vcvt.f32.s32 %v5976
        %v5978 = vcvt.f32.s32 %v5972
        %v5979 = vshll.u32 %v5978, 16
        %v5980 = vadd.s32 %v5979, %v5977
        %vm5981 = vcmp.lt.s32.totalorder %v5907, %v5908
        %v5982 = vsel %vm5981, %v5907, %v5908
        %v5983 = vand.u32 %v5982, 65535
        %v5984 = vshra.s32 %v5982, 16
        %v5985 = vcvt.s32.f32 %v5983
        %v5986 = vcvt.s32.f32 %v5984
        %5987 = vmin.xlane.f32.xlu0 %v5986
        %v5988 = vpop.xlane.xlu0 %5987
        %vm5989 = vcmp.eq.f32.partialorder %v5986, %v5988
        %v5990 = vsel %vm5989, %v5985, inf
        %5991 = vmin.xlane.f32.xlu0 %v5990
        %v5992 = vpop.xlane.xlu0 %5991
        %v5993 = vcvt.f32.s32 %v5992
        %v5994 = vcvt.f32.s32 %v5988
        %v5995 = vshll.u32 %v5994, 16
        %v5996 = vadd.s32 %v5995, %v5993
        %vm5997 = vcmp.lt.s32.totalorder %v5909, %v5910
        %v5998 = vsel %vm5997, %v5909, %v5910
        %v5999 = vand.u32 %v5998, 65535
        %v6000 = vshra.s32 %v5998, 16
        %v6001 = vcvt.s32.f32 %v5999
        %v6002 = vcvt.s32.f32 %v6000
        %6003 = vmin.xlane.f32.xlu0 %v6002
        %v6004 = vpop.xlane.xlu0 %6003
        %vm6005 = vcmp.eq.f32.partialorder %v6002, %v6004
        %v6006 = vsel %vm6005, %v6001, inf
        %6007 = vmin.xlane.f32.xlu0 %v6006
        %v6008 = vpop.xlane.xlu0 %6007
        %v6009 = vcvt.f32.s32 %v6008
        %v6010 = vcvt.f32.s32 %v6004
        %v6011 = vshll.u32 %v6010, 16
        %v6012 = vadd.s32 %v6011, %v6009
        %vm6013 = vcmp.lt.s32.totalorder %v5911, %v5912
        %v6014 = vsel %vm6013, %v5911, %v5912
        %v6015 = vand.u32 %v6014, 65535
        %v6016 = vshra.s32 %v6014, 16
        %v6017 = vcvt.s32.f32 %v6015
        %v6018 = vcvt.s32.f32 %v6016
        %6019 = vmin.xlane.f32.xlu0 %v6018
        %v6020 = vpop.xlane.xlu0 %6019
        %vm6021 = vcmp.eq.f32.partialorder %v6018, %v6020
        %v6022 = vsel %vm6021, %v6017, inf
        %6023 = vmin.xlane.f32.xlu0 %v6022
        %v6024 = vpop.xlane.xlu0 %6023
        %v6025 = vcvt.f32.s32 %v6024
        %v6026 = vcvt.f32.s32 %v6020
        %v6027 = vshll.u32 %v6026, 16
        %v6028 = vadd.s32 %v6027, %v6025
        %vm6029 = vcmp.lt.s32.totalorder %v5913, %v5914
        %v6030 = vsel %vm6029, %v5913, %v5914
        %v6031 = vand.u32 %v6030, 65535
        %v6032 = vshra.s32 %v6030, 16
        %v6033 = vcvt.s32.f32 %v6031
        %v6034 = vcvt.s32.f32 %v6032
        %6035 = vmin.xlane.f32.xlu0 %v6034
        %v6036 = vpop.xlane.xlu0 %6035
        %vm6037 = vcmp.eq.f32.partialorder %v6034, %v6036
        %v6038 = vsel %vm6037, %v6033, inf
        %6039 = vmin.xlane.f32.xlu0 %v6038
        %v6040 = vpop.xlane.xlu0 %6039
        %v6041 = vcvt.f32.s32 %v6040
        %v6042 = vcvt.f32.s32 %v6036
        %v6043 = vshll.u32 %v6042, 16
        %v6044 = vadd.s32 %v6043, %v6041
        %vm6045 = vcmp.lt.s32.totalorder %v5915, %v5916
        %v6046 = vsel %vm6045, %v5915, %v5916
        %v6047 = vand.u32 %v6046, 65535
        %v6048 = vshra.s32 %v6046, 16
        %v6049 = vcvt.s32.f32 %v6047
        %v6050 = vcvt.s32.f32 %v6048
        %6051 = vmin.xlane.f32.xlu0 %v6050
        %v6052 = vpop.xlane.xlu0 %6051
        %vm6053 = vcmp.eq.f32.partialorder %v6050, %v6052
        %v6054 = vsel %vm6053, %v6049, inf
        %6055 = vmin.xlane.f32.xlu0 %v6054
        %v6056 = vpop.xlane.xlu0 %6055
        %v6057 = vcvt.f32.s32 %v6056
        %v6058 = vcvt.f32.s32 %v6052
        %v6059 = vshll.u32 %v6058, 16
        %v6060 = vadd.s32 %v6059, %v6057
        %vm6061 = vcmp.lt.s32.totalorder %v5917, %v5918
        %v6062 = vsel %vm6061, %v5917, %v5918
        %v6063 = vand.u32 %v6062, 65535
        %v6064 = vshra.s32 %v6062, 16
        %v6065 = vcvt.s32.f32 %v6063
        %v6066 = vcvt.s32.f32 %v6064
        %6067 = vmin.xlane.f32.xlu0 %v6066
        %v6068 = vpop.xlane.xlu0 %6067
        %vm6069 = vcmp.eq.f32.partialorder %v6066, %v6068
        %v6070 = vsel %vm6069, %v6065, inf
        %6071 = vmin.xlane.f32.xlu0 %v6070
        %v6072 = vpop.xlane.xlu0 %6071
        %v6073 = vcvt.f32.s32 %v6072
        %v6074 = vcvt.f32.s32 %v6068
        %v6075 = vshll.u32 %v6074, 16
        %v6076 = vadd.s32 %v6075, %v6073
        %vm6077 = vcmp.lt.s32.totalorder %v5919, %v5920
        %v6078 = vsel %vm6077, %v5919, %v5920
        %v6079 = vand.u32 %v6078, 65535
        %v6080 = vshra.s32 %v6078, 16
        %v6081 = vcvt.s32.f32 %v6079
        %v6082 = vcvt.s32.f32 %v6080
        %6083 = vmin.xlane.f32.xlu0 %v6082
        %v6084 = vpop.xlane.xlu0 %6083
        %vm6085 = vcmp.eq.f32.partialorder %v6082, %v6084
        %v6086 = vsel %vm6085, %v6081, inf
        %6087 = vmin.xlane.f32.xlu0 %v6086
        %v6088 = vpop.xlane.xlu0 %6087
        %v6089 = vcvt.f32.s32 %v6088
        %v6090 = vcvt.f32.s32 %v6084
        %v6091 = vshll.u32 %v6090, 16
        %v6092 = vadd.s32 %v6091, %v6089
        %vm6093 = vcmp.lt.s32.totalorder %v5921, %v5922
        %v6094 = vsel %vm6093, %v5921, %v5922
        %v6095 = vand.u32 %v6094, 65535
        %v6096 = vshra.s32 %v6094, 16
        %v6097 = vcvt.s32.f32 %v6095
        %v6098 = vcvt.s32.f32 %v6096
        %6099 = vmin.xlane.f32.xlu0 %v6098
        %v6100 = vpop.xlane.xlu0 %6099
        %vm6101 = vcmp.eq.f32.partialorder %v6098, %v6100
        %v6102 = vsel %vm6101, %v6097, inf
        %6103 = vmin.xlane.f32.xlu0 %v6102
        %v6104 = vpop.xlane.xlu0 %6103
        %v6105 = vcvt.f32.s32 %v6104
        %v6106 = vcvt.f32.s32 %v6100
        %v6107 = vshll.u32 %v6106, 16
        %v6108 = vadd.s32 %v6107, %v6105
        %vm6109 = vcmp.lt.s32.totalorder %v5923, %v5924
        %v6110 = vsel %vm6109, %v5923, %v5924
        %v6111 = vand.u32 %v6110, 65535
        %v6112 = vshra.s32 %v6110, 16
        %v6113 = vcvt.s32.f32 %v6111
        %v6114 = vcvt.s32.f32 %v6112
        %6115 = vmin.xlane.f32.xlu0 %v6114
        %v6116 = vpop.xlane.xlu0 %6115
        %vm6117 = vcmp.eq.f32.partialorder %v6114, %v6116
        %v6118 = vsel %vm6117, %v6113, inf
        %6119 = vmin.xlane.f32.xlu0 %v6118
        %v6120 = vpop.xlane.xlu0 %6119
        %v6121 = vcvt.f32.s32 %v6120
        %v6122 = vcvt.f32.s32 %v6116
        %v6123 = vshll.u32 %v6122, 16
        %v6124 = vadd.s32 %v6123, %v6121
        %vm6125 = vcmp.lt.s32.totalorder %v5925, %v5926
        %v6126 = vsel %vm6125, %v5925, %v5926
        %v6127 = vand.u32 %v6126, 65535
        %v6128 = vshra.s32 %v6126, 16
        %v6129 = vcvt.s32.f32 %v6127
        %v6130 = vcvt.s32.f32 %v6128
        %6131 = vmin.xlane.f32.xlu0 %v6130
        %v6132 = vpop.xlane.xlu0 %6131
        %vm6133 = vcmp.eq.f32.partialorder %v6130, %v6132
        %v6134 = vsel %vm6133, %v6129, inf
        %6135 = vmin.xlane.f32.xlu0 %v6134
        %v6136 = vpop.xlane.xlu0 %6135
        %v6137 = vcvt.f32.s32 %v6136
        %v6138 = vcvt.f32.s32 %v6132
        %v6139 = vshll.u32 %v6138, 16
        %v6140 = vadd.s32 %v6139, %v6137
        %vm6141 = vcmp.lt.s32.totalorder %v5927, %v5928
        %v6142 = vsel %vm6141, %v5927, %v5928
        %v6143 = vand.u32 %v6142, 65535
        %v6144 = vshra.s32 %v6142, 16
        %v6145 = vcvt.s32.f32 %v6143
        %v6146 = vcvt.s32.f32 %v6144
        %6147 = vmin.xlane.f32.xlu0 %v6146
        %v6148 = vpop.xlane.xlu0 %6147
        %vm6149 = vcmp.eq.f32.partialorder %v6146, %v6148
        %v6150 = vsel %vm6149, %v6145, inf
        %6151 = vmin.xlane.f32.xlu0 %v6150
        %v6152 = vpop.xlane.xlu0 %6151
        %v6153 = vcvt.f32.s32 %v6152
        %v6154 = vcvt.f32.s32 %v6148
        %v6155 = vshll.u32 %v6154, 16
        %v6156 = vadd.s32 %v6155, %v6153
        %vm6157 = vcmp.lt.s32.totalorder %v5929, %v5930
        %v6158 = vsel %vm6157, %v5929, %v5930
        %v6159 = vand.u32 %v6158, 65535
        %v6160 = vshra.s32 %v6158, 16
        %v6161 = vcvt.s32.f32 %v6159
        %v6162 = vcvt.s32.f32 %v6160
        %6163 = vmin.xlane.f32.xlu0 %v6162
        %v6164 = vpop.xlane.xlu0 %6163
        %vm6165 = vcmp.eq.f32.partialorder %v6162, %v6164
        %v6166 = vsel %vm6165, %v6161, inf
        %6167 = vmin.xlane.f32.xlu0 %v6166
        %v6168 = vpop.xlane.xlu0 %6167
        %v6169 = vcvt.f32.s32 %v6168
        %v6170 = vcvt.f32.s32 %v6164
        %v6171 = vshll.u32 %v6170, 16
        %v6172 = vadd.s32 %v6171, %v6169
        %vm6173 = vcmp.lt.s32.totalorder %v5931, %v5932
        %v6174 = vsel %vm6173, %v5931, %v5932
        %v6175 = vand.u32 %v6174, 65535
        %v6176 = vshra.s32 %v6174, 16
        %v6177 = vcvt.s32.f32 %v6175
        %v6178 = vcvt.s32.f32 %v6176
        %6179 = vmin.xlane.f32.xlu0 %v6178
        %v6180 = vpop.xlane.xlu0 %6179
        %vm6181 = vcmp.eq.f32.partialorder %v6178, %v6180
        %v6182 = vsel %vm6181, %v6177, inf
        %6183 = vmin.xlane.f32.xlu0 %v6182
        %v6184 = vpop.xlane.xlu0 %6183
        %v6185 = vcvt.f32.s32 %v6184
        %v6186 = vcvt.f32.s32 %v6180
        %v6187 = vshll.u32 %v6186, 16
        %v6188 = vadd.s32 %v6187, %v6185
        %v6189 = vand.u32 %v5948, 255
        %v6190 = vand.u32 %v5964, 255
        %v6191 = vand.u32 %v5980, 255
        %v6192 = vand.u32 %v5996, 255
        %v6193 = vand.u32 %v6012, 255
        %v6194 = vand.u32 %v6028, 255
        %v6195 = vand.u32 %v6044, 255
        %v6196 = vand.u32 %v6060, 255
        %v6197 = vand.u32 %v6076, 255
        %v6198 = vand.u32 %v6092, 255
        %v6199 = vand.u32 %v6108, 255
        %v6200 = vand.u32 %v6124, 255
        %v6201 = vand.u32 %v6140, 255
        %v6202 = vand.u32 %v6156, 255
        %v6203 = vand.u32 %v6172, 255
        %v6204 = vand.u32 %v6188, 255
        %6205 = vst.msk [vmem:[%s4796] sm:$0xff] %vm2602, %v6189
        %6206 = vst.msk [vmem:[%s4796 + $0x8] sm:$0xff] %vm2602, %v6190
        %6207 = vst.msk [vmem:[%s4796 + $0x10] sm:$0xff] %vm2602, %v6191
        %6208 = vst.msk [vmem:[%s4796 + $0x18] sm:$0xff] %vm2602, %v6192
        %6209 = vst.msk [vmem:[%s4796 + $0x20] sm:$0xff] %vm2602, %v6193
        %6210 = vst.msk [vmem:[%s4796 + $0x28] sm:$0xff] %vm2602, %v6194
        %6211 = vst.msk [vmem:[%s4796 + $0x30] sm:$0xff] %vm2602, %v6195
        %6212 = vst.msk [vmem:[%s4796 + $0x38] sm:$0xff] %vm2602, %v6196
        %6213 = vst.msk [vmem:[%s4796 + $0x40] sm:$0xff] %vm2602, %v6197
        %6214 = vst.msk [vmem:[%s4796 + $0x48] sm:$0xff] %vm2602, %v6198
        %6215 = vst.msk [vmem:[%s4796 + $0x50] sm:$0xff] %vm2602, %v6199
        %6216 = vst.msk [vmem:[%s4796 + $0x58] sm:$0xff] %vm2602, %v6200
        %6217 = vst.msk [vmem:[%s4796 + $0x60] sm:$0xff] %vm2602, %v6201
        %6218 = vst.msk [vmem:[%s4796 + $0x68] sm:$0xff] %vm2602, %v6202
        %6219 = vst.msk [vmem:[%s4796 + $0x70] sm:$0xff] %vm2602, %v6203
        %6220 = vst.msk [vmem:[%s4796 + $0x78] sm:$0xff] %vm2602, %v6204
        %vm6221 = vcmp.eq.s32.totalorder %v5901, %v5948
        %vm6222 = vcmp.eq.s32.totalorder %v5902, %v5948
        %vm6223 = vcmp.eq.s32.totalorder %v5903, %v5964
        %vm6224 = vcmp.eq.s32.totalorder %v5904, %v5964
        %vm6225 = vcmp.eq.s32.totalorder %v5905, %v5980
        %vm6226 = vcmp.eq.s32.totalorder %v5906, %v5980
        %vm6227 = vcmp.eq.s32.totalorder %v5907, %v5996
        %vm6228 = vcmp.eq.s32.totalorder %v5908, %v5996
        %vm6229 = vcmp.eq.s32.totalorder %v5909, %v6012
        %vm6230 = vcmp.eq.s32.totalorder %v5910, %v6012
        %vm6231 = vcmp.eq.s32.totalorder %v5911, %v6028
        %vm6232 = vcmp.eq.s32.totalorder %v5912, %v6028
        %vm6233 = vcmp.eq.s32.totalorder %v5913, %v6044
        %vm6234 = vcmp.eq.s32.totalorder %v5914, %v6044
        %vm6235 = vcmp.eq.s32.totalorder %v5915, %v6060
        %vm6236 = vcmp.eq.s32.totalorder %v5916, %v6060
        %vm6237 = vcmp.eq.s32.totalorder %v5917, %v6076
        %vm6238 = vcmp.eq.s32.totalorder %v5918, %v6076
        %vm6239 = vcmp.eq.s32.totalorder %v5919, %v6092
        %vm6240 = vcmp.eq.s32.totalorder %v5920, %v6092
        %vm6241 = vcmp.eq.s32.totalorder %v5921, %v6108
        %vm6242 = vcmp.eq.s32.totalorder %v5922, %v6108
        %vm6243 = vcmp.eq.s32.totalorder %v5923, %v6124
        %vm6244 = vcmp.eq.s32.totalorder %v5924, %v6124
        %vm6245 = vcmp.eq.s32.totalorder %v5925, %v6140
        %vm6246 = vcmp.eq.s32.totalorder %v5926, %v6140
        %vm6247 = vcmp.eq.s32.totalorder %v5927, %v6156
        %vm6248 = vcmp.eq.s32.totalorder %v5928, %v6156
        %vm6249 = vcmp.eq.s32.totalorder %v5929, %v6172
        %vm6250 = vcmp.eq.s32.totalorder %v5930, %v6172
        %vm6251 = vcmp.eq.s32.totalorder %v5931, %v6188
        %vm6252 = vcmp.eq.s32.totalorder %v5932, %v6188
        %v6253 = vsel %vm6221, 2147483647, %v5901
        %v6254 = vsel %vm6222, 2147483647, %v5902
        %v6255 = vsel %vm6223, 2147483647, %v5903
        %v6256 = vsel %vm6224, 2147483647, %v5904
        %v6257 = vsel %vm6225, 2147483647, %v5905
        %v6258 = vsel %vm6226, 2147483647, %v5906
        %v6259 = vsel %vm6227, 2147483647, %v5907
        %v6260 = vsel %vm6228, 2147483647, %v5908
        %v6261 = vsel %vm6229, 2147483647, %v5909
        %v6262 = vsel %vm6230, 2147483647, %v5910
        %v6263 = vsel %vm6231, 2147483647, %v5911
        %v6264 = vsel %vm6232, 2147483647, %v5912
        %v6265 = vsel %vm6233, 2147483647, %v5913
        %v6266 = vsel %vm6234, 2147483647, %v5914
        %v6267 = vsel %vm6235, 2147483647, %v5915
        %v6268 = vsel %vm6236, 2147483647, %v5916
        %v6269 = vsel %vm6237, 2147483647, %v5917
        %v6270 = vsel %vm6238, 2147483647, %v5918
        %v6271 = vsel %vm6239, 2147483647, %v5919
        %v6272 = vsel %vm6240, 2147483647, %v5920
        %v6273 = vsel %vm6241, 2147483647, %v5921
        %v6274 = vsel %vm6242, 2147483647, %v5922
        %v6275 = vsel %vm6243, 2147483647, %v5923
        %v6276 = vsel %vm6244, 2147483647, %v5924
        %v6277 = vsel %vm6245, 2147483647, %v5925
        %v6278 = vsel %vm6246, 2147483647, %v5926
        %v6279 = vsel %vm6247, 2147483647, %v5927
        %v6280 = vsel %vm6248, 2147483647, %v5928
        %v6281 = vsel %vm6249, 2147483647, %v5929
        %v6282 = vsel %vm6250, 2147483647, %v5930
        %v6283 = vsel %vm6251, 2147483647, %v5931
        %v6284 = vsel %vm6252, 2147483647, %v5932
        %vm6285 = vcmp.lt.s32.totalorder %v6253, %v6254
        %v6286 = vsel %vm6285, %v6253, %v6254
        %v6287 = vand.u32 %v6286, 65535
        %v6288 = vshra.s32 %v6286, 16
        %v6289 = vcvt.s32.f32 %v6287
        %v6290 = vcvt.s32.f32 %v6288
        %6291 = vmin.xlane.f32.xlu0 %v6290
        %v6292 = vpop.xlane.xlu0 %6291
        %vm6293 = vcmp.eq.f32.partialorder %v6290, %v6292
        %v6294 = vsel %vm6293, %v6289, inf
        %6295 = vmin.xlane.f32.xlu0 %v6294
        %v6296 = vpop.xlane.xlu0 %6295
        %v6297 = vcvt.f32.s32 %v6296
        %v6298 = vcvt.f32.s32 %v6292
        %v6299 = vshll.u32 %v6298, 16
        %v6300 = vadd.s32 %v6299, %v6297
        %vm6301 = vcmp.lt.s32.totalorder %v6255, %v6256
        %v6302 = vsel %vm6301, %v6255, %v6256
        %v6303 = vand.u32 %v6302, 65535
        %v6304 = vshra.s32 %v6302, 16
        %v6305 = vcvt.s32.f32 %v6303
        %v6306 = vcvt.s32.f32 %v6304
        %6307 = vmin.xlane.f32.xlu0 %v6306
        %v6308 = vpop.xlane.xlu0 %6307
        %vm6309 = vcmp.eq.f32.partialorder %v6306, %v6308
        %v6310 = vsel %vm6309, %v6305, inf
        %6311 = vmin.xlane.f32.xlu0 %v6310
        %v6312 = vpop.xlane.xlu0 %6311
        %v6313 = vcvt.f32.s32 %v6312
        %v6314 = vcvt.f32.s32 %v6308
        %v6315 = vshll.u32 %v6314, 16
        %v6316 = vadd.s32 %v6315, %v6313
        %vm6317 = vcmp.lt.s32.totalorder %v6257, %v6258
        %v6318 = vsel %vm6317, %v6257, %v6258
        %v6319 = vand.u32 %v6318, 65535
        %v6320 = vshra.s32 %v6318, 16
        %v6321 = vcvt.s32.f32 %v6319
        %v6322 = vcvt.s32.f32 %v6320
        %6323 = vmin.xlane.f32.xlu0 %v6322
        %v6324 = vpop.xlane.xlu0 %6323
        %vm6325 = vcmp.eq.f32.partialorder %v6322, %v6324
        %v6326 = vsel %vm6325, %v6321, inf
        %6327 = vmin.xlane.f32.xlu0 %v6326
        %v6328 = vpop.xlane.xlu0 %6327
        %v6329 = vcvt.f32.s32 %v6328
        %v6330 = vcvt.f32.s32 %v6324
        %v6331 = vshll.u32 %v6330, 16
        %v6332 = vadd.s32 %v6331, %v6329
        %vm6333 = vcmp.lt.s32.totalorder %v6259, %v6260
        %v6334 = vsel %vm6333, %v6259, %v6260
        %v6335 = vand.u32 %v6334, 65535
        %v6336 = vshra.s32 %v6334, 16
        %v6337 = vcvt.s32.f32 %v6335
        %v6338 = vcvt.s32.f32 %v6336
        %6339 = vmin.xlane.f32.xlu0 %v6338
        %v6340 = vpop.xlane.xlu0 %6339
        %vm6341 = vcmp.eq.f32.partialorder %v6338, %v6340
        %v6342 = vsel %vm6341, %v6337, inf
        %6343 = vmin.xlane.f32.xlu0 %v6342
        %v6344 = vpop.xlane.xlu0 %6343
        %v6345 = vcvt.f32.s32 %v6344
        %v6346 = vcvt.f32.s32 %v6340
        %v6347 = vshll.u32 %v6346, 16
        %v6348 = vadd.s32 %v6347, %v6345
        %vm6349 = vcmp.lt.s32.totalorder %v6261, %v6262
        %v6350 = vsel %vm6349, %v6261, %v6262
        %v6351 = vand.u32 %v6350, 65535
        %v6352 = vshra.s32 %v6350, 16
        %v6353 = vcvt.s32.f32 %v6351
        %v6354 = vcvt.s32.f32 %v6352
        %6355 = vmin.xlane.f32.xlu0 %v6354
        %v6356 = vpop.xlane.xlu0 %6355
        %vm6357 = vcmp.eq.f32.partialorder %v6354, %v6356
        %v6358 = vsel %vm6357, %v6353, inf
        %6359 = vmin.xlane.f32.xlu0 %v6358
        %v6360 = vpop.xlane.xlu0 %6359
        %v6361 = vcvt.f32.s32 %v6360
        %v6362 = vcvt.f32.s32 %v6356
        %v6363 = vshll.u32 %v6362, 16
        %v6364 = vadd.s32 %v6363, %v6361
        %vm6365 = vcmp.lt.s32.totalorder %v6263, %v6264
        %v6366 = vsel %vm6365, %v6263, %v6264
        %v6367 = vand.u32 %v6366, 65535
        %v6368 = vshra.s32 %v6366, 16
        %v6369 = vcvt.s32.f32 %v6367
        %v6370 = vcvt.s32.f32 %v6368
        %6371 = vmin.xlane.f32.xlu0 %v6370
        %v6372 = vpop.xlane.xlu0 %6371
        %vm6373 = vcmp.eq.f32.partialorder %v6370, %v6372
        %v6374 = vsel %vm6373, %v6369, inf
        %6375 = vmin.xlane.f32.xlu0 %v6374
        %v6376 = vpop.xlane.xlu0 %6375
        %v6377 = vcvt.f32.s32 %v6376
        %v6378 = vcvt.f32.s32 %v6372
        %v6379 = vshll.u32 %v6378, 16
        %v6380 = vadd.s32 %v6379, %v6377
        %vm6381 = vcmp.lt.s32.totalorder %v6265, %v6266
        %v6382 = vsel %vm6381, %v6265, %v6266
        %v6383 = vand.u32 %v6382, 65535
        %v6384 = vshra.s32 %v6382, 16
        %v6385 = vcvt.s32.f32 %v6383
        %v6386 = vcvt.s32.f32 %v6384
        %6387 = vmin.xlane.f32.xlu0 %v6386
        %v6388 = vpop.xlane.xlu0 %6387
        %vm6389 = vcmp.eq.f32.partialorder %v6386, %v6388
        %v6390 = vsel %vm6389, %v6385, inf
        %6391 = vmin.xlane.f32.xlu0 %v6390
        %v6392 = vpop.xlane.xlu0 %6391
        %v6393 = vcvt.f32.s32 %v6392
        %v6394 = vcvt.f32.s32 %v6388
        %v6395 = vshll.u32 %v6394, 16
        %v6396 = vadd.s32 %v6395, %v6393
        %vm6397 = vcmp.lt.s32.totalorder %v6267, %v6268
        %v6398 = vsel %vm6397, %v6267, %v6268
        %v6399 = vand.u32 %v6398, 65535
        %v6400 = vshra.s32 %v6398, 16
        %v6401 = vcvt.s32.f32 %v6399
        %v6402 = vcvt.s32.f32 %v6400
        %6403 = vmin.xlane.f32.xlu0 %v6402
        %v6404 = vpop.xlane.xlu0 %6403
        %vm6405 = vcmp.eq.f32.partialorder %v6402, %v6404
        %v6406 = vsel %vm6405, %v6401, inf
        %6407 = vmin.xlane.f32.xlu0 %v6406
        %v6408 = vpop.xlane.xlu0 %6407
        %v6409 = vcvt.f32.s32 %v6408
        %v6410 = vcvt.f32.s32 %v6404
        %v6411 = vshll.u32 %v6410, 16
        %v6412 = vadd.s32 %v6411, %v6409
        %vm6413 = vcmp.lt.s32.totalorder %v6269, %v6270
        %v6414 = vsel %vm6413, %v6269, %v6270
        %v6415 = vand.u32 %v6414, 65535
        %v6416 = vshra.s32 %v6414, 16
        %v6417 = vcvt.s32.f32 %v6415
        %v6418 = vcvt.s32.f32 %v6416
        %6419 = vmin.xlane.f32.xlu0 %v6418
        %v6420 = vpop.xlane.xlu0 %6419
        %vm6421 = vcmp.eq.f32.partialorder %v6418, %v6420
        %v6422 = vsel %vm6421, %v6417, inf
        %6423 = vmin.xlane.f32.xlu0 %v6422
        %v6424 = vpop.xlane.xlu0 %6423
        %v6425 = vcvt.f32.s32 %v6424
        %v6426 = vcvt.f32.s32 %v6420
        %v6427 = vshll.u32 %v6426, 16
        %v6428 = vadd.s32 %v6427, %v6425
        %vm6429 = vcmp.lt.s32.totalorder %v6271, %v6272
        %v6430 = vsel %vm6429, %v6271, %v6272
        %v6431 = vand.u32 %v6430, 65535
        %v6432 = vshra.s32 %v6430, 16
        %v6433 = vcvt.s32.f32 %v6431
        %v6434 = vcvt.s32.f32 %v6432
        %6435 = vmin.xlane.f32.xlu0 %v6434
        %v6436 = vpop.xlane.xlu0 %6435
        %vm6437 = vcmp.eq.f32.partialorder %v6434, %v6436
        %v6438 = vsel %vm6437, %v6433, inf
        %6439 = vmin.xlane.f32.xlu0 %v6438
        %v6440 = vpop.xlane.xlu0 %6439
        %v6441 = vcvt.f32.s32 %v6440
        %v6442 = vcvt.f32.s32 %v6436
        %v6443 = vshll.u32 %v6442, 16
        %v6444 = vadd.s32 %v6443, %v6441
        %vm6445 = vcmp.lt.s32.totalorder %v6273, %v6274
        %v6446 = vsel %vm6445, %v6273, %v6274
        %v6447 = vand.u32 %v6446, 65535
        %v6448 = vshra.s32 %v6446, 16
        %v6449 = vcvt.s32.f32 %v6447
        %v6450 = vcvt.s32.f32 %v6448
        %6451 = vmin.xlane.f32.xlu0 %v6450
        %v6452 = vpop.xlane.xlu0 %6451
        %vm6453 = vcmp.eq.f32.partialorder %v6450, %v6452
        %v6454 = vsel %vm6453, %v6449, inf
        %6455 = vmin.xlane.f32.xlu0 %v6454
        %v6456 = vpop.xlane.xlu0 %6455
        %v6457 = vcvt.f32.s32 %v6456
        %v6458 = vcvt.f32.s32 %v6452
        %v6459 = vshll.u32 %v6458, 16
        %v6460 = vadd.s32 %v6459, %v6457
        %vm6461 = vcmp.lt.s32.totalorder %v6275, %v6276
        %v6462 = vsel %vm6461, %v6275, %v6276
        %v6463 = vand.u32 %v6462, 65535
        %v6464 = vshra.s32 %v6462, 16
        %v6465 = vcvt.s32.f32 %v6463
        %v6466 = vcvt.s32.f32 %v6464
        %6467 = vmin.xlane.f32.xlu0 %v6466
        %v6468 = vpop.xlane.xlu0 %6467
        %vm6469 = vcmp.eq.f32.partialorder %v6466, %v6468
        %v6470 = vsel %vm6469, %v6465, inf
        %6471 = vmin.xlane.f32.xlu0 %v6470
        %v6472 = vpop.xlane.xlu0 %6471
        %v6473 = vcvt.f32.s32 %v6472
        %v6474 = vcvt.f32.s32 %v6468
        %v6475 = vshll.u32 %v6474, 16
        %v6476 = vadd.s32 %v6475, %v6473
        %vm6477 = vcmp.lt.s32.totalorder %v6277, %v6278
        %v6478 = vsel %vm6477, %v6277, %v6278
        %v6479 = vand.u32 %v6478, 65535
        %v6480 = vshra.s32 %v6478, 16
        %v6481 = vcvt.s32.f32 %v6479
        %v6482 = vcvt.s32.f32 %v6480
        %6483 = vmin.xlane.f32.xlu0 %v6482
        %v6484 = vpop.xlane.xlu0 %6483
        %vm6485 = vcmp.eq.f32.partialorder %v6482, %v6484
        %v6486 = vsel %vm6485, %v6481, inf
        %6487 = vmin.xlane.f32.xlu0 %v6486
        %v6488 = vpop.xlane.xlu0 %6487
        %v6489 = vcvt.f32.s32 %v6488
        %v6490 = vcvt.f32.s32 %v6484
        %v6491 = vshll.u32 %v6490, 16
        %v6492 = vadd.s32 %v6491, %v6489
        %vm6493 = vcmp.lt.s32.totalorder %v6279, %v6280
        %v6494 = vsel %vm6493, %v6279, %v6280
        %v6495 = vand.u32 %v6494, 65535
        %v6496 = vshra.s32 %v6494, 16
        %v6497 = vcvt.s32.f32 %v6495
        %v6498 = vcvt.s32.f32 %v6496
        %6499 = vmin.xlane.f32.xlu0 %v6498
        %v6500 = vpop.xlane.xlu0 %6499
        %vm6501 = vcmp.eq.f32.partialorder %v6498, %v6500
        %v6502 = vsel %vm6501, %v6497, inf
        %6503 = vmin.xlane.f32.xlu0 %v6502
        %v6504 = vpop.xlane.xlu0 %6503
        %v6505 = vcvt.f32.s32 %v6504
        %v6506 = vcvt.f32.s32 %v6500
        %v6507 = vshll.u32 %v6506, 16
        %v6508 = vadd.s32 %v6507, %v6505
        %vm6509 = vcmp.lt.s32.totalorder %v6281, %v6282
        %v6510 = vsel %vm6509, %v6281, %v6282
        %v6511 = vand.u32 %v6510, 65535
        %v6512 = vshra.s32 %v6510, 16
        %v6513 = vcvt.s32.f32 %v6511
        %v6514 = vcvt.s32.f32 %v6512
        %6515 = vmin.xlane.f32.xlu0 %v6514
        %v6516 = vpop.xlane.xlu0 %6515
        %vm6517 = vcmp.eq.f32.partialorder %v6514, %v6516
        %v6518 = vsel %vm6517, %v6513, inf
        %6519 = vmin.xlane.f32.xlu0 %v6518
        %v6520 = vpop.xlane.xlu0 %6519
        %v6521 = vcvt.f32.s32 %v6520
        %v6522 = vcvt.f32.s32 %v6516
        %v6523 = vshll.u32 %v6522, 16
        %v6524 = vadd.s32 %v6523, %v6521
        %vm6525 = vcmp.lt.s32.totalorder %v6283, %v6284
        %v6526 = vsel %vm6525, %v6283, %v6284
        %v6527 = vand.u32 %v6526, 65535
        %v6528 = vshra.s32 %v6526, 16
        %v6529 = vcvt.s32.f32 %v6527
        %v6530 = vcvt.s32.f32 %v6528
        %6531 = vmin.xlane.f32.xlu0 %v6530
        %v6532 = vpop.xlane.xlu0 %6531
        %vm6533 = vcmp.eq.f32.partialorder %v6530, %v6532
        %v6534 = vsel %vm6533, %v6529, inf
        %6535 = vmin.xlane.f32.xlu0 %v6534
        %v6536 = vpop.xlane.xlu0 %6535
        %v6537 = vcvt.f32.s32 %v6536
        %v6538 = vcvt.f32.s32 %v6532
        %v6539 = vshll.u32 %v6538, 16
        %v6540 = vadd.s32 %v6539, %v6537
        %v6541 = vand.u32 %v6300, 255
        %v6542 = vand.u32 %v6316, 255
        %v6543 = vand.u32 %v6332, 255
        %v6544 = vand.u32 %v6348, 255
        %v6545 = vand.u32 %v6364, 255
        %v6546 = vand.u32 %v6380, 255
        %v6547 = vand.u32 %v6396, 255
        %v6548 = vand.u32 %v6412, 255
        %v6549 = vand.u32 %v6428, 255
        %v6550 = vand.u32 %v6444, 255
        %v6551 = vand.u32 %v6460, 255
        %v6552 = vand.u32 %v6476, 255
        %v6553 = vand.u32 %v6492, 255
        %v6554 = vand.u32 %v6508, 255
        %v6555 = vand.u32 %v6524, 255
        %v6556 = vand.u32 %v6540, 255
        %6557 = vst.msk [vmem:[%s4796] sm:$0xff] %vm2955, %v6541
        %6558 = vst.msk [vmem:[%s4796 + $0x8] sm:$0xff] %vm2955, %v6542
        %6559 = vst.msk [vmem:[%s4796 + $0x10] sm:$0xff] %vm2955, %v6543
        %6560 = vst.msk [vmem:[%s4796 + $0x18] sm:$0xff] %vm2955, %v6544
        %6561 = vst.msk [vmem:[%s4796 + $0x20] sm:$0xff] %vm2955, %v6545
        %6562 = vst.msk [vmem:[%s4796 + $0x28] sm:$0xff] %vm2955, %v6546
        %6563 = vst.msk [vmem:[%s4796 + $0x30] sm:$0xff] %vm2955, %v6547
        %6564 = vst.msk [vmem:[%s4796 + $0x38] sm:$0xff] %vm2955, %v6548
        %6565 = vst.msk [vmem:[%s4796 + $0x40] sm:$0xff] %vm2955, %v6549
        %6566 = vst.msk [vmem:[%s4796 + $0x48] sm:$0xff] %vm2955, %v6550
        %6567 = vst.msk [vmem:[%s4796 + $0x50] sm:$0xff] %vm2955, %v6551
        %6568 = vst.msk [vmem:[%s4796 + $0x58] sm:$0xff] %vm2955, %v6552
        %6569 = vst.msk [vmem:[%s4796 + $0x60] sm:$0xff] %vm2955, %v6553
        %6570 = vst.msk [vmem:[%s4796 + $0x68] sm:$0xff] %vm2955, %v6554
        %6571 = vst.msk [vmem:[%s4796 + $0x70] sm:$0xff] %vm2955, %v6555
        %6572 = vst.msk [vmem:[%s4796 + $0x78] sm:$0xff] %vm2955, %v6556
        %vm6573 = vcmp.eq.s32.totalorder %v6253, %v6300
        %vm6574 = vcmp.eq.s32.totalorder %v6254, %v6300
        %vm6575 = vcmp.eq.s32.totalorder %v6255, %v6316
        %vm6576 = vcmp.eq.s32.totalorder %v6256, %v6316
        %vm6577 = vcmp.eq.s32.totalorder %v6257, %v6332
        %vm6578 = vcmp.eq.s32.totalorder %v6258, %v6332
        %vm6579 = vcmp.eq.s32.totalorder %v6259, %v6348
        %vm6580 = vcmp.eq.s32.totalorder %v6260, %v6348
        %vm6581 = vcmp.eq.s32.totalorder %v6261, %v6364
        %vm6582 = vcmp.eq.s32.totalorder %v6262, %v6364
        %vm6583 = vcmp.eq.s32.totalorder %v6263, %v6380
        %vm6584 = vcmp.eq.s32.totalorder %v6264, %v6380
        %vm6585 = vcmp.eq.s32.totalorder %v6265, %v6396
        %vm6586 = vcmp.eq.s32.totalorder %v6266, %v6396
        %vm6587 = vcmp.eq.s32.totalorder %v6267, %v6412
        %vm6588 = vcmp.eq.s32.totalorder %v6268, %v6412
        %vm6589 = vcmp.eq.s32.totalorder %v6269, %v6428
        %vm6590 = vcmp.eq.s32.totalorder %v6270, %v6428
        %vm6591 = vcmp.eq.s32.totalorder %v6271, %v6444
        %vm6592 = vcmp.eq.s32.totalorder %v6272, %v6444
        %vm6593 = vcmp.eq.s32.totalorder %v6273, %v6460
        %vm6594 = vcmp.eq.s32.totalorder %v6274, %v6460
        %vm6595 = vcmp.eq.s32.totalorder %v6275, %v6476
        %vm6596 = vcmp.eq.s32.totalorder %v6276, %v6476
        %vm6597 = vcmp.eq.s32.totalorder %v6277, %v6492
        %vm6598 = vcmp.eq.s32.totalorder %v6278, %v6492
        %vm6599 = vcmp.eq.s32.totalorder %v6279, %v6508
        %vm6600 = vcmp.eq.s32.totalorder %v6280, %v6508
        %vm6601 = vcmp.eq.s32.totalorder %v6281, %v6524
        %vm6602 = vcmp.eq.s32.totalorder %v6282, %v6524
        %vm6603 = vcmp.eq.s32.totalorder %v6283, %v6540
        %vm6604 = vcmp.eq.s32.totalorder %v6284, %v6540
        %v6605 = vsel %vm6573, 2147483647, %v6253
        %v6606 = vsel %vm6574, 2147483647, %v6254
        %v6607 = vsel %vm6575, 2147483647, %v6255
        %v6608 = vsel %vm6576, 2147483647, %v6256
        %v6609 = vsel %vm6577, 2147483647, %v6257
        %v6610 = vsel %vm6578, 2147483647, %v6258
        %v6611 = vsel %vm6579, 2147483647, %v6259
        %v6612 = vsel %vm6580, 2147483647, %v6260
        %v6613 = vsel %vm6581, 2147483647, %v6261
        %v6614 = vsel %vm6582, 2147483647, %v6262
        %v6615 = vsel %vm6583, 2147483647, %v6263
        %v6616 = vsel %vm6584, 2147483647, %v6264
        %v6617 = vsel %vm6585, 2147483647, %v6265
        %v6618 = vsel %vm6586, 2147483647, %v6266
        %v6619 = vsel %vm6587, 2147483647, %v6267
        %v6620 = vsel %vm6588, 2147483647, %v6268
        %v6621 = vsel %vm6589, 2147483647, %v6269
        %v6622 = vsel %vm6590, 2147483647, %v6270
        %v6623 = vsel %vm6591, 2147483647, %v6271
        %v6624 = vsel %vm6592, 2147483647, %v6272
        %v6625 = vsel %vm6593, 2147483647, %v6273
        %v6626 = vsel %vm6594, 2147483647, %v6274
        %v6627 = vsel %vm6595, 2147483647, %v6275
        %v6628 = vsel %vm6596, 2147483647, %v6276
        %v6629 = vsel %vm6597, 2147483647, %v6277
        %v6630 = vsel %vm6598, 2147483647, %v6278
        %v6631 = vsel %vm6599, 2147483647, %v6279
        %v6632 = vsel %vm6600, 2147483647, %v6280
        %v6633 = vsel %vm6601, 2147483647, %v6281
        %v6634 = vsel %vm6602, 2147483647, %v6282
        %v6635 = vsel %vm6603, 2147483647, %v6283
        %v6636 = vsel %vm6604, 2147483647, %v6284
        %vm6637 = vcmp.lt.s32.totalorder %v6605, %v6606
        %v6638 = vsel %vm6637, %v6605, %v6606
        %v6639 = vand.u32 %v6638, 65535
        %v6640 = vshra.s32 %v6638, 16
        %v6641 = vcvt.s32.f32 %v6639
        %v6642 = vcvt.s32.f32 %v6640
        %6643 = vmin.xlane.f32.xlu0 %v6642
        %v6644 = vpop.xlane.xlu0 %6643
        %vm6645 = vcmp.eq.f32.partialorder %v6642, %v6644
        %v6646 = vsel %vm6645, %v6641, inf
        %6647 = vmin.xlane.f32.xlu0 %v6646
        %v6648 = vpop.xlane.xlu0 %6647
        %v6649 = vcvt.f32.s32 %v6648
        %v6650 = vcvt.f32.s32 %v6644
        %v6651 = vshll.u32 %v6650, 16
        %v6652 = vadd.s32 %v6651, %v6649
        %vm6653 = vcmp.lt.s32.totalorder %v6607, %v6608
        %v6654 = vsel %vm6653, %v6607, %v6608
        %v6655 = vand.u32 %v6654, 65535
        %v6656 = vshra.s32 %v6654, 16
        %v6657 = vcvt.s32.f32 %v6655
        %v6658 = vcvt.s32.f32 %v6656
        %6659 = vmin.xlane.f32.xlu0 %v6658
        %v6660 = vpop.xlane.xlu0 %6659
        %vm6661 = vcmp.eq.f32.partialorder %v6658, %v6660
        %v6662 = vsel %vm6661, %v6657, inf
        %6663 = vmin.xlane.f32.xlu0 %v6662
        %v6664 = vpop.xlane.xlu0 %6663
        %v6665 = vcvt.f32.s32 %v6664
        %v6666 = vcvt.f32.s32 %v6660
        %v6667 = vshll.u32 %v6666, 16
        %v6668 = vadd.s32 %v6667, %v6665
        %vm6669 = vcmp.lt.s32.totalorder %v6609, %v6610
        %v6670 = vsel %vm6669, %v6609, %v6610
        %v6671 = vand.u32 %v6670, 65535
        %v6672 = vshra.s32 %v6670, 16
        %v6673 = vcvt.s32.f32 %v6671
        %v6674 = vcvt.s32.f32 %v6672
        %6675 = vmin.xlane.f32.xlu0 %v6674
        %v6676 = vpop.xlane.xlu0 %6675
        %vm6677 = vcmp.eq.f32.partialorder %v6674, %v6676
        %v6678 = vsel %vm6677, %v6673, inf
        %6679 = vmin.xlane.f32.xlu0 %v6678
        %v6680 = vpop.xlane.xlu0 %6679
        %v6681 = vcvt.f32.s32 %v6680
        %v6682 = vcvt.f32.s32 %v6676
        %v6683 = vshll.u32 %v6682, 16
        %v6684 = vadd.s32 %v6683, %v6681
        %vm6685 = vcmp.lt.s32.totalorder %v6611, %v6612
        %v6686 = vsel %vm6685, %v6611, %v6612
        %v6687 = vand.u32 %v6686, 65535
        %v6688 = vshra.s32 %v6686, 16
        %v6689 = vcvt.s32.f32 %v6687
        %v6690 = vcvt.s32.f32 %v6688
        %6691 = vmin.xlane.f32.xlu0 %v6690
        %v6692 = vpop.xlane.xlu0 %6691
        %vm6693 = vcmp.eq.f32.partialorder %v6690, %v6692
        %v6694 = vsel %vm6693, %v6689, inf
        %6695 = vmin.xlane.f32.xlu0 %v6694
        %v6696 = vpop.xlane.xlu0 %6695
        %v6697 = vcvt.f32.s32 %v6696
        %v6698 = vcvt.f32.s32 %v6692
        %v6699 = vshll.u32 %v6698, 16
        %v6700 = vadd.s32 %v6699, %v6697
        %vm6701 = vcmp.lt.s32.totalorder %v6613, %v6614
        %v6702 = vsel %vm6701, %v6613, %v6614
        %v6703 = vand.u32 %v6702, 65535
        %v6704 = vshra.s32 %v6702, 16
        %v6705 = vcvt.s32.f32 %v6703
        %v6706 = vcvt.s32.f32 %v6704
        %6707 = vmin.xlane.f32.xlu0 %v6706
        %v6708 = vpop.xlane.xlu0 %6707
        %vm6709 = vcmp.eq.f32.partialorder %v6706, %v6708
        %v6710 = vsel %vm6709, %v6705, inf
        %6711 = vmin.xlane.f32.xlu0 %v6710
        %v6712 = vpop.xlane.xlu0 %6711
        %v6713 = vcvt.f32.s32 %v6712
        %v6714 = vcvt.f32.s32 %v6708
        %v6715 = vshll.u32 %v6714, 16
        %v6716 = vadd.s32 %v6715, %v6713
        %vm6717 = vcmp.lt.s32.totalorder %v6615, %v6616
        %v6718 = vsel %vm6717, %v6615, %v6616
        %v6719 = vand.u32 %v6718, 65535
        %v6720 = vshra.s32 %v6718, 16
        %v6721 = vcvt.s32.f32 %v6719
        %v6722 = vcvt.s32.f32 %v6720
        %6723 = vmin.xlane.f32.xlu0 %v6722
        %v6724 = vpop.xlane.xlu0 %6723
        %vm6725 = vcmp.eq.f32.partialorder %v6722, %v6724
        %v6726 = vsel %vm6725, %v6721, inf
        %6727 = vmin.xlane.f32.xlu0 %v6726
        %v6728 = vpop.xlane.xlu0 %6727
        %v6729 = vcvt.f32.s32 %v6728
        %v6730 = vcvt.f32.s32 %v6724
        %v6731 = vshll.u32 %v6730, 16
        %v6732 = vadd.s32 %v6731, %v6729
        %vm6733 = vcmp.lt.s32.totalorder %v6617, %v6618
        %v6734 = vsel %vm6733, %v6617, %v6618
        %v6735 = vand.u32 %v6734, 65535
        %v6736 = vshra.s32 %v6734, 16
        %v6737 = vcvt.s32.f32 %v6735
        %v6738 = vcvt.s32.f32 %v6736
        %6739 = vmin.xlane.f32.xlu0 %v6738
        %v6740 = vpop.xlane.xlu0 %6739
        %vm6741 = vcmp.eq.f32.partialorder %v6738, %v6740
        %v6742 = vsel %vm6741, %v6737, inf
        %6743 = vmin.xlane.f32.xlu0 %v6742
        %v6744 = vpop.xlane.xlu0 %6743
        %v6745 = vcvt.f32.s32 %v6744
        %v6746 = vcvt.f32.s32 %v6740
        %v6747 = vshll.u32 %v6746, 16
        %v6748 = vadd.s32 %v6747, %v6745
        %vm6749 = vcmp.lt.s32.totalorder %v6619, %v6620
        %v6750 = vsel %vm6749, %v6619, %v6620
        %v6751 = vand.u32 %v6750, 65535
        %v6752 = vshra.s32 %v6750, 16
        %v6753 = vcvt.s32.f32 %v6751
        %v6754 = vcvt.s32.f32 %v6752
        %6755 = vmin.xlane.f32.xlu0 %v6754
        %v6756 = vpop.xlane.xlu0 %6755
        %vm6757 = vcmp.eq.f32.partialorder %v6754, %v6756
        %v6758 = vsel %vm6757, %v6753, inf
        %6759 = vmin.xlane.f32.xlu0 %v6758
        %v6760 = vpop.xlane.xlu0 %6759
        %v6761 = vcvt.f32.s32 %v6760
        %v6762 = vcvt.f32.s32 %v6756
        %v6763 = vshll.u32 %v6762, 16
        %v6764 = vadd.s32 %v6763, %v6761
        %vm6765 = vcmp.lt.s32.totalorder %v6621, %v6622
        %v6766 = vsel %vm6765, %v6621, %v6622
        %v6767 = vand.u32 %v6766, 65535
        %v6768 = vshra.s32 %v6766, 16
        %v6769 = vcvt.s32.f32 %v6767
        %v6770 = vcvt.s32.f32 %v6768
        %6771 = vmin.xlane.f32.xlu0 %v6770
        %v6772 = vpop.xlane.xlu0 %6771
        %vm6773 = vcmp.eq.f32.partialorder %v6770, %v6772
        %v6774 = vsel %vm6773, %v6769, inf
        %6775 = vmin.xlane.f32.xlu0 %v6774
        %v6776 = vpop.xlane.xlu0 %6775
        %v6777 = vcvt.f32.s32 %v6776
        %v6778 = vcvt.f32.s32 %v6772
        %v6779 = vshll.u32 %v6778, 16
        %v6780 = vadd.s32 %v6779, %v6777
        %vm6781 = vcmp.lt.s32.totalorder %v6623, %v6624
        %v6782 = vsel %vm6781, %v6623, %v6624
        %v6783 = vand.u32 %v6782, 65535
        %v6784 = vshra.s32 %v6782, 16
        %v6785 = vcvt.s32.f32 %v6783
        %v6786 = vcvt.s32.f32 %v6784
        %6787 = vmin.xlane.f32.xlu0 %v6786
        %v6788 = vpop.xlane.xlu0 %6787
        %vm6789 = vcmp.eq.f32.partialorder %v6786, %v6788
        %v6790 = vsel %vm6789, %v6785, inf
        %6791 = vmin.xlane.f32.xlu0 %v6790
        %v6792 = vpop.xlane.xlu0 %6791
        %v6793 = vcvt.f32.s32 %v6792
        %v6794 = vcvt.f32.s32 %v6788
        %v6795 = vshll.u32 %v6794, 16
        %v6796 = vadd.s32 %v6795, %v6793
        %vm6797 = vcmp.lt.s32.totalorder %v6625, %v6626
        %v6798 = vsel %vm6797, %v6625, %v6626
        %v6799 = vand.u32 %v6798, 65535
        %v6800 = vshra.s32 %v6798, 16
        %v6801 = vcvt.s32.f32 %v6799
        %v6802 = vcvt.s32.f32 %v6800
        %6803 = vmin.xlane.f32.xlu0 %v6802
        %v6804 = vpop.xlane.xlu0 %6803
        %vm6805 = vcmp.eq.f32.partialorder %v6802, %v6804
        %v6806 = vsel %vm6805, %v6801, inf
        %6807 = vmin.xlane.f32.xlu0 %v6806
        %v6808 = vpop.xlane.xlu0 %6807
        %v6809 = vcvt.f32.s32 %v6808
        %v6810 = vcvt.f32.s32 %v6804
        %v6811 = vshll.u32 %v6810, 16
        %v6812 = vadd.s32 %v6811, %v6809
        %vm6813 = vcmp.lt.s32.totalorder %v6627, %v6628
        %v6814 = vsel %vm6813, %v6627, %v6628
        %v6815 = vand.u32 %v6814, 65535
        %v6816 = vshra.s32 %v6814, 16
        %v6817 = vcvt.s32.f32 %v6815
        %v6818 = vcvt.s32.f32 %v6816
        %6819 = vmin.xlane.f32.xlu0 %v6818
        %v6820 = vpop.xlane.xlu0 %6819
        %vm6821 = vcmp.eq.f32.partialorder %v6818, %v6820
        %v6822 = vsel %vm6821, %v6817, inf
        %6823 = vmin.xlane.f32.xlu0 %v6822
        %v6824 = vpop.xlane.xlu0 %6823
        %v6825 = vcvt.f32.s32 %v6824
        %v6826 = vcvt.f32.s32 %v6820
        %v6827 = vshll.u32 %v6826, 16
        %v6828 = vadd.s32 %v6827, %v6825
        %vm6829 = vcmp.lt.s32.totalorder %v6629, %v6630
        %v6830 = vsel %vm6829, %v6629, %v6630
        %v6831 = vand.u32 %v6830, 65535
        %v6832 = vshra.s32 %v6830, 16
        %v6833 = vcvt.s32.f32 %v6831
        %v6834 = vcvt.s32.f32 %v6832
        %6835 = vmin.xlane.f32.xlu0 %v6834
        %v6836 = vpop.xlane.xlu0 %6835
        %vm6837 = vcmp.eq.f32.partialorder %v6834, %v6836
        %v6838 = vsel %vm6837, %v6833, inf
        %6839 = vmin.xlane.f32.xlu0 %v6838
        %v6840 = vpop.xlane.xlu0 %6839
        %v6841 = vcvt.f32.s32 %v6840
        %v6842 = vcvt.f32.s32 %v6836
        %v6843 = vshll.u32 %v6842, 16
        %v6844 = vadd.s32 %v6843, %v6841
        %vm6845 = vcmp.lt.s32.totalorder %v6631, %v6632
        %v6846 = vsel %vm6845, %v6631, %v6632
        %v6847 = vand.u32 %v6846, 65535
        %v6848 = vshra.s32 %v6846, 16
        %v6849 = vcvt.s32.f32 %v6847
        %v6850 = vcvt.s32.f32 %v6848
        %6851 = vmin.xlane.f32.xlu0 %v6850
        %v6852 = vpop.xlane.xlu0 %6851
        %vm6853 = vcmp.eq.f32.partialorder %v6850, %v6852
        %v6854 = vsel %vm6853, %v6849, inf
        %6855 = vmin.xlane.f32.xlu0 %v6854
        %v6856 = vpop.xlane.xlu0 %6855
        %v6857 = vcvt.f32.s32 %v6856
        %v6858 = vcvt.f32.s32 %v6852
        %v6859 = vshll.u32 %v6858, 16
        %v6860 = vadd.s32 %v6859, %v6857
        %vm6861 = vcmp.lt.s32.totalorder %v6633, %v6634
        %v6862 = vsel %vm6861, %v6633, %v6634
        %v6863 = vand.u32 %v6862, 65535
        %v6864 = vshra.s32 %v6862, 16
        %v6865 = vcvt.s32.f32 %v6863
        %v6866 = vcvt.s32.f32 %v6864
        %6867 = vmin.xlane.f32.xlu0 %v6866
        %v6868 = vpop.xlane.xlu0 %6867
        %vm6869 = vcmp.eq.f32.partialorder %v6866, %v6868
        %v6870 = vsel %vm6869, %v6865, inf
        %6871 = vmin.xlane.f32.xlu0 %v6870
        %v6872 = vpop.xlane.xlu0 %6871
        %v6873 = vcvt.f32.s32 %v6872
        %v6874 = vcvt.f32.s32 %v6868
        %v6875 = vshll.u32 %v6874, 16
        %v6876 = vadd.s32 %v6875, %v6873
        %vm6877 = vcmp.lt.s32.totalorder %v6635, %v6636
        %v6878 = vsel %vm6877, %v6635, %v6636
        %v6879 = vand.u32 %v6878, 65535
        %v6880 = vshra.s32 %v6878, 16
        %v6881 = vcvt.s32.f32 %v6879
        %v6882 = vcvt.s32.f32 %v6880
        %6883 = vmin.xlane.f32.xlu0 %v6882
        %v6884 = vpop.xlane.xlu0 %6883
        %vm6885 = vcmp.eq.f32.partialorder %v6882, %v6884
        %v6886 = vsel %vm6885, %v6881, inf
        %6887 = vmin.xlane.f32.xlu0 %v6886
        %v6888 = vpop.xlane.xlu0 %6887
        %v6889 = vcvt.f32.s32 %v6888
        %v6890 = vcvt.f32.s32 %v6884
        %v6891 = vshll.u32 %v6890, 16
        %v6892 = vadd.s32 %v6891, %v6889
        %v6893 = vand.u32 %v6652, 255
        %v6894 = vand.u32 %v6668, 255
        %v6895 = vand.u32 %v6684, 255
        %v6896 = vand.u32 %v6700, 255
        %v6897 = vand.u32 %v6716, 255
        %v6898 = vand.u32 %v6732, 255
        %v6899 = vand.u32 %v6748, 255
        %v6900 = vand.u32 %v6764, 255
        %v6901 = vand.u32 %v6780, 255
        %v6902 = vand.u32 %v6796, 255
        %v6903 = vand.u32 %v6812, 255
        %v6904 = vand.u32 %v6828, 255
        %v6905 = vand.u32 %v6844, 255
        %v6906 = vand.u32 %v6860, 255
        %v6907 = vand.u32 %v6876, 255
        %v6908 = vand.u32 %v6892, 255
        %6909 = vst.msk [vmem:[%s4796] sm:$0xff] %vm3308, %v6893
        %6910 = vst.msk [vmem:[%s4796 + $0x8] sm:$0xff] %vm3308, %v6894
        %6911 = vst.msk [vmem:[%s4796 + $0x10] sm:$0xff] %vm3308, %v6895
        %6912 = vst.msk [vmem:[%s4796 + $0x18] sm:$0xff] %vm3308, %v6896
        %6913 = vst.msk [vmem:[%s4796 + $0x20] sm:$0xff] %vm3308, %v6897
        %6914 = vst.msk [vmem:[%s4796 + $0x28] sm:$0xff] %vm3308, %v6898
        %6915 = vst.msk [vmem:[%s4796 + $0x30] sm:$0xff] %vm3308, %v6899
        %6916 = vst.msk [vmem:[%s4796 + $0x38] sm:$0xff] %vm3308, %v6900
        %6917 = vst.msk [vmem:[%s4796 + $0x40] sm:$0xff] %vm3308, %v6901
        %6918 = vst.msk [vmem:[%s4796 + $0x48] sm:$0xff] %vm3308, %v6902
        %6919 = vst.msk [vmem:[%s4796 + $0x50] sm:$0xff] %vm3308, %v6903
        %6920 = vst.msk [vmem:[%s4796 + $0x58] sm:$0xff] %vm3308, %v6904
        %6921 = vst.msk [vmem:[%s4796 + $0x60] sm:$0xff] %vm3308, %v6905
        %6922 = vst.msk [vmem:[%s4796 + $0x68] sm:$0xff] %vm3308, %v6906
        %6923 = vst.msk [vmem:[%s4796 + $0x70] sm:$0xff] %vm3308, %v6907
        %6924 = vst.msk [vmem:[%s4796 + $0x78] sm:$0xff] %vm3308, %v6908
        %vm6925 = vcmp.eq.s32.totalorder %v6605, %v6652
        %vm6926 = vcmp.eq.s32.totalorder %v6606, %v6652
        %vm6927 = vcmp.eq.s32.totalorder %v6607, %v6668
        %vm6928 = vcmp.eq.s32.totalorder %v6608, %v6668
        %vm6929 = vcmp.eq.s32.totalorder %v6609, %v6684
        %vm6930 = vcmp.eq.s32.totalorder %v6610, %v6684
        %vm6931 = vcmp.eq.s32.totalorder %v6611, %v6700
        %vm6932 = vcmp.eq.s32.totalorder %v6612, %v6700
        %vm6933 = vcmp.eq.s32.totalorder %v6613, %v6716
        %vm6934 = vcmp.eq.s32.totalorder %v6614, %v6716
        %vm6935 = vcmp.eq.s32.totalorder %v6615, %v6732
        %vm6936 = vcmp.eq.s32.totalorder %v6616, %v6732
        %vm6937 = vcmp.eq.s32.totalorder %v6617, %v6748
        %vm6938 = vcmp.eq.s32.totalorder %v6618, %v6748
        %vm6939 = vcmp.eq.s32.totalorder %v6619, %v6764
        %vm6940 = vcmp.eq.s32.totalorder %v6620, %v6764
        %vm6941 = vcmp.eq.s32.totalorder %v6621, %v6780
        %vm6942 = vcmp.eq.s32.totalorder %v6622, %v6780
        %vm6943 = vcmp.eq.s32.totalorder %v6623, %v6796
        %vm6944 = vcmp.eq.s32.totalorder %v6624, %v6796
        %vm6945 = vcmp.eq.s32.totalorder %v6625, %v6812
        %vm6946 = vcmp.eq.s32.totalorder %v6626, %v6812
        %vm6947 = vcmp.eq.s32.totalorder %v6627, %v6828
        %vm6948 = vcmp.eq.s32.totalorder %v6628, %v6828
        %vm6949 = vcmp.eq.s32.totalorder %v6629, %v6844
        %vm6950 = vcmp.eq.s32.totalorder %v6630, %v6844
        %vm6951 = vcmp.eq.s32.totalorder %v6631, %v6860
        %vm6952 = vcmp.eq.s32.totalorder %v6632, %v6860
        %vm6953 = vcmp.eq.s32.totalorder %v6633, %v6876
        %vm6954 = vcmp.eq.s32.totalorder %v6634, %v6876
        %vm6955 = vcmp.eq.s32.totalorder %v6635, %v6892
        %vm6956 = vcmp.eq.s32.totalorder %v6636, %v6892
        %v6957 = vsel %vm6925, 2147483647, %v6605
        %v6958 = vsel %vm6926, 2147483647, %v6606
        %v6959 = vsel %vm6927, 2147483647, %v6607
        %v6960 = vsel %vm6928, 2147483647, %v6608
        %v6961 = vsel %vm6929, 2147483647, %v6609
        %v6962 = vsel %vm6930, 2147483647, %v6610
        %v6963 = vsel %vm6931, 2147483647, %v6611
        %v6964 = vsel %vm6932, 2147483647, %v6612
        %v6965 = vsel %vm6933, 2147483647, %v6613
        %v6966 = vsel %vm6934, 2147483647, %v6614
        %v6967 = vsel %vm6935, 2147483647, %v6615
        %v6968 = vsel %vm6936, 2147483647, %v6616
        %v6969 = vsel %vm6937, 2147483647, %v6617
        %v6970 = vsel %vm6938, 2147483647, %v6618
        %v6971 = vsel %vm6939, 2147483647, %v6619
        %v6972 = vsel %vm6940, 2147483647, %v6620
        %v6973 = vsel %vm6941, 2147483647, %v6621
        %v6974 = vsel %vm6942, 2147483647, %v6622
        %v6975 = vsel %vm6943, 2147483647, %v6623
        %v6976 = vsel %vm6944, 2147483647, %v6624
        %v6977 = vsel %vm6945, 2147483647, %v6625
        %v6978 = vsel %vm6946, 2147483647, %v6626
        %v6979 = vsel %vm6947, 2147483647, %v6627
        %v6980 = vsel %vm6948, 2147483647, %v6628
        %v6981 = vsel %vm6949, 2147483647, %v6629
        %v6982 = vsel %vm6950, 2147483647, %v6630
        %v6983 = vsel %vm6951, 2147483647, %v6631
        %v6984 = vsel %vm6952, 2147483647, %v6632
        %v6985 = vsel %vm6953, 2147483647, %v6633
        %v6986 = vsel %vm6954, 2147483647, %v6634
        %v6987 = vsel %vm6955, 2147483647, %v6635
        %v6988 = vsel %vm6956, 2147483647, %v6636
        %vm6989 = vcmp.lt.s32.totalorder %v6957, %v6958
        %v6990 = vsel %vm6989, %v6957, %v6958
        %v6991 = vand.u32 %v6990, 65535
        %v6992 = vshra.s32 %v6990, 16
        %v6993 = vcvt.s32.f32 %v6991
        %v6994 = vcvt.s32.f32 %v6992
        %6995 = vmin.xlane.f32.xlu0 %v6994
        %v6996 = vpop.xlane.xlu0 %6995
        %vm6997 = vcmp.eq.f32.partialorder %v6994, %v6996
        %v6998 = vsel %vm6997, %v6993, inf
        %6999 = vmin.xlane.f32.xlu0 %v6998
        %v7000 = vpop.xlane.xlu0 %6999
        %v7001 = vcvt.f32.s32 %v7000
        %v7002 = vcvt.f32.s32 %v6996
        %v7003 = vshll.u32 %v7002, 16
        %v7004 = vadd.s32 %v7003, %v7001
        %vm7005 = vcmp.lt.s32.totalorder %v6959, %v6960
        %v7006 = vsel %vm7005, %v6959, %v6960
        %v7007 = vand.u32 %v7006, 65535
        %v7008 = vshra.s32 %v7006, 16
        %v7009 = vcvt.s32.f32 %v7007
        %v7010 = vcvt.s32.f32 %v7008
        %7011 = vmin.xlane.f32.xlu0 %v7010
        %v7012 = vpop.xlane.xlu0 %7011
        %vm7013 = vcmp.eq.f32.partialorder %v7010, %v7012
        %v7014 = vsel %vm7013, %v7009, inf
        %7015 = vmin.xlane.f32.xlu0 %v7014
        %v7016 = vpop.xlane.xlu0 %7015
        %v7017 = vcvt.f32.s32 %v7016
        %v7018 = vcvt.f32.s32 %v7012
        %v7019 = vshll.u32 %v7018, 16
        %v7020 = vadd.s32 %v7019, %v7017
        %vm7021 = vcmp.lt.s32.totalorder %v6961, %v6962
        %v7022 = vsel %vm7021, %v6961, %v6962
        %v7023 = vand.u32 %v7022, 65535
        %v7024 = vshra.s32 %v7022, 16
        %v7025 = vcvt.s32.f32 %v7023
        %v7026 = vcvt.s32.f32 %v7024
        %7027 = vmin.xlane.f32.xlu0 %v7026
        %v7028 = vpop.xlane.xlu0 %7027
        %vm7029 = vcmp.eq.f32.partialorder %v7026, %v7028
        %v7030 = vsel %vm7029, %v7025, inf
        %7031 = vmin.xlane.f32.xlu0 %v7030
        %v7032 = vpop.xlane.xlu0 %7031
        %v7033 = vcvt.f32.s32 %v7032
        %v7034 = vcvt.f32.s32 %v7028
        %v7035 = vshll.u32 %v7034, 16
        %v7036 = vadd.s32 %v7035, %v7033
        %vm7037 = vcmp.lt.s32.totalorder %v6963, %v6964
        %v7038 = vsel %vm7037, %v6963, %v6964
        %v7039 = vand.u32 %v7038, 65535
        %v7040 = vshra.s32 %v7038, 16
        %v7041 = vcvt.s32.f32 %v7039
        %v7042 = vcvt.s32.f32 %v7040
        %7043 = vmin.xlane.f32.xlu0 %v7042
        %v7044 = vpop.xlane.xlu0 %7043
        %vm7045 = vcmp.eq.f32.partialorder %v7042, %v7044
        %v7046 = vsel %vm7045, %v7041, inf
        %7047 = vmin.xlane.f32.xlu0 %v7046
        %v7048 = vpop.xlane.xlu0 %7047
        %v7049 = vcvt.f32.s32 %v7048
        %v7050 = vcvt.f32.s32 %v7044
        %v7051 = vshll.u32 %v7050, 16
        %v7052 = vadd.s32 %v7051, %v7049
        %vm7053 = vcmp.lt.s32.totalorder %v6965, %v6966
        %v7054 = vsel %vm7053, %v6965, %v6966
        %v7055 = vand.u32 %v7054, 65535
        %v7056 = vshra.s32 %v7054, 16
        %v7057 = vcvt.s32.f32 %v7055
        %v7058 = vcvt.s32.f32 %v7056
        %7059 = vmin.xlane.f32.xlu0 %v7058
        %v7060 = vpop.xlane.xlu0 %7059
        %vm7061 = vcmp.eq.f32.partialorder %v7058, %v7060
        %v7062 = vsel %vm7061, %v7057, inf
        %7063 = vmin.xlane.f32.xlu0 %v7062
        %v7064 = vpop.xlane.xlu0 %7063
        %v7065 = vcvt.f32.s32 %v7064
        %v7066 = vcvt.f32.s32 %v7060
        %v7067 = vshll.u32 %v7066, 16
        %v7068 = vadd.s32 %v7067, %v7065
        %vm7069 = vcmp.lt.s32.totalorder %v6967, %v6968
        %v7070 = vsel %vm7069, %v6967, %v6968
        %v7071 = vand.u32 %v7070, 65535
        %v7072 = vshra.s32 %v7070, 16
        %v7073 = vcvt.s32.f32 %v7071
        %v7074 = vcvt.s32.f32 %v7072
        %7075 = vmin.xlane.f32.xlu0 %v7074
        %v7076 = vpop.xlane.xlu0 %7075
        %vm7077 = vcmp.eq.f32.partialorder %v7074, %v7076
        %v7078 = vsel %vm7077, %v7073, inf
        %7079 = vmin.xlane.f32.xlu0 %v7078
        %v7080 = vpop.xlane.xlu0 %7079
        %v7081 = vcvt.f32.s32 %v7080
        %v7082 = vcvt.f32.s32 %v7076
        %v7083 = vshll.u32 %v7082, 16
        %v7084 = vadd.s32 %v7083, %v7081
        %vm7085 = vcmp.lt.s32.totalorder %v6969, %v6970
        %v7086 = vsel %vm7085, %v6969, %v6970
        %v7087 = vand.u32 %v7086, 65535
        %v7088 = vshra.s32 %v7086, 16
        %v7089 = vcvt.s32.f32 %v7087
        %v7090 = vcvt.s32.f32 %v7088
        %7091 = vmin.xlane.f32.xlu0 %v7090
        %v7092 = vpop.xlane.xlu0 %7091
        %vm7093 = vcmp.eq.f32.partialorder %v7090, %v7092
        %v7094 = vsel %vm7093, %v7089, inf
        %7095 = vmin.xlane.f32.xlu0 %v7094
        %v7096 = vpop.xlane.xlu0 %7095
        %v7097 = vcvt.f32.s32 %v7096
        %v7098 = vcvt.f32.s32 %v7092
        %v7099 = vshll.u32 %v7098, 16
        %v7100 = vadd.s32 %v7099, %v7097
        %vm7101 = vcmp.lt.s32.totalorder %v6971, %v6972
        %v7102 = vsel %vm7101, %v6971, %v6972
        %v7103 = vand.u32 %v7102, 65535
        %v7104 = vshra.s32 %v7102, 16
        %v7105 = vcvt.s32.f32 %v7103
        %v7106 = vcvt.s32.f32 %v7104
        %7107 = vmin.xlane.f32.xlu0 %v7106
        %v7108 = vpop.xlane.xlu0 %7107
        %vm7109 = vcmp.eq.f32.partialorder %v7106, %v7108
        %v7110 = vsel %vm7109, %v7105, inf
        %7111 = vmin.xlane.f32.xlu0 %v7110
        %v7112 = vpop.xlane.xlu0 %7111
        %v7113 = vcvt.f32.s32 %v7112
        %v7114 = vcvt.f32.s32 %v7108
        %v7115 = vshll.u32 %v7114, 16
        %v7116 = vadd.s32 %v7115, %v7113
        %vm7117 = vcmp.lt.s32.totalorder %v6973, %v6974
        %v7118 = vsel %vm7117, %v6973, %v6974
        %v7119 = vand.u32 %v7118, 65535
        %v7120 = vshra.s32 %v7118, 16
        %v7121 = vcvt.s32.f32 %v7119
        %v7122 = vcvt.s32.f32 %v7120
        %7123 = vmin.xlane.f32.xlu0 %v7122
        %v7124 = vpop.xlane.xlu0 %7123
        %vm7125 = vcmp.eq.f32.partialorder %v7122, %v7124
        %v7126 = vsel %vm7125, %v7121, inf
        %7127 = vmin.xlane.f32.xlu0 %v7126
        %v7128 = vpop.xlane.xlu0 %7127
        %v7129 = vcvt.f32.s32 %v7128
        %v7130 = vcvt.f32.s32 %v7124
        %v7131 = vshll.u32 %v7130, 16
        %v7132 = vadd.s32 %v7131, %v7129
        %vm7133 = vcmp.lt.s32.totalorder %v6975, %v6976
        %v7134 = vsel %vm7133, %v6975, %v6976
        %v7135 = vand.u32 %v7134, 65535
        %v7136 = vshra.s32 %v7134, 16
        %v7137 = vcvt.s32.f32 %v7135
        %v7138 = vcvt.s32.f32 %v7136
        %7139 = vmin.xlane.f32.xlu0 %v7138
        %v7140 = vpop.xlane.xlu0 %7139
        %vm7141 = vcmp.eq.f32.partialorder %v7138, %v7140
        %v7142 = vsel %vm7141, %v7137, inf
        %7143 = vmin.xlane.f32.xlu0 %v7142
        %v7144 = vpop.xlane.xlu0 %7143
        %v7145 = vcvt.f32.s32 %v7144
        %v7146 = vcvt.f32.s32 %v7140
        %v7147 = vshll.u32 %v7146, 16
        %v7148 = vadd.s32 %v7147, %v7145
        %vm7149 = vcmp.lt.s32.totalorder %v6977, %v6978
        %v7150 = vsel %vm7149, %v6977, %v6978
        %v7151 = vand.u32 %v7150, 65535
        %v7152 = vshra.s32 %v7150, 16
        %v7153 = vcvt.s32.f32 %v7151
        %v7154 = vcvt.s32.f32 %v7152
        %7155 = vmin.xlane.f32.xlu0 %v7154
        %v7156 = vpop.xlane.xlu0 %7155
        %vm7157 = vcmp.eq.f32.partialorder %v7154, %v7156
        %v7158 = vsel %vm7157, %v7153, inf
        %7159 = vmin.xlane.f32.xlu0 %v7158
        %v7160 = vpop.xlane.xlu0 %7159
        %v7161 = vcvt.f32.s32 %v7160
        %v7162 = vcvt.f32.s32 %v7156
        %v7163 = vshll.u32 %v7162, 16
        %v7164 = vadd.s32 %v7163, %v7161
        %vm7165 = vcmp.lt.s32.totalorder %v6979, %v6980
        %v7166 = vsel %vm7165, %v6979, %v6980
        %v7167 = vand.u32 %v7166, 65535
        %v7168 = vshra.s32 %v7166, 16
        %v7169 = vcvt.s32.f32 %v7167
        %v7170 = vcvt.s32.f32 %v7168
        %7171 = vmin.xlane.f32.xlu0 %v7170
        %v7172 = vpop.xlane.xlu0 %7171
        %vm7173 = vcmp.eq.f32.partialorder %v7170, %v7172
        %v7174 = vsel %vm7173, %v7169, inf
        %7175 = vmin.xlane.f32.xlu0 %v7174
        %v7176 = vpop.xlane.xlu0 %7175
        %v7177 = vcvt.f32.s32 %v7176
        %v7178 = vcvt.f32.s32 %v7172
        %v7179 = vshll.u32 %v7178, 16
        %v7180 = vadd.s32 %v7179, %v7177
        %vm7181 = vcmp.lt.s32.totalorder %v6981, %v6982
        %v7182 = vsel %vm7181, %v6981, %v6982
        %v7183 = vand.u32 %v7182, 65535
        %v7184 = vshra.s32 %v7182, 16
        %v7185 = vcvt.s32.f32 %v7183
        %v7186 = vcvt.s32.f32 %v7184
        %7187 = vmin.xlane.f32.xlu0 %v7186
        %v7188 = vpop.xlane.xlu0 %7187
        %vm7189 = vcmp.eq.f32.partialorder %v7186, %v7188
        %v7190 = vsel %vm7189, %v7185, inf
        %7191 = vmin.xlane.f32.xlu0 %v7190
        %v7192 = vpop.xlane.xlu0 %7191
        %v7193 = vcvt.f32.s32 %v7192
        %v7194 = vcvt.f32.s32 %v7188
        %v7195 = vshll.u32 %v7194, 16
        %v7196 = vadd.s32 %v7195, %v7193
        %vm7197 = vcmp.lt.s32.totalorder %v6983, %v6984
        %v7198 = vsel %vm7197, %v6983, %v6984
        %v7199 = vand.u32 %v7198, 65535
        %v7200 = vshra.s32 %v7198, 16
        %v7201 = vcvt.s32.f32 %v7199
        %v7202 = vcvt.s32.f32 %v7200
        %7203 = vmin.xlane.f32.xlu0 %v7202
        %v7204 = vpop.xlane.xlu0 %7203
        %vm7205 = vcmp.eq.f32.partialorder %v7202, %v7204
        %v7206 = vsel %vm7205, %v7201, inf
        %7207 = vmin.xlane.f32.xlu0 %v7206
        %v7208 = vpop.xlane.xlu0 %7207
        %v7209 = vcvt.f32.s32 %v7208
        %v7210 = vcvt.f32.s32 %v7204
        %v7211 = vshll.u32 %v7210, 16
        %v7212 = vadd.s32 %v7211, %v7209
        %vm7213 = vcmp.lt.s32.totalorder %v6985, %v6986
        %v7214 = vsel %vm7213, %v6985, %v6986
        %v7215 = vand.u32 %v7214, 65535
        %v7216 = vshra.s32 %v7214, 16
        %v7217 = vcvt.s32.f32 %v7215
        %v7218 = vcvt.s32.f32 %v7216
        %7219 = vmin.xlane.f32.xlu0 %v7218
        %v7220 = vpop.xlane.xlu0 %7219
        %vm7221 = vcmp.eq.f32.partialorder %v7218, %v7220
        %v7222 = vsel %vm7221, %v7217, inf
        %7223 = vmin.xlane.f32.xlu0 %v7222
        %v7224 = vpop.xlane.xlu0 %7223
        %v7225 = vcvt.f32.s32 %v7224
        %v7226 = vcvt.f32.s32 %v7220
        %v7227 = vshll.u32 %v7226, 16
        %v7228 = vadd.s32 %v7227, %v7225
        %vm7229 = vcmp.lt.s32.totalorder %v6987, %v6988
        %v7230 = vsel %vm7229, %v6987, %v6988
        %v7231 = vand.u32 %v7230, 65535
        %v7232 = vshra.s32 %v7230, 16
        %v7233 = vcvt.s32.f32 %v7231
        %v7234 = vcvt.s32.f32 %v7232
        %7235 = vmin.xlane.f32.xlu0 %v7234
        %v7236 = vpop.xlane.xlu0 %7235
        %vm7237 = vcmp.eq.f32.partialorder %v7234, %v7236
        %v7238 = vsel %vm7237, %v7233, inf
        %7239 = vmin.xlane.f32.xlu0 %v7238
        %v7240 = vpop.xlane.xlu0 %7239
        %v7241 = vcvt.f32.s32 %v7240
        %v7242 = vcvt.f32.s32 %v7236
        %v7243 = vshll.u32 %v7242, 16
        %v7244 = vadd.s32 %v7243, %v7241
        %v7245 = vand.u32 %v7004, 255
        %v7246 = vand.u32 %v7020, 255
        %v7247 = vand.u32 %v7036, 255
        %v7248 = vand.u32 %v7052, 255
        %v7249 = vand.u32 %v7068, 255
        %v7250 = vand.u32 %v7084, 255
        %v7251 = vand.u32 %v7100, 255
        %v7252 = vand.u32 %v7116, 255
        %v7253 = vand.u32 %v7132, 255
        %v7254 = vand.u32 %v7148, 255
        %v7255 = vand.u32 %v7164, 255
        %v7256 = vand.u32 %v7180, 255
        %v7257 = vand.u32 %v7196, 255
        %v7258 = vand.u32 %v7212, 255
        %v7259 = vand.u32 %v7228, 255
        %v7260 = vand.u32 %v7244, 255
        %7261 = vst.msk [vmem:[%s4796] sm:$0xff] %vm3661, %v7245
        %7262 = vst.msk [vmem:[%s4796 + $0x8] sm:$0xff] %vm3661, %v7246
        %7263 = vst.msk [vmem:[%s4796 + $0x10] sm:$0xff] %vm3661, %v7247
        %7264 = vst.msk [vmem:[%s4796 + $0x18] sm:$0xff] %vm3661, %v7248
        %7265 = vst.msk [vmem:[%s4796 + $0x20] sm:$0xff] %vm3661, %v7249
        %7266 = vst.msk [vmem:[%s4796 + $0x28] sm:$0xff] %vm3661, %v7250
        %7267 = vst.msk [vmem:[%s4796 + $0x30] sm:$0xff] %vm3661, %v7251
        %7268 = vst.msk [vmem:[%s4796 + $0x38] sm:$0xff] %vm3661, %v7252
        %7269 = vst.msk [vmem:[%s4796 + $0x40] sm:$0xff] %vm3661, %v7253
        %7270 = vst.msk [vmem:[%s4796 + $0x48] sm:$0xff] %vm3661, %v7254
        %7271 = vst.msk [vmem:[%s4796 + $0x50] sm:$0xff] %vm3661, %v7255
        %7272 = vst.msk [vmem:[%s4796 + $0x58] sm:$0xff] %vm3661, %v7256
        %7273 = vst.msk [vmem:[%s4796 + $0x60] sm:$0xff] %vm3661, %v7257
        %7274 = vst.msk [vmem:[%s4796 + $0x68] sm:$0xff] %vm3661, %v7258
        %7275 = vst.msk [vmem:[%s4796 + $0x70] sm:$0xff] %vm3661, %v7259
        %7276 = vst.msk [vmem:[%s4796 + $0x78] sm:$0xff] %vm3661, %v7260
        %vm7277 = vcmp.eq.s32.totalorder %v6957, %v7004
        %vm7278 = vcmp.eq.s32.totalorder %v6958, %v7004
        %vm7279 = vcmp.eq.s32.totalorder %v6959, %v7020
        %vm7280 = vcmp.eq.s32.totalorder %v6960, %v7020
        %vm7281 = vcmp.eq.s32.totalorder %v6961, %v7036
        %vm7282 = vcmp.eq.s32.totalorder %v6962, %v7036
        %vm7283 = vcmp.eq.s32.totalorder %v6963, %v7052
        %vm7284 = vcmp.eq.s32.totalorder %v6964, %v7052
        %vm7285 = vcmp.eq.s32.totalorder %v6965, %v7068
        %vm7286 = vcmp.eq.s32.totalorder %v6966, %v7068
        %vm7287 = vcmp.eq.s32.totalorder %v6967, %v7084
        %vm7288 = vcmp.eq.s32.totalorder %v6968, %v7084
        %vm7289 = vcmp.eq.s32.totalorder %v6969, %v7100
        %vm7290 = vcmp.eq.s32.totalorder %v6970, %v7100
        %vm7291 = vcmp.eq.s32.totalorder %v6971, %v7116
        %vm7292 = vcmp.eq.s32.totalorder %v6972, %v7116
        %vm7293 = vcmp.eq.s32.totalorder %v6973, %v7132
        %vm7294 = vcmp.eq.s32.totalorder %v6974, %v7132
        %vm7295 = vcmp.eq.s32.totalorder %v6975, %v7148
        %vm7296 = vcmp.eq.s32.totalorder %v6976, %v7148
        %vm7297 = vcmp.eq.s32.totalorder %v6977, %v7164
        %vm7298 = vcmp.eq.s32.totalorder %v6978, %v7164
        %vm7299 = vcmp.eq.s32.totalorder %v6979, %v7180
        %vm7300 = vcmp.eq.s32.totalorder %v6980, %v7180
        %vm7301 = vcmp.eq.s32.totalorder %v6981, %v7196
        %vm7302 = vcmp.eq.s32.totalorder %v6982, %v7196
        %vm7303 = vcmp.eq.s32.totalorder %v6983, %v7212
        %vm7304 = vcmp.eq.s32.totalorder %v6984, %v7212
        %vm7305 = vcmp.eq.s32.totalorder %v6985, %v7228
        %vm7306 = vcmp.eq.s32.totalorder %v6986, %v7228
        %vm7307 = vcmp.eq.s32.totalorder %v6987, %v7244
        %vm7308 = vcmp.eq.s32.totalorder %v6988, %v7244
        %v7309 = vsel %vm7277, 2147483647, %v6957
        %v7310 = vsel %vm7278, 2147483647, %v6958
        %v7311 = vsel %vm7279, 2147483647, %v6959
        %v7312 = vsel %vm7280, 2147483647, %v6960
        %v7313 = vsel %vm7281, 2147483647, %v6961
        %v7314 = vsel %vm7282, 2147483647, %v6962
        %v7315 = vsel %vm7283, 2147483647, %v6963
        %v7316 = vsel %vm7284, 2147483647, %v6964
        %v7317 = vsel %vm7285, 2147483647, %v6965
        %v7318 = vsel %vm7286, 2147483647, %v6966
        %v7319 = vsel %vm7287, 2147483647, %v6967
        %v7320 = vsel %vm7288, 2147483647, %v6968
        %v7321 = vsel %vm7289, 2147483647, %v6969
        %v7322 = vsel %vm7290, 2147483647, %v6970
        %v7323 = vsel %vm7291, 2147483647, %v6971
        %v7324 = vsel %vm7292, 2147483647, %v6972
        %v7325 = vsel %vm7293, 2147483647, %v6973
        %v7326 = vsel %vm7294, 2147483647, %v6974
        %v7327 = vsel %vm7295, 2147483647, %v6975
        %v7328 = vsel %vm7296, 2147483647, %v6976
        %v7329 = vsel %vm7297, 2147483647, %v6977
        %v7330 = vsel %vm7298, 2147483647, %v6978
        %v7331 = vsel %vm7299, 2147483647, %v6979
        %v7332 = vsel %vm7300, 2147483647, %v6980
        %v7333 = vsel %vm7301, 2147483647, %v6981
        %v7334 = vsel %vm7302, 2147483647, %v6982
        %v7335 = vsel %vm7303, 2147483647, %v6983
        %v7336 = vsel %vm7304, 2147483647, %v6984
        %v7337 = vsel %vm7305, 2147483647, %v6985
        %v7338 = vsel %vm7306, 2147483647, %v6986
        %v7339 = vsel %vm7307, 2147483647, %v6987
        %v7340 = vsel %vm7308, 2147483647, %v6988
        %vm7341 = vcmp.lt.s32.totalorder %v7309, %v7310
        %v7342 = vsel %vm7341, %v7309, %v7310
        %v7343 = vand.u32 %v7342, 65535
        %v7344 = vshra.s32 %v7342, 16
        %v7345 = vcvt.s32.f32 %v7343
        %v7346 = vcvt.s32.f32 %v7344
        %7347 = vmin.xlane.f32.xlu0 %v7346
        %v7348 = vpop.xlane.xlu0 %7347
        %vm7349 = vcmp.eq.f32.partialorder %v7346, %v7348
        %v7350 = vsel %vm7349, %v7345, inf
        %7351 = vmin.xlane.f32.xlu0 %v7350
        %v7352 = vpop.xlane.xlu0 %7351
        %v7353 = vcvt.f32.s32 %v7352
        %v7354 = vcvt.f32.s32 %v7348
        %v7355 = vshll.u32 %v7354, 16
        %v7356 = vadd.s32 %v7355, %v7353
        %vm7357 = vcmp.lt.s32.totalorder %v7311, %v7312
        %v7358 = vsel %vm7357, %v7311, %v7312
        %v7359 = vand.u32 %v7358, 65535
        %v7360 = vshra.s32 %v7358, 16
        %v7361 = vcvt.s32.f32 %v7359
        %v7362 = vcvt.s32.f32 %v7360
        %7363 = vmin.xlane.f32.xlu0 %v7362
        %v7364 = vpop.xlane.xlu0 %7363
        %vm7365 = vcmp.eq.f32.partialorder %v7362, %v7364
        %v7366 = vsel %vm7365, %v7361, inf
        %7367 = vmin.xlane.f32.xlu0 %v7366
        %v7368 = vpop.xlane.xlu0 %7367
        %v7369 = vcvt.f32.s32 %v7368
        %v7370 = vcvt.f32.s32 %v7364
        %v7371 = vshll.u32 %v7370, 16
        %v7372 = vadd.s32 %v7371, %v7369
        %vm7373 = vcmp.lt.s32.totalorder %v7313, %v7314
        %v7374 = vsel %vm7373, %v7313, %v7314
        %v7375 = vand.u32 %v7374, 65535
        %v7376 = vshra.s32 %v7374, 16
        %v7377 = vcvt.s32.f32 %v7375
        %v7378 = vcvt.s32.f32 %v7376
        %7379 = vmin.xlane.f32.xlu0 %v7378
        %v7380 = vpop.xlane.xlu0 %7379
        %vm7381 = vcmp.eq.f32.partialorder %v7378, %v7380
        %v7382 = vsel %vm7381, %v7377, inf
        %7383 = vmin.xlane.f32.xlu0 %v7382
        %v7384 = vpop.xlane.xlu0 %7383
        %v7385 = vcvt.f32.s32 %v7384
        %v7386 = vcvt.f32.s32 %v7380
        %v7387 = vshll.u32 %v7386, 16
        %v7388 = vadd.s32 %v7387, %v7385
        %vm7389 = vcmp.lt.s32.totalorder %v7315, %v7316
        %v7390 = vsel %vm7389, %v7315, %v7316
        %v7391 = vand.u32 %v7390, 65535
        %v7392 = vshra.s32 %v7390, 16
        %v7393 = vcvt.s32.f32 %v7391
        %v7394 = vcvt.s32.f32 %v7392
        %7395 = vmin.xlane.f32.xlu0 %v7394
        %v7396 = vpop.xlane.xlu0 %7395
        %vm7397 = vcmp.eq.f32.partialorder %v7394, %v7396
        %v7398 = vsel %vm7397, %v7393, inf
        %7399 = vmin.xlane.f32.xlu0 %v7398
        %v7400 = vpop.xlane.xlu0 %7399
        %v7401 = vcvt.f32.s32 %v7400
        %v7402 = vcvt.f32.s32 %v7396
        %v7403 = vshll.u32 %v7402, 16
        %v7404 = vadd.s32 %v7403, %v7401
        %vm7405 = vcmp.lt.s32.totalorder %v7317, %v7318
        %v7406 = vsel %vm7405, %v7317, %v7318
        %v7407 = vand.u32 %v7406, 65535
        %v7408 = vshra.s32 %v7406, 16
        %v7409 = vcvt.s32.f32 %v7407
        %v7410 = vcvt.s32.f32 %v7408
        %7411 = vmin.xlane.f32.xlu0 %v7410
        %v7412 = vpop.xlane.xlu0 %7411
        %vm7413 = vcmp.eq.f32.partialorder %v7410, %v7412
        %v7414 = vsel %vm7413, %v7409, inf
        %7415 = vmin.xlane.f32.xlu0 %v7414
        %v7416 = vpop.xlane.xlu0 %7415
        %v7417 = vcvt.f32.s32 %v7416
        %v7418 = vcvt.f32.s32 %v7412
        %v7419 = vshll.u32 %v7418, 16
        %v7420 = vadd.s32 %v7419, %v7417
        %vm7421 = vcmp.lt.s32.totalorder %v7319, %v7320
        %v7422 = vsel %vm7421, %v7319, %v7320
        %v7423 = vand.u32 %v7422, 65535
        %v7424 = vshra.s32 %v7422, 16
        %v7425 = vcvt.s32.f32 %v7423
        %v7426 = vcvt.s32.f32 %v7424
        %7427 = vmin.xlane.f32.xlu0 %v7426
        %v7428 = vpop.xlane.xlu0 %7427
        %vm7429 = vcmp.eq.f32.partialorder %v7426, %v7428
        %v7430 = vsel %vm7429, %v7425, inf
        %7431 = vmin.xlane.f32.xlu0 %v7430
        %v7432 = vpop.xlane.xlu0 %7431
        %v7433 = vcvt.f32.s32 %v7432
        %v7434 = vcvt.f32.s32 %v7428
        %v7435 = vshll.u32 %v7434, 16
        %v7436 = vadd.s32 %v7435, %v7433
        %vm7437 = vcmp.lt.s32.totalorder %v7321, %v7322
        %v7438 = vsel %vm7437, %v7321, %v7322
        %v7439 = vand.u32 %v7438, 65535
        %v7440 = vshra.s32 %v7438, 16
        %v7441 = vcvt.s32.f32 %v7439
        %v7442 = vcvt.s32.f32 %v7440
        %7443 = vmin.xlane.f32.xlu0 %v7442
        %v7444 = vpop.xlane.xlu0 %7443
        %vm7445 = vcmp.eq.f32.partialorder %v7442, %v7444
        %v7446 = vsel %vm7445, %v7441, inf
        %7447 = vmin.xlane.f32.xlu0 %v7446
        %v7448 = vpop.xlane.xlu0 %7447
        %v7449 = vcvt.f32.s32 %v7448
        %v7450 = vcvt.f32.s32 %v7444
        %v7451 = vshll.u32 %v7450, 16
        %v7452 = vadd.s32 %v7451, %v7449
        %vm7453 = vcmp.lt.s32.totalorder %v7323, %v7324
        %v7454 = vsel %vm7453, %v7323, %v7324
        %v7455 = vand.u32 %v7454, 65535
        %v7456 = vshra.s32 %v7454, 16
        %v7457 = vcvt.s32.f32 %v7455
        %v7458 = vcvt.s32.f32 %v7456
        %7459 = vmin.xlane.f32.xlu0 %v7458
        %v7460 = vpop.xlane.xlu0 %7459
        %vm7461 = vcmp.eq.f32.partialorder %v7458, %v7460
        %v7462 = vsel %vm7461, %v7457, inf
        %7463 = vmin.xlane.f32.xlu0 %v7462
        %v7464 = vpop.xlane.xlu0 %7463
        %v7465 = vcvt.f32.s32 %v7464
        %v7466 = vcvt.f32.s32 %v7460
        %v7467 = vshll.u32 %v7466, 16
        %v7468 = vadd.s32 %v7467, %v7465
        %vm7469 = vcmp.lt.s32.totalorder %v7325, %v7326
        %v7470 = vsel %vm7469, %v7325, %v7326
        %v7471 = vand.u32 %v7470, 65535
        %v7472 = vshra.s32 %v7470, 16
        %v7473 = vcvt.s32.f32 %v7471
        %v7474 = vcvt.s32.f32 %v7472
        %7475 = vmin.xlane.f32.xlu0 %v7474
        %v7476 = vpop.xlane.xlu0 %7475
        %vm7477 = vcmp.eq.f32.partialorder %v7474, %v7476
        %v7478 = vsel %vm7477, %v7473, inf
        %7479 = vmin.xlane.f32.xlu0 %v7478
        %v7480 = vpop.xlane.xlu0 %7479
        %v7481 = vcvt.f32.s32 %v7480
        %v7482 = vcvt.f32.s32 %v7476
        %v7483 = vshll.u32 %v7482, 16
        %v7484 = vadd.s32 %v7483, %v7481
        %vm7485 = vcmp.lt.s32.totalorder %v7327, %v7328
        %v7486 = vsel %vm7485, %v7327, %v7328
        %v7487 = vand.u32 %v7486, 65535
        %v7488 = vshra.s32 %v7486, 16
        %v7489 = vcvt.s32.f32 %v7487
        %v7490 = vcvt.s32.f32 %v7488
        %7491 = vmin.xlane.f32.xlu0 %v7490
        %v7492 = vpop.xlane.xlu0 %7491
        %vm7493 = vcmp.eq.f32.partialorder %v7490, %v7492
        %v7494 = vsel %vm7493, %v7489, inf
        %7495 = vmin.xlane.f32.xlu0 %v7494
        %v7496 = vpop.xlane.xlu0 %7495
        %v7497 = vcvt.f32.s32 %v7496
        %v7498 = vcvt.f32.s32 %v7492
        %v7499 = vshll.u32 %v7498, 16
        %v7500 = vadd.s32 %v7499, %v7497
        %vm7501 = vcmp.lt.s32.totalorder %v7329, %v7330
        %v7502 = vsel %vm7501, %v7329, %v7330
        %v7503 = vand.u32 %v7502, 65535
        %v7504 = vshra.s32 %v7502, 16
        %v7505 = vcvt.s32.f32 %v7503
        %v7506 = vcvt.s32.f32 %v7504
        %7507 = vmin.xlane.f32.xlu0 %v7506
        %v7508 = vpop.xlane.xlu0 %7507
        %vm7509 = vcmp.eq.f32.partialorder %v7506, %v7508
        %v7510 = vsel %vm7509, %v7505, inf
        %7511 = vmin.xlane.f32.xlu0 %v7510
        %v7512 = vpop.xlane.xlu0 %7511
        %v7513 = vcvt.f32.s32 %v7512
        %v7514 = vcvt.f32.s32 %v7508
        %v7515 = vshll.u32 %v7514, 16
        %v7516 = vadd.s32 %v7515, %v7513
        %vm7517 = vcmp.lt.s32.totalorder %v7331, %v7332
        %v7518 = vsel %vm7517, %v7331, %v7332
        %v7519 = vand.u32 %v7518, 65535
        %v7520 = vshra.s32 %v7518, 16
        %v7521 = vcvt.s32.f32 %v7519
        %v7522 = vcvt.s32.f32 %v7520
        %7523 = vmin.xlane.f32.xlu0 %v7522
        %v7524 = vpop.xlane.xlu0 %7523
        %vm7525 = vcmp.eq.f32.partialorder %v7522, %v7524
        %v7526 = vsel %vm7525, %v7521, inf
        %7527 = vmin.xlane.f32.xlu0 %v7526
        %v7528 = vpop.xlane.xlu0 %7527
        %v7529 = vcvt.f32.s32 %v7528
        %v7530 = vcvt.f32.s32 %v7524
        %v7531 = vshll.u32 %v7530, 16
        %v7532 = vadd.s32 %v7531, %v7529
        %vm7533 = vcmp.lt.s32.totalorder %v7333, %v7334
        %v7534 = vsel %vm7533, %v7333, %v7334
        %v7535 = vand.u32 %v7534, 65535
        %v7536 = vshra.s32 %v7534, 16
        %v7537 = vcvt.s32.f32 %v7535
        %v7538 = vcvt.s32.f32 %v7536
        %7539 = vmin.xlane.f32.xlu0 %v7538
        %v7540 = vpop.xlane.xlu0 %7539
        %vm7541 = vcmp.eq.f32.partialorder %v7538, %v7540
        %v7542 = vsel %vm7541, %v7537, inf
        %7543 = vmin.xlane.f32.xlu0 %v7542
        %v7544 = vpop.xlane.xlu0 %7543
        %v7545 = vcvt.f32.s32 %v7544
        %v7546 = vcvt.f32.s32 %v7540
        %v7547 = vshll.u32 %v7546, 16
        %v7548 = vadd.s32 %v7547, %v7545
        %vm7549 = vcmp.lt.s32.totalorder %v7335, %v7336
        %v7550 = vsel %vm7549, %v7335, %v7336
        %v7551 = vand.u32 %v7550, 65535
        %v7552 = vshra.s32 %v7550, 16
        %v7553 = vcvt.s32.f32 %v7551
        %v7554 = vcvt.s32.f32 %v7552
        %7555 = vmin.xlane.f32.xlu0 %v7554
        %v7556 = vpop.xlane.xlu0 %7555
        %vm7557 = vcmp.eq.f32.partialorder %v7554, %v7556
        %v7558 = vsel %vm7557, %v7553, inf
        %7559 = vmin.xlane.f32.xlu0 %v7558
        %v7560 = vpop.xlane.xlu0 %7559
        %v7561 = vcvt.f32.s32 %v7560
        %v7562 = vcvt.f32.s32 %v7556
        %v7563 = vshll.u32 %v7562, 16
        %v7564 = vadd.s32 %v7563, %v7561
        %vm7565 = vcmp.lt.s32.totalorder %v7337, %v7338
        %v7566 = vsel %vm7565, %v7337, %v7338
        %v7567 = vand.u32 %v7566, 65535
        %v7568 = vshra.s32 %v7566, 16
        %v7569 = vcvt.s32.f32 %v7567
        %v7570 = vcvt.s32.f32 %v7568
        %7571 = vmin.xlane.f32.xlu0 %v7570
        %v7572 = vpop.xlane.xlu0 %7571
        %vm7573 = vcmp.eq.f32.partialorder %v7570, %v7572
        %v7574 = vsel %vm7573, %v7569, inf
        %7575 = vmin.xlane.f32.xlu0 %v7574
        %v7576 = vpop.xlane.xlu0 %7575
        %v7577 = vcvt.f32.s32 %v7576
        %v7578 = vcvt.f32.s32 %v7572
        %v7579 = vshll.u32 %v7578, 16
        %v7580 = vadd.s32 %v7579, %v7577
        %vm7581 = vcmp.lt.s32.totalorder %v7339, %v7340
        %v7582 = vsel %vm7581, %v7339, %v7340
        %v7583 = vand.u32 %v7582, 65535
        %v7584 = vshra.s32 %v7582, 16
        %v7585 = vcvt.s32.f32 %v7583
        %v7586 = vcvt.s32.f32 %v7584
        %7587 = vmin.xlane.f32.xlu0 %v7586
        %v7588 = vpop.xlane.xlu0 %7587
        %vm7589 = vcmp.eq.f32.partialorder %v7586, %v7588
        %v7590 = vsel %vm7589, %v7585, inf
        %7591 = vmin.xlane.f32.xlu0 %v7590
        %v7592 = vpop.xlane.xlu0 %7591
        %v7593 = vcvt.f32.s32 %v7592
        %v7594 = vcvt.f32.s32 %v7588
        %v7595 = vshll.u32 %v7594, 16
        %v7596 = vadd.s32 %v7595, %v7593
        %v7597 = vand.u32 %v7356, 255
        %v7598 = vand.u32 %v7372, 255
        %v7599 = vand.u32 %v7388, 255
        %v7600 = vand.u32 %v7404, 255
        %v7601 = vand.u32 %v7420, 255
        %v7602 = vand.u32 %v7436, 255
        %v7603 = vand.u32 %v7452, 255
        %v7604 = vand.u32 %v7468, 255
        %v7605 = vand.u32 %v7484, 255
        %v7606 = vand.u32 %v7500, 255
        %v7607 = vand.u32 %v7516, 255
        %v7608 = vand.u32 %v7532, 255
        %v7609 = vand.u32 %v7548, 255
        %v7610 = vand.u32 %v7564, 255
        %v7611 = vand.u32 %v7580, 255
        %v7612 = vand.u32 %v7596, 255
        %7613 = vst.msk [vmem:[%s4796] sm:$0xff] %vm4014, %v7597
        %7614 = vst.msk [vmem:[%s4796 + $0x8] sm:$0xff] %vm4014, %v7598
        %7615 = vst.msk [vmem:[%s4796 + $0x10] sm:$0xff] %vm4014, %v7599
        %7616 = vst.msk [vmem:[%s4796 + $0x18] sm:$0xff] %vm4014, %v7600
        %7617 = vst.msk [vmem:[%s4796 + $0x20] sm:$0xff] %vm4014, %v7601
        %7618 = vst.msk [vmem:[%s4796 + $0x28] sm:$0xff] %vm4014, %v7602
        %7619 = vst.msk [vmem:[%s4796 + $0x30] sm:$0xff] %vm4014, %v7603
        %7620 = vst.msk [vmem:[%s4796 + $0x38] sm:$0xff] %vm4014, %v7604
        %7621 = vst.msk [vmem:[%s4796 + $0x40] sm:$0xff] %vm4014, %v7605
        %7622 = vst.msk [vmem:[%s4796 + $0x48] sm:$0xff] %vm4014, %v7606
        %7623 = vst.msk [vmem:[%s4796 + $0x50] sm:$0xff] %vm4014, %v7607
        %7624 = vst.msk [vmem:[%s4796 + $0x58] sm:$0xff] %vm4014, %v7608
        %7625 = vst.msk [vmem:[%s4796 + $0x60] sm:$0xff] %vm4014, %v7609
        %7626 = vst.msk [vmem:[%s4796 + $0x68] sm:$0xff] %vm4014, %v7610
        %7627 = vst.msk [vmem:[%s4796 + $0x70] sm:$0xff] %vm4014, %v7611
        %7628 = vst.msk [vmem:[%s4796 + $0x78] sm:$0xff] %vm4014, %v7612
      $region33: #{tpu_custom_call.1} parent=27 // loop_footer
        %s4036 = sadd.s32 1, %s4032
      $region34: #{tpu_custom_call.1} parent=27 // loop_footer_branch
        %4031 = sbr.rel target = $region30
      $region35: #{tpu_custom_call.1} parent=27 // loop_exit
        _
      %s7629 = smul.u32 64, %s18
      %p7630 = scmp.lt.s32.totalorder %s17, 1
      %s7631 = scalar_select %p7630, %s17, 1
      %p7632 = scmp.lt.s32.totalorder %s7629, 127
      %s7633 = scalar_select %p7632, %s7629, 127
      %s7634 = smul.addr %s7631, 128
      %s7635 = sadd.s32 %s7633, %s7634
      %s7636 = smul.addr %s7635, 8
      %s7637 = scalar_lea.vmem %s2, %s7636
      // Predicated region
      $region36: #{tpu_custom_call.1} parent=27 // pred_check
        %p7638 = pneg %p109
      $region37: #{tpu_custom_call.1} parent=27 // pred_check_branch
        %7640 = sbr.rel (%p7638) target = $region39
      $region38: #{tpu_custom_call.1} parent=27 // pred_region
        %s7641 = smul.u32 64, %s18
      $region39: #{tpu_custom_call.1} parent=27 // pred_fallthru
        _
    $region28: #{tpu_custom_call.1} parent=5 // pred_fallthru
      _
    %p7642 = scmp.le.s32.totalorder 2, %s8
    // Predicated region
    $region40: #{tpu_custom_call.1} parent=5 // pred_check
      %p7643 = pneg %p7642
    $region41: #{tpu_custom_call.1} parent=5 // pred_check_branch
      %7645 = sbr.rel (%p7643) target = $region43
    $region42: #{tpu_custom_call.1} parent=5 // pred_region
      %s7646 = ssub.s32 %s8, 2
      // Predicated region
      $region44: #{tpu_custom_call.1} parent=42 // pred_check
        %p7647 = pneg %p115
      $region45: #{tpu_custom_call.1} parent=42 // pred_check_branch
        %7649 = sbr.rel (%p7647) target = $region47
      $region46: #{tpu_custom_call.1} parent=42 // pred_region
        %s7650 = smul.u32 64, %s20
        %p7651 = scmp.lt.s32.totalorder %s19, 1
        %s7652 = scalar_select %p7651, %s19, 1
        %p7653 = scmp.lt.s32.totalorder %s7650, 127
        %s7654 = scalar_select %p7653, %s7650, 127
        %s7655 = smul.addr %s7652, 128
        %s7656 = sadd.s32 %s7654, %s7655
        %s7657 = smul.addr %s7656, 8
        %s7658 = scalar_lea.vmem %s2, %s7657
      $region47: #{tpu_custom_call.1} parent=42 // pred_fallthru
        _
    $region43: #{tpu_custom_call.1} parent=5 // pred_fallthru
      _
  $region6: #{tpu_custom_call.1} parent=0 // loop_footer
    %s12 = sadd.s32 1, %s8
  $region7: #{tpu_custom_call.1} parent=0 // loop_footer_branch
    %7 = sbr.rel target = $region3
  $region8: #{tpu_custom_call.1} parent=0 // loop_exit
    _

</llo_original>
